<compile_context>
chip_gen: v7x
topology: tpu7x:2x2x1
jax: 0.10.0
libtpu: 0.0.40
codegen_flags: <defaults>
</compile_context>

<pallas_src>
import functools

import jax
import jax.numpy as jnp
from jax.experimental import pallas as pl
from jax.experimental.pallas import tpu as pltpu


def _round_up(x, m):
    return (x + m - 1) // m * m


def _pick_chunk(seq_len, max_chunk):
    """Pick a time-chunk size; prefer a divisor of T so no tail masking is needed."""
    max_chunk = max(1, min(max_chunk, seq_len))
    if seq_len % max_chunk == 0:
        return max_chunk, False
    for c in range(max_chunk, 0, -1):
        if seq_len % c == 0:
            if c >= max(8, max_chunk // 2):
                return c, False
            break
    return max_chunk, True  # fall back to zero-padded tail + in-kernel masking


def _sigmoid_tanh(x):
    # sigmoid(x) == 0.5*tanh(0.5*x) + 0.5 : one EUP op; mul/add run on idle VPU slots.
    return 0.5 * jnp.tanh(0.5 * x) + 0.5


# --------------------------- fused LSTM-layer Pallas kernel ---------------------------
def _lstm_fused_kernel(x_ref, wih_ref, whh_ref, bias_ref,
                       y_ref, h_out_ref, c_out_ref,
                       h_sc, c_sc, gx_sc, y_sc,
                       *, hidden_pad, batch_pad, chunk, seq_len, masked, unroll):
    """One LSTM layer over one time chunk. grid=(num_time_chunks,).

    x_ref:    (chunk*Bp, F)      layer input rows for this chunk (time-major, flat)
    wih_ref:  (F, 4*Hp)   bf16   input->hidden weights (gate blocks i|f|g|o)
    whh_ref:  (Hp, 4*Hp)  bf16   hidden->hidden weights
    bias_ref: (1, 4*Hp)   f32    b_ih + b_hh (gate-block padded)
    y_ref:    (chunk*Bp, Hp)     hidden outputs for this chunk (bf16 or f32)
    h_out_ref / c_out_ref: (Bp, Hp) f32  final states (written on last grid step)
    h_sc / c_sc: (Bp, Hp) f32    recurrent state carried across chunks (VMEM)
    gx_sc: (chunk*Bp, 4*Hp) f32  precomputed input projection for this chunk
    y_sc:  (chunk*Bp, Hp)   f32  per-step output staging (one block store at the end)
    """
    c_idx = pl.program_id(0)
    Hp, Bp = hidden_pad, batch_pad

    @pl.when(c_idx == 0)
    def _():
        h_sc[...] = jnp.zeros_like(h_sc)
        c_sc[...] = jnp.zeros_like(c_sc)

    # Time-parallel input projection for the whole chunk (off the sequential path):
    # one MXU matmul with M = chunk*Bp, fused bias, result lands in VMEM scratch.
    gx_sc[...] = (jnp.dot(x_ref[...].astype(wih_ref.dtype), wih_ref[...],
                          preferred_element_type=jnp.float32)
                  + bias_ref[...])

    def step(i, carry):
        h, c = carry
        row = pl.multiple_of(i * Bp, Bp)
        # Sequential part: only the (Bp, Hp) @ (Hp, 4Hp) recurrence matmul remains.
        gates = gx_sc[pl.ds(row, Bp), :] + jnp.dot(
            h.astype(whh_ref.dtype), whh_ref[...],
            preferred_element_type=jnp.float32)                        # (Bp, 4Hp) f32
        i_g = _sigmoid_tanh(gates[:, 0 * Hp:1 * Hp])
        f_g = _sigmoid_tanh(gates[:, 1 * Hp:2 * Hp])
        g_g = jnp.tanh(gates[:, 2 * Hp:3 * Hp])
        o_g = _sigmoid_tanh(gates[:, 3 * Hp:4 * Hp])
        c_new = f_g * c + i_g * g_g
        h_new = o_g * jnp.tanh(c_new)
        if masked:  # only generated when chunk does not divide T
            valid = (c_idx * chunk + i) < seq_len
            h_new = jnp.where(valid, h_new, h)
            c_new = jnp.where(valid, c_new, c)
        y_sc[pl.ds(row, Bp), :] = h_new                                 # full-tile store
        return (h_new, c_new)

    h, c = jax.lax.fori_loop(0, chunk, step, (h_sc[...], c_sc[...]), unroll=unroll)

    # One lane-dense block writeback per chunk (cast to output dtype here).
    y_ref[...] = y_sc[...].astype(y_ref.dtype)

    h_sc[...] = h
    c_sc[...] = c

    @pl.when(c_idx == pl.num_programs(0) - 1)
    def _():
        h_out_ref[...] = h.astype(h_out_ref.dtype)
        c_out_ref[...] = c.astype(c_out_ref.dtype)


def _lstm_layer(x_2d, wih_t, whh_t, bias, *, seq_len, seq_pad, batch_pad, chunk,
                masked, y_dtype):
    """Run one full LSTM layer over a flat, padded time-major stream.

    x_2d: (Tp*Bp, F)  layer input (f32 for layer 0, bf16 for deeper layers)
    Returns y (Tp*Bp, Hp) [y_dtype], h_T (Bp, Hp) f32, c_T (Bp, Hp) f32.
    """
    Hp = whh_t.shape[0]
    F = x_2d.shape[1]
    Bp, Tp = batch_pad, seq_pad
    rows = chunk * Bp
    num_chunks = Tp // chunk
    unroll = min(chunk, 8)

    kernel = functools.partial(_lstm_fused_kernel, hidden_pad=Hp, batch_pad=Bp,
                               chunk=chunk, seq_len=seq_len, masked=masked,
                               unroll=unroll)

    # VMEM budget from actual buffer sizes (x2 for double-buffered grid I/O),
    # generous floor, capped at v7x's 64 MiB physical VMEM.
    isz = lambda dt: jnp.dtype(dt).itemsize
    vmem_needed = (
        2 * rows * F * isz(x_2d.dtype)          # x chunk (double-buffered)
        + 2 * F * 4 * Hp * 2                    # W_ih^T bf16
        + 2 * Hp * 4 * Hp * 2                   # W_hh^T bf16
        + 2 * 4 * Hp * 4                        # bias
        + 2 * rows * Hp * isz(y_dtype)          # y chunk
        + 4 * Bp * Hp * 4                       # h_T, c_T outputs
        + rows * 4 * Hp * 4                     # gx scratch
        + rows * Hp * 4                         # y staging scratch
        + 2 * Bp * Hp * 4                       # h/c state scratch
    )
    vmem_limit = int(min(max(2 * vmem_needed, 32 * 1024 * 1024), 64 * 1024 * 1024))

    y, h_T, c_T = pl.pallas_call(
        kernel,
        out_shape=(
            jax.ShapeDtypeStruct((Tp * Bp, Hp), y_dtype),
            jax.ShapeDtypeStruct((Bp, Hp), jnp.float32),
            jax.ShapeDtypeStruct((Bp, Hp), jnp.float32),
        ),
        grid_spec=pltpu.PrefetchScalarGridSpec(
            num_scalar_prefetch=0,
            grid=(num_chunks,),
            in_specs=[
                pl.BlockSpec((rows, F), lambda c: (c, 0)),        # x rows of this chunk
                pl.BlockSpec((F, 4 * Hp), lambda c: (0, 0)),      # W_ih^T (VMEM resident)
                pl.BlockSpec((Hp, 4 * Hp), lambda c: (0, 0)),     # W_hh^T (VMEM resident)
                pl.BlockSpec((1, 4 * Hp), lambda c: (0, 0)),      # fused bias
            ],
            out_specs=[
                pl.BlockSpec((rows, Hp), lambda c: (c, 0)),       # y rows of this chunk
                pl.BlockSpec((Bp, Hp), lambda c: (0, 0)),         # h_T
                pl.BlockSpec((Bp, Hp), lambda c: (0, 0)),         # c_T
            ],
            scratch_shapes=[
                pltpu.VMEM((Bp, Hp), jnp.float32),                # h state
                pltpu.VMEM((Bp, Hp), jnp.float32),                # c state
                pltpu.VMEM((rows, 4 * Hp), jnp.float32),          # gx (input projection)
                pltpu.VMEM((rows, Hp), jnp.float32),              # y staging
            ],
        ),
        compiler_params=pltpu.CompilerParams(
            dimension_semantics=("arbitrary",),                   # sequential recurrence
            vmem_limit_bytes=vmem_limit,
        ),
    )(x_2d, wih_t, whh_t, bias)
    return y, h_T, c_T


# ----------------------- parameter prep (done once) ----------------------------
def prepare_encoder_params(params, *, compute_dtype=jnp.bfloat16):
    """Transpose / gate-block-pad / cast PyTorch-shaped LSTM params once.

    params: list of (w_ih (4H,in), w_hh (4H,H), b_ih (4H,), b_hh (4H,)) per layer.
    Returns (prepared, Hp) where prepared[layer] = (wih_t, whh_t, bias):
      wih_t: (in_or_Hp, 4*Hp) compute_dtype   (rows padded to Hp for layers >= 1)
      whh_t: (Hp, 4*Hp)       compute_dtype
      bias:  (1, 4*Hp)        f32             (b_ih + b_hh, gate-block padded)
    Padded rows/cols are zero so padded hidden lanes never contaminate real state.
    NOTE: bf16 W_hh in a long recurrence compounds rounding; re-validate tolerance
    (or use f32 W_hh) if T grows into the hundreds.
    """
    H = params[0][1].shape[1]
    Hp = _round_up(max(H, 128), 128)

    def pad_gate_cols(w_t):  # (rows, 4H) -> (rows, 4Hp), per-gate zero padding
        r = w_t.shape[0]
        return jnp.pad(w_t.reshape(r, 4, H),
                       ((0, 0), (0, 0), (0, Hp - H))).reshape(r, 4 * Hp)

    prepared = []
    for layer, (w_ih, w_hh, b_ih, b_hh) in enumerate(params):
        wih_t = pad_gate_cols(jnp.transpose(w_ih))                    # (in, 4Hp)
        if layer > 0:
            # deeper layers consume the padded (.., Hp) output of the previous layer
            wih_t = jnp.pad(wih_t, ((0, Hp - H), (0, 0)))             # (Hp, 4Hp)
        whh_t = jnp.pad(pad_gate_cols(jnp.transpose(w_hh)),
                        ((0, Hp - H), (0, 0)))                        # (Hp, 4Hp)
        bias = pad_gate_cols((b_ih + b_hh)[None, :])                  # (1, 4Hp)
        prepared.append((wih_t.astype(compute_dtype),
                         whh_t.astype(compute_dtype),
                         bias.astype(jnp.float32)))
    return prepared, Hp


# ------------------------------- forward ---------------------------------------
def encoder_forward(x_bti, prepared_params, *, hidden_size, hidden_pad, chunk=32):
    """Encoder.forward: returns (encoder_output (B,T,H), hidden (L,B,H), cell (L,B,H)).

    x_bti: (B, T, input_size) batch_first, matching the PyTorch module.
    Eval-mode forward: inter-layer dropout is identity.
    """
    B, T, _ = x_bti.shape
    H, Hp = hidden_size, hidden_pad
    Bp = _round_up(max(B, 8), 8)
    Tc, masked = _pick_chunk(T, chunk)
    Tp = _round_up(T, Tc)

    # Time-major, zero-pad T and B, flatten to a (Tp*Bp, F) stream for the kernel.
    x_tbi = jnp.transpose(x_bti, (1, 0, 2))
    x_tbi = jnp.pad(x_tbi, ((0, Tp - T), (0, Bp - B), (0, 0)))
    layer_in = x_tbi.reshape(Tp * Bp, x_tbi.shape[-1])

    hs, cs = [], []
    n_layers = len(prepared_params)
    for li, (wih_t, whh_t, bias) in enumerate(prepared_params):
        # Intermediate-layer activations travel in bf16 (halves HBM traffic); the
        # next layer casts to bf16 for its matmul anyway.  Final layer stays f32.
        y_dtype = jnp.float32 if li == n_layers - 1 else jnp.bfloat16
        y2d, h_T, c_T = _lstm_layer(layer_in, wih_t, whh_t, bias,
                                    seq_len=T, seq_pad=Tp, batch_pad=Bp,
                                    chunk=Tc, masked=masked, y_dtype=y_dtype)
        hs.append(h_T[:B, :H])
        cs.append(c_T[:B, :H])
        layer_in = y2d

    y_tbh = layer_in.reshape(Tp, Bp, Hp)[:T, :B, :H]
    encoder_output = jnp.transpose(y_tbh, (1, 0, 2))                  # (B, T, H)
    hidden = jnp.stack(hs, axis=0)                                    # (L, B, H)
    cell = jnp.stack(cs, axis=0)                                      # (L, B, H)
    return encoder_output, hidden, cell


# ---------------- pure-JAX f32 reference (for correctness check) ----------------
def _lstm_layer_ref(x_tbi, w_ih, w_hh, b_ih, b_hh):
    _, B, _ = x_tbi.shape
    H = w_hh.shape[1]

    def step(carry, x_t):
        h, c = carry
        gates = x_t @ w_ih.T + h @ w_hh.T + b_ih + b_hh
        i = jax.nn.sigmoid(gates[:, 0 * H:1 * H])
        f = jax.nn.sigmoid(gates[:, 1 * H:2 * H])
        g = jnp.tanh(gates[:, 2 * H:3 * H])
        o = jax.nn.sigmoid(gates[:, 3 * H:4 * H])
        c_new = f * c + i * g
        h_new = o * jnp.tanh(c_new)
        return (h_new, c_new), h_new

    h0 = jnp.zeros((B, H), jnp.float32)
    c0 = jnp.zeros((B, H), jnp.float32)
    (h_T, c_T), ys = jax.lax.scan(step, (h0, c0), x_tbi)
    return ys, h_T, c_T


def encoder_forward_ref(x_bti, params):
    x_tbi = jnp.transpose(x_bti, (1, 0, 2))
    hs, cs = [], []
    layer_in = x_tbi
    for (w_ih, w_hh, b_ih, b_hh) in params:
        y, h_T, c_T = _lstm_layer_ref(layer_in, w_ih, w_hh, b_ih, b_hh)
        hs.append(h_T)
        cs.append(c_T)
        layer_in = y
    return (jnp.transpose(layer_in, (1, 0, 2)),
            jnp.stack(hs, axis=0), jnp.stack(cs, axis=0))


def init_lstm_params(key, input_size, hidden_size, num_layers):
    """PyTorch nn.LSTM parameter shapes, uniform(-1/sqrt(H), 1/sqrt(H))."""
    params = []
    k = 1.0 / jnp.sqrt(jnp.float32(hidden_size))
    for layer in range(num_layers):
        in_sz = input_size if layer == 0 else hidden_size
        key, k1, k2, k3, k4 = jax.random.split(key, 5)
        w_ih = jax.random.uniform(k1, (4 * hidden_size, in_sz), jnp.float32, -k, k)
        w_hh = jax.random.uniform(k2, (4 * hidden_size, hidden_size), jnp.float32, -k, k)
        b_ih = jax.random.uniform(k3, (4 * hidden_size,), jnp.float32, -k, k)
        b_hh = jax.random.uniform(k4, (4 * hidden_size,), jnp.float32, -k, k)
        params.append((w_ih, w_hh, b_ih, b_hh))
    return params


if __name__ == "__main__":
    # Small shapes consistent with the module: batch=2, seq=8, input=16, hidden=32, layers=2
    B, T, INPUT, HIDDEN, LAYERS = 2, 8, 16, 32, 2

    key = jax.random.PRNGKey(0)
    key, kx = jax.random.split(key)
    x = jax.random.normal(kx, (B, T, INPUT), dtype=jnp.float32)   # (B, T, input_size)

    params = init_lstm_params(key, INPUT, HIDDEN, LAYERS)

    # Prepare (transpose / pad / cast) weights ONCE, outside the per-call path.
    prepped, Hp = prepare_encoder_params(params)

    fwd = jax.jit(functools.partial(encoder_forward, hidden_size=HIDDEN,
                                    hidden_pad=Hp, chunk=32))
    enc_out, hidden, cell = fwd(x, prepped)
    enc_out = jax.block_until_ready(enc_out)
    hidden = jax.block_until_ready(hidden)
    cell = jax.block_until_ready(cell)

    # Shapes match PyTorch nn.LSTM(batch_first=True) outputs
    assert enc_out.shape == (B, T, HIDDEN)
    assert hidden.shape == (LAYERS, B, HIDDEN)
    assert cell.shape == (LAYERS, B, HIDDEN)

    # Numerical check against a pure-JAX f32 reference.
    # (bf16 MXU operands + bf16 inter-layer activations introduce a small,
    #  expected drift; tolerance covers it at these shapes.)
    ref_out, ref_h, ref_c = encoder_forward_ref(x, params)
    assert jnp.allclose(enc_out, ref_out, rtol=2e-2, atol=2e-2)
    assert jnp.allclose(hidden, ref_h, rtol=2e-2, atol=2e-2)
    assert jnp.allclose(cell, ref_c, rtol=2e-2, atol=2e-2)

    print("KERNEL_OK")
</pallas_src>

<mosaic_0001>
module attributes {stable_mosaic.version = 11 : i64} {
  func.func @_lstm_fused_kernel(%arg0: i32, %arg1: memref<64x16xf32, #tpu.memory_space<vmem>>, %arg2: memref<16x512xbf16, #tpu.memory_space<vmem>>, %arg3: memref<128x512xbf16, #tpu.memory_space<vmem>>, %arg4: memref<1x512xf32, #tpu.memory_space<vmem>>, %arg5: memref<64x128xbf16, #tpu.memory_space<vmem>>, %arg6: memref<8x128xf32, #tpu.memory_space<vmem>>, %arg7: memref<8x128xf32, #tpu.memory_space<vmem>>, %arg8: memref<8x128xf32, #tpu.memory_space<vmem>>, %arg9: memref<8x128xf32, #tpu.memory_space<vmem>>, %arg10: memref<64x512xf32, #tpu.memory_space<vmem>>, %arg11: memref<64x128xf32, #tpu.memory_space<vmem>>) attributes {dimension_semantics = [#tpu.dimension_semantics<arbitrary>], iteration_bounds = array<i64: 1>, scalar_prefetch = 0 : i64, scratch_operands = 4 : i64, tpu.core_type = #tpu.core_type<tc>, window_params = [{transform_indices = @transform_0, window_bounds = array<i64: 64, 16>}, {pipeline_mode = #tpu.pipeline_mode<synchronous>, transform_indices = @transform_1, window_bounds = array<i64: 16, 512>}, {pipeline_mode = #tpu.pipeline_mode<synchronous>, transform_indices = @transform_2, window_bounds = array<i64: 128, 512>}, {pipeline_mode = #tpu.pipeline_mode<synchronous>, transform_indices = @transform_3, window_bounds = array<i64: 1, 512>}, {transform_indices = @transform_4, window_bounds = array<i64: 64, 128>}, {pipeline_mode = #tpu.pipeline_mode<synchronous>, transform_indices = @transform_5, window_bounds = array<i64: 8, 128>}, {pipeline_mode = #tpu.pipeline_mode<synchronous>, transform_indices = @transform_6, window_bounds = array<i64: 8, 128>}]} {
    %c0_i32 = arith.constant 0 : i32
    %0 = arith.cmpi eq, %arg0, %c0_i32 : i32
    %1 = arith.extui %0 : i1 to i32
    %c0_i32_0 = arith.constant 0 : i32
    %2 = arith.cmpi ne, %1, %c0_i32_0 : i32
    scf.if %2 {
      %cst_143 = arith.constant 0.000000e+00 : f32
      %349 = vector.broadcast %cst_143 : f32 to vector<8x128xf32>
      %c0_144 = arith.constant 0 : index
      %c0_145 = arith.constant 0 : index
      %350 = vector.load %arg8[%c0_144, %c0_145] : memref<8x128xf32, #tpu.memory_space<vmem>>, vector<8x128xf32>
      tpu.vector_store %arg8[%c0_144, %c0_145], %349 {strides = array<i32>} : memref<8x128xf32, #tpu.memory_space<vmem>>, vector<8x128xf32>,
      %cst_146 = arith.constant 0.000000e+00 : f32
      %351 = vector.broadcast %cst_146 : f32 to vector<8x128xf32>
      %c0_147 = arith.constant 0 : index
      %c0_148 = arith.constant 0 : index
      %352 = vector.load %arg9[%c0_147, %c0_148] : memref<8x128xf32, #tpu.memory_space<vmem>>, vector<8x128xf32>
      tpu.vector_store %arg9[%c0_147, %c0_148], %351 {strides = array<i32>} : memref<8x128xf32, #tpu.memory_space<vmem>>, vector<8x128xf32>,
    } else {
    }
    %c0 = arith.constant 0 : index
    %c0_1 = arith.constant 0 : index
    %3 = vector.load %arg1[%c0, %c0_1] : memref<64x16xf32, #tpu.memory_space<vmem>>, vector<64x16xf32>
    %4 = arith.truncf %3 : vector<64x16xf32> to vector<64x16xbf16>
    %c0_2 = arith.constant 0 : index
    %c0_3 = arith.constant 0 : index
    %5 = vector.load %arg2[%c0_2, %c0_3] : memref<16x512xbf16, #tpu.memory_space<vmem>>, vector<16x512xbf16>
    %cst = arith.constant dense<0.000000e+00> : vector<64x512xf32>
    %6 = tpu.matmul %4, %5, %cst {dimension_numbers = #tpu.dot_dimension_numbers<[1], [0], [0], [1], [0, 0, 1, 1], [], []>} : vector<64x16xbf16>, vector<16x512xbf16>, vector<64x512xf32> -> vector<64x512xf32>
    %c0_4 = arith.constant 0 : index
    %c0_5 = arith.constant 0 : index
    %7 = vector.load %arg4[%c0_4, %c0_5] : memref<1x512xf32, #tpu.memory_space<vmem>>, vector<1x512xf32>
    %8 = vector.broadcast %7 : vector<1x512xf32> to vector<64x512xf32>
    %9 = arith.addf %6, %8 : vector<64x512xf32>
    %c0_6 = arith.constant 0 : index
    %c0_7 = arith.constant 0 : index
    %10 = vector.load %arg10[%c0_6, %c0_7] : memref<64x512xf32, #tpu.memory_space<vmem>>, vector<64x512xf32>
    tpu.vector_store %arg10[%c0_6, %c0_7], %9 {strides = array<i32>} : memref<64x512xf32, #tpu.memory_space<vmem>>, vector<64x512xf32>,
    %c0_8 = arith.constant 0 : index
    %c0_9 = arith.constant 0 : index
    %11 = vector.load %arg8[%c0_8, %c0_9] : memref<8x128xf32, #tpu.memory_space<vmem>>, vector<8x128xf32>
    %c0_10 = arith.constant 0 : index
    %c0_11 = arith.constant 0 : index
    %12 = vector.load %arg9[%c0_10, %c0_11] : memref<8x128xf32, #tpu.memory_space<vmem>>, vector<8x128xf32>
    %c0_i32_12 = arith.constant 0 : i32
    %c8_i32 = arith.constant 8 : i32
    %13 = arith.muli %c0_i32_12, %c8_i32 : i32
    %14 = tpu.assume_multiple %13, 8 : i32
    %15 = arith.index_cast %14 : i32 to index
    %c0_13 = arith.constant 0 : index
    %16 = vector.load %arg10[%15, %c0_13] : memref<64x512xf32, #tpu.memory_space<vmem>>, vector<8x512xf32>
    %17 = arith.truncf %11 : vector<8x128xf32> to vector<8x128xbf16>
    %c0_14 = arith.constant 0 : index
    %c0_15 = arith.constant 0 : index
    %18 = vector.load %arg3[%c0_14, %c0_15] : memref<128x512xbf16, #tpu.memory_space<vmem>>, vector<128x512xbf16>
    %cst_16 = arith.constant dense<0.000000e+00> : vector<8x512xf32>
    %19 = tpu.matmul %17, %18, %cst_16 {dimension_numbers = #tpu.dot_dimension_numbers<[1], [0], [0], [1], [0, 0, 1, 1], [], []>} : vector<8x128xbf16>, vector<128x512xbf16>, vector<8x512xf32> -> vector<8x512xf32>
    %20 = arith.addf %16, %19 : vector<8x512xf32>
    %21 = vector.extract_strided_slice %20 {offsets = [0, 0], sizes = [8, 128], strides = [1, 1]} : vector<8x512xf32> to vector<8x128xf32>
    %cst_17 = arith.constant 5.000000e-01 : f32
    %22 = vector.broadcast %cst_17 : f32 to vector<8x128xf32>
    %23 = arith.mulf %22, %21 : vector<8x128xf32>
    %24 = math.tanh %23 : vector<8x128xf32>
    %cst_18 = arith.constant 5.000000e-01 : f32
    %25 = vector.broadcast %cst_18 : f32 to vector<8x128xf32>
    %26 = arith.mulf %25, %24 : vector<8x128xf32>
    %cst_19 = arith.constant 5.000000e-01 : f32
    %27 = vector.broadcast %cst_19 : f32 to vector<8x128xf32>
    %28 = arith.addf %26, %27 : vector<8x128xf32>
    %29 = vector.extract_strided_slice %20 {offsets = [0, 128], sizes = [8, 128], strides = [1, 1]} : vector<8x512xf32> to vector<8x128xf32>
    %cst_20 = arith.constant 5.000000e-01 : f32
    %30 = vector.broadcast %cst_20 : f32 to vector<8x128xf32>
    %31 = arith.mulf %30, %29 : vector<8x128xf32>
    %32 = math.tanh %31 : vector<8x128xf32>
    %cst_21 = arith.constant 5.000000e-01 : f32
    %33 = vector.broadcast %cst_21 : f32 to vector<8x128xf32>
    %34 = arith.mulf %33, %32 : vector<8x128xf32>
    %cst_22 = arith.constant 5.000000e-01 : f32
    %35 = vector.broadcast %cst_22 : f32 to vector<8x128xf32>
    %36 = arith.addf %34, %35 : vector<8x128xf32>
    %37 = vector.extract_strided_slice %20 {offsets = [0, 256], sizes = [8, 128], strides = [1, 1]} : vector<8x512xf32> to vector<8x128xf32>
    %38 = math.tanh %37 : vector<8x128xf32>
    %39 = vector.extract_strided_slice %20 {offsets = [0, 384], sizes = [8, 128], strides = [1, 1]} : vector<8x512xf32> to vector<8x128xf32>
    %cst_23 = arith.constant 5.000000e-01 : f32
    %40 = vector.broadcast %cst_23 : f32 to vector<8x128xf32>
    %41 = arith.mulf %40, %39 : vector<8x128xf32>
    %42 = math.tanh %41 : vector<8x128xf32>
    %cst_24 = arith.constant 5.000000e-01 : f32
    %43 = vector.broadcast %cst_24 : f32 to vector<8x128xf32>
    %44 = arith.mulf %43, %42 : vector<8x128xf32>
    %cst_25 = arith.constant 5.000000e-01 : f32
    %45 = vector.broadcast %cst_25 : f32 to vector<8x128xf32>
    %46 = arith.addf %44, %45 : vector<8x128xf32>
    %47 = arith.mulf %36, %12 : vector<8x128xf32>
    %48 = arith.mulf %28, %38 : vector<8x128xf32>
    %49 = arith.addf %47, %48 : vector<8x128xf32>
    %50 = math.tanh %49 : vector<8x128xf32>
    %51 = arith.mulf %46, %50 : vector<8x128xf32>
    %52 = arith.index_cast %14 : i32 to index
    %c0_26 = arith.constant 0 : index
    %53 = vector.load %arg11[%52, %c0_26] : memref<64x128xf32, #tpu.memory_space<vmem>>, vector<8x128xf32>
    tpu.vector_store %arg11[%52, %c0_26], %51 {strides = array<i32>} : memref<64x128xf32, #tpu.memory_space<vmem>>, vector<8x128xf32>,
    %c1_i32 = arith.constant 1 : i32
    %c8_i32_27 = arith.constant 8 : i32
    %54 = arith.muli %c1_i32, %c8_i32_27 : i32
    %55 = tpu.assume_multiple %54, 8 : i32
    %56 = arith.index_cast %55 : i32 to index
    %c0_28 = arith.constant 0 : index
    %57 = vector.load %arg10[%56, %c0_28] : memref<64x512xf32, #tpu.memory_space<vmem>>, vector<8x512xf32>
    %58 = arith.truncf %51 : vector<8x128xf32> to vector<8x128xbf16>
    %c0_29 = arith.constant 0 : index
    %c0_30 = arith.constant 0 : index
    %59 = vector.load %arg3[%c0_29, %c0_30] : memref<128x512xbf16, #tpu.memory_space<vmem>>, vector<128x512xbf16>
    %cst_31 = arith.constant dense<0.000000e+00> : vector<8x512xf32>
    %60 = tpu.matmul %58, %59, %cst_31 {dimension_numbers = #tpu.dot_dimension_numbers<[1], [0], [0], [1], [0, 0, 1, 1], [], []>} : vector<8x128xbf16>, vector<128x512xbf16>, vector<8x512xf32> -> vector<8x512xf32>
    %61 = arith.addf %57, %60 : vector<8x512xf32>
    %62 = vector.extract_strided_slice %61 {offsets = [0, 0], sizes = [8, 128], strides = [1, 1]} : vector<8x512xf32> to vector<8x128xf32>
    %cst_32 = arith.constant 5.000000e-01 : f32
    %63 = vector.broadcast %cst_32 : f32 to vector<8x128xf32>
    %64 = arith.mulf %63, %62 : vector<8x128xf32>
    %65 = math.tanh %64 : vector<8x128xf32>
    %cst_33 = arith.constant 5.000000e-01 : f32
    %66 = vector.broadcast %cst_33 : f32 to vector<8x128xf32>
    %67 = arith.mulf %66, %65 : vector<8x128xf32>
    %cst_34 = arith.constant 5.000000e-01 : f32
    %68 = vector.broadcast %cst_34 : f32 to vector<8x128xf32>
    %69 = arith.addf %67, %68 : vector<8x128xf32>
    %70 = vector.extract_strided_slice %61 {offsets = [0, 128], sizes = [8, 128], strides = [1, 1]} : vector<8x512xf32> to vector<8x128xf32>
    %cst_35 = arith.constant 5.000000e-01 : f32
    %71 = vector.broadcast %cst_35 : f32 to vector<8x128xf32>
    %72 = arith.mulf %71, %70 : vector<8x128xf32>
    %73 = math.tanh %72 : vector<8x128xf32>
    %cst_36 = arith.constant 5.000000e-01 : f32
    %74 = vector.broadcast %cst_36 : f32 to vector<8x128xf32>
    %75 = arith.mulf %74, %73 : vector<8x128xf32>
    %cst_37 = arith.constant 5.000000e-01 : f32
    %76 = vector.broadcast %cst_37 : f32 to vector<8x128xf32>
    %77 = arith.addf %75, %76 : vector<8x128xf32>
    %78 = vector.extract_strided_slice %61 {offsets = [0, 256], sizes = [8, 128], strides = [1, 1]} : vector<8x512xf32> to vector<8x128xf32>
    %79 = math.tanh %78 : vector<8x128xf32>
    %80 = vector.extract_strided_slice %61 {offsets = [0, 384], sizes = [8, 128], strides = [1, 1]} : vector<8x512xf32> to vector<8x128xf32>
    %cst_38 = arith.constant 5.000000e-01 : f32
    %81 = vector.broadcast %cst_38 : f32 to vector<8x128xf32>
    %82 = arith.mulf %81, %80 : vector<8x128xf32>
    %83 = math.tanh %82 : vector<8x128xf32>
    %cst_39 = arith.constant 5.000000e-01 : f32
    %84 = vector.broadcast %cst_39 : f32 to vector<8x128xf32>
    %85 = arith.mulf %84, %83 : vector<8x128xf32>
    %cst_40 = arith.constant 5.000000e-01 : f32
    %86 = vector.broadcast %cst_40 : f32 to vector<8x128xf32>
    %87 = arith.addf %85, %86 : vector<8x128xf32>
    %88 = arith.mulf %77, %49 : vector<8x128xf32>
    %89 = arith.mulf %69, %79 : vector<8x128xf32>
    %90 = arith.addf %88, %89 : vector<8x128xf32>
    %91 = math.tanh %90 : vector<8x128xf32>
    %92 = arith.mulf %87, %91 : vector<8x128xf32>
    %93 = arith.index_cast %55 : i32 to index
    %c0_41 = arith.constant 0 : index
    %94 = vector.load %arg11[%93, %c0_41] : memref<64x128xf32, #tpu.memory_space<vmem>>, vector<8x128xf32>
    tpu.vector_store %arg11[%93, %c0_41], %92 {strides = array<i32>} : memref<64x128xf32, #tpu.memory_space<vmem>>, vector<8x128xf32>,
    %c2_i32 = arith.constant 2 : i32
    %c8_i32_42 = arith.constant 8 : i32
    %95 = arith.muli %c2_i32, %c8_i32_42 : i32
    %96 = tpu.assume_multiple %95, 8 : i32
    %97 = arith.index_cast %96 : i32 to index
    %c0_43 = arith.constant 0 : index
    %98 = vector.load %arg10[%97, %c0_43] : memref<64x512xf32, #tpu.memory_space<vmem>>, vector<8x512xf32>
    %99 = arith.truncf %92 : vector<8x128xf32> to vector<8x128xbf16>
    %c0_44 = arith.constant 0 : index
    %c0_45 = arith.constant 0 : index
    %100 = vector.load %arg3[%c0_44, %c0_45] : memref<128x512xbf16, #tpu.memory_space<vmem>>, vector<128x512xbf16>
    %cst_46 = arith.constant dense<0.000000e+00> : vector<8x512xf32>
    %101 = tpu.matmul %99, %100, %cst_46 {dimension_numbers = #tpu.dot_dimension_numbers<[1], [0], [0], [1], [0, 0, 1, 1], [], []>} : vector<8x128xbf16>, vector<128x512xbf16>, vector<8x512xf32> -> vector<8x512xf32>
    %102 = arith.addf %98, %101 : vector<8x512xf32>
    %103 = vector.extract_strided_slice %102 {offsets = [0, 0], sizes = [8, 128], strides = [1, 1]} : vector<8x512xf32> to vector<8x128xf32>
    %cst_47 = arith.constant 5.000000e-01 : f32
    %104 = vector.broadcast %cst_47 : f32 to vector<8x128xf32>
    %105 = arith.mulf %104, %103 : vector<8x128xf32>
    %106 = math.tanh %105 : vector<8x128xf32>
    %cst_48 = arith.constant 5.000000e-01 : f32
    %107 = vector.broadcast %cst_48 : f32 to vector<8x128xf32>
    %108 = arith.mulf %107, %106 : vector<8x128xf32>
    %cst_49 = arith.constant 5.000000e-01 : f32
    %109 = vector.broadcast %cst_49 : f32 to vector<8x128xf32>
    %110 = arith.addf %108, %109 : vector<8x128xf32>
    %111 = vector.extract_strided_slice %102 {offsets = [0, 128], sizes = [8, 128], strides = [1, 1]} : vector<8x512xf32> to vector<8x128xf32>
    %cst_50 = arith.constant 5.000000e-01 : f32
    %112 = vector.broadcast %cst_50 : f32 to vector<8x128xf32>
    %113 = arith.mulf %112, %111 : vector<8x128xf32>
    %114 = math.tanh %113 : vector<8x128xf32>
    %cst_51 = arith.constant 5.000000e-01 : f32
    %115 = vector.broadcast %cst_51 : f32 to vector<8x128xf32>
    %116 = arith.mulf %115, %114 : vector<8x128xf32>
    %cst_52 = arith.constant 5.000000e-01 : f32
    %117 = vector.broadcast %cst_52 : f32 to vector<8x128xf32>
    %118 = arith.addf %116, %117 : vector<8x128xf32>
    %119 = vector.extract_strided_slice %102 {offsets = [0, 256], sizes = [8, 128], strides = [1, 1]} : vector<8x512xf32> to vector<8x128xf32>
    %120 = math.tanh %119 : vector<8x128xf32>
    %121 = vector.extract_strided_slice %102 {offsets = [0, 384], sizes = [8, 128], strides = [1, 1]} : vector<8x512xf32> to vector<8x128xf32>
    %cst_53 = arith.constant 5.000000e-01 : f32
    %122 = vector.broadcast %cst_53 : f32 to vector<8x128xf32>
    %123 = arith.mulf %122, %121 : vector<8x128xf32>
    %124 = math.tanh %123 : vector<8x128xf32>
    %cst_54 = arith.constant 5.000000e-01 : f32
    %125 = vector.broadcast %cst_54 : f32 to vector<8x128xf32>
    %126 = arith.mulf %125, %124 : vector<8x128xf32>
    %cst_55 = arith.constant 5.000000e-01 : f32
    %127 = vector.broadcast %cst_55 : f32 to vector<8x128xf32>
    %128 = arith.addf %126, %127 : vector<8x128xf32>
    %129 = arith.mulf %118, %90 : vector<8x128xf32>
    %130 = arith.mulf %110, %120 : vector<8x128xf32>
    %131 = arith.addf %129, %130 : vector<8x128xf32>
    %132 = math.tanh %131 : vector<8x128xf32>
    %133 = arith.mulf %128, %132 : vector<8x128xf32>
    %134 = arith.index_cast %96 : i32 to index
    %c0_56 = arith.constant 0 : index
    %135 = vector.load %arg11[%134, %c0_56] : memref<64x128xf32, #tpu.memory_space<vmem>>, vector<8x128xf32>
    tpu.vector_store %arg11[%134, %c0_56], %133 {strides = array<i32>} : memref<64x128xf32, #tpu.memory_space<vmem>>, vector<8x128xf32>,
    %c3_i32 = arith.constant 3 : i32
    %c8_i32_57 = arith.constant 8 : i32
    %136 = arith.muli %c3_i32, %c8_i32_57 : i32
    %137 = tpu.assume_multiple %136, 8 : i32
    %138 = arith.index_cast %137 : i32 to index
    %c0_58 = arith.constant 0 : index
    %139 = vector.load %arg10[%138, %c0_58] : memref<64x512xf32, #tpu.memory_space<vmem>>, vector<8x512xf32>
    %140 = arith.truncf %133 : vector<8x128xf32> to vector<8x128xbf16>
    %c0_59 = arith.constant 0 : index
    %c0_60 = arith.constant 0 : index
    %141 = vector.load %arg3[%c0_59, %c0_60] : memref<128x512xbf16, #tpu.memory_space<vmem>>, vector<128x512xbf16>
    %cst_61 = arith.constant dense<0.000000e+00> : vector<8x512xf32>
    %142 = tpu.matmul %140, %141, %cst_61 {dimension_numbers = #tpu.dot_dimension_numbers<[1], [0], [0], [1], [0, 0, 1, 1], [], []>} : vector<8x128xbf16>, vector<128x512xbf16>, vector<8x512xf32> -> vector<8x512xf32>
    %143 = arith.addf %139, %142 : vector<8x512xf32>
    %144 = vector.extract_strided_slice %143 {offsets = [0, 0], sizes = [8, 128], strides = [1, 1]} : vector<8x512xf32> to vector<8x128xf32>
    %cst_62 = arith.constant 5.000000e-01 : f32
    %145 = vector.broadcast %cst_62 : f32 to vector<8x128xf32>
    %146 = arith.mulf %145, %144 : vector<8x128xf32>
    %147 = math.tanh %146 : vector<8x128xf32>
    %cst_63 = arith.constant 5.000000e-01 : f32
    %148 = vector.broadcast %cst_63 : f32 to vector<8x128xf32>
    %149 = arith.mulf %148, %147 : vector<8x128xf32>
    %cst_64 = arith.constant 5.000000e-01 : f32
    %150 = vector.broadcast %cst_64 : f32 to vector<8x128xf32>
    %151 = arith.addf %149, %150 : vector<8x128xf32>
    %152 = vector.extract_strided_slice %143 {offsets = [0, 128], sizes = [8, 128], strides = [1, 1]} : vector<8x512xf32> to vector<8x128xf32>
    %cst_65 = arith.constant 5.000000e-01 : f32
    %153 = vector.broadcast %cst_65 : f32 to vector<8x128xf32>
    %154 = arith.mulf %153, %152 : vector<8x128xf32>
    %155 = math.tanh %154 : vector<8x128xf32>
    %cst_66 = arith.constant 5.000000e-01 : f32
    %156 = vector.broadcast %cst_66 : f32 to vector<8x128xf32>
    %157 = arith.mulf %156, %155 : vector<8x128xf32>
    %cst_67 = arith.constant 5.000000e-01 : f32
    %158 = vector.broadcast %cst_67 : f32 to vector<8x128xf32>
    %159 = arith.addf %157, %158 : vector<8x128xf32>
    %160 = vector.extract_strided_slice %143 {offsets = [0, 256], sizes = [8, 128], strides = [1, 1]} : vector<8x512xf32> to vector<8x128xf32>
    %161 = math.tanh %160 : vector<8x128xf32>
    %162 = vector.extract_strided_slice %143 {offsets = [0, 384], sizes = [8, 128], strides = [1, 1]} : vector<8x512xf32> to vector<8x128xf32>
    %cst_68 = arith.constant 5.000000e-01 : f32
    %163 = vector.broadcast %cst_68 : f32 to vector<8x128xf32>
    %164 = arith.mulf %163, %162 : vector<8x128xf32>
    %165 = math.tanh %164 : vector<8x128xf32>
    %cst_69 = arith.constant 5.000000e-01 : f32
    %166 = vector.broadcast %cst_69 : f32 to vector<8x128xf32>
    %167 = arith.mulf %166, %165 : vector<8x128xf32>
    %cst_70 = arith.constant 5.000000e-01 : f32
    %168 = vector.broadcast %cst_70 : f32 to vector<8x128xf32>
    %169 = arith.addf %167, %168 : vector<8x128xf32>
    %170 = arith.mulf %159, %131 : vector<8x128xf32>
    %171 = arith.mulf %151, %161 : vector<8x128xf32>
    %172 = arith.addf %170, %171 : vector<8x128xf32>
    %173 = math.tanh %172 : vector<8x128xf32>
    %174 = arith.mulf %169, %173 : vector<8x128xf32>
    %175 = arith.index_cast %137 : i32 to index
    %c0_71 = arith.constant 0 : index
    %176 = vector.load %arg11[%175, %c0_71] : memref<64x128xf32, #tpu.memory_space<vmem>>, vector<8x128xf32>
    tpu.vector_store %arg11[%175, %c0_71], %174 {strides = array<i32>} : memref<64x128xf32, #tpu.memory_space<vmem>>, vector<8x128xf32>,
    %c4_i32 = arith.constant 4 : i32
    %c8_i32_72 = arith.constant 8 : i32
    %177 = arith.muli %c4_i32, %c8_i32_72 : i32
    %178 = tpu.assume_multiple %177, 8 : i32
    %179 = arith.index_cast %178 : i32 to index
    %c0_73 = arith.constant 0 : index
    %180 = vector.load %arg10[%179, %c0_73] : memref<64x512xf32, #tpu.memory_space<vmem>>, vector<8x512xf32>
    %181 = arith.truncf %174 : vector<8x128xf32> to vector<8x128xbf16>
    %c0_74 = arith.constant 0 : index
    %c0_75 = arith.constant 0 : index
    %182 = vector.load %arg3[%c0_74, %c0_75] : memref<128x512xbf16, #tpu.memory_space<vmem>>, vector<128x512xbf16>
    %cst_76 = arith.constant dense<0.000000e+00> : vector<8x512xf32>
    %183 = tpu.matmul %181, %182, %cst_76 {dimension_numbers = #tpu.dot_dimension_numbers<[1], [0], [0], [1], [0, 0, 1, 1], [], []>} : vector<8x128xbf16>, vector<128x512xbf16>, vector<8x512xf32> -> vector<8x512xf32>
    %184 = arith.addf %180, %183 : vector<8x512xf32>
    %185 = vector.extract_strided_slice %184 {offsets = [0, 0], sizes = [8, 128], strides = [1, 1]} : vector<8x512xf32> to vector<8x128xf32>
    %cst_77 = arith.constant 5.000000e-01 : f32
    %186 = vector.broadcast %cst_77 : f32 to vector<8x128xf32>
    %187 = arith.mulf %186, %185 : vector<8x128xf32>
    %188 = math.tanh %187 : vector<8x128xf32>
    %cst_78 = arith.constant 5.000000e-01 : f32
    %189 = vector.broadcast %cst_78 : f32 to vector<8x128xf32>
    %190 = arith.mulf %189, %188 : vector<8x128xf32>
    %cst_79 = arith.constant 5.000000e-01 : f32
    %191 = vector.broadcast %cst_79 : f32 to vector<8x128xf32>
    %192 = arith.addf %190, %191 : vector<8x128xf32>
    %193 = vector.extract_strided_slice %184 {offsets = [0, 128], sizes = [8, 128], strides = [1, 1]} : vector<8x512xf32> to vector<8x128xf32>
    %cst_80 = arith.constant 5.000000e-01 : f32
    %194 = vector.broadcast %cst_80 : f32 to vector<8x128xf32>
    %195 = arith.mulf %194, %193 : vector<8x128xf32>
    %196 = math.tanh %195 : vector<8x128xf32>
    %cst_81 = arith.constant 5.000000e-01 : f32
    %197 = vector.broadcast %cst_81 : f32 to vector<8x128xf32>
    %198 = arith.mulf %197, %196 : vector<8x128xf32>
    %cst_82 = arith.constant 5.000000e-01 : f32
    %199 = vector.broadcast %cst_82 : f32 to vector<8x128xf32>
    %200 = arith.addf %198, %199 : vector<8x128xf32>
    %201 = vector.extract_strided_slice %184 {offsets = [0, 256], sizes = [8, 128], strides = [1, 1]} : vector<8x512xf32> to vector<8x128xf32>
    %202 = math.tanh %201 : vector<8x128xf32>
    %203 = vector.extract_strided_slice %184 {offsets = [0, 384], sizes = [8, 128], strides = [1, 1]} : vector<8x512xf32> to vector<8x128xf32>
    %cst_83 = arith.constant 5.000000e-01 : f32
    %204 = vector.broadcast %cst_83 : f32 to vector<8x128xf32>
    %205 = arith.mulf %204, %203 : vector<8x128xf32>
    %206 = math.tanh %205 : vector<8x128xf32>
    %cst_84 = arith.constant 5.000000e-01 : f32
    %207 = vector.broadcast %cst_84 : f32 to vector<8x128xf32>
    %208 = arith.mulf %207, %206 : vector<8x128xf32>
    %cst_85 = arith.constant 5.000000e-01 : f32
    %209 = vector.broadcast %cst_85 : f32 to vector<8x128xf32>
    %210 = arith.addf %208, %209 : vector<8x128xf32>
    %211 = arith.mulf %200, %172 : vector<8x128xf32>
    %212 = arith.mulf %192, %202 : vector<8x128xf32>
    %213 = arith.addf %211, %212 : vector<8x128xf32>
    %214 = math.tanh %213 : vector<8x128xf32>
    %215 = arith.mulf %210, %214 : vector<8x128xf32>
    %216 = arith.index_cast %178 : i32 to index
    %c0_86 = arith.constant 0 : index
    %217 = vector.load %arg11[%216, %c0_86] : memref<64x128xf32, #tpu.memory_space<vmem>>, vector<8x128xf32>
    tpu.vector_store %arg11[%216, %c0_86], %215 {strides = array<i32>} : memref<64x128xf32, #tpu.memory_space<vmem>>, vector<8x128xf32>,
    %c5_i32 = arith.constant 5 : i32
    %c8_i32_87 = arith.constant 8 : i32
    %218 = arith.muli %c5_i32, %c8_i32_87 : i32
    %219 = tpu.assume_multiple %218, 8 : i32
    %220 = arith.index_cast %219 : i32 to index
    %c0_88 = arith.constant 0 : index
    %221 = vector.load %arg10[%220, %c0_88] : memref<64x512xf32, #tpu.memory_space<vmem>>, vector<8x512xf32>
    %222 = arith.truncf %215 : vector<8x128xf32> to vector<8x128xbf16>
    %c0_89 = arith.constant 0 : index
    %c0_90 = arith.constant 0 : index
    %223 = vector.load %arg3[%c0_89, %c0_90] : memref<128x512xbf16, #tpu.memory_space<vmem>>, vector<128x512xbf16>
    %cst_91 = arith.constant dense<0.000000e+00> : vector<8x512xf32>
    %224 = tpu.matmul %222, %223, %cst_91 {dimension_numbers = #tpu.dot_dimension_numbers<[1], [0], [0], [1], [0, 0, 1, 1], [], []>} : vector<8x128xbf16>, vector<128x512xbf16>, vector<8x512xf32> -> vector<8x512xf32>
    %225 = arith.addf %221, %224 : vector<8x512xf32>
    %226 = vector.extract_strided_slice %225 {offsets = [0, 0], sizes = [8, 128], strides = [1, 1]} : vector<8x512xf32> to vector<8x128xf32>
    %cst_92 = arith.constant 5.000000e-01 : f32
    %227 = vector.broadcast %cst_92 : f32 to vector<8x128xf32>
    %228 = arith.mulf %227, %226 : vector<8x128xf32>
    %229 = math.tanh %228 : vector<8x128xf32>
    %cst_93 = arith.constant 5.000000e-01 : f32
    %230 = vector.broadcast %cst_93 : f32 to vector<8x128xf32>
    %231 = arith.mulf %230, %229 : vector<8x128xf32>
    %cst_94 = arith.constant 5.000000e-01 : f32
    %232 = vector.broadcast %cst_94 : f32 to vector<8x128xf32>
    %233 = arith.addf %231, %232 : vector<8x128xf32>
    %234 = vector.extract_strided_slice %225 {offsets = [0, 128], sizes = [8, 128], strides = [1, 1]} : vector<8x512xf32> to vector<8x128xf32>
    %cst_95 = arith.constant 5.000000e-01 : f32
    %235 = vector.broadcast %cst_95 : f32 to vector<8x128xf32>
    %236 = arith.mulf %235, %234 : vector<8x128xf32>
    %237 = math.tanh %236 : vector<8x128xf32>
    %cst_96 = arith.constant 5.000000e-01 : f32
    %238 = vector.broadcast %cst_96 : f32 to vector<8x128xf32>
    %239 = arith.mulf %238, %237 : vector<8x128xf32>
    %cst_97 = arith.constant 5.000000e-01 : f32
    %240 = vector.broadcast %cst_97 : f32 to vector<8x128xf32>
    %241 = arith.addf %239, %240 : vector<8x128xf32>
    %242 = vector.extract_strided_slice %225 {offsets = [0, 256], sizes = [8, 128], strides = [1, 1]} : vector<8x512xf32> to vector<8x128xf32>
    %243 = math.tanh %242 : vector<8x128xf32>
    %244 = vector.extract_strided_slice %225 {offsets = [0, 384], sizes = [8, 128], strides = [1, 1]} : vector<8x512xf32> to vector<8x128xf32>
    %cst_98 = arith.constant 5.000000e-01 : f32
    %245 = vector.broadcast %cst_98 : f32 to vector<8x128xf32>
    %246 = arith.mulf %245, %244 : vector<8x128xf32>
    %247 = math.tanh %246 : vector<8x128xf32>
    %cst_99 = arith.constant 5.000000e-01 : f32
    %248 = vector.broadcast %cst_99 : f32 to vector<8x128xf32>
    %249 = arith.mulf %248, %247 : vector<8x128xf32>
    %cst_100 = arith.constant 5.000000e-01 : f32
    %250 = vector.broadcast %cst_100 : f32 to vector<8x128xf32>
    %251 = arith.addf %249, %250 : vector<8x128xf32>
    %252 = arith.mulf %241, %213 : vector<8x128xf32>
    %253 = arith.mulf %233, %243 : vector<8x128xf32>
    %254 = arith.addf %252, %253 : vector<8x128xf32>
    %255 = math.tanh %254 : vector<8x128xf32>
    %256 = arith.mulf %251, %255 : vector<8x128xf32>
    %257 = arith.index_cast %219 : i32 to index
    %c0_101 = arith.constant 0 : index
    %258 = vector.load %arg11[%257, %c0_101] : memref<64x128xf32, #tpu.memory_space<vmem>>, vector<8x128xf32>
    tpu.vector_store %arg11[%257, %c0_101], %256 {strides = array<i32>} : memref<64x128xf32, #tpu.memory_space<vmem>>, vector<8x128xf32>,
    %c6_i32 = arith.constant 6 : i32
    %c8_i32_102 = arith.constant 8 : i32
    %259 = arith.muli %c6_i32, %c8_i32_102 : i32
    %260 = tpu.assume_multiple %259, 8 : i32
    %261 = arith.index_cast %260 : i32 to index
    %c0_103 = arith.constant 0 : index
    %262 = vector.load %arg10[%261, %c0_103] : memref<64x512xf32, #tpu.memory_space<vmem>>, vector<8x512xf32>
    %263 = arith.truncf %256 : vector<8x128xf32> to vector<8x128xbf16>
    %c0_104 = arith.constant 0 : index
    %c0_105 = arith.constant 0 : index
    %264 = vector.load %arg3[%c0_104, %c0_105] : memref<128x512xbf16, #tpu.memory_space<vmem>>, vector<128x512xbf16>
    %cst_106 = arith.constant dense<0.000000e+00> : vector<8x512xf32>
    %265 = tpu.matmul %263, %264, %cst_106 {dimension_numbers = #tpu.dot_dimension_numbers<[1], [0], [0], [1], [0, 0, 1, 1], [], []>} : vector<8x128xbf16>, vector<128x512xbf16>, vector<8x512xf32> -> vector<8x512xf32>
    %266 = arith.addf %262, %265 : vector<8x512xf32>
    %267 = vector.extract_strided_slice %266 {offsets = [0, 0], sizes = [8, 128], strides = [1, 1]} : vector<8x512xf32> to vector<8x128xf32>
    %cst_107 = arith.constant 5.000000e-01 : f32
    %268 = vector.broadcast %cst_107 : f32 to vector<8x128xf32>
    %269 = arith.mulf %268, %267 : vector<8x128xf32>
    %270 = math.tanh %269 : vector<8x128xf32>
    %cst_108 = arith.constant 5.000000e-01 : f32
    %271 = vector.broadcast %cst_108 : f32 to vector<8x128xf32>
    %272 = arith.mulf %271, %270 : vector<8x128xf32>
    %cst_109 = arith.constant 5.000000e-01 : f32
    %273 = vector.broadcast %cst_109 : f32 to vector<8x128xf32>
    %274 = arith.addf %272, %273 : vector<8x128xf32>
    %275 = vector.extract_strided_slice %266 {offsets = [0, 128], sizes = [8, 128], strides = [1, 1]} : vector<8x512xf32> to vector<8x128xf32>
    %cst_110 = arith.constant 5.000000e-01 : f32
    %276 = vector.broadcast %cst_110 : f32 to vector<8x128xf32>
    %277 = arith.mulf %276, %275 : vector<8x128xf32>
    %278 = math.tanh %277 : vector<8x128xf32>
    %cst_111 = arith.constant 5.000000e-01 : f32
    %279 = vector.broadcast %cst_111 : f32 to vector<8x128xf32>
    %280 = arith.mulf %279, %278 : vector<8x128xf32>
    %cst_112 = arith.constant 5.000000e-01 : f32
    %281 = vector.broadcast %cst_112 : f32 to vector<8x128xf32>
    %282 = arith.addf %280, %281 : vector<8x128xf32>
    %283 = vector.extract_strided_slice %266 {offsets = [0, 256], sizes = [8, 128], strides = [1, 1]} : vector<8x512xf32> to vector<8x128xf32>
    %284 = math.tanh %283 : vector<8x128xf32>
    %285 = vector.extract_strided_slice %266 {offsets = [0, 384], sizes = [8, 128], strides = [1, 1]} : vector<8x512xf32> to vector<8x128xf32>
    %cst_113 = arith.constant 5.000000e-01 : f32
    %286 = vector.broadcast %cst_113 : f32 to vector<8x128xf32>
    %287 = arith.mulf %286, %285 : vector<8x128xf32>
    %288 = math.tanh %287 : vector<8x128xf32>
    %cst_114 = arith.constant 5.000000e-01 : f32
    %289 = vector.broadcast %cst_114 : f32 to vector<8x128xf32>
    %290 = arith.mulf %289, %288 : vector<8x128xf32>
    %cst_115 = arith.constant 5.000000e-01 : f32
    %291 = vector.broadcast %cst_115 : f32 to vector<8x128xf32>
    %292 = arith.addf %290, %291 : vector<8x128xf32>
    %293 = arith.mulf %282, %254 : vector<8x128xf32>
    %294 = arith.mulf %274, %284 : vector<8x128xf32>
    %295 = arith.addf %293, %294 : vector<8x128xf32>
    %296 = math.tanh %295 : vector<8x128xf32>
    %297 = arith.mulf %292, %296 : vector<8x128xf32>
    %298 = arith.index_cast %260 : i32 to index
    %c0_116 = arith.constant 0 : index
    %299 = vector.load %arg11[%298, %c0_116] : memref<64x128xf32, #tpu.memory_space<vmem>>, vector<8x128xf32>
    tpu.vector_store %arg11[%298, %c0_116], %297 {strides = array<i32>} : memref<64x128xf32, #tpu.memory_space<vmem>>, vector<8x128xf32>,
    %c7_i32 = arith.constant 7 : i32
    %c8_i32_117 = arith.constant 8 : i32
    %300 = arith.muli %c7_i32, %c8_i32_117 : i32
    %301 = tpu.assume_multiple %300, 8 : i32
    %302 = arith.index_cast %301 : i32 to index
    %c0_118 = arith.constant 0 : index
    %303 = vector.load %arg10[%302, %c0_118] : memref<64x512xf32, #tpu.memory_space<vmem>>, vector<8x512xf32>
    %304 = arith.truncf %297 : vector<8x128xf32> to vector<8x128xbf16>
    %c0_119 = arith.constant 0 : index
    %c0_120 = arith.constant 0 : index
    %305 = vector.load %arg3[%c0_119, %c0_120] : memref<128x512xbf16, #tpu.memory_space<vmem>>, vector<128x512xbf16>
    %cst_121 = arith.constant dense<0.000000e+00> : vector<8x512xf32>
    %306 = tpu.matmul %304, %305, %cst_121 {dimension_numbers = #tpu.dot_dimension_numbers<[1], [0], [0], [1], [0, 0, 1, 1], [], []>} : vector<8x128xbf16>, vector<128x512xbf16>, vector<8x512xf32> -> vector<8x512xf32>
    %307 = arith.addf %303, %306 : vector<8x512xf32>
    %308 = vector.extract_strided_slice %307 {offsets = [0, 0], sizes = [8, 128], strides = [1, 1]} : vector<8x512xf32> to vector<8x128xf32>
    %cst_122 = arith.constant 5.000000e-01 : f32
    %309 = vector.broadcast %cst_122 : f32 to vector<8x128xf32>
    %310 = arith.mulf %309, %308 : vector<8x128xf32>
    %311 = math.tanh %310 : vector<8x128xf32>
    %cst_123 = arith.constant 5.000000e-01 : f32
    %312 = vector.broadcast %cst_123 : f32 to vector<8x128xf32>
    %313 = arith.mulf %312, %311 : vector<8x128xf32>
    %cst_124 = arith.constant 5.000000e-01 : f32
    %314 = vector.broadcast %cst_124 : f32 to vector<8x128xf32>
    %315 = arith.addf %313, %314 : vector<8x128xf32>
    %316 = vector.extract_strided_slice %307 {offsets = [0, 128], sizes = [8, 128], strides = [1, 1]} : vector<8x512xf32> to vector<8x128xf32>
    %cst_125 = arith.constant 5.000000e-01 : f32
    %317 = vector.broadcast %cst_125 : f32 to vector<8x128xf32>
    %318 = arith.mulf %317, %316 : vector<8x128xf32>
    %319 = math.tanh %318 : vector<8x128xf32>
    %cst_126 = arith.constant 5.000000e-01 : f32
    %320 = vector.broadcast %cst_126 : f32 to vector<8x128xf32>
    %321 = arith.mulf %320, %319 : vector<8x128xf32>
    %cst_127 = arith.constant 5.000000e-01 : f32
    %322 = vector.broadcast %cst_127 : f32 to vector<8x128xf32>
    %323 = arith.addf %321, %322 : vector<8x128xf32>
    %324 = vector.extract_strided_slice %307 {offsets = [0, 256], sizes = [8, 128], strides = [1, 1]} : vector<8x512xf32> to vector<8x128xf32>
    %325 = math.tanh %324 : vector<8x128xf32>
    %326 = vector.extract_strided_slice %307 {offsets = [0, 384], sizes = [8, 128], strides = [1, 1]} : vector<8x512xf32> to vector<8x128xf32>
    %cst_128 = arith.constant 5.000000e-01 : f32
    %327 = vector.broadcast %cst_128 : f32 to vector<8x128xf32>
    %328 = arith.mulf %327, %326 : vector<8x128xf32>
    %329 = math.tanh %328 : vector<8x128xf32>
    %cst_129 = arith.constant 5.000000e-01 : f32
    %330 = vector.broadcast %cst_129 : f32 to vector<8x128xf32>
    %331 = arith.mulf %330, %329 : vector<8x128xf32>
    %cst_130 = arith.constant 5.000000e-01 : f32
    %332 = vector.broadcast %cst_130 : f32 to vector<8x128xf32>
    %333 = arith.addf %331, %332 : vector<8x128xf32>
    %334 = arith.mulf %323, %295 : vector<8x128xf32>
    %335 = arith.mulf %315, %325 : vector<8x128xf32>
    %336 = arith.addf %334, %335 : vector<8x128xf32>
    %337 = math.tanh %336 : vector<8x128xf32>
    %338 = arith.mulf %333, %337 : vector<8x128xf32>
    %339 = arith.index_cast %301 : i32 to index
    %c0_131 = arith.constant 0 : index
    %340 = vector.load %arg11[%339, %c0_131] : memref<64x128xf32, #tpu.memory_space<vmem>>, vector<8x128xf32>
    tpu.vector_store %arg11[%339, %c0_131], %338 {strides = array<i32>} : memref<64x128xf32, #tpu.memory_space<vmem>>, vector<8x128xf32>,
    %c8_i32_132 = arith.constant 8 : i32
    %c0_133 = arith.constant 0 : index
    %c0_134 = arith.constant 0 : index
    %341 = vector.load %arg11[%c0_133, %c0_134] : memref<64x128xf32, #tpu.memory_space<vmem>>, vector<64x128xf32>
    %342 = arith.truncf %341 : vector<64x128xf32> to vector<64x128xbf16>
    %c0_135 = arith.constant 0 : index
    %c0_136 = arith.constant 0 : index
    %343 = vector.load %arg5[%c0_135, %c0_136] : memref<64x128xbf16, #tpu.memory_space<vmem>>, vector<64x128xbf16>
    tpu.vector_store %arg5[%c0_135, %c0_136], %342 {strides = array<i32>} : memref<64x128xbf16, #tpu.memory_space<vmem>>, vector<64x128xbf16>,
    %c0_137 = arith.constant 0 : index
    %c0_138 = arith.constant 0 : index
    %344 = vector.load %arg8[%c0_137, %c0_138] : memref<8x128xf32, #tpu.memory_space<vmem>>, vector<8x128xf32>
    tpu.vector_store %arg8[%c0_137, %c0_138], %338 {strides = array<i32>} : memref<8x128xf32, #tpu.memory_space<vmem>>, vector<8x128xf32>,
    %c0_139 = arith.constant 0 : index
    %c0_140 = arith.constant 0 : index
    %345 = vector.load %arg9[%c0_139, %c0_140] : memref<8x128xf32, #tpu.memory_space<vmem>>, vector<8x128xf32>
    tpu.vector_store %arg9[%c0_139, %c0_140], %336 {strides = array<i32>} : memref<8x128xf32, #tpu.memory_space<vmem>>, vector<8x128xf32>,
    %c0_i32_141 = arith.constant 0 : i32
    %346 = arith.cmpi eq, %arg0, %c0_i32_141 : i32
    %347 = arith.extui %346 : i1 to i32
    %c0_i32_142 = arith.constant 0 : i32
    %348 = arith.cmpi ne, %347, %c0_i32_142 : i32
    scf.if %348 {
      %c0_143 = arith.constant 0 : index
      %c0_144 = arith.constant 0 : index
      %349 = vector.load %arg6[%c0_143, %c0_144] : memref<8x128xf32, #tpu.memory_space<vmem>>, vector<8x128xf32>
      tpu.vector_store %arg6[%c0_143, %c0_144], %338 {strides = array<i32>} : memref<8x128xf32, #tpu.memory_space<vmem>>, vector<8x128xf32>,
      %c0_145 = arith.constant 0 : index
      %c0_146 = arith.constant 0 : index
      %350 = vector.load %arg7[%c0_145, %c0_146] : memref<8x128xf32, #tpu.memory_space<vmem>>, vector<8x128xf32>
      tpu.vector_store %arg7[%c0_145, %c0_146], %336 {strides = array<i32>} : memref<8x128xf32, #tpu.memory_space<vmem>>, vector<8x128xf32>,
    } else {
    }
    return
  }
  func.func @transform_0(%arg0: i32) -> (i32, i32) {
    %c0_i32 = arith.constant 0 : i32
    %c0_i32_0 = arith.constant 0 : i32
    return %arg0, %c0_i32 : i32, i32
  }
  func.func @transform_1(%arg0: i32) -> (i32, i32) {
    %c0_i32 = arith.constant 0 : i32
    %c0_i32_0 = arith.constant 0 : i32
    %c0_i32_1 = arith.constant 0 : i32
    return %c0_i32, %c0_i32_0 : i32, i32
  }
  func.func @transform_2(%arg0: i32) -> (i32, i32) {
    %c0_i32 = arith.constant 0 : i32
    %c0_i32_0 = arith.constant 0 : i32
    %c0_i32_1 = arith.constant 0 : i32
    return %c0_i32, %c0_i32_0 : i32, i32
  }
  func.func @transform_3(%arg0: i32) -> (i32, i32) {
    %c0_i32 = arith.constant 0 : i32
    %c0_i32_0 = arith.constant 0 : i32
    %c0_i32_1 = arith.constant 0 : i32
    return %c0_i32, %c0_i32_0 : i32, i32
  }
  func.func @transform_4(%arg0: i32) -> (i32, i32) {
    %c0_i32 = arith.constant 0 : i32
    %c0_i32_0 = arith.constant 0 : i32
    return %arg0, %c0_i32 : i32, i32
  }
  func.func @transform_5(%arg0: i32) -> (i32, i32) {
    %c0_i32 = arith.constant 0 : i32
    %c0_i32_0 = arith.constant 0 : i32
    %c0_i32_1 = arith.constant 0 : i32
    return %c0_i32, %c0_i32_0 : i32, i32
  }
  func.func @transform_6(%arg0: i32) -> (i32, i32) {
    %c0_i32 = arith.constant 0 : i32
    %c0_i32_0 = arith.constant 0 : i32
    %c0_i32_1 = arith.constant 0 : i32
    return %c0_i32, %c0_i32_0 : i32, i32
  }
}

module attributes {stable_mosaic.version = 11 : i64} {
  func.func @_lstm_fused_kernel(%arg0: i32, %arg1: memref<64x128xbf16, #tpu.memory_space<vmem>>, %arg2: memref<128x512xbf16, #tpu.memory_space<vmem>>, %arg3: memref<128x512xbf16, #tpu.memory_space<vmem>>, %arg4: memref<1x512xf32, #tpu.memory_space<vmem>>, %arg5: memref<64x128xf32, #tpu.memory_space<vmem>>, %arg6: memref<8x128xf32, #tpu.memory_space<vmem>>, %arg7: memref<8x128xf32, #tpu.memory_space<vmem>>, %arg8: memref<8x128xf32, #tpu.memory_space<vmem>>, %arg9: memref<8x128xf32, #tpu.memory_space<vmem>>, %arg10: memref<64x512xf32, #tpu.memory_space<vmem>>, %arg11: memref<64x128xf32, #tpu.memory_space<vmem>>) attributes {dimension_semantics = [#tpu.dimension_semantics<arbitrary>], iteration_bounds = array<i64: 1>, scalar_prefetch = 0 : i64, scratch_operands = 4 : i64, tpu.core_type = #tpu.core_type<tc>, window_params = [{transform_indices = @transform_0, window_bounds = array<i64: 64, 128>}, {pipeline_mode = #tpu.pipeline_mode<synchronous>, transform_indices = @transform_1, window_bounds = array<i64: 128, 512>}, {pipeline_mode = #tpu.pipeline_mode<synchronous>, transform_indices = @transform_2, window_bounds = array<i64: 128, 512>}, {pipeline_mode = #tpu.pipeline_mode<synchronous>, transform_indices = @transform_3, window_bounds = array<i64: 1, 512>}, {transform_indices = @transform_4, window_bounds = array<i64: 64, 128>}, {pipeline_mode = #tpu.pipeline_mode<synchronous>, transform_indices = @transform_5, window_bounds = array<i64: 8, 128>}, {pipeline_mode = #tpu.pipeline_mode<synchronous>, transform_indices = @transform_6, window_bounds = array<i64: 8, 128>}]} {
    %c0_i32 = arith.constant 0 : i32
    %0 = arith.cmpi eq, %arg0, %c0_i32 : i32
    %1 = arith.extui %0 : i1 to i32
    %c0_i32_0 = arith.constant 0 : i32
    %2 = arith.cmpi ne, %1, %c0_i32_0 : i32
    scf.if %2 {
      %cst_143 = arith.constant 0.000000e+00 : f32
      %347 = vector.broadcast %cst_143 : f32 to vector<8x128xf32>
      %c0_144 = arith.constant 0 : index
      %c0_145 = arith.constant 0 : index
      %348 = vector.load %arg8[%c0_144, %c0_145] : memref<8x128xf32, #tpu.memory_space<vmem>>, vector<8x128xf32>
      tpu.vector_store %arg8[%c0_144, %c0_145], %347 {strides = array<i32>} : memref<8x128xf32, #tpu.memory_space<vmem>>, vector<8x128xf32>,
      %cst_146 = arith.constant 0.000000e+00 : f32
      %349 = vector.broadcast %cst_146 : f32 to vector<8x128xf32>
      %c0_147 = arith.constant 0 : index
      %c0_148 = arith.constant 0 : index
      %350 = vector.load %arg9[%c0_147, %c0_148] : memref<8x128xf32, #tpu.memory_space<vmem>>, vector<8x128xf32>
      tpu.vector_store %arg9[%c0_147, %c0_148], %349 {strides = array<i32>} : memref<8x128xf32, #tpu.memory_space<vmem>>, vector<8x128xf32>,
    } else {
    }
    %c0 = arith.constant 0 : index
    %c0_1 = arith.constant 0 : index
    %3 = vector.load %arg1[%c0, %c0_1] : memref<64x128xbf16, #tpu.memory_space<vmem>>, vector<64x128xbf16>
    %c0_2 = arith.constant 0 : index
    %c0_3 = arith.constant 0 : index
    %4 = vector.load %arg2[%c0_2, %c0_3] : memref<128x512xbf16, #tpu.memory_space<vmem>>, vector<128x512xbf16>
    %cst = arith.constant dense<0.000000e+00> : vector<64x512xf32>
    %5 = tpu.matmul %3, %4, %cst {dimension_numbers = #tpu.dot_dimension_numbers<[1], [0], [0], [1], [0, 0, 1, 1], [], []>} : vector<64x128xbf16>, vector<128x512xbf16>, vector<64x512xf32> -> vector<64x512xf32>
    %c0_4 = arith.constant 0 : index
    %c0_5 = arith.constant 0 : index
    %6 = vector.load %arg4[%c0_4, %c0_5] : memref<1x512xf32, #tpu.memory_space<vmem>>, vector<1x512xf32>
    %7 = vector.broadcast %6 : vector<1x512xf32> to vector<64x512xf32>
    %8 = arith.addf %5, %7 : vector<64x512xf32>
    %c0_6 = arith.constant 0 : index
    %c0_7 = arith.constant 0 : index
    %9 = vector.load %arg10[%c0_6, %c0_7] : memref<64x512xf32, #tpu.memory_space<vmem>>, vector<64x512xf32>
    tpu.vector_store %arg10[%c0_6, %c0_7], %8 {strides = array<i32>} : memref<64x512xf32, #tpu.memory_space<vmem>>, vector<64x512xf32>,
    %c0_8 = arith.constant 0 : index
    %c0_9 = arith.constant 0 : index
    %10 = vector.load %arg8[%c0_8, %c0_9] : memref<8x128xf32, #tpu.memory_space<vmem>>, vector<8x128xf32>
    %c0_10 = arith.constant 0 : index
    %c0_11 = arith.constant 0 : index
    %11 = vector.load %arg9[%c0_10, %c0_11] : memref<8x128xf32, #tpu.memory_space<vmem>>, vector<8x128xf32>
    %c0_i32_12 = arith.constant 0 : i32
    %c8_i32 = arith.constant 8 : i32
    %12 = arith.muli %c0_i32_12, %c8_i32 : i32
    %13 = tpu.assume_multiple %12, 8 : i32
    %14 = arith.index_cast %13 : i32 to index
    %c0_13 = arith.constant 0 : index
    %15 = vector.load %arg10[%14, %c0_13] : memref<64x512xf32, #tpu.memory_space<vmem>>, vector<8x512xf32>
    %16 = arith.truncf %10 : vector<8x128xf32> to vector<8x128xbf16>
    %c0_14 = arith.constant 0 : index
    %c0_15 = arith.constant 0 : index
    %17 = vector.load %arg3[%c0_14, %c0_15] : memref<128x512xbf16, #tpu.memory_space<vmem>>, vector<128x512xbf16>
    %cst_16 = arith.constant dense<0.000000e+00> : vector<8x512xf32>
    %18 = tpu.matmul %16, %17, %cst_16 {dimension_numbers = #tpu.dot_dimension_numbers<[1], [0], [0], [1], [0, 0, 1, 1], [], []>} : vector<8x128xbf16>, vector<128x512xbf16>, vector<8x512xf32> -> vector<8x512xf32>
    %19 = arith.addf %15, %18 : vector<8x512xf32>
    %20 = vector.extract_strided_slice %19 {offsets = [0, 0], sizes = [8, 128], strides = [1, 1]} : vector<8x512xf32> to vector<8x128xf32>
    %cst_17 = arith.constant 5.000000e-01 : f32
    %21 = vector.broadcast %cst_17 : f32 to vector<8x128xf32>
    %22 = arith.mulf %21, %20 : vector<8x128xf32>
    %23 = math.tanh %22 : vector<8x128xf32>
    %cst_18 = arith.constant 5.000000e-01 : f32
    %24 = vector.broadcast %cst_18 : f32 to vector<8x128xf32>
    %25 = arith.mulf %24, %23 : vector<8x128xf32>
    %cst_19 = arith.constant 5.000000e-01 : f32
    %26 = vector.broadcast %cst_19 : f32 to vector<8x128xf32>
    %27 = arith.addf %25, %26 : vector<8x128xf32>
    %28 = vector.extract_strided_slice %19 {offsets = [0, 128], sizes = [8, 128], strides = [1, 1]} : vector<8x512xf32> to vector<8x128xf32>
    %cst_20 = arith.constant 5.000000e-01 : f32
    %29 = vector.broadcast %cst_20 : f32 to vector<8x128xf32>
    %30 = arith.mulf %29, %28 : vector<8x128xf32>
    %31 = math.tanh %30 : vector<8x128xf32>
    %cst_21 = arith.constant 5.000000e-01 : f32
    %32 = vector.broadcast %cst_21 : f32 to vector<8x128xf32>
    %33 = arith.mulf %32, %31 : vector<8x128xf32>
    %cst_22 = arith.constant 5.000000e-01 : f32
    %34 = vector.broadcast %cst_22 : f32 to vector<8x128xf32>
    %35 = arith.addf %33, %34 : vector<8x128xf32>
    %36 = vector.extract_strided_slice %19 {offsets = [0, 256], sizes = [8, 128], strides = [1, 1]} : vector<8x512xf32> to vector<8x128xf32>
    %37 = math.tanh %36 : vector<8x128xf32>
    %38 = vector.extract_strided_slice %19 {offsets = [0, 384], sizes = [8, 128], strides = [1, 1]} : vector<8x512xf32> to vector<8x128xf32>
    %cst_23 = arith.constant 5.000000e-01 : f32
    %39 = vector.broadcast %cst_23 : f32 to vector<8x128xf32>
    %40 = arith.mulf %39, %38 : vector<8x128xf32>
    %41 = math.tanh %40 : vector<8x128xf32>
    %cst_24 = arith.constant 5.000000e-01 : f32
    %42 = vector.broadcast %cst_24 : f32 to vector<8x128xf32>
    %43 = arith.mulf %42, %41 : vector<8x128xf32>
    %cst_25 = arith.constant 5.000000e-01 : f32
    %44 = vector.broadcast %cst_25 : f32 to vector<8x128xf32>
    %45 = arith.addf %43, %44 : vector<8x128xf32>
    %46 = arith.mulf %35, %11 : vector<8x128xf32>
    %47 = arith.mulf %27, %37 : vector<8x128xf32>
    %48 = arith.addf %46, %47 : vector<8x128xf32>
    %49 = math.tanh %48 : vector<8x128xf32>
    %50 = arith.mulf %45, %49 : vector<8x128xf32>
    %51 = arith.index_cast %13 : i32 to index
    %c0_26 = arith.constant 0 : index
    %52 = vector.load %arg11[%51, %c0_26] : memref<64x128xf32, #tpu.memory_space<vmem>>, vector<8x128xf32>
    tpu.vector_store %arg11[%51, %c0_26], %50 {strides = array<i32>} : memref<64x128xf32, #tpu.memory_space<vmem>>, vector<8x128xf32>,
    %c1_i32 = arith.constant 1 : i32
    %c8_i32_27 = arith.constant 8 : i32
    %53 = arith.muli %c1_i32, %c8_i32_27 : i32
    %54 = tpu.assume_multiple %53, 8 : i32
    %55 = arith.index_cast %54 : i32 to index
    %c0_28 = arith.constant 0 : index
    %56 = vector.load %arg10[%55, %c0_28] : memref<64x512xf32, #tpu.memory_space<vmem>>, vector<8x512xf32>
    %57 = arith.truncf %50 : vector<8x128xf32> to vector<8x128xbf16>
    %c0_29 = arith.constant 0 : index
    %c0_30 = arith.constant 0 : index
    %58 = vector.load %arg3[%c0_29, %c0_30] : memref<128x512xbf16, #tpu.memory_space<vmem>>, vector<128x512xbf16>
    %cst_31 = arith.constant dense<0.000000e+00> : vector<8x512xf32>
    %59 = tpu.matmul %57, %58, %cst_31 {dimension_numbers = #tpu.dot_dimension_numbers<[1], [0], [0], [1], [0, 0, 1, 1], [], []>} : vector<8x128xbf16>, vector<128x512xbf16>, vector<8x512xf32> -> vector<8x512xf32>
    %60 = arith.addf %56, %59 : vector<8x512xf32>
    %61 = vector.extract_strided_slice %60 {offsets = [0, 0], sizes = [8, 128], strides = [1, 1]} : vector<8x512xf32> to vector<8x128xf32>
    %cst_32 = arith.constant 5.000000e-01 : f32
    %62 = vector.broadcast %cst_32 : f32 to vector<8x128xf32>
    %63 = arith.mulf %62, %61 : vector<8x128xf32>
    %64 = math.tanh %63 : vector<8x128xf32>
    %cst_33 = arith.constant 5.000000e-01 : f32
    %65 = vector.broadcast %cst_33 : f32 to vector<8x128xf32>
    %66 = arith.mulf %65, %64 : vector<8x128xf32>
    %cst_34 = arith.constant 5.000000e-01 : f32
    %67 = vector.broadcast %cst_34 : f32 to vector<8x128xf32>
    %68 = arith.addf %66, %67 : vector<8x128xf32>
    %69 = vector.extract_strided_slice %60 {offsets = [0, 128], sizes = [8, 128], strides = [1, 1]} : vector<8x512xf32> to vector<8x128xf32>
    %cst_35 = arith.constant 5.000000e-01 : f32
    %70 = vector.broadcast %cst_35 : f32 to vector<8x128xf32>
    %71 = arith.mulf %70, %69 : vector<8x128xf32>
    %72 = math.tanh %71 : vector<8x128xf32>
    %cst_36 = arith.constant 5.000000e-01 : f32
    %73 = vector.broadcast %cst_36 : f32 to vector<8x128xf32>
    %74 = arith.mulf %73, %72 : vector<8x128xf32>
    %cst_37 = arith.constant 5.000000e-01 : f32
    %75 = vector.broadcast %cst_37 : f32 to vector<8x128xf32>
    %76 = arith.addf %74, %75 : vector<8x128xf32>
    %77 = vector.extract_strided_slice %60 {offsets = [0, 256], sizes = [8, 128], strides = [1, 1]} : vector<8x512xf32> to vector<8x128xf32>
    %78 = math.tanh %77 : vector<8x128xf32>
    %79 = vector.extract_strided_slice %60 {offsets = [0, 384], sizes = [8, 128], strides = [1, 1]} : vector<8x512xf32> to vector<8x128xf32>
    %cst_38 = arith.constant 5.000000e-01 : f32
    %80 = vector.broadcast %cst_38 : f32 to vector<8x128xf32>
    %81 = arith.mulf %80, %79 : vector<8x128xf32>
    %82 = math.tanh %81 : vector<8x128xf32>
    %cst_39 = arith.constant 5.000000e-01 : f32
    %83 = vector.broadcast %cst_39 : f32 to vector<8x128xf32>
    %84 = arith.mulf %83, %82 : vector<8x128xf32>
    %cst_40 = arith.constant 5.000000e-01 : f32
    %85 = vector.broadcast %cst_40 : f32 to vector<8x128xf32>
    %86 = arith.addf %84, %85 : vector<8x128xf32>
    %87 = arith.mulf %76, %48 : vector<8x128xf32>
    %88 = arith.mulf %68, %78 : vector<8x128xf32>
    %89 = arith.addf %87, %88 : vector<8x128xf32>
    %90 = math.tanh %89 : vector<8x128xf32>
    %91 = arith.mulf %86, %90 : vector<8x128xf32>
    %92 = arith.index_cast %54 : i32 to index
    %c0_41 = arith.constant 0 : index
    %93 = vector.load %arg11[%92, %c0_41] : memref<64x128xf32, #tpu.memory_space<vmem>>, vector<8x128xf32>
    tpu.vector_store %arg11[%92, %c0_41], %91 {strides = array<i32>} : memref<64x128xf32, #tpu.memory_space<vmem>>, vector<8x128xf32>,
    %c2_i32 = arith.constant 2 : i32
    %c8_i32_42 = arith.constant 8 : i32
    %94 = arith.muli %c2_i32, %c8_i32_42 : i32
    %95 = tpu.assume_multiple %94, 8 : i32
    %96 = arith.index_cast %95 : i32 to index
    %c0_43 = arith.constant 0 : index
    %97 = vector.load %arg10[%96, %c0_43] : memref<64x512xf32, #tpu.memory_space<vmem>>, vector<8x512xf32>
    %98 = arith.truncf %91 : vector<8x128xf32> to vector<8x128xbf16>
    %c0_44 = arith.constant 0 : index
    %c0_45 = arith.constant 0 : index
    %99 = vector.load %arg3[%c0_44, %c0_45] : memref<128x512xbf16, #tpu.memory_space<vmem>>, vector<128x512xbf16>
    %cst_46 = arith.constant dense<0.000000e+00> : vector<8x512xf32>
    %100 = tpu.matmul %98, %99, %cst_46 {dimension_numbers = #tpu.dot_dimension_numbers<[1], [0], [0], [1], [0, 0, 1, 1], [], []>} : vector<8x128xbf16>, vector<128x512xbf16>, vector<8x512xf32> -> vector<8x512xf32>
    %101 = arith.addf %97, %100 : vector<8x512xf32>
    %102 = vector.extract_strided_slice %101 {offsets = [0, 0], sizes = [8, 128], strides = [1, 1]} : vector<8x512xf32> to vector<8x128xf32>
    %cst_47 = arith.constant 5.000000e-01 : f32
    %103 = vector.broadcast %cst_47 : f32 to vector<8x128xf32>
    %104 = arith.mulf %103, %102 : vector<8x128xf32>
    %105 = math.tanh %104 : vector<8x128xf32>
    %cst_48 = arith.constant 5.000000e-01 : f32
    %106 = vector.broadcast %cst_48 : f32 to vector<8x128xf32>
    %107 = arith.mulf %106, %105 : vector<8x128xf32>
    %cst_49 = arith.constant 5.000000e-01 : f32
    %108 = vector.broadcast %cst_49 : f32 to vector<8x128xf32>
    %109 = arith.addf %107, %108 : vector<8x128xf32>
    %110 = vector.extract_strided_slice %101 {offsets = [0, 128], sizes = [8, 128], strides = [1, 1]} : vector<8x512xf32> to vector<8x128xf32>
    %cst_50 = arith.constant 5.000000e-01 : f32
    %111 = vector.broadcast %cst_50 : f32 to vector<8x128xf32>
    %112 = arith.mulf %111, %110 : vector<8x128xf32>
    %113 = math.tanh %112 : vector<8x128xf32>
    %cst_51 = arith.constant 5.000000e-01 : f32
    %114 = vector.broadcast %cst_51 : f32 to vector<8x128xf32>
    %115 = arith.mulf %114, %113 : vector<8x128xf32>
    %cst_52 = arith.constant 5.000000e-01 : f32
    %116 = vector.broadcast %cst_52 : f32 to vector<8x128xf32>
    %117 = arith.addf %115, %116 : vector<8x128xf32>
    %118 = vector.extract_strided_slice %101 {offsets = [0, 256], sizes = [8, 128], strides = [1, 1]} : vector<8x512xf32> to vector<8x128xf32>
    %119 = math.tanh %118 : vector<8x128xf32>
    %120 = vector.extract_strided_slice %101 {offsets = [0, 384], sizes = [8, 128], strides = [1, 1]} : vector<8x512xf32> to vector<8x128xf32>
    %cst_53 = arith.constant 5.000000e-01 : f32
    %121 = vector.broadcast %cst_53 : f32 to vector<8x128xf32>
    %122 = arith.mulf %121, %120 : vector<8x128xf32>
    %123 = math.tanh %122 : vector<8x128xf32>
    %cst_54 = arith.constant 5.000000e-01 : f32
    %124 = vector.broadcast %cst_54 : f32 to vector<8x128xf32>
    %125 = arith.mulf %124, %123 : vector<8x128xf32>
    %cst_55 = arith.constant 5.000000e-01 : f32
    %126 = vector.broadcast %cst_55 : f32 to vector<8x128xf32>
    %127 = arith.addf %125, %126 : vector<8x128xf32>
    %128 = arith.mulf %117, %89 : vector<8x128xf32>
    %129 = arith.mulf %109, %119 : vector<8x128xf32>
    %130 = arith.addf %128, %129 : vector<8x128xf32>
    %131 = math.tanh %130 : vector<8x128xf32>
    %132 = arith.mulf %127, %131 : vector<8x128xf32>
    %133 = arith.index_cast %95 : i32 to index
    %c0_56 = arith.constant 0 : index
    %134 = vector.load %arg11[%133, %c0_56] : memref<64x128xf32, #tpu.memory_space<vmem>>, vector<8x128xf32>
    tpu.vector_store %arg11[%133, %c0_56], %132 {strides = array<i32>} : memref<64x128xf32, #tpu.memory_space<vmem>>, vector<8x128xf32>,
    %c3_i32 = arith.constant 3 : i32
    %c8_i32_57 = arith.constant 8 : i32
    %135 = arith.muli %c3_i32, %c8_i32_57 : i32
    %136 = tpu.assume_multiple %135, 8 : i32
    %137 = arith.index_cast %136 : i32 to index
    %c0_58 = arith.constant 0 : index
    %138 = vector.load %arg10[%137, %c0_58] : memref<64x512xf32, #tpu.memory_space<vmem>>, vector<8x512xf32>
    %139 = arith.truncf %132 : vector<8x128xf32> to vector<8x128xbf16>
    %c0_59 = arith.constant 0 : index
    %c0_60 = arith.constant 0 : index
    %140 = vector.load %arg3[%c0_59, %c0_60] : memref<128x512xbf16, #tpu.memory_space<vmem>>, vector<128x512xbf16>
    %cst_61 = arith.constant dense<0.000000e+00> : vector<8x512xf32>
    %141 = tpu.matmul %139, %140, %cst_61 {dimension_numbers = #tpu.dot_dimension_numbers<[1], [0], [0], [1], [0, 0, 1, 1], [], []>} : vector<8x128xbf16>, vector<128x512xbf16>, vector<8x512xf32> -> vector<8x512xf32>
    %142 = arith.addf %138, %141 : vector<8x512xf32>
    %143 = vector.extract_strided_slice %142 {offsets = [0, 0], sizes = [8, 128], strides = [1, 1]} : vector<8x512xf32> to vector<8x128xf32>
    %cst_62 = arith.constant 5.000000e-01 : f32
    %144 = vector.broadcast %cst_62 : f32 to vector<8x128xf32>
    %145 = arith.mulf %144, %143 : vector<8x128xf32>
    %146 = math.tanh %145 : vector<8x128xf32>
    %cst_63 = arith.constant 5.000000e-01 : f32
    %147 = vector.broadcast %cst_63 : f32 to vector<8x128xf32>
    %148 = arith.mulf %147, %146 : vector<8x128xf32>
    %cst_64 = arith.constant 5.000000e-01 : f32
    %149 = vector.broadcast %cst_64 : f32 to vector<8x128xf32>
    %150 = arith.addf %148, %149 : vector<8x128xf32>
    %151 = vector.extract_strided_slice %142 {offsets = [0, 128], sizes = [8, 128], strides = [1, 1]} : vector<8x512xf32> to vector<8x128xf32>
    %cst_65 = arith.constant 5.000000e-01 : f32
    %152 = vector.broadcast %cst_65 : f32 to vector<8x128xf32>
    %153 = arith.mulf %152, %151 : vector<8x128xf32>
    %154 = math.tanh %153 : vector<8x128xf32>
    %cst_66 = arith.constant 5.000000e-01 : f32
    %155 = vector.broadcast %cst_66 : f32 to vector<8x128xf32>
    %156 = arith.mulf %155, %154 : vector<8x128xf32>
    %cst_67 = arith.constant 5.000000e-01 : f32
    %157 = vector.broadcast %cst_67 : f32 to vector<8x128xf32>
    %158 = arith.addf %156, %157 : vector<8x128xf32>
    %159 = vector.extract_strided_slice %142 {offsets = [0, 256], sizes = [8, 128], strides = [1, 1]} : vector<8x512xf32> to vector<8x128xf32>
    %160 = math.tanh %159 : vector<8x128xf32>
    %161 = vector.extract_strided_slice %142 {offsets = [0, 384], sizes = [8, 128], strides = [1, 1]} : vector<8x512xf32> to vector<8x128xf32>
    %cst_68 = arith.constant 5.000000e-01 : f32
    %162 = vector.broadcast %cst_68 : f32 to vector<8x128xf32>
    %163 = arith.mulf %162, %161 : vector<8x128xf32>
    %164 = math.tanh %163 : vector<8x128xf32>
    %cst_69 = arith.constant 5.000000e-01 : f32
    %165 = vector.broadcast %cst_69 : f32 to vector<8x128xf32>
    %166 = arith.mulf %165, %164 : vector<8x128xf32>
    %cst_70 = arith.constant 5.000000e-01 : f32
    %167 = vector.broadcast %cst_70 : f32 to vector<8x128xf32>
    %168 = arith.addf %166, %167 : vector<8x128xf32>
    %169 = arith.mulf %158, %130 : vector<8x128xf32>
    %170 = arith.mulf %150, %160 : vector<8x128xf32>
    %171 = arith.addf %169, %170 : vector<8x128xf32>
    %172 = math.tanh %171 : vector<8x128xf32>
    %173 = arith.mulf %168, %172 : vector<8x128xf32>
    %174 = arith.index_cast %136 : i32 to index
    %c0_71 = arith.constant 0 : index
    %175 = vector.load %arg11[%174, %c0_71] : memref<64x128xf32, #tpu.memory_space<vmem>>, vector<8x128xf32>
    tpu.vector_store %arg11[%174, %c0_71], %173 {strides = array<i32>} : memref<64x128xf32, #tpu.memory_space<vmem>>, vector<8x128xf32>,
    %c4_i32 = arith.constant 4 : i32
    %c8_i32_72 = arith.constant 8 : i32
    %176 = arith.muli %c4_i32, %c8_i32_72 : i32
    %177 = tpu.assume_multiple %176, 8 : i32
    %178 = arith.index_cast %177 : i32 to index
    %c0_73 = arith.constant 0 : index
    %179 = vector.load %arg10[%178, %c0_73] : memref<64x512xf32, #tpu.memory_space<vmem>>, vector<8x512xf32>
    %180 = arith.truncf %173 : vector<8x128xf32> to vector<8x128xbf16>
    %c0_74 = arith.constant 0 : index
    %c0_75 = arith.constant 0 : index
    %181 = vector.load %arg3[%c0_74, %c0_75] : memref<128x512xbf16, #tpu.memory_space<vmem>>, vector<128x512xbf16>
    %cst_76 = arith.constant dense<0.000000e+00> : vector<8x512xf32>
    %182 = tpu.matmul %180, %181, %cst_76 {dimension_numbers = #tpu.dot_dimension_numbers<[1], [0], [0], [1], [0, 0, 1, 1], [], []>} : vector<8x128xbf16>, vector<128x512xbf16>, vector<8x512xf32> -> vector<8x512xf32>
    %183 = arith.addf %179, %182 : vector<8x512xf32>
    %184 = vector.extract_strided_slice %183 {offsets = [0, 0], sizes = [8, 128], strides = [1, 1]} : vector<8x512xf32> to vector<8x128xf32>
    %cst_77 = arith.constant 5.000000e-01 : f32
    %185 = vector.broadcast %cst_77 : f32 to vector<8x128xf32>
    %186 = arith.mulf %185, %184 : vector<8x128xf32>
    %187 = math.tanh %186 : vector<8x128xf32>
    %cst_78 = arith.constant 5.000000e-01 : f32
    %188 = vector.broadcast %cst_78 : f32 to vector<8x128xf32>
    %189 = arith.mulf %188, %187 : vector<8x128xf32>
    %cst_79 = arith.constant 5.000000e-01 : f32
    %190 = vector.broadcast %cst_79 : f32 to vector<8x128xf32>
    %191 = arith.addf %189, %190 : vector<8x128xf32>
    %192 = vector.extract_strided_slice %183 {offsets = [0, 128], sizes = [8, 128], strides = [1, 1]} : vector<8x512xf32> to vector<8x128xf32>
    %cst_80 = arith.constant 5.000000e-01 : f32
    %193 = vector.broadcast %cst_80 : f32 to vector<8x128xf32>
    %194 = arith.mulf %193, %192 : vector<8x128xf32>
    %195 = math.tanh %194 : vector<8x128xf32>
    %cst_81 = arith.constant 5.000000e-01 : f32
    %196 = vector.broadcast %cst_81 : f32 to vector<8x128xf32>
    %197 = arith.mulf %196, %195 : vector<8x128xf32>
    %cst_82 = arith.constant 5.000000e-01 : f32
    %198 = vector.broadcast %cst_82 : f32 to vector<8x128xf32>
    %199 = arith.addf %197, %198 : vector<8x128xf32>
    %200 = vector.extract_strided_slice %183 {offsets = [0, 256], sizes = [8, 128], strides = [1, 1]} : vector<8x512xf32> to vector<8x128xf32>
    %201 = math.tanh %200 : vector<8x128xf32>
    %202 = vector.extract_strided_slice %183 {offsets = [0, 384], sizes = [8, 128], strides = [1, 1]} : vector<8x512xf32> to vector<8x128xf32>
    %cst_83 = arith.constant 5.000000e-01 : f32
    %203 = vector.broadcast %cst_83 : f32 to vector<8x128xf32>
    %204 = arith.mulf %203, %202 : vector<8x128xf32>
    %205 = math.tanh %204 : vector<8x128xf32>
    %cst_84 = arith.constant 5.000000e-01 : f32
    %206 = vector.broadcast %cst_84 : f32 to vector<8x128xf32>
    %207 = arith.mulf %206, %205 : vector<8x128xf32>
    %cst_85 = arith.constant 5.000000e-01 : f32
    %208 = vector.broadcast %cst_85 : f32 to vector<8x128xf32>
    %209 = arith.addf %207, %208 : vector<8x128xf32>
    %210 = arith.mulf %199, %171 : vector<8x128xf32>
    %211 = arith.mulf %191, %201 : vector<8x128xf32>
    %212 = arith.addf %210, %211 : vector<8x128xf32>
    %213 = math.tanh %212 : vector<8x128xf32>
    %214 = arith.mulf %209, %213 : vector<8x128xf32>
    %215 = arith.index_cast %177 : i32 to index
    %c0_86 = arith.constant 0 : index
    %216 = vector.load %arg11[%215, %c0_86] : memref<64x128xf32, #tpu.memory_space<vmem>>, vector<8x128xf32>
    tpu.vector_store %arg11[%215, %c0_86], %214 {strides = array<i32>} : memref<64x128xf32, #tpu.memory_space<vmem>>, vector<8x128xf32>,
    %c5_i32 = arith.constant 5 : i32
    %c8_i32_87 = arith.constant 8 : i32
    %217 = arith.muli %c5_i32, %c8_i32_87 : i32
    %218 = tpu.assume_multiple %217, 8 : i32
    %219 = arith.index_cast %218 : i32 to index
    %c0_88 = arith.constant 0 : index
    %220 = vector.load %arg10[%219, %c0_88] : memref<64x512xf32, #tpu.memory_space<vmem>>, vector<8x512xf32>
    %221 = arith.truncf %214 : vector<8x128xf32> to vector<8x128xbf16>
    %c0_89 = arith.constant 0 : index
    %c0_90 = arith.constant 0 : index
    %222 = vector.load %arg3[%c0_89, %c0_90] : memref<128x512xbf16, #tpu.memory_space<vmem>>, vector<128x512xbf16>
    %cst_91 = arith.constant dense<0.000000e+00> : vector<8x512xf32>
    %223 = tpu.matmul %221, %222, %cst_91 {dimension_numbers = #tpu.dot_dimension_numbers<[1], [0], [0], [1], [0, 0, 1, 1], [], []>} : vector<8x128xbf16>, vector<128x512xbf16>, vector<8x512xf32> -> vector<8x512xf32>
    %224 = arith.addf %220, %223 : vector<8x512xf32>
    %225 = vector.extract_strided_slice %224 {offsets = [0, 0], sizes = [8, 128], strides = [1, 1]} : vector<8x512xf32> to vector<8x128xf32>
    %cst_92 = arith.constant 5.000000e-01 : f32
    %226 = vector.broadcast %cst_92 : f32 to vector<8x128xf32>
    %227 = arith.mulf %226, %225 : vector<8x128xf32>
    %228 = math.tanh %227 : vector<8x128xf32>
    %cst_93 = arith.constant 5.000000e-01 : f32
    %229 = vector.broadcast %cst_93 : f32 to vector<8x128xf32>
    %230 = arith.mulf %229, %228 : vector<8x128xf32>
    %cst_94 = arith.constant 5.000000e-01 : f32
    %231 = vector.broadcast %cst_94 : f32 to vector<8x128xf32>
    %232 = arith.addf %230, %231 : vector<8x128xf32>
    %233 = vector.extract_strided_slice %224 {offsets = [0, 128], sizes = [8, 128], strides = [1, 1]} : vector<8x512xf32> to vector<8x128xf32>
    %cst_95 = arith.constant 5.000000e-01 : f32
    %234 = vector.broadcast %cst_95 : f32 to vector<8x128xf32>
    %235 = arith.mulf %234, %233 : vector<8x128xf32>
    %236 = math.tanh %235 : vector<8x128xf32>
    %cst_96 = arith.constant 5.000000e-01 : f32
    %237 = vector.broadcast %cst_96 : f32 to vector<8x128xf32>
    %238 = arith.mulf %237, %236 : vector<8x128xf32>
    %cst_97 = arith.constant 5.000000e-01 : f32
    %239 = vector.broadcast %cst_97 : f32 to vector<8x128xf32>
    %240 = arith.addf %238, %239 : vector<8x128xf32>
    %241 = vector.extract_strided_slice %224 {offsets = [0, 256], sizes = [8, 128], strides = [1, 1]} : vector<8x512xf32> to vector<8x128xf32>
    %242 = math.tanh %241 : vector<8x128xf32>
    %243 = vector.extract_strided_slice %224 {offsets = [0, 384], sizes = [8, 128], strides = [1, 1]} : vector<8x512xf32> to vector<8x128xf32>
    %cst_98 = arith.constant 5.000000e-01 : f32
    %244 = vector.broadcast %cst_98 : f32 to vector<8x128xf32>
    %245 = arith.mulf %244, %243 : vector<8x128xf32>
    %246 = math.tanh %245 : vector<8x128xf32>
    %cst_99 = arith.constant 5.000000e-01 : f32
    %247 = vector.broadcast %cst_99 : f32 to vector<8x128xf32>
    %248 = arith.mulf %247, %246 : vector<8x128xf32>
    %cst_100 = arith.constant 5.000000e-01 : f32
    %249 = vector.broadcast %cst_100 : f32 to vector<8x128xf32>
    %250 = arith.addf %248, %249 : vector<8x128xf32>
    %251 = arith.mulf %240, %212 : vector<8x128xf32>
    %252 = arith.mulf %232, %242 : vector<8x128xf32>
    %253 = arith.addf %251, %252 : vector<8x128xf32>
    %254 = math.tanh %253 : vector<8x128xf32>
    %255 = arith.mulf %250, %254 : vector<8x128xf32>
    %256 = arith.index_cast %218 : i32 to index
    %c0_101 = arith.constant 0 : index
    %257 = vector.load %arg11[%256, %c0_101] : memref<64x128xf32, #tpu.memory_space<vmem>>, vector<8x128xf32>
    tpu.vector_store %arg11[%256, %c0_101], %255 {strides = array<i32>} : memref<64x128xf32, #tpu.memory_space<vmem>>, vector<8x128xf32>,
    %c6_i32 = arith.constant 6 : i32
    %c8_i32_102 = arith.constant 8 : i32
    %258 = arith.muli %c6_i32, %c8_i32_102 : i32
    %259 = tpu.assume_multiple %258, 8 : i32
    %260 = arith.index_cast %259 : i32 to index
    %c0_103 = arith.constant 0 : index
    %261 = vector.load %arg10[%260, %c0_103] : memref<64x512xf32, #tpu.memory_space<vmem>>, vector<8x512xf32>
    %262 = arith.truncf %255 : vector<8x128xf32> to vector<8x128xbf16>
    %c0_104 = arith.constant 0 : index
    %c0_105 = arith.constant 0 : index
    %263 = vector.load %arg3[%c0_104, %c0_105] : memref<128x512xbf16, #tpu.memory_space<vmem>>, vector<128x512xbf16>
    %cst_106 = arith.constant dense<0.000000e+00> : vector<8x512xf32>
    %264 = tpu.matmul %262, %263, %cst_106 {dimension_numbers = #tpu.dot_dimension_numbers<[1], [0], [0], [1], [0, 0, 1, 1], [], []>} : vector<8x128xbf16>, vector<128x512xbf16>, vector<8x512xf32> -> vector<8x512xf32>
    %265 = arith.addf %261, %264 : vector<8x512xf32>
    %266 = vector.extract_strided_slice %265 {offsets = [0, 0], sizes = [8, 128], strides = [1, 1]} : vector<8x512xf32> to vector<8x128xf32>
    %cst_107 = arith.constant 5.000000e-01 : f32
    %267 = vector.broadcast %cst_107 : f32 to vector<8x128xf32>
    %268 = arith.mulf %267, %266 : vector<8x128xf32>
    %269 = math.tanh %268 : vector<8x128xf32>
    %cst_108 = arith.constant 5.000000e-01 : f32
    %270 = vector.broadcast %cst_108 : f32 to vector<8x128xf32>
    %271 = arith.mulf %270, %269 : vector<8x128xf32>
    %cst_109 = arith.constant 5.000000e-01 : f32
    %272 = vector.broadcast %cst_109 : f32 to vector<8x128xf32>
    %273 = arith.addf %271, %272 : vector<8x128xf32>
    %274 = vector.extract_strided_slice %265 {offsets = [0, 128], sizes = [8, 128], strides = [1, 1]} : vector<8x512xf32> to vector<8x128xf32>
    %cst_110 = arith.constant 5.000000e-01 : f32
    %275 = vector.broadcast %cst_110 : f32 to vector<8x128xf32>
    %276 = arith.mulf %275, %274 : vector<8x128xf32>
    %277 = math.tanh %276 : vector<8x128xf32>
    %cst_111 = arith.constant 5.000000e-01 : f32
    %278 = vector.broadcast %cst_111 : f32 to vector<8x128xf32>
    %279 = arith.mulf %278, %277 : vector<8x128xf32>
    %cst_112 = arith.constant 5.000000e-01 : f32
    %280 = vector.broadcast %cst_112 : f32 to vector<8x128xf32>
    %281 = arith.addf %279, %280 : vector<8x128xf32>
    %282 = vector.extract_strided_slice %265 {offsets = [0, 256], sizes = [8, 128], strides = [1, 1]} : vector<8x512xf32> to vector<8x128xf32>
    %283 = math.tanh %282 : vector<8x128xf32>
    %284 = vector.extract_strided_slice %265 {offsets = [0, 384], sizes = [8, 128], strides = [1, 1]} : vector<8x512xf32> to vector<8x128xf32>
    %cst_113 = arith.constant 5.000000e-01 : f32
    %285 = vector.broadcast %cst_113 : f32 to vector<8x128xf32>
    %286 = arith.mulf %285, %284 : vector<8x128xf32>
    %287 = math.tanh %286 : vector<8x128xf32>
    %cst_114 = arith.constant 5.000000e-01 : f32
    %288 = vector.broadcast %cst_114 : f32 to vector<8x128xf32>
    %289 = arith.mulf %288, %287 : vector<8x128xf32>
    %cst_115 = arith.constant 5.000000e-01 : f32
    %290 = vector.broadcast %cst_115 : f32 to vector<8x128xf32>
    %291 = arith.addf %289, %290 : vector<8x128xf32>
    %292 = arith.mulf %281, %253 : vector<8x128xf32>
    %293 = arith.mulf %273, %283 : vector<8x128xf32>
    %294 = arith.addf %292, %293 : vector<8x128xf32>
    %295 = math.tanh %294 : vector<8x128xf32>
    %296 = arith.mulf %291, %295 : vector<8x128xf32>
    %297 = arith.index_cast %259 : i32 to index
    %c0_116 = arith.constant 0 : index
    %298 = vector.load %arg11[%297, %c0_116] : memref<64x128xf32, #tpu.memory_space<vmem>>, vector<8x128xf32>
    tpu.vector_store %arg11[%297, %c0_116], %296 {strides = array<i32>} : memref<64x128xf32, #tpu.memory_space<vmem>>, vector<8x128xf32>,
    %c7_i32 = arith.constant 7 : i32
    %c8_i32_117 = arith.constant 8 : i32
    %299 = arith.muli %c7_i32, %c8_i32_117 : i32
    %300 = tpu.assume_multiple %299, 8 : i32
    %301 = arith.index_cast %300 : i32 to index
    %c0_118 = arith.constant 0 : index
    %302 = vector.load %arg10[%301, %c0_118] : memref<64x512xf32, #tpu.memory_space<vmem>>, vector<8x512xf32>
    %303 = arith.truncf %296 : vector<8x128xf32> to vector<8x128xbf16>
    %c0_119 = arith.constant 0 : index
    %c0_120 = arith.constant 0 : index
    %304 = vector.load %arg3[%c0_119, %c0_120] : memref<128x512xbf16, #tpu.memory_space<vmem>>, vector<128x512xbf16>
    %cst_121 = arith.constant dense<0.000000e+00> : vector<8x512xf32>
    %305 = tpu.matmul %303, %304, %cst_121 {dimension_numbers = #tpu.dot_dimension_numbers<[1], [0], [0], [1], [0, 0, 1, 1], [], []>} : vector<8x128xbf16>, vector<128x512xbf16>, vector<8x512xf32> -> vector<8x512xf32>
    %306 = arith.addf %302, %305 : vector<8x512xf32>
    %307 = vector.extract_strided_slice %306 {offsets = [0, 0], sizes = [8, 128], strides = [1, 1]} : vector<8x512xf32> to vector<8x128xf32>
    %cst_122 = arith.constant 5.000000e-01 : f32
    %308 = vector.broadcast %cst_122 : f32 to vector<8x128xf32>
    %309 = arith.mulf %308, %307 : vector<8x128xf32>
    %310 = math.tanh %309 : vector<8x128xf32>
    %cst_123 = arith.constant 5.000000e-01 : f32
    %311 = vector.broadcast %cst_123 : f32 to vector<8x128xf32>
    %312 = arith.mulf %311, %310 : vector<8x128xf32>
    %cst_124 = arith.constant 5.000000e-01 : f32
    %313 = vector.broadcast %cst_124 : f32 to vector<8x128xf32>
    %314 = arith.addf %312, %313 : vector<8x128xf32>
    %315 = vector.extract_strided_slice %306 {offsets = [0, 128], sizes = [8, 128], strides = [1, 1]} : vector<8x512xf32> to vector<8x128xf32>
    %cst_125 = arith.constant 5.000000e-01 : f32
    %316 = vector.broadcast %cst_125 : f32 to vector<8x128xf32>
    %317 = arith.mulf %316, %315 : vector<8x128xf32>
    %318 = math.tanh %317 : vector<8x128xf32>
    %cst_126 = arith.constant 5.000000e-01 : f32
    %319 = vector.broadcast %cst_126 : f32 to vector<8x128xf32>
    %320 = arith.mulf %319, %318 : vector<8x128xf32>
    %cst_127 = arith.constant 5.000000e-01 : f32
    %321 = vector.broadcast %cst_127 : f32 to vector<8x128xf32>
    %322 = arith.addf %320, %321 : vector<8x128xf32>
    %323 = vector.extract_strided_slice %306 {offsets = [0, 256], sizes = [8, 128], strides = [1, 1]} : vector<8x512xf32> to vector<8x128xf32>
    %324 = math.tanh %323 : vector<8x128xf32>
    %325 = vector.extract_strided_slice %306 {offsets = [0, 384], sizes = [8, 128], strides = [1, 1]} : vector<8x512xf32> to vector<8x128xf32>
    %cst_128 = arith.constant 5.000000e-01 : f32
    %326 = vector.broadcast %cst_128 : f32 to vector<8x128xf32>
    %327 = arith.mulf %326, %325 : vector<8x128xf32>
    %328 = math.tanh %327 : vector<8x128xf32>
    %cst_129 = arith.constant 5.000000e-01 : f32
    %329 = vector.broadcast %cst_129 : f32 to vector<8x128xf32>
    %330 = arith.mulf %329, %328 : vector<8x128xf32>
    %cst_130 = arith.constant 5.000000e-01 : f32
    %331 = vector.broadcast %cst_130 : f32 to vector<8x128xf32>
    %332 = arith.addf %330, %331 : vector<8x128xf32>
    %333 = arith.mulf %322, %294 : vector<8x128xf32>
    %334 = arith.mulf %314, %324 : vector<8x128xf32>
    %335 = arith.addf %333, %334 : vector<8x128xf32>
    %336 = math.tanh %335 : vector<8x128xf32>
    %337 = arith.mulf %332, %336 : vector<8x128xf32>
    %338 = arith.index_cast %300 : i32 to index
    %c0_131 = arith.constant 0 : index
    %339 = vector.load %arg11[%338, %c0_131] : memref<64x128xf32, #tpu.memory_space<vmem>>, vector<8x128xf32>
    tpu.vector_store %arg11[%338, %c0_131], %337 {strides = array<i32>} : memref<64x128xf32, #tpu.memory_space<vmem>>, vector<8x128xf32>,
    %c8_i32_132 = arith.constant 8 : i32
    %c0_133 = arith.constant 0 : index
    %c0_134 = arith.constant 0 : index
    %340 = vector.load %arg11[%c0_133, %c0_134] : memref<64x128xf32, #tpu.memory_space<vmem>>, vector<64x128xf32>
    %c0_135 = arith.constant 0 : index
    %c0_136 = arith.constant 0 : index
    %341 = vector.load %arg5[%c0_135, %c0_136] : memref<64x128xf32, #tpu.memory_space<vmem>>, vector<64x128xf32>
    tpu.vector_store %arg5[%c0_135, %c0_136], %340 {strides = array<i32>} : memref<64x128xf32, #tpu.memory_space<vmem>>, vector<64x128xf32>,
    %c0_137 = arith.constant 0 : index
    %c0_138 = arith.constant 0 : index
    %342 = vector.load %arg8[%c0_137, %c0_138] : memref<8x128xf32, #tpu.memory_space<vmem>>, vector<8x128xf32>
    tpu.vector_store %arg8[%c0_137, %c0_138], %337 {strides = array<i32>} : memref<8x128xf32, #tpu.memory_space<vmem>>, vector<8x128xf32>,
    %c0_139 = arith.constant 0 : index
    %c0_140 = arith.constant 0 : index
    %343 = vector.load %arg9[%c0_139, %c0_140] : memref<8x128xf32, #tpu.memory_space<vmem>>, vector<8x128xf32>
    tpu.vector_store %arg9[%c0_139, %c0_140], %335 {strides = array<i32>} : memref<8x128xf32, #tpu.memory_space<vmem>>, vector<8x128xf32>,
    %c0_i32_141 = arith.constant 0 : i32
    %344 = arith.cmpi eq, %arg0, %c0_i32_141 : i32
    %345 = arith.extui %344 : i1 to i32
    %c0_i32_142 = arith.constant 0 : i32
    %346 = arith.cmpi ne, %345, %c0_i32_142 : i32
    scf.if %346 {
      %c0_143 = arith.constant 0 : index
      %c0_144 = arith.constant 0 : index
      %347 = vector.load %arg6[%c0_143, %c0_144] : memref<8x128xf32, #tpu.memory_space<vmem>>, vector<8x128xf32>
      tpu.vector_store %arg6[%c0_143, %c0_144], %337 {strides = array<i32>} : memref<8x128xf32, #tpu.memory_space<vmem>>, vector<8x128xf32>,
      %c0_145 = arith.constant 0 : index
      %c0_146 = arith.constant 0 : index
      %348 = vector.load %arg7[%c0_145, %c0_146] : memref<8x128xf32, #tpu.memory_space<vmem>>, vector<8x128xf32>
      tpu.vector_store %arg7[%c0_145, %c0_146], %335 {strides = array<i32>} : memref<8x128xf32, #tpu.memory_space<vmem>>, vector<8x128xf32>,
    } else {
    }
    return
  }
  func.func @transform_0(%arg0: i32) -> (i32, i32) {
    %c0_i32 = arith.constant 0 : i32
    %c0_i32_0 = arith.constant 0 : i32
    return %arg0, %c0_i32 : i32, i32
  }
  func.func @transform_1(%arg0: i32) -> (i32, i32) {
    %c0_i32 = arith.constant 0 : i32
    %c0_i32_0 = arith.constant 0 : i32
    %c0_i32_1 = arith.constant 0 : i32
    return %c0_i32, %c0_i32_0 : i32, i32
  }
  func.func @transform_2(%arg0: i32) -> (i32, i32) {
    %c0_i32 = arith.constant 0 : i32
    %c0_i32_0 = arith.constant 0 : i32
    %c0_i32_1 = arith.constant 0 : i32
    return %c0_i32, %c0_i32_0 : i32, i32
  }
  func.func @transform_3(%arg0: i32) -> (i32, i32) {
    %c0_i32 = arith.constant 0 : i32
    %c0_i32_0 = arith.constant 0 : i32
    %c0_i32_1 = arith.constant 0 : i32
    return %c0_i32, %c0_i32_0 : i32, i32
  }
  func.func @transform_4(%arg0: i32) -> (i32, i32) {
    %c0_i32 = arith.constant 0 : i32
    %c0_i32_0 = arith.constant 0 : i32
    return %arg0, %c0_i32 : i32, i32
  }
  func.func @transform_5(%arg0: i32) -> (i32, i32) {
    %c0_i32 = arith.constant 0 : i32
    %c0_i32_0 = arith.constant 0 : i32
    %c0_i32_1 = arith.constant 0 : i32
    return %c0_i32, %c0_i32_0 : i32, i32
  }
  func.func @transform_6(%arg0: i32) -> (i32, i32) {
    %c0_i32 = arith.constant 0 : i32
    %c0_i32_0 = arith.constant 0 : i32
    %c0_i32_1 = arith.constant 0 : i32
    return %c0_i32, %c0_i32_0 : i32, i32
  }
}

</mosaic_0001>

<llo_original>
// kernel: encoder_forward.2
$region0: #{encoder_forward.2}
  #allocation0 [shape = 'u32[]', space=smem, size = 0x4, offset = 0x4, fixed_abs, tag = 'smem constant byte address 0x4 - core index']
  #allocation1 [shape = 'u32[144,128]{1,0:T(1,128)}', space=vmem, size = 0x12000, scoped, tag = 'internal scratch']
  #allocation2 [shape = 'f32[8,128]{1,0:T(8,128)}', space=vmem, size = 0x1000, scoped, tag = 'scratch operand']
  #allocation3 [shape = 'f32[8,128]{1,0:T(8,128)}', space=vmem, size = 0x1000, scoped, tag = 'scratch operand']
  #allocation4 [shape = 'f32[64,512]{1,0:T(8,128)}', space=vmem, size = 0x20000, scoped, tag = 'scratch operand']
  #allocation5 [shape = 'f32[64,128]{1,0:T(8,128)}', space=vmem, size = 0x8000, scoped, tag = 'scratch operand']
  %s0 = inlined_call_operand.vmem [shape: f32[64,16], index: 0, kind: input, shape index: {}]
  %s1 = inlined_call_operand.hbm [shape: bf16[16,512], index: 1, kind: input, shape index: {}]
  %s2 = inlined_call_operand.hbm [shape: bf16[128,512], index: 2, kind: input, shape index: {}]
  %s3 = inlined_call_operand.hbm [shape: f32[1,512], index: 3, kind: input, shape index: {}]
  %s4 = inlined_call_operand.vmem [shape: bf16[64,128], index: 4, kind: output, shape index: {0}]
  %s5 = inlined_call_operand.vmem [shape: f32[8,128], index: 5, kind: output, shape index: {1}]
  %s6 = inlined_call_operand.vmem [shape: f32[8,128], index: 6, kind: output, shape index: {2}]
  %7 = xla_tuple %s4, %s5, %s6
  %s8 = sld [smem:[#allocation0]]
  $region62: #{encoder_forward.2} parent=0
    _
  %s10 = ssub.s32 1, %s8
  %s11 = scalar_select 0, %s10, %s8
  $region1: #{encoder_forward.2} parent=0
    #allocation6 [shape = 'u8[16384]{0}', space=vmem, size = 0x4000, scoped, tag = 'input window, operand 1, single buffered']
    #allocation7 [shape = 's32[1]{0}', space=sflag, size = 0x4, scoped, tag = 'scoped memory for encoder_forward.2']
    #allocation8 [shape = 'u8[131072]{0}', space=vmem, size = 0x20000, scoped, tag = 'input window, operand 2, single buffered']
    #allocation9 [shape = 's32[1]{0}', space=sflag, size = 0x4, scoped, tag = 'scoped memory for encoder_forward.2']
    #allocation10 [shape = 'u8[2048]{0}', space=vmem, size = 0x800, scoped, tag = 'input window, operand 3, single buffered']
    %12 = vsyncpa [#allocation7], 0
    %13 = vsyncpa [#allocation9], 0
    // Predicated region
    $region2: #{encoder_forward.2} parent=1 // pred_check
      _
    $region3: #{encoder_forward.2} parent=1 // pred_check_branch
      %15 = sbr.rel (0) target = $region5
    $region4: #{encoder_forward.2} parent=1 // pred_region
      _
    $region5: #{encoder_forward.2} parent=1 // pred_fallthru
      _
    // Predicated region
    $region6: #{encoder_forward.2} parent=1 // pred_check
      _
    $region7: #{encoder_forward.2} parent=1 // pred_check_branch
      %17 = sbr.rel (0) target = $region9
    $region8: #{encoder_forward.2} parent=1 // pred_region
      %s19 = ssub.s32 512, 512
      %20 = vsyncadd [#allocation7], %s19
      %s21 = sshll.u32 [#allocation6], 4
      %s22 = int_to_ptr.vmem [resolvable:$true] %s21
      %27 = dma.hbm_to_vmem [thread:$0]  %s1, 512, %s22, [#allocation7], 256, 256, 16
    $region9: #{encoder_forward.2} parent=1 // pred_fallthru
      _
    // Predicated region
    $region10: #{encoder_forward.2} parent=1 // pred_check
      _
    $region11: #{encoder_forward.2} parent=1 // pred_check_branch
      %29 = sbr.rel (0) target = $region13
    $region12: #{encoder_forward.2} parent=1 // pred_region
      %s31 = ssub.s32 4096, 4096
      %32 = vsyncadd [#allocation9], %s31
      %s33 = sshll.u32 [#allocation8], 4
      %s34 = int_to_ptr.vmem [resolvable:$true] %s33
      %39 = dma.hbm_to_vmem [thread:$0]  %s2, 4096, %s34, [#allocation9], 256, 256, 16
    $region13: #{encoder_forward.2} parent=1 // pred_fallthru
      _
    // Predicated region
    $region14: #{encoder_forward.2} parent=1 // pred_check
      _
    $region15: #{encoder_forward.2} parent=1 // pred_check_branch
      %41 = sbr.rel (0) target = $region17
    $region16: #{encoder_forward.2} parent=1 // pred_region
      %s43 = ssub.s32 64, 64
      %44 = vsyncadd [#allocation9], %s43
      %s46 = sshll.u32 [#allocation10], 4
      %s47 = int_to_ptr.vmem [resolvable:$true] %s46
      %49 = dma.hbm_to_vmem [thread:$0]  %s3, 64, %s47, [#allocation9]
    $region17: #{encoder_forward.2} parent=1 // pred_fallthru
      _
    // Predicated region
    $region18: #{encoder_forward.2} parent=1 // pred_check
      _
    $region19: #{encoder_forward.2} parent=1 // pred_check_branch
      %51 = sbr.rel (0) target = $region21
    $region20: #{encoder_forward.2} parent=1 // pred_region
      %52 = dma.done [#allocation7], 512
    $region21: #{encoder_forward.2} parent=1 // pred_fallthru
      _
    // Predicated region
    $region22: #{encoder_forward.2} parent=1 // pred_check
      _
    $region23: #{encoder_forward.2} parent=1 // pred_check_branch
      %54 = sbr.rel (0) target = $region25
    $region24: #{encoder_forward.2} parent=1 // pred_region
      %55 = dma.done [#allocation9], 4096
    $region25: #{encoder_forward.2} parent=1 // pred_fallthru
      _
    // Predicated region
    $region26: #{encoder_forward.2} parent=1 // pred_check
      _
    $region27: #{encoder_forward.2} parent=1 // pred_check_branch
      %57 = sbr.rel (0) target = $region29
    $region28: #{encoder_forward.2} parent=1 // pred_region
      %58 = dma.done [#allocation9], 64
    $region29: #{encoder_forward.2} parent=1 // pred_fallthru
      _
    %p60 = scmp.eq.s32.totalorder 0, 0
    // Predicated region
    $region30: #{encoder_forward.2} parent=1 // pred_check
      %p61 = pneg %p60
    $region31: #{encoder_forward.2} parent=1 // pred_check_branch
      %63 = sbr.rel (%p61) target = $region33
    $region32: #{encoder_forward.2} parent=1 // pred_region
      %64 = vst [vmem:[#allocation2] sm:$0xff] 0.0
      %65 = vst [vmem:[#allocation3] sm:$0xff] 0.0
    $region33: #{encoder_forward.2} parent=1 // pred_fallthru
      _
    %v66 = vld [vmem:[%s0] sm:$0xff]
    %v67 = vld [vmem:[%s0 + $0x8] sm:$0xff]
    %v68 = vld [vmem:[%s0 + $0x10] sm:$0xff]
    %v69 = vld [vmem:[%s0 + $0x18] sm:$0xff]
    %v70 = vld [vmem:[%s0 + $0x20] sm:$0xff]
    %v71 = vld [vmem:[%s0 + $0x28] sm:$0xff]
    %v72 = vld [vmem:[%s0 + $0x30] sm:$0xff]
    %v73 = vld [vmem:[%s0 + $0x38] sm:$0xff]
    %v74 = vpack.c.bf16 %v67, %v66
    %v75 = vpack.c.bf16 %v69, %v68
    %v76 = vpack.c.bf16 %v71, %v70
    %v77 = vpack.c.bf16 %v73, %v72
    %v78 = vld [vmem:[#allocation6] sm:$0xff]
    %v79 = vld [vmem:[#allocation6 + $0x8] sm:$0xff]
    %v80 = vld [vmem:[#allocation6 + $0x10] sm:$0xff]
    %v81 = vld [vmem:[#allocation6 + $0x18] sm:$0xff]
    %v82 = vld [vmem:[#allocation10] sm:$0xf]
    %v84 = vlaneseq
    %v85 = vshrl.u32 %v84, 7
    %v86 = vsub.s32 0, %v85
    %v87 = vrot.slane %v82, %v86
    %v88 = vlaneseq
    %v89 = vshrl.u32 %v88, 7
    %v90 = vsub.s32 1, %v89
    %v91 = vrot.slane %v82, %v90
    %v92 = vlaneseq
    %v93 = vshrl.u32 %v92, 7
    %v94 = vsub.s32 2, %v93
    %v95 = vrot.slane %v82, %v94
    %v96 = vlaneseq
    %v97 = vshrl.u32 %v96, 7
    %v98 = vsub.s32 3, %v97
    %v99 = vrot.slane %v82, %v98
    %v108 = vunpack.c.l.b16 %v78
    %v109 = vunpack.c.h.b16 %v78
    %v110 = vunpack.c.l.b16 %v79
    %v111 = vunpack.c.h.b16 %v79
    %v112 = vunpack.c.l.b16 %v80
    %v113 = vunpack.c.h.b16 %v80
    %v114 = vunpack.c.l.b16 %v81
    %v115 = vunpack.c.h.b16 %v81
    %v116 = vpack.c.b16 %v112, %v108
    %v117 = vpack.c.b16 %v113, %v109
    %v118 = vpack.c.b16 %v114, %v110
    %v119 = vpack.c.b16 %v115, %v111
    %vm124 = vcmask 130048
    %v126 = vsel %vm124, %v74, 0
    %v129 = vsel %vm124, %v75, 0
    %v132 = vsel %vm124, %v76, 0
    %v135 = vsel %vm124, %v77, 0
    %137 = vmatprep.subr.bf16.mxu0 %v117
    %138 = vmatpush1.bf16.msra.mxu0 %v116
    %139 = vmatprep.subr.bf16.mxu0 0
    %140 = vmatpush1.bf16.msra.mxu0 0
    %141 = vmatprep.subr.bf16.mxu0 0
    %142 = vmatpush1.bf16.msra.mxu0 0
    %143 = vmatprep.subr.bf16.mxu0 0
    %144 = vmatpush1.bf16.msra.mxu0 0
    %145 = vmatprep.subr.bf16.mxu0 0
    %146 = vmatpush1.bf16.msra.mxu0 0
    %147 = vmatprep.subr.bf16.mxu0 0
    %148 = vmatpush1.bf16.msra.mxu0 0
    %149 = vmatprep.subr.bf16.mxu0 0
    %150 = vmatpush1.bf16.msra.mxu0 0
    %151 = vmatprep.subr.bf16.mxu0 0
    %152 = vmatpush1.bf16.msra.mxu0 0
    %153 = vmatprep.subr.bf16.mxu0 0
    %154 = vmatpush1.bf16.msra.mxu0 0
    %155 = vmatprep.subr.bf16.mxu0 0
    %156 = vmatpush1.bf16.msra.mxu0 0
    %157 = vmatprep.subr.bf16.mxu0 0
    %158 = vmatpush1.bf16.msra.mxu0 0
    %159 = vmatprep.subr.bf16.mxu0 0
    %160 = vmatpush1.bf16.msra.mxu0 0
    %161 = vmatprep.subr.bf16.mxu0 0
    %162 = vmatpush1.bf16.msra.mxu0 0
    %163 = vmatprep.subr.bf16.mxu0 0
    %164 = vmatpush1.bf16.msra.mxu0 0
    %165 = vmatprep.subr.bf16.mxu0 0
    %166 = vmatpush1.bf16.msra.mxu0 0
    %167 = vmatprep.subr.bf16.mxu0 0
    %168 = vmatpush1.bf16.msra.mxu0 0
    %169 = vmatprep.mubr.bf16.mxu0 0
    %170 = vmatmul.mubr.bf16.gmra.mrb[0].mxu0 %v126
    %v171 = vpop.f32.mrb[0].mxu0
    %v172 = vadd.f32 %v87, %v171
    %v173 = vpop.f32.mrb[0].mxu0
    %v174 = vadd.f32 %v91, %v173
    %v175 = vpop.f32.mrb[0].mxu0
    %v176 = vadd.f32 %v87, %v175
    %v177 = vpop.f32.mrb[0].mxu0
    %v178 = vadd.f32 %v91, %v177
    %179 = vmatprep.mubr.bf16.mxu0 0
    %180 = vmatmul.mubr.bf16.gmra.mrb[0].mxu0 %v129
    %v181 = vpop.f32.mrb[0].mxu0
    %v182 = vadd.f32 %v87, %v181
    %v183 = vpop.f32.mrb[0].mxu0
    %v184 = vadd.f32 %v91, %v183
    %v185 = vpop.f32.mrb[0].mxu0
    %v186 = vadd.f32 %v87, %v185
    %v187 = vpop.f32.mrb[0].mxu0
    %v188 = vadd.f32 %v91, %v187
    %189 = vmatprep.mubr.bf16.mxu0 0
    %190 = vmatmul.mubr.bf16.gmra.mrb[0].mxu0 %v132
    %v191 = vpop.f32.mrb[0].mxu0
    %v192 = vadd.f32 %v87, %v191
    %v193 = vpop.f32.mrb[0].mxu0
    %v194 = vadd.f32 %v91, %v193
    %v195 = vpop.f32.mrb[0].mxu0
    %v196 = vadd.f32 %v87, %v195
    %v197 = vpop.f32.mrb[0].mxu0
    %v198 = vadd.f32 %v91, %v197
    %199 = vmatprep.mubr.bf16.mxu0 0
    %200 = vmatmul.mubr.bf16.gmra.mrb[0].mxu0 %v135
    %v201 = vpop.f32.mrb[0].mxu0
    %v202 = vadd.f32 %v87, %v201
    %v203 = vpop.f32.mrb[0].mxu0
    %v204 = vadd.f32 %v91, %v203
    %v205 = vpop.f32.mrb[0].mxu0
    %v206 = vadd.f32 %v87, %v205
    %v207 = vpop.f32.mrb[0].mxu0
    %v208 = vadd.f32 %v91, %v207
    %209 = vdwg.mxu0
    %210 = vmatprep.subr.bf16.mxu0 %v119
    %211 = vmatpush1.bf16.msra.mxu0 %v118
    %212 = vmatprep.subr.bf16.mxu0 0
    %213 = vmatpush1.bf16.msra.mxu0 0
    %214 = vmatprep.subr.bf16.mxu0 0
    %215 = vmatpush1.bf16.msra.mxu0 0
    %216 = vmatprep.subr.bf16.mxu0 0
    %217 = vmatpush1.bf16.msra.mxu0 0
    %218 = vmatprep.subr.bf16.mxu0 0
    %219 = vmatpush1.bf16.msra.mxu0 0
    %220 = vmatprep.subr.bf16.mxu0 0
    %221 = vmatpush1.bf16.msra.mxu0 0
    %222 = vmatprep.subr.bf16.mxu0 0
    %223 = vmatpush1.bf16.msra.mxu0 0
    %224 = vmatprep.subr.bf16.mxu0 0
    %225 = vmatpush1.bf16.msra.mxu0 0
    %226 = vmatprep.subr.bf16.mxu0 0
    %227 = vmatpush1.bf16.msra.mxu0 0
    %228 = vmatprep.subr.bf16.mxu0 0
    %229 = vmatpush1.bf16.msra.mxu0 0
    %230 = vmatprep.subr.bf16.mxu0 0
    %231 = vmatpush1.bf16.msra.mxu0 0
    %232 = vmatprep.subr.bf16.mxu0 0
    %233 = vmatpush1.bf16.msra.mxu0 0
    %234 = vmatprep.subr.bf16.mxu0 0
    %235 = vmatpush1.bf16.msra.mxu0 0
    %236 = vmatprep.subr.bf16.mxu0 0
    %237 = vmatpush1.bf16.msra.mxu0 0
    %238 = vmatprep.subr.bf16.mxu0 0
    %239 = vmatpush1.bf16.msra.mxu0 0
    %240 = vmatprep.subr.bf16.mxu0 0
    %241 = vmatpush1.bf16.msra.mxu0 0
    %242 = vmatprep.mubr.bf16.mxu0 0
    %243 = vmatmul.mubr.bf16.gmra.mrb[0].mxu0 %v126
    %v244 = vpop.f32.mrb[0].mxu0
    %v245 = vadd.f32 %v95, %v244
    %v246 = vpop.f32.mrb[0].mxu0
    %v247 = vadd.f32 %v99, %v246
    %v248 = vpop.f32.mrb[0].mxu0
    %v249 = vadd.f32 %v95, %v248
    %v250 = vpop.f32.mrb[0].mxu0
    %v251 = vadd.f32 %v99, %v250
    %252 = vmatprep.mubr.bf16.mxu0 0
    %253 = vmatmul.mubr.bf16.gmra.mrb[0].mxu0 %v129
    %v254 = vpop.f32.mrb[0].mxu0
    %v255 = vadd.f32 %v95, %v254
    %v256 = vpop.f32.mrb[0].mxu0
    %v257 = vadd.f32 %v99, %v256
    %v258 = vpop.f32.mrb[0].mxu0
    %v259 = vadd.f32 %v95, %v258
    %v260 = vpop.f32.mrb[0].mxu0
    %v261 = vadd.f32 %v99, %v260
    %262 = vmatprep.mubr.bf16.mxu0 0
    %263 = vmatmul.mubr.bf16.gmra.mrb[0].mxu0 %v132
    %v264 = vpop.f32.mrb[0].mxu0
    %v265 = vadd.f32 %v95, %v264
    %v266 = vpop.f32.mrb[0].mxu0
    %v267 = vadd.f32 %v99, %v266
    %v268 = vpop.f32.mrb[0].mxu0
    %v269 = vadd.f32 %v95, %v268
    %v270 = vpop.f32.mrb[0].mxu0
    %v271 = vadd.f32 %v99, %v270
    %272 = vmatprep.mubr.bf16.mxu0 0
    %273 = vmatmul.mubr.bf16.gmra.mrb[0].mxu0 %v135
    %v274 = vpop.f32.mrb[0].mxu0
    %v275 = vadd.f32 %v95, %v274
    %v276 = vpop.f32.mrb[0].mxu0
    %v277 = vadd.f32 %v99, %v276
    %v278 = vpop.f32.mrb[0].mxu0
    %v279 = vadd.f32 %v95, %v278
    %v280 = vpop.f32.mrb[0].mxu0
    %v281 = vadd.f32 %v99, %v280
    %282 = vdwg.mxu0
    %283 = vst [vmem:[#allocation4] sm:$0xff] %v172
    %284 = vst [vmem:[#allocation4 + $0x8] sm:$0xff] %v174
    %285 = vst [vmem:[#allocation4 + $0x10] sm:$0xff] %v245
    %286 = vst [vmem:[#allocation4 + $0x18] sm:$0xff] %v247
    %287 = vst [vmem:[#allocation4 + $0x20] sm:$0xff] %v176
    %288 = vst [vmem:[#allocation4 + $0x28] sm:$0xff] %v178
    %289 = vst [vmem:[#allocation4 + $0x30] sm:$0xff] %v249
    %290 = vst [vmem:[#allocation4 + $0x38] sm:$0xff] %v251
    %291 = vst [vmem:[#allocation4 + $0x40] sm:$0xff] %v182
    %292 = vst [vmem:[#allocation4 + $0x48] sm:$0xff] %v184
    %293 = vst [vmem:[#allocation4 + $0x50] sm:$0xff] %v255
    %294 = vst [vmem:[#allocation4 + $0x58] sm:$0xff] %v257
    %295 = vst [vmem:[#allocation4 + $0x60] sm:$0xff] %v186
    %296 = vst [vmem:[#allocation4 + $0x68] sm:$0xff] %v188
    %297 = vst [vmem:[#allocation4 + $0x70] sm:$0xff] %v259
    %298 = vst [vmem:[#allocation4 + $0x78] sm:$0xff] %v261
    %299 = vst [vmem:[#allocation4 + $0x80] sm:$0xff] %v192
    %300 = vst [vmem:[#allocation4 + $0x88] sm:$0xff] %v194
    %301 = vst [vmem:[#allocation4 + $0x90] sm:$0xff] %v265
    %302 = vst [vmem:[#allocation4 + $0x98] sm:$0xff] %v267
    %303 = vst [vmem:[#allocation4 + $0xa0] sm:$0xff] %v196
    %304 = vst [vmem:[#allocation4 + $0xa8] sm:$0xff] %v198
    %305 = vst [vmem:[#allocation4 + $0xb0] sm:$0xff] %v269
    %306 = vst [vmem:[#allocation4 + $0xb8] sm:$0xff] %v271
    %307 = vst [vmem:[#allocation4 + $0xc0] sm:$0xff] %v202
    %308 = vst [vmem:[#allocation4 + $0xc8] sm:$0xff] %v204
    %309 = vst [vmem:[#allocation4 + $0xd0] sm:$0xff] %v275
    %310 = vst [vmem:[#allocation4 + $0xd8] sm:$0xff] %v277
    %311 = vst [vmem:[#allocation4 + $0xe0] sm:$0xff] %v206
    %312 = vst [vmem:[#allocation4 + $0xe8] sm:$0xff] %v208
    %313 = vst [vmem:[#allocation4 + $0xf0] sm:$0xff] %v279
    %314 = vst [vmem:[#allocation4 + $0xf8] sm:$0xff] %v281
    %v315 = vld [vmem:[#allocation2] sm:$0xff]
    %v316 = vld [vmem:[#allocation3] sm:$0xff]
    %s317 = smul.u32 0, 4
    %s318 = smul.addr %s317, 8
    %s319 = scalar_lea.vmem [#allocation4], %s318
    %v320 = vld [vmem:[%s319] sm:$0xff]
    %v321 = vld [vmem:[%s319 + $0x8] sm:$0xff]
    %v322 = vld [vmem:[%s319 + $0x10] sm:$0xff]
    %v323 = vld [vmem:[%s319 + $0x18] sm:$0xff]
    %v324 = vpack.c.bf16 %v315, %v315
    %v325 = vld [vmem:[#allocation8] sm:$0xff]
    %v326 = vld [vmem:[#allocation8 + $0x8] sm:$0xff]
    %v327 = vld [vmem:[#allocation8 + $0x10] sm:$0xff]
    %v328 = vld [vmem:[#allocation8 + $0x18] sm:$0xff]
    %v329 = vld [vmem:[#allocation8 + $0x20] sm:$0xff]
    %v330 = vld [vmem:[#allocation8 + $0x28] sm:$0xff]
    %v331 = vld [vmem:[#allocation8 + $0x30] sm:$0xff]
    %v332 = vld [vmem:[#allocation8 + $0x38] sm:$0xff]
    %v333 = vld [vmem:[#allocation8 + $0x40] sm:$0xff]
    %v334 = vld [vmem:[#allocation8 + $0x48] sm:$0xff]
    %v335 = vld [vmem:[#allocation8 + $0x50] sm:$0xff]
    %v336 = vld [vmem:[#allocation8 + $0x58] sm:$0xff]
    %v337 = vld [vmem:[#allocation8 + $0x60] sm:$0xff]
    %v338 = vld [vmem:[#allocation8 + $0x68] sm:$0xff]
    %v339 = vld [vmem:[#allocation8 + $0x70] sm:$0xff]
    %v340 = vld [vmem:[#allocation8 + $0x78] sm:$0xff]
    %v341 = vld [vmem:[#allocation8 + $0x80] sm:$0xff]
    %v342 = vld [vmem:[#allocation8 + $0x88] sm:$0xff]
    %v343 = vld [vmem:[#allocation8 + $0x90] sm:$0xff]
    %v344 = vld [vmem:[#allocation8 + $0x98] sm:$0xff]
    %v345 = vld [vmem:[#allocation8 + $0xa0] sm:$0xff]
    %v346 = vld [vmem:[#allocation8 + $0xa8] sm:$0xff]
    %v347 = vld [vmem:[#allocation8 + $0xb0] sm:$0xff]
    %v348 = vld [vmem:[#allocation8 + $0xb8] sm:$0xff]
    %v349 = vld [vmem:[#allocation8 + $0xc0] sm:$0xff]
    %v350 = vld [vmem:[#allocation8 + $0xc8] sm:$0xff]
    %v351 = vld [vmem:[#allocation8 + $0xd0] sm:$0xff]
    %v352 = vld [vmem:[#allocation8 + $0xd8] sm:$0xff]
    %v353 = vld [vmem:[#allocation8 + $0xe0] sm:$0xff]
    %v354 = vld [vmem:[#allocation8 + $0xe8] sm:$0xff]
    %v355 = vld [vmem:[#allocation8 + $0xf0] sm:$0xff]
    %v356 = vld [vmem:[#allocation8 + $0xf8] sm:$0xff]
    %v389 = vunpack.c.l.b16 %v325
    %v390 = vunpack.c.h.b16 %v325
    %v391 = vunpack.c.l.b16 %v326
    %v392 = vunpack.c.h.b16 %v326
    %v393 = vunpack.c.l.b16 %v327
    %v394 = vunpack.c.h.b16 %v327
    %v395 = vunpack.c.l.b16 %v328
    %v396 = vunpack.c.h.b16 %v328
    %v397 = vunpack.c.l.b16 %v329
    %v398 = vunpack.c.h.b16 %v329
    %v399 = vunpack.c.l.b16 %v330
    %v400 = vunpack.c.h.b16 %v330
    %v401 = vunpack.c.l.b16 %v331
    %v402 = vunpack.c.h.b16 %v331
    %v403 = vunpack.c.l.b16 %v332
    %v404 = vunpack.c.h.b16 %v332
    %v405 = vunpack.c.l.b16 %v333
    %v406 = vunpack.c.h.b16 %v333
    %v407 = vunpack.c.l.b16 %v334
    %v408 = vunpack.c.h.b16 %v334
    %v409 = vunpack.c.l.b16 %v335
    %v410 = vunpack.c.h.b16 %v335
    %v411 = vunpack.c.l.b16 %v336
    %v412 = vunpack.c.h.b16 %v336
    %v413 = vunpack.c.l.b16 %v337
    %v414 = vunpack.c.h.b16 %v337
    %v415 = vunpack.c.l.b16 %v338
    %v416 = vunpack.c.h.b16 %v338
    %v417 = vunpack.c.l.b16 %v339
    %v418 = vunpack.c.h.b16 %v339
    %v419 = vunpack.c.l.b16 %v340
    %v420 = vunpack.c.h.b16 %v340
    %v421 = vunpack.c.l.b16 %v341
    %v422 = vunpack.c.h.b16 %v341
    %v423 = vunpack.c.l.b16 %v342
    %v424 = vunpack.c.h.b16 %v342
    %v425 = vunpack.c.l.b16 %v343
    %v426 = vunpack.c.h.b16 %v343
    %v427 = vunpack.c.l.b16 %v344
    %v428 = vunpack.c.h.b16 %v344
    %v429 = vunpack.c.l.b16 %v345
    %v430 = vunpack.c.h.b16 %v345
    %v431 = vunpack.c.l.b16 %v346
    %v432 = vunpack.c.h.b16 %v346
    %v433 = vunpack.c.l.b16 %v347
    %v434 = vunpack.c.h.b16 %v347
    %v435 = vunpack.c.l.b16 %v348
    %v436 = vunpack.c.h.b16 %v348
    %v437 = vunpack.c.l.b16 %v349
    %v438 = vunpack.c.h.b16 %v349
    %v439 = vunpack.c.l.b16 %v350
    %v440 = vunpack.c.h.b16 %v350
    %v441 = vunpack.c.l.b16 %v351
    %v442 = vunpack.c.h.b16 %v351
    %v443 = vunpack.c.l.b16 %v352
    %v444 = vunpack.c.h.b16 %v352
    %v445 = vunpack.c.l.b16 %v353
    %v446 = vunpack.c.h.b16 %v353
    %v447 = vunpack.c.l.b16 %v354
    %v448 = vunpack.c.h.b16 %v354
    %v449 = vunpack.c.l.b16 %v355
    %v450 = vunpack.c.h.b16 %v355
    %v451 = vunpack.c.l.b16 %v356
    %v452 = vunpack.c.h.b16 %v356
    %v453 = vpack.c.b16 %v393, %v389
    %v454 = vpack.c.b16 %v394, %v390
    %v455 = vpack.c.b16 %v395, %v391
    %v456 = vpack.c.b16 %v396, %v392
    %v457 = vpack.c.b16 %v401, %v397
    %v458 = vpack.c.b16 %v402, %v398
    %v459 = vpack.c.b16 %v403, %v399
    %v460 = vpack.c.b16 %v404, %v400
    %v461 = vpack.c.b16 %v409, %v405
    %v462 = vpack.c.b16 %v410, %v406
    %v463 = vpack.c.b16 %v411, %v407
    %v464 = vpack.c.b16 %v412, %v408
    %v465 = vpack.c.b16 %v417, %v413
    %v466 = vpack.c.b16 %v418, %v414
    %v467 = vpack.c.b16 %v419, %v415
    %v468 = vpack.c.b16 %v420, %v416
    %v469 = vpack.c.b16 %v425, %v421
    %v470 = vpack.c.b16 %v426, %v422
    %v471 = vpack.c.b16 %v427, %v423
    %v472 = vpack.c.b16 %v428, %v424
    %v473 = vpack.c.b16 %v433, %v429
    %v474 = vpack.c.b16 %v434, %v430
    %v475 = vpack.c.b16 %v435, %v431
    %v476 = vpack.c.b16 %v436, %v432
    %v477 = vpack.c.b16 %v441, %v437
    %v478 = vpack.c.b16 %v442, %v438
    %v479 = vpack.c.b16 %v443, %v439
    %v480 = vpack.c.b16 %v444, %v440
    %v481 = vpack.c.b16 %v449, %v445
    %v482 = vpack.c.b16 %v450, %v446
    %v483 = vpack.c.b16 %v451, %v447
    %v484 = vpack.c.b16 %v452, %v448
    %517 = vmatprep.subr.bf16.mxu0 %v454
    %518 = vmatpush1.bf16.msra.mxu0 %v453
    %519 = vmatprep.subr.bf16.mxu0 %v458
    %520 = vmatpush1.bf16.msra.mxu0 %v457
    %521 = vmatprep.subr.bf16.mxu0 %v462
    %522 = vmatpush1.bf16.msra.mxu0 %v461
    %523 = vmatprep.subr.bf16.mxu0 %v466
    %524 = vmatpush1.bf16.msra.mxu0 %v465
    %525 = vmatprep.subr.bf16.mxu0 %v470
    %526 = vmatpush1.bf16.msra.mxu0 %v469
    %527 = vmatprep.subr.bf16.mxu0 %v474
    %528 = vmatpush1.bf16.msra.mxu0 %v473
    %529 = vmatprep.subr.bf16.mxu0 %v478
    %530 = vmatpush1.bf16.msra.mxu0 %v477
    %531 = vmatprep.subr.bf16.mxu0 %v482
    %532 = vmatpush1.bf16.msra.mxu0 %v481
    %533 = vmatprep.subr.bf16.mxu0 0
    %534 = vmatpush1.bf16.msra.mxu0 0
    %535 = vmatprep.subr.bf16.mxu0 0
    %536 = vmatpush1.bf16.msra.mxu0 0
    %537 = vmatprep.subr.bf16.mxu0 0
    %538 = vmatpush1.bf16.msra.mxu0 0
    %539 = vmatprep.subr.bf16.mxu0 0
    %540 = vmatpush1.bf16.msra.mxu0 0
    %541 = vmatprep.subr.bf16.mxu0 0
    %542 = vmatpush1.bf16.msra.mxu0 0
    %543 = vmatprep.subr.bf16.mxu0 0
    %544 = vmatpush1.bf16.msra.mxu0 0
    %545 = vmatprep.subr.bf16.mxu0 0
    %546 = vmatpush1.bf16.msra.mxu0 0
    %547 = vmatprep.subr.bf16.mxu0 0
    %548 = vmatpush1.bf16.msra.mxu0 0
    %549 = vmatprep.mubr.bf16.mxu0 0
    %550 = vmatmul.mubr.bf16.gmra.mrb[0].mxu0 %v324
    %v551 = vpop.f32.mrb[0].mxu0
    %v552 = vadd.f32 0.0, %v551
    %v553 = vpop.f32.mrb[0].mxu0
    %v554 = vadd.f32 0.0, %v553
    %v555 = vpop.f32.mrb[0].mxu0
    %v556 = vpop.f32.mrb[0].mxu0
    %557 = vdwg.mxu0
    %558 = vmatprep.subr.bf16.mxu0 %v456
    %559 = vmatpush1.bf16.msra.mxu0 %v455
    %560 = vmatprep.subr.bf16.mxu0 %v460
    %561 = vmatpush1.bf16.msra.mxu0 %v459
    %562 = vmatprep.subr.bf16.mxu0 %v464
    %563 = vmatpush1.bf16.msra.mxu0 %v463
    %564 = vmatprep.subr.bf16.mxu0 %v468
    %565 = vmatpush1.bf16.msra.mxu0 %v467
    %566 = vmatprep.subr.bf16.mxu0 %v472
    %567 = vmatpush1.bf16.msra.mxu0 %v471
    %568 = vmatprep.subr.bf16.mxu0 %v476
    %569 = vmatpush1.bf16.msra.mxu0 %v475
    %570 = vmatprep.subr.bf16.mxu0 %v480
    %571 = vmatpush1.bf16.msra.mxu0 %v479
    %572 = vmatprep.subr.bf16.mxu0 %v484
    %573 = vmatpush1.bf16.msra.mxu0 %v483
    %574 = vmatprep.subr.bf16.mxu0 0
    %575 = vmatpush1.bf16.msra.mxu0 0
    %576 = vmatprep.subr.bf16.mxu0 0
    %577 = vmatpush1.bf16.msra.mxu0 0
    %578 = vmatprep.subr.bf16.mxu0 0
    %579 = vmatpush1.bf16.msra.mxu0 0
    %580 = vmatprep.subr.bf16.mxu0 0
    %581 = vmatpush1.bf16.msra.mxu0 0
    %582 = vmatprep.subr.bf16.mxu0 0
    %583 = vmatpush1.bf16.msra.mxu0 0
    %584 = vmatprep.subr.bf16.mxu0 0
    %585 = vmatpush1.bf16.msra.mxu0 0
    %586 = vmatprep.subr.bf16.mxu0 0
    %587 = vmatpush1.bf16.msra.mxu0 0
    %588 = vmatprep.subr.bf16.mxu0 0
    %589 = vmatpush1.bf16.msra.mxu0 0
    %590 = vmatprep.mubr.bf16.mxu0 0
    %591 = vmatmul.mubr.bf16.gmra.mrb[0].mxu0 %v324
    %v592 = vpop.f32.mrb[0].mxu0
    %v593 = vadd.f32 0.0, %v592
    %v594 = vpop.f32.mrb[0].mxu0
    %v595 = vadd.f32 0.0, %v594
    %v596 = vpop.f32.mrb[0].mxu0
    %v597 = vpop.f32.mrb[0].mxu0
    %598 = vdwg.mxu0
    %v599 = vadd.f32 %v320, %v552
    %v600 = vadd.f32 %v321, %v554
    %v601 = vadd.f32 %v322, %v593
    %v602 = vadd.f32 %v323, %v595
    %v603 = vmul.f32 %v599, 0.5
    %v604 = vtanh.pop %v603
    %v605 = vmul.f32 %v604, 0.5
    %v606 = vadd.f32 %v605, 0.5
    %v607 = vmul.f32 %v600, 0.5
    %v608 = vtanh.pop %v607
    %v609 = vmul.f32 %v608, 0.5
    %v610 = vadd.f32 %v609, 0.5
    %v611 = vtanh.pop %v601
    %v612 = vmul.f32 %v602, 0.5
    %v613 = vtanh.pop %v612
    %v614 = vmul.f32 %v613, 0.5
    %v615 = vadd.f32 %v614, 0.5
    %v616 = vmul.f32 %v610, %v316
    %v617 = vmul.f32 %v606, %v611
    %v618 = vadd.f32 %v616, %v617
    %v619 = vtanh.pop %v618
    %v620 = vmul.f32 %v615, %v619
    %621 = vst [vmem:[#allocation5] sm:$0xff] %v620
    %s622 = smul.u32 1, 4
    %s623 = smul.addr %s622, 8
    %s624 = scalar_lea.vmem [#allocation4], %s623
    %v625 = vld [vmem:[%s624] sm:$0xff]
    %v626 = vld [vmem:[%s624 + $0x8] sm:$0xff]
    %v627 = vld [vmem:[%s624 + $0x10] sm:$0xff]
    %v628 = vld [vmem:[%s624 + $0x18] sm:$0xff]
    %v629 = vpack.c.bf16 %v620, %v620
    %v630 = vld [vmem:[#allocation8] sm:$0xff]
    %v631 = vld [vmem:[#allocation8 + $0x8] sm:$0xff]
    %v632 = vld [vmem:[#allocation8 + $0x10] sm:$0xff]
    %v633 = vld [vmem:[#allocation8 + $0x18] sm:$0xff]
    %v634 = vld [vmem:[#allocation8 + $0x20] sm:$0xff]
    %v635 = vld [vmem:[#allocation8 + $0x28] sm:$0xff]
    %v636 = vld [vmem:[#allocation8 + $0x30] sm:$0xff]
    %v637 = vld [vmem:[#allocation8 + $0x38] sm:$0xff]
    %v638 = vld [vmem:[#allocation8 + $0x40] sm:$0xff]
    %v639 = vld [vmem:[#allocation8 + $0x48] sm:$0xff]
    %v640 = vld [vmem:[#allocation8 + $0x50] sm:$0xff]
    %v641 = vld [vmem:[#allocation8 + $0x58] sm:$0xff]
    %v642 = vld [vmem:[#allocation8 + $0x60] sm:$0xff]
    %v643 = vld [vmem:[#allocation8 + $0x68] sm:$0xff]
    %v644 = vld [vmem:[#allocation8 + $0x70] sm:$0xff]
    %v645 = vld [vmem:[#allocation8 + $0x78] sm:$0xff]
    %v646 = vld [vmem:[#allocation8 + $0x80] sm:$0xff]
    %v647 = vld [vmem:[#allocation8 + $0x88] sm:$0xff]
    %v648 = vld [vmem:[#allocation8 + $0x90] sm:$0xff]
    %v649 = vld [vmem:[#allocation8 + $0x98] sm:$0xff]
    %v650 = vld [vmem:[#allocation8 + $0xa0] sm:$0xff]
    %v651 = vld [vmem:[#allocation8 + $0xa8] sm:$0xff]
    %v652 = vld [vmem:[#allocation8 + $0xb0] sm:$0xff]
    %v653 = vld [vmem:[#allocation8 + $0xb8] sm:$0xff]
    %v654 = vld [vmem:[#allocation8 + $0xc0] sm:$0xff]
    %v655 = vld [vmem:[#allocation8 + $0xc8] sm:$0xff]
    %v656 = vld [vmem:[#allocation8 + $0xd0] sm:$0xff]
    %v657 = vld [vmem:[#allocation8 + $0xd8] sm:$0xff]
    %v658 = vld [vmem:[#allocation8 + $0xe0] sm:$0xff]
    %v659 = vld [vmem:[#allocation8 + $0xe8] sm:$0xff]
    %v660 = vld [vmem:[#allocation8 + $0xf0] sm:$0xff]
    %v661 = vld [vmem:[#allocation8 + $0xf8] sm:$0xff]
    %v694 = vunpack.c.l.b16 %v630
    %v695 = vunpack.c.h.b16 %v630
    %v696 = vunpack.c.l.b16 %v631
    %v697 = vunpack.c.h.b16 %v631
    %v698 = vunpack.c.l.b16 %v632
    %v699 = vunpack.c.h.b16 %v632
    %v700 = vunpack.c.l.b16 %v633
    %v701 = vunpack.c.h.b16 %v633
    %v702 = vunpack.c.l.b16 %v634
    %v703 = vunpack.c.h.b16 %v634
    %v704 = vunpack.c.l.b16 %v635
    %v705 = vunpack.c.h.b16 %v635
    %v706 = vunpack.c.l.b16 %v636
    %v707 = vunpack.c.h.b16 %v636
    %v708 = vunpack.c.l.b16 %v637
    %v709 = vunpack.c.h.b16 %v637
    %v710 = vunpack.c.l.b16 %v638
    %v711 = vunpack.c.h.b16 %v638
    %v712 = vunpack.c.l.b16 %v639
    %v713 = vunpack.c.h.b16 %v639
    %v714 = vunpack.c.l.b16 %v640
    %v715 = vunpack.c.h.b16 %v640
    %v716 = vunpack.c.l.b16 %v641
    %v717 = vunpack.c.h.b16 %v641
    %v718 = vunpack.c.l.b16 %v642
    %v719 = vunpack.c.h.b16 %v642
    %v720 = vunpack.c.l.b16 %v643
    %v721 = vunpack.c.h.b16 %v643
    %v722 = vunpack.c.l.b16 %v644
    %v723 = vunpack.c.h.b16 %v644
    %v724 = vunpack.c.l.b16 %v645
    %v725 = vunpack.c.h.b16 %v645
    %v726 = vunpack.c.l.b16 %v646
    %v727 = vunpack.c.h.b16 %v646
    %v728 = vunpack.c.l.b16 %v647
    %v729 = vunpack.c.h.b16 %v647
    %v730 = vunpack.c.l.b16 %v648
    %v731 = vunpack.c.h.b16 %v648
    %v732 = vunpack.c.l.b16 %v649
    %v733 = vunpack.c.h.b16 %v649
    %v734 = vunpack.c.l.b16 %v650
    %v735 = vunpack.c.h.b16 %v650
    %v736 = vunpack.c.l.b16 %v651
    %v737 = vunpack.c.h.b16 %v651
    %v738 = vunpack.c.l.b16 %v652
    %v739 = vunpack.c.h.b16 %v652
    %v740 = vunpack.c.l.b16 %v653
    %v741 = vunpack.c.h.b16 %v653
    %v742 = vunpack.c.l.b16 %v654
    %v743 = vunpack.c.h.b16 %v654
    %v744 = vunpack.c.l.b16 %v655
    %v745 = vunpack.c.h.b16 %v655
    %v746 = vunpack.c.l.b16 %v656
    %v747 = vunpack.c.h.b16 %v656
    %v748 = vunpack.c.l.b16 %v657
    %v749 = vunpack.c.h.b16 %v657
    %v750 = vunpack.c.l.b16 %v658
    %v751 = vunpack.c.h.b16 %v658
    %v752 = vunpack.c.l.b16 %v659
    %v753 = vunpack.c.h.b16 %v659
    %v754 = vunpack.c.l.b16 %v660
    %v755 = vunpack.c.h.b16 %v660
    %v756 = vunpack.c.l.b16 %v661
    %v757 = vunpack.c.h.b16 %v661
    %v758 = vpack.c.b16 %v698, %v694
    %v759 = vpack.c.b16 %v699, %v695
    %v760 = vpack.c.b16 %v700, %v696
    %v761 = vpack.c.b16 %v701, %v697
    %v762 = vpack.c.b16 %v706, %v702
    %v763 = vpack.c.b16 %v707, %v703
    %v764 = vpack.c.b16 %v708, %v704
    %v765 = vpack.c.b16 %v709, %v705
    %v766 = vpack.c.b16 %v714, %v710
    %v767 = vpack.c.b16 %v715, %v711
    %v768 = vpack.c.b16 %v716, %v712
    %v769 = vpack.c.b16 %v717, %v713
    %v770 = vpack.c.b16 %v722, %v718
    %v771 = vpack.c.b16 %v723, %v719
    %v772 = vpack.c.b16 %v724, %v720
    %v773 = vpack.c.b16 %v725, %v721
    %v774 = vpack.c.b16 %v730, %v726
    %v775 = vpack.c.b16 %v731, %v727
    %v776 = vpack.c.b16 %v732, %v728
    %v777 = vpack.c.b16 %v733, %v729
    %v778 = vpack.c.b16 %v738, %v734
    %v779 = vpack.c.b16 %v739, %v735
    %v780 = vpack.c.b16 %v740, %v736
    %v781 = vpack.c.b16 %v741, %v737
    %v782 = vpack.c.b16 %v746, %v742
    %v783 = vpack.c.b16 %v747, %v743
    %v784 = vpack.c.b16 %v748, %v744
    %v785 = vpack.c.b16 %v749, %v745
    %v786 = vpack.c.b16 %v754, %v750
    %v787 = vpack.c.b16 %v755, %v751
    %v788 = vpack.c.b16 %v756, %v752
    %v789 = vpack.c.b16 %v757, %v753
    %822 = vmatprep.subr.bf16.mxu0 %v759
    %823 = vmatpush1.bf16.msra.mxu0 %v758
    %824 = vmatprep.subr.bf16.mxu0 %v763
    %825 = vmatpush1.bf16.msra.mxu0 %v762
    %826 = vmatprep.subr.bf16.mxu0 %v767
    %827 = vmatpush1.bf16.msra.mxu0 %v766
    %828 = vmatprep.subr.bf16.mxu0 %v771
    %829 = vmatpush1.bf16.msra.mxu0 %v770
    %830 = vmatprep.subr.bf16.mxu0 %v775
    %831 = vmatpush1.bf16.msra.mxu0 %v774
    %832 = vmatprep.subr.bf16.mxu0 %v779
    %833 = vmatpush1.bf16.msra.mxu0 %v778
    %834 = vmatprep.subr.bf16.mxu0 %v783
    %835 = vmatpush1.bf16.msra.mxu0 %v782
    %836 = vmatprep.subr.bf16.mxu0 %v787
    %837 = vmatpush1.bf16.msra.mxu0 %v786
    %838 = vmatprep.subr.bf16.mxu0 0
    %839 = vmatpush1.bf16.msra.mxu0 0
    %840 = vmatprep.subr.bf16.mxu0 0
    %841 = vmatpush1.bf16.msra.mxu0 0
    %842 = vmatprep.subr.bf16.mxu0 0
    %843 = vmatpush1.bf16.msra.mxu0 0
    %844 = vmatprep.subr.bf16.mxu0 0
    %845 = vmatpush1.bf16.msra.mxu0 0
    %846 = vmatprep.subr.bf16.mxu0 0
    %847 = vmatpush1.bf16.msra.mxu0 0
    %848 = vmatprep.subr.bf16.mxu0 0
    %849 = vmatpush1.bf16.msra.mxu0 0
    %850 = vmatprep.subr.bf16.mxu0 0
    %851 = vmatpush1.bf16.msra.mxu0 0
    %852 = vmatprep.subr.bf16.mxu0 0
    %853 = vmatpush1.bf16.msra.mxu0 0
    %854 = vmatprep.mubr.bf16.mxu0 0
    %855 = vmatmul.mubr.bf16.gmra.mrb[0].mxu0 %v629
    %v856 = vpop.f32.mrb[0].mxu0
    %v857 = vadd.f32 0.0, %v856
    %v858 = vpop.f32.mrb[0].mxu0
    %v859 = vadd.f32 0.0, %v858
    %v860 = vpop.f32.mrb[0].mxu0
    %v861 = vpop.f32.mrb[0].mxu0
    %862 = vdwg.mxu0
    %863 = vmatprep.subr.bf16.mxu0 %v761
    %864 = vmatpush1.bf16.msra.mxu0 %v760
    %865 = vmatprep.subr.bf16.mxu0 %v765
    %866 = vmatpush1.bf16.msra.mxu0 %v764
    %867 = vmatprep.subr.bf16.mxu0 %v769
    %868 = vmatpush1.bf16.msra.mxu0 %v768
    %869 = vmatprep.subr.bf16.mxu0 %v773
    %870 = vmatpush1.bf16.msra.mxu0 %v772
    %871 = vmatprep.subr.bf16.mxu0 %v777
    %872 = vmatpush1.bf16.msra.mxu0 %v776
    %873 = vmatprep.subr.bf16.mxu0 %v781
    %874 = vmatpush1.bf16.msra.mxu0 %v780
    %875 = vmatprep.subr.bf16.mxu0 %v785
    %876 = vmatpush1.bf16.msra.mxu0 %v784
    %877 = vmatprep.subr.bf16.mxu0 %v789
    %878 = vmatpush1.bf16.msra.mxu0 %v788
    %879 = vmatprep.subr.bf16.mxu0 0
    %880 = vmatpush1.bf16.msra.mxu0 0
    %881 = vmatprep.subr.bf16.mxu0 0
    %882 = vmatpush1.bf16.msra.mxu0 0
    %883 = vmatprep.subr.bf16.mxu0 0
    %884 = vmatpush1.bf16.msra.mxu0 0
    %885 = vmatprep.subr.bf16.mxu0 0
    %886 = vmatpush1.bf16.msra.mxu0 0
    %887 = vmatprep.subr.bf16.mxu0 0
    %888 = vmatpush1.bf16.msra.mxu0 0
    %889 = vmatprep.subr.bf16.mxu0 0
    %890 = vmatpush1.bf16.msra.mxu0 0
    %891 = vmatprep.subr.bf16.mxu0 0
    %892 = vmatpush1.bf16.msra.mxu0 0
    %893 = vmatprep.subr.bf16.mxu0 0
    %894 = vmatpush1.bf16.msra.mxu0 0
    %895 = vmatprep.mubr.bf16.mxu0 0
    %896 = vmatmul.mubr.bf16.gmra.mrb[0].mxu0 %v629
    %v897 = vpop.f32.mrb[0].mxu0
    %v898 = vadd.f32 0.0, %v897
    %v899 = vpop.f32.mrb[0].mxu0
    %v900 = vadd.f32 0.0, %v899
    %v901 = vpop.f32.mrb[0].mxu0
    %v902 = vpop.f32.mrb[0].mxu0
    %903 = vdwg.mxu0
    %v904 = vadd.f32 %v625, %v857
    %v905 = vadd.f32 %v626, %v859
    %v906 = vadd.f32 %v627, %v898
    %v907 = vadd.f32 %v628, %v900
    %v908 = vmul.f32 %v904, 0.5
    %v909 = vtanh.pop %v908
    %v910 = vmul.f32 %v909, 0.5
    %v911 = vadd.f32 %v910, 0.5
    %v912 = vmul.f32 %v905, 0.5
    %v913 = vtanh.pop %v912
    %v914 = vmul.f32 %v913, 0.5
    %v915 = vadd.f32 %v914, 0.5
    %v916 = vtanh.pop %v906
    %v917 = vmul.f32 %v907, 0.5
    %v918 = vtanh.pop %v917
    %v919 = vmul.f32 %v918, 0.5
    %v920 = vadd.f32 %v919, 0.5
    %v921 = vmul.f32 %v915, %v618
    %v922 = vmul.f32 %v911, %v916
    %v923 = vadd.f32 %v921, %v922
    %v924 = vtanh.pop %v923
    %v925 = vmul.f32 %v920, %v924
    %s926 = scalar_lea.vmem [#allocation5], 8
    %927 = vst [vmem:[%s926] sm:$0xff] %v925
    %s928 = smul.u32 2, 4
    %s929 = smul.addr %s928, 8
    %s930 = scalar_lea.vmem [#allocation4], %s929
    %v931 = vld [vmem:[%s930] sm:$0xff]
    %v932 = vld [vmem:[%s930 + $0x8] sm:$0xff]
    %v933 = vld [vmem:[%s930 + $0x10] sm:$0xff]
    %v934 = vld [vmem:[%s930 + $0x18] sm:$0xff]
    %v935 = vpack.c.bf16 %v925, %v925
    %v936 = vld [vmem:[#allocation8] sm:$0xff]
    %v937 = vld [vmem:[#allocation8 + $0x8] sm:$0xff]
    %v938 = vld [vmem:[#allocation8 + $0x10] sm:$0xff]
    %v939 = vld [vmem:[#allocation8 + $0x18] sm:$0xff]
    %v940 = vld [vmem:[#allocation8 + $0x20] sm:$0xff]
    %v941 = vld [vmem:[#allocation8 + $0x28] sm:$0xff]
    %v942 = vld [vmem:[#allocation8 + $0x30] sm:$0xff]
    %v943 = vld [vmem:[#allocation8 + $0x38] sm:$0xff]
    %v944 = vld [vmem:[#allocation8 + $0x40] sm:$0xff]
    %v945 = vld [vmem:[#allocation8 + $0x48] sm:$0xff]
    %v946 = vld [vmem:[#allocation8 + $0x50] sm:$0xff]
    %v947 = vld [vmem:[#allocation8 + $0x58] sm:$0xff]
    %v948 = vld [vmem:[#allocation8 + $0x60] sm:$0xff]
    %v949 = vld [vmem:[#allocation8 + $0x68] sm:$0xff]
    %v950 = vld [vmem:[#allocation8 + $0x70] sm:$0xff]
    %v951 = vld [vmem:[#allocation8 + $0x78] sm:$0xff]
    %v952 = vld [vmem:[#allocation8 + $0x80] sm:$0xff]
    %v953 = vld [vmem:[#allocation8 + $0x88] sm:$0xff]
    %v954 = vld [vmem:[#allocation8 + $0x90] sm:$0xff]
    %v955 = vld [vmem:[#allocation8 + $0x98] sm:$0xff]
    %v956 = vld [vmem:[#allocation8 + $0xa0] sm:$0xff]
    %v957 = vld [vmem:[#allocation8 + $0xa8] sm:$0xff]
    %v958 = vld [vmem:[#allocation8 + $0xb0] sm:$0xff]
    %v959 = vld [vmem:[#allocation8 + $0xb8] sm:$0xff]
    %v960 = vld [vmem:[#allocation8 + $0xc0] sm:$0xff]
    %v961 = vld [vmem:[#allocation8 + $0xc8] sm:$0xff]
    %v962 = vld [vmem:[#allocation8 + $0xd0] sm:$0xff]
    %v963 = vld [vmem:[#allocation8 + $0xd8] sm:$0xff]
    %v964 = vld [vmem:[#allocation8 + $0xe0] sm:$0xff]
    %v965 = vld [vmem:[#allocation8 + $0xe8] sm:$0xff]
    %v966 = vld [vmem:[#allocation8 + $0xf0] sm:$0xff]
    %v967 = vld [vmem:[#allocation8 + $0xf8] sm:$0xff]
    %v1000 = vunpack.c.l.b16 %v936
    %v1001 = vunpack.c.h.b16 %v936
    %v1002 = vunpack.c.l.b16 %v937
    %v1003 = vunpack.c.h.b16 %v937
    %v1004 = vunpack.c.l.b16 %v938
    %v1005 = vunpack.c.h.b16 %v938
    %v1006 = vunpack.c.l.b16 %v939
    %v1007 = vunpack.c.h.b16 %v939
    %v1008 = vunpack.c.l.b16 %v940
    %v1009 = vunpack.c.h.b16 %v940
    %v1010 = vunpack.c.l.b16 %v941
    %v1011 = vunpack.c.h.b16 %v941
    %v1012 = vunpack.c.l.b16 %v942
    %v1013 = vunpack.c.h.b16 %v942
    %v1014 = vunpack.c.l.b16 %v943
    %v1015 = vunpack.c.h.b16 %v943
    %v1016 = vunpack.c.l.b16 %v944
    %v1017 = vunpack.c.h.b16 %v944
    %v1018 = vunpack.c.l.b16 %v945
    %v1019 = vunpack.c.h.b16 %v945
    %v1020 = vunpack.c.l.b16 %v946
    %v1021 = vunpack.c.h.b16 %v946
    %v1022 = vunpack.c.l.b16 %v947
    %v1023 = vunpack.c.h.b16 %v947
    %v1024 = vunpack.c.l.b16 %v948
    %v1025 = vunpack.c.h.b16 %v948
    %v1026 = vunpack.c.l.b16 %v949
    %v1027 = vunpack.c.h.b16 %v949
    %v1028 = vunpack.c.l.b16 %v950
    %v1029 = vunpack.c.h.b16 %v950
    %v1030 = vunpack.c.l.b16 %v951
    %v1031 = vunpack.c.h.b16 %v951
    %v1032 = vunpack.c.l.b16 %v952
    %v1033 = vunpack.c.h.b16 %v952
    %v1034 = vunpack.c.l.b16 %v953
    %v1035 = vunpack.c.h.b16 %v953
    %v1036 = vunpack.c.l.b16 %v954
    %v1037 = vunpack.c.h.b16 %v954
    %v1038 = vunpack.c.l.b16 %v955
    %v1039 = vunpack.c.h.b16 %v955
    %v1040 = vunpack.c.l.b16 %v956
    %v1041 = vunpack.c.h.b16 %v956
    %v1042 = vunpack.c.l.b16 %v957
    %v1043 = vunpack.c.h.b16 %v957
    %v1044 = vunpack.c.l.b16 %v958
    %v1045 = vunpack.c.h.b16 %v958
    %v1046 = vunpack.c.l.b16 %v959
    %v1047 = vunpack.c.h.b16 %v959
    %v1048 = vunpack.c.l.b16 %v960
    %v1049 = vunpack.c.h.b16 %v960
    %v1050 = vunpack.c.l.b16 %v961
    %v1051 = vunpack.c.h.b16 %v961
    %v1052 = vunpack.c.l.b16 %v962
    %v1053 = vunpack.c.h.b16 %v962
    %v1054 = vunpack.c.l.b16 %v963
    %v1055 = vunpack.c.h.b16 %v963
    %v1056 = vunpack.c.l.b16 %v964
    %v1057 = vunpack.c.h.b16 %v964
    %v1058 = vunpack.c.l.b16 %v965
    %v1059 = vunpack.c.h.b16 %v965
    %v1060 = vunpack.c.l.b16 %v966
    %v1061 = vunpack.c.h.b16 %v966
    %v1062 = vunpack.c.l.b16 %v967
    %v1063 = vunpack.c.h.b16 %v967
    %v1064 = vpack.c.b16 %v1004, %v1000
    %v1065 = vpack.c.b16 %v1005, %v1001
    %v1066 = vpack.c.b16 %v1006, %v1002
    %v1067 = vpack.c.b16 %v1007, %v1003
    %v1068 = vpack.c.b16 %v1012, %v1008
    %v1069 = vpack.c.b16 %v1013, %v1009
    %v1070 = vpack.c.b16 %v1014, %v1010
    %v1071 = vpack.c.b16 %v1015, %v1011
    %v1072 = vpack.c.b16 %v1020, %v1016
    %v1073 = vpack.c.b16 %v1021, %v1017
    %v1074 = vpack.c.b16 %v1022, %v1018
    %v1075 = vpack.c.b16 %v1023, %v1019
    %v1076 = vpack.c.b16 %v1028, %v1024
    %v1077 = vpack.c.b16 %v1029, %v1025
    %v1078 = vpack.c.b16 %v1030, %v1026
    %v1079 = vpack.c.b16 %v1031, %v1027
    %v1080 = vpack.c.b16 %v1036, %v1032
    %v1081 = vpack.c.b16 %v1037, %v1033
    %v1082 = vpack.c.b16 %v1038, %v1034
    %v1083 = vpack.c.b16 %v1039, %v1035
    %v1084 = vpack.c.b16 %v1044, %v1040
    %v1085 = vpack.c.b16 %v1045, %v1041
    %v1086 = vpack.c.b16 %v1046, %v1042
    %v1087 = vpack.c.b16 %v1047, %v1043
    %v1088 = vpack.c.b16 %v1052, %v1048
    %v1089 = vpack.c.b16 %v1053, %v1049
    %v1090 = vpack.c.b16 %v1054, %v1050
    %v1091 = vpack.c.b16 %v1055, %v1051
    %v1092 = vpack.c.b16 %v1060, %v1056
    %v1093 = vpack.c.b16 %v1061, %v1057
    %v1094 = vpack.c.b16 %v1062, %v1058
    %v1095 = vpack.c.b16 %v1063, %v1059
    %1128 = vmatprep.subr.bf16.mxu0 %v1065
    %1129 = vmatpush1.bf16.msra.mxu0 %v1064
    %1130 = vmatprep.subr.bf16.mxu0 %v1069
    %1131 = vmatpush1.bf16.msra.mxu0 %v1068
    %1132 = vmatprep.subr.bf16.mxu0 %v1073
    %1133 = vmatpush1.bf16.msra.mxu0 %v1072
    %1134 = vmatprep.subr.bf16.mxu0 %v1077
    %1135 = vmatpush1.bf16.msra.mxu0 %v1076
    %1136 = vmatprep.subr.bf16.mxu0 %v1081
    %1137 = vmatpush1.bf16.msra.mxu0 %v1080
    %1138 = vmatprep.subr.bf16.mxu0 %v1085
    %1139 = vmatpush1.bf16.msra.mxu0 %v1084
    %1140 = vmatprep.subr.bf16.mxu0 %v1089
    %1141 = vmatpush1.bf16.msra.mxu0 %v1088
    %1142 = vmatprep.subr.bf16.mxu0 %v1093
    %1143 = vmatpush1.bf16.msra.mxu0 %v1092
    %1144 = vmatprep.subr.bf16.mxu0 0
    %1145 = vmatpush1.bf16.msra.mxu0 0
    %1146 = vmatprep.subr.bf16.mxu0 0
    %1147 = vmatpush1.bf16.msra.mxu0 0
    %1148 = vmatprep.subr.bf16.mxu0 0
    %1149 = vmatpush1.bf16.msra.mxu0 0
    %1150 = vmatprep.subr.bf16.mxu0 0
    %1151 = vmatpush1.bf16.msra.mxu0 0
    %1152 = vmatprep.subr.bf16.mxu0 0
    %1153 = vmatpush1.bf16.msra.mxu0 0
    %1154 = vmatprep.subr.bf16.mxu0 0
    %1155 = vmatpush1.bf16.msra.mxu0 0
    %1156 = vmatprep.subr.bf16.mxu0 0
    %1157 = vmatpush1.bf16.msra.mxu0 0
    %1158 = vmatprep.subr.bf16.mxu0 0
    %1159 = vmatpush1.bf16.msra.mxu0 0
    %1160 = vmatprep.mubr.bf16.mxu0 0
    %1161 = vmatmul.mubr.bf16.gmra.mrb[0].mxu0 %v935
    %v1162 = vpop.f32.mrb[0].mxu0
    %v1163 = vadd.f32 0.0, %v1162
    %v1164 = vpop.f32.mrb[0].mxu0
    %v1165 = vadd.f32 0.0, %v1164
    %v1166 = vpop.f32.mrb[0].mxu0
    %v1167 = vpop.f32.mrb[0].mxu0
    %1168 = vdwg.mxu0
    %1169 = vmatprep.subr.bf16.mxu0 %v1067
    %1170 = vmatpush1.bf16.msra.mxu0 %v1066
    %1171 = vmatprep.subr.bf16.mxu0 %v1071
    %1172 = vmatpush1.bf16.msra.mxu0 %v1070
    %1173 = vmatprep.subr.bf16.mxu0 %v1075
    %1174 = vmatpush1.bf16.msra.mxu0 %v1074
    %1175 = vmatprep.subr.bf16.mxu0 %v1079
    %1176 = vmatpush1.bf16.msra.mxu0 %v1078
    %1177 = vmatprep.subr.bf16.mxu0 %v1083
    %1178 = vmatpush1.bf16.msra.mxu0 %v1082
    %1179 = vmatprep.subr.bf16.mxu0 %v1087
    %1180 = vmatpush1.bf16.msra.mxu0 %v1086
    %1181 = vmatprep.subr.bf16.mxu0 %v1091
    %1182 = vmatpush1.bf16.msra.mxu0 %v1090
    %1183 = vmatprep.subr.bf16.mxu0 %v1095
    %1184 = vmatpush1.bf16.msra.mxu0 %v1094
    %1185 = vmatprep.subr.bf16.mxu0 0
    %1186 = vmatpush1.bf16.msra.mxu0 0
    %1187 = vmatprep.subr.bf16.mxu0 0
    %1188 = vmatpush1.bf16.msra.mxu0 0
    %1189 = vmatprep.subr.bf16.mxu0 0
    %1190 = vmatpush1.bf16.msra.mxu0 0
    %1191 = vmatprep.subr.bf16.mxu0 0
    %1192 = vmatpush1.bf16.msra.mxu0 0
    %1193 = vmatprep.subr.bf16.mxu0 0
    %1194 = vmatpush1.bf16.msra.mxu0 0
    %1195 = vmatprep.subr.bf16.mxu0 0
    %1196 = vmatpush1.bf16.msra.mxu0 0
    %1197 = vmatprep.subr.bf16.mxu0 0
    %1198 = vmatpush1.bf16.msra.mxu0 0
    %1199 = vmatprep.subr.bf16.mxu0 0
    %1200 = vmatpush1.bf16.msra.mxu0 0
    %1201 = vmatprep.mubr.bf16.mxu0 0
    %1202 = vmatmul.mubr.bf16.gmra.mrb[0].mxu0 %v935
    %v1203 = vpop.f32.mrb[0].mxu0
    %v1204 = vadd.f32 0.0, %v1203
    %v1205 = vpop.f32.mrb[0].mxu0
    %v1206 = vadd.f32 0.0, %v1205
    %v1207 = vpop.f32.mrb[0].mxu0
    %v1208 = vpop.f32.mrb[0].mxu0
    %1209 = vdwg.mxu0
    %v1210 = vadd.f32 %v931, %v1163
    %v1211 = vadd.f32 %v932, %v1165
    %v1212 = vadd.f32 %v933, %v1204
    %v1213 = vadd.f32 %v934, %v1206
    %v1214 = vmul.f32 %v1210, 0.5
    %v1215 = vtanh.pop %v1214
    %v1216 = vmul.f32 %v1215, 0.5
    %v1217 = vadd.f32 %v1216, 0.5
    %v1218 = vmul.f32 %v1211, 0.5
    %v1219 = vtanh.pop %v1218
    %v1220 = vmul.f32 %v1219, 0.5
    %v1221 = vadd.f32 %v1220, 0.5
    %v1222 = vtanh.pop %v1212
    %v1223 = vmul.f32 %v1213, 0.5
    %v1224 = vtanh.pop %v1223
    %v1225 = vmul.f32 %v1224, 0.5
    %v1226 = vadd.f32 %v1225, 0.5
    %v1227 = vmul.f32 %v1221, %v923
    %v1228 = vmul.f32 %v1217, %v1222
    %v1229 = vadd.f32 %v1227, %v1228
    %v1230 = vtanh.pop %v1229
    %v1231 = vmul.f32 %v1226, %v1230
    %s1232 = scalar_lea.vmem [#allocation5], 16
    %1233 = vst [vmem:[%s1232] sm:$0xff] %v1231
    %s1234 = smul.u32 3, 4
    %s1235 = smul.addr %s1234, 8
    %s1236 = scalar_lea.vmem [#allocation4], %s1235
    %v1237 = vld [vmem:[%s1236] sm:$0xff]
    %v1238 = vld [vmem:[%s1236 + $0x8] sm:$0xff]
    %v1239 = vld [vmem:[%s1236 + $0x10] sm:$0xff]
    %v1240 = vld [vmem:[%s1236 + $0x18] sm:$0xff]
    %v1241 = vpack.c.bf16 %v1231, %v1231
    %v1242 = vld [vmem:[#allocation8] sm:$0xff]
    %v1243 = vld [vmem:[#allocation8 + $0x8] sm:$0xff]
    %v1244 = vld [vmem:[#allocation8 + $0x10] sm:$0xff]
    %v1245 = vld [vmem:[#allocation8 + $0x18] sm:$0xff]
    %v1246 = vld [vmem:[#allocation8 + $0x20] sm:$0xff]
    %v1247 = vld [vmem:[#allocation8 + $0x28] sm:$0xff]
    %v1248 = vld [vmem:[#allocation8 + $0x30] sm:$0xff]
    %v1249 = vld [vmem:[#allocation8 + $0x38] sm:$0xff]
    %v1250 = vld [vmem:[#allocation8 + $0x40] sm:$0xff]
    %v1251 = vld [vmem:[#allocation8 + $0x48] sm:$0xff]
    %v1252 = vld [vmem:[#allocation8 + $0x50] sm:$0xff]
    %v1253 = vld [vmem:[#allocation8 + $0x58] sm:$0xff]
    %v1254 = vld [vmem:[#allocation8 + $0x60] sm:$0xff]
    %v1255 = vld [vmem:[#allocation8 + $0x68] sm:$0xff]
    %v1256 = vld [vmem:[#allocation8 + $0x70] sm:$0xff]
    %v1257 = vld [vmem:[#allocation8 + $0x78] sm:$0xff]
    %v1258 = vld [vmem:[#allocation8 + $0x80] sm:$0xff]
    %v1259 = vld [vmem:[#allocation8 + $0x88] sm:$0xff]
    %v1260 = vld [vmem:[#allocation8 + $0x90] sm:$0xff]
    %v1261 = vld [vmem:[#allocation8 + $0x98] sm:$0xff]
    %v1262 = vld [vmem:[#allocation8 + $0xa0] sm:$0xff]
    %v1263 = vld [vmem:[#allocation8 + $0xa8] sm:$0xff]
    %v1264 = vld [vmem:[#allocation8 + $0xb0] sm:$0xff]
    %v1265 = vld [vmem:[#allocation8 + $0xb8] sm:$0xff]
    %v1266 = vld [vmem:[#allocation8 + $0xc0] sm:$0xff]
    %v1267 = vld [vmem:[#allocation8 + $0xc8] sm:$0xff]
    %v1268 = vld [vmem:[#allocation8 + $0xd0] sm:$0xff]
    %v1269 = vld [vmem:[#allocation8 + $0xd8] sm:$0xff]
    %v1270 = vld [vmem:[#allocation8 + $0xe0] sm:$0xff]
    %v1271 = vld [vmem:[#allocation8 + $0xe8] sm:$0xff]
    %v1272 = vld [vmem:[#allocation8 + $0xf0] sm:$0xff]
    %v1273 = vld [vmem:[#allocation8 + $0xf8] sm:$0xff]
    %v1306 = vunpack.c.l.b16 %v1242
    %v1307 = vunpack.c.h.b16 %v1242
    %v1308 = vunpack.c.l.b16 %v1243
    %v1309 = vunpack.c.h.b16 %v1243
    %v1310 = vunpack.c.l.b16 %v1244
    %v1311 = vunpack.c.h.b16 %v1244
    %v1312 = vunpack.c.l.b16 %v1245
    %v1313 = vunpack.c.h.b16 %v1245
    %v1314 = vunpack.c.l.b16 %v1246
    %v1315 = vunpack.c.h.b16 %v1246
    %v1316 = vunpack.c.l.b16 %v1247
    %v1317 = vunpack.c.h.b16 %v1247
    %v1318 = vunpack.c.l.b16 %v1248
    %v1319 = vunpack.c.h.b16 %v1248
    %v1320 = vunpack.c.l.b16 %v1249
    %v1321 = vunpack.c.h.b16 %v1249
    %v1322 = vunpack.c.l.b16 %v1250
    %v1323 = vunpack.c.h.b16 %v1250
    %v1324 = vunpack.c.l.b16 %v1251
    %v1325 = vunpack.c.h.b16 %v1251
    %v1326 = vunpack.c.l.b16 %v1252
    %v1327 = vunpack.c.h.b16 %v1252
    %v1328 = vunpack.c.l.b16 %v1253
    %v1329 = vunpack.c.h.b16 %v1253
    %v1330 = vunpack.c.l.b16 %v1254
    %v1331 = vunpack.c.h.b16 %v1254
    %v1332 = vunpack.c.l.b16 %v1255
    %v1333 = vunpack.c.h.b16 %v1255
    %v1334 = vunpack.c.l.b16 %v1256
    %v1335 = vunpack.c.h.b16 %v1256
    %v1336 = vunpack.c.l.b16 %v1257
    %v1337 = vunpack.c.h.b16 %v1257
    %v1338 = vunpack.c.l.b16 %v1258
    %v1339 = vunpack.c.h.b16 %v1258
    %v1340 = vunpack.c.l.b16 %v1259
    %v1341 = vunpack.c.h.b16 %v1259
    %v1342 = vunpack.c.l.b16 %v1260
    %v1343 = vunpack.c.h.b16 %v1260
    %v1344 = vunpack.c.l.b16 %v1261
    %v1345 = vunpack.c.h.b16 %v1261
    %v1346 = vunpack.c.l.b16 %v1262
    %v1347 = vunpack.c.h.b16 %v1262
    %v1348 = vunpack.c.l.b16 %v1263
    %v1349 = vunpack.c.h.b16 %v1263
    %v1350 = vunpack.c.l.b16 %v1264
    %v1351 = vunpack.c.h.b16 %v1264
    %v1352 = vunpack.c.l.b16 %v1265
    %v1353 = vunpack.c.h.b16 %v1265
    %v1354 = vunpack.c.l.b16 %v1266
    %v1355 = vunpack.c.h.b16 %v1266
    %v1356 = vunpack.c.l.b16 %v1267
    %v1357 = vunpack.c.h.b16 %v1267
    %v1358 = vunpack.c.l.b16 %v1268
    %v1359 = vunpack.c.h.b16 %v1268
    %v1360 = vunpack.c.l.b16 %v1269
    %v1361 = vunpack.c.h.b16 %v1269
    %v1362 = vunpack.c.l.b16 %v1270
    %v1363 = vunpack.c.h.b16 %v1270
    %v1364 = vunpack.c.l.b16 %v1271
    %v1365 = vunpack.c.h.b16 %v1271
    %v1366 = vunpack.c.l.b16 %v1272
    %v1367 = vunpack.c.h.b16 %v1272
    %v1368 = vunpack.c.l.b16 %v1273
    %v1369 = vunpack.c.h.b16 %v1273
    %v1370 = vpack.c.b16 %v1310, %v1306
    %v1371 = vpack.c.b16 %v1311, %v1307
    %v1372 = vpack.c.b16 %v1312, %v1308
    %v1373 = vpack.c.b16 %v1313, %v1309
    %v1374 = vpack.c.b16 %v1318, %v1314
    %v1375 = vpack.c.b16 %v1319, %v1315
    %v1376 = vpack.c.b16 %v1320, %v1316
    %v1377 = vpack.c.b16 %v1321, %v1317
    %v1378 = vpack.c.b16 %v1326, %v1322
    %v1379 = vpack.c.b16 %v1327, %v1323
    %v1380 = vpack.c.b16 %v1328, %v1324
    %v1381 = vpack.c.b16 %v1329, %v1325
    %v1382 = vpack.c.b16 %v1334, %v1330
    %v1383 = vpack.c.b16 %v1335, %v1331
    %v1384 = vpack.c.b16 %v1336, %v1332
    %v1385 = vpack.c.b16 %v1337, %v1333
    %v1386 = vpack.c.b16 %v1342, %v1338
    %v1387 = vpack.c.b16 %v1343, %v1339
    %v1388 = vpack.c.b16 %v1344, %v1340
    %v1389 = vpack.c.b16 %v1345, %v1341
    %v1390 = vpack.c.b16 %v1350, %v1346
    %v1391 = vpack.c.b16 %v1351, %v1347
    %v1392 = vpack.c.b16 %v1352, %v1348
    %v1393 = vpack.c.b16 %v1353, %v1349
    %v1394 = vpack.c.b16 %v1358, %v1354
    %v1395 = vpack.c.b16 %v1359, %v1355
    %v1396 = vpack.c.b16 %v1360, %v1356
    %v1397 = vpack.c.b16 %v1361, %v1357
    %v1398 = vpack.c.b16 %v1366, %v1362
    %v1399 = vpack.c.b16 %v1367, %v1363
    %v1400 = vpack.c.b16 %v1368, %v1364
    %v1401 = vpack.c.b16 %v1369, %v1365
    %1434 = vmatprep.subr.bf16.mxu0 %v1371
    %1435 = vmatpush1.bf16.msra.mxu0 %v1370
    %1436 = vmatprep.subr.bf16.mxu0 %v1375
    %1437 = vmatpush1.bf16.msra.mxu0 %v1374
    %1438 = vmatprep.subr.bf16.mxu0 %v1379
    %1439 = vmatpush1.bf16.msra.mxu0 %v1378
    %1440 = vmatprep.subr.bf16.mxu0 %v1383
    %1441 = vmatpush1.bf16.msra.mxu0 %v1382
    %1442 = vmatprep.subr.bf16.mxu0 %v1387
    %1443 = vmatpush1.bf16.msra.mxu0 %v1386
    %1444 = vmatprep.subr.bf16.mxu0 %v1391
    %1445 = vmatpush1.bf16.msra.mxu0 %v1390
    %1446 = vmatprep.subr.bf16.mxu0 %v1395
    %1447 = vmatpush1.bf16.msra.mxu0 %v1394
    %1448 = vmatprep.subr.bf16.mxu0 %v1399
    %1449 = vmatpush1.bf16.msra.mxu0 %v1398
    %1450 = vmatprep.subr.bf16.mxu0 0
    %1451 = vmatpush1.bf16.msra.mxu0 0
    %1452 = vmatprep.subr.bf16.mxu0 0
    %1453 = vmatpush1.bf16.msra.mxu0 0
    %1454 = vmatprep.subr.bf16.mxu0 0
    %1455 = vmatpush1.bf16.msra.mxu0 0
    %1456 = vmatprep.subr.bf16.mxu0 0
    %1457 = vmatpush1.bf16.msra.mxu0 0
    %1458 = vmatprep.subr.bf16.mxu0 0
    %1459 = vmatpush1.bf16.msra.mxu0 0
    %1460 = vmatprep.subr.bf16.mxu0 0
    %1461 = vmatpush1.bf16.msra.mxu0 0
    %1462 = vmatprep.subr.bf16.mxu0 0
    %1463 = vmatpush1.bf16.msra.mxu0 0
    %1464 = vmatprep.subr.bf16.mxu0 0
    %1465 = vmatpush1.bf16.msra.mxu0 0
    %1466 = vmatprep.mubr.bf16.mxu0 0
    %1467 = vmatmul.mubr.bf16.gmra.mrb[0].mxu0 %v1241
    %v1468 = vpop.f32.mrb[0].mxu0
    %v1469 = vadd.f32 0.0, %v1468
    %v1470 = vpop.f32.mrb[0].mxu0
    %v1471 = vadd.f32 0.0, %v1470
    %v1472 = vpop.f32.mrb[0].mxu0
    %v1473 = vpop.f32.mrb[0].mxu0
    %1474 = vdwg.mxu0
    %1475 = vmatprep.subr.bf16.mxu0 %v1373
    %1476 = vmatpush1.bf16.msra.mxu0 %v1372
    %1477 = vmatprep.subr.bf16.mxu0 %v1377
    %1478 = vmatpush1.bf16.msra.mxu0 %v1376
    %1479 = vmatprep.subr.bf16.mxu0 %v1381
    %1480 = vmatpush1.bf16.msra.mxu0 %v1380
    %1481 = vmatprep.subr.bf16.mxu0 %v1385
    %1482 = vmatpush1.bf16.msra.mxu0 %v1384
    %1483 = vmatprep.subr.bf16.mxu0 %v1389
    %1484 = vmatpush1.bf16.msra.mxu0 %v1388
    %1485 = vmatprep.subr.bf16.mxu0 %v1393
    %1486 = vmatpush1.bf16.msra.mxu0 %v1392
    %1487 = vmatprep.subr.bf16.mxu0 %v1397
    %1488 = vmatpush1.bf16.msra.mxu0 %v1396
    %1489 = vmatprep.subr.bf16.mxu0 %v1401
    %1490 = vmatpush1.bf16.msra.mxu0 %v1400
    %1491 = vmatprep.subr.bf16.mxu0 0
    %1492 = vmatpush1.bf16.msra.mxu0 0
    %1493 = vmatprep.subr.bf16.mxu0 0
    %1494 = vmatpush1.bf16.msra.mxu0 0
    %1495 = vmatprep.subr.bf16.mxu0 0
    %1496 = vmatpush1.bf16.msra.mxu0 0
    %1497 = vmatprep.subr.bf16.mxu0 0
    %1498 = vmatpush1.bf16.msra.mxu0 0
    %1499 = vmatprep.subr.bf16.mxu0 0
    %1500 = vmatpush1.bf16.msra.mxu0 0
    %1501 = vmatprep.subr.bf16.mxu0 0
    %1502 = vmatpush1.bf16.msra.mxu0 0
    %1503 = vmatprep.subr.bf16.mxu0 0
    %1504 = vmatpush1.bf16.msra.mxu0 0
    %1505 = vmatprep.subr.bf16.mxu0 0
    %1506 = vmatpush1.bf16.msra.mxu0 0
    %1507 = vmatprep.mubr.bf16.mxu0 0
    %1508 = vmatmul.mubr.bf16.gmra.mrb[0].mxu0 %v1241
    %v1509 = vpop.f32.mrb[0].mxu0
    %v1510 = vadd.f32 0.0, %v1509
    %v1511 = vpop.f32.mrb[0].mxu0
    %v1512 = vadd.f32 0.0, %v1511
    %v1513 = vpop.f32.mrb[0].mxu0
    %v1514 = vpop.f32.mrb[0].mxu0
    %1515 = vdwg.mxu0
    %v1516 = vadd.f32 %v1237, %v1469
    %v1517 = vadd.f32 %v1238, %v1471
    %v1518 = vadd.f32 %v1239, %v1510
    %v1519 = vadd.f32 %v1240, %v1512
    %v1520 = vmul.f32 %v1516, 0.5
    %v1521 = vtanh.pop %v1520
    %v1522 = vmul.f32 %v1521, 0.5
    %v1523 = vadd.f32 %v1522, 0.5
    %v1524 = vmul.f32 %v1517, 0.5
    %v1525 = vtanh.pop %v1524
    %v1526 = vmul.f32 %v1525, 0.5
    %v1527 = vadd.f32 %v1526, 0.5
    %v1528 = vtanh.pop %v1518
    %v1529 = vmul.f32 %v1519, 0.5
    %v1530 = vtanh.pop %v1529
    %v1531 = vmul.f32 %v1530, 0.5
    %v1532 = vadd.f32 %v1531, 0.5
    %v1533 = vmul.f32 %v1527, %v1229
    %v1534 = vmul.f32 %v1523, %v1528
    %v1535 = vadd.f32 %v1533, %v1534
    %v1536 = vtanh.pop %v1535
    %v1537 = vmul.f32 %v1532, %v1536
    %s1538 = scalar_lea.vmem [#allocation5], 24
    %1539 = vst [vmem:[%s1538] sm:$0xff] %v1537
    %s1540 = smul.u32 4, 4
    %s1541 = smul.addr %s1540, 8
    %s1542 = scalar_lea.vmem [#allocation4], %s1541
    %v1543 = vld [vmem:[%s1542] sm:$0xff]
    %v1544 = vld [vmem:[%s1542 + $0x8] sm:$0xff]
    %v1545 = vld [vmem:[%s1542 + $0x10] sm:$0xff]
    %v1546 = vld [vmem:[%s1542 + $0x18] sm:$0xff]
    %v1547 = vpack.c.bf16 %v1537, %v1537
    %v1548 = vld [vmem:[#allocation8] sm:$0xff]
    %v1549 = vld [vmem:[#allocation8 + $0x8] sm:$0xff]
    %v1550 = vld [vmem:[#allocation8 + $0x10] sm:$0xff]
    %v1551 = vld [vmem:[#allocation8 + $0x18] sm:$0xff]
    %v1552 = vld [vmem:[#allocation8 + $0x20] sm:$0xff]
    %v1553 = vld [vmem:[#allocation8 + $0x28] sm:$0xff]
    %v1554 = vld [vmem:[#allocation8 + $0x30] sm:$0xff]
    %v1555 = vld [vmem:[#allocation8 + $0x38] sm:$0xff]
    %v1556 = vld [vmem:[#allocation8 + $0x40] sm:$0xff]
    %v1557 = vld [vmem:[#allocation8 + $0x48] sm:$0xff]
    %v1558 = vld [vmem:[#allocation8 + $0x50] sm:$0xff]
    %v1559 = vld [vmem:[#allocation8 + $0x58] sm:$0xff]
    %v1560 = vld [vmem:[#allocation8 + $0x60] sm:$0xff]
    %v1561 = vld [vmem:[#allocation8 + $0x68] sm:$0xff]
    %v1562 = vld [vmem:[#allocation8 + $0x70] sm:$0xff]
    %v1563 = vld [vmem:[#allocation8 + $0x78] sm:$0xff]
    %v1564 = vld [vmem:[#allocation8 + $0x80] sm:$0xff]
    %v1565 = vld [vmem:[#allocation8 + $0x88] sm:$0xff]
    %v1566 = vld [vmem:[#allocation8 + $0x90] sm:$0xff]
    %v1567 = vld [vmem:[#allocation8 + $0x98] sm:$0xff]
    %v1568 = vld [vmem:[#allocation8 + $0xa0] sm:$0xff]
    %v1569 = vld [vmem:[#allocation8 + $0xa8] sm:$0xff]
    %v1570 = vld [vmem:[#allocation8 + $0xb0] sm:$0xff]
    %v1571 = vld [vmem:[#allocation8 + $0xb8] sm:$0xff]
    %v1572 = vld [vmem:[#allocation8 + $0xc0] sm:$0xff]
    %v1573 = vld [vmem:[#allocation8 + $0xc8] sm:$0xff]
    %v1574 = vld [vmem:[#allocation8 + $0xd0] sm:$0xff]
    %v1575 = vld [vmem:[#allocation8 + $0xd8] sm:$0xff]
    %v1576 = vld [vmem:[#allocation8 + $0xe0] sm:$0xff]
    %v1577 = vld [vmem:[#allocation8 + $0xe8] sm:$0xff]
    %v1578 = vld [vmem:[#allocation8 + $0xf0] sm:$0xff]
    %v1579 = vld [vmem:[#allocation8 + $0xf8] sm:$0xff]
    %v1612 = vunpack.c.l.b16 %v1548
    %v1613 = vunpack.c.h.b16 %v1548
    %v1614 = vunpack.c.l.b16 %v1549
    %v1615 = vunpack.c.h.b16 %v1549
    %v1616 = vunpack.c.l.b16 %v1550
    %v1617 = vunpack.c.h.b16 %v1550
    %v1618 = vunpack.c.l.b16 %v1551
    %v1619 = vunpack.c.h.b16 %v1551
    %v1620 = vunpack.c.l.b16 %v1552
    %v1621 = vunpack.c.h.b16 %v1552
    %v1622 = vunpack.c.l.b16 %v1553
    %v1623 = vunpack.c.h.b16 %v1553
    %v1624 = vunpack.c.l.b16 %v1554
    %v1625 = vunpack.c.h.b16 %v1554
    %v1626 = vunpack.c.l.b16 %v1555
    %v1627 = vunpack.c.h.b16 %v1555
    %v1628 = vunpack.c.l.b16 %v1556
    %v1629 = vunpack.c.h.b16 %v1556
    %v1630 = vunpack.c.l.b16 %v1557
    %v1631 = vunpack.c.h.b16 %v1557
    %v1632 = vunpack.c.l.b16 %v1558
    %v1633 = vunpack.c.h.b16 %v1558
    %v1634 = vunpack.c.l.b16 %v1559
    %v1635 = vunpack.c.h.b16 %v1559
    %v1636 = vunpack.c.l.b16 %v1560
    %v1637 = vunpack.c.h.b16 %v1560
    %v1638 = vunpack.c.l.b16 %v1561
    %v1639 = vunpack.c.h.b16 %v1561
    %v1640 = vunpack.c.l.b16 %v1562
    %v1641 = vunpack.c.h.b16 %v1562
    %v1642 = vunpack.c.l.b16 %v1563
    %v1643 = vunpack.c.h.b16 %v1563
    %v1644 = vunpack.c.l.b16 %v1564
    %v1645 = vunpack.c.h.b16 %v1564
    %v1646 = vunpack.c.l.b16 %v1565
    %v1647 = vunpack.c.h.b16 %v1565
    %v1648 = vunpack.c.l.b16 %v1566
    %v1649 = vunpack.c.h.b16 %v1566
    %v1650 = vunpack.c.l.b16 %v1567
    %v1651 = vunpack.c.h.b16 %v1567
    %v1652 = vunpack.c.l.b16 %v1568
    %v1653 = vunpack.c.h.b16 %v1568
    %v1654 = vunpack.c.l.b16 %v1569
    %v1655 = vunpack.c.h.b16 %v1569
    %v1656 = vunpack.c.l.b16 %v1570
    %v1657 = vunpack.c.h.b16 %v1570
    %v1658 = vunpack.c.l.b16 %v1571
    %v1659 = vunpack.c.h.b16 %v1571
    %v1660 = vunpack.c.l.b16 %v1572
    %v1661 = vunpack.c.h.b16 %v1572
    %v1662 = vunpack.c.l.b16 %v1573
    %v1663 = vunpack.c.h.b16 %v1573
    %v1664 = vunpack.c.l.b16 %v1574
    %v1665 = vunpack.c.h.b16 %v1574
    %v1666 = vunpack.c.l.b16 %v1575
    %v1667 = vunpack.c.h.b16 %v1575
    %v1668 = vunpack.c.l.b16 %v1576
    %v1669 = vunpack.c.h.b16 %v1576
    %v1670 = vunpack.c.l.b16 %v1577
    %v1671 = vunpack.c.h.b16 %v1577
    %v1672 = vunpack.c.l.b16 %v1578
    %v1673 = vunpack.c.h.b16 %v1578
    %v1674 = vunpack.c.l.b16 %v1579
    %v1675 = vunpack.c.h.b16 %v1579
    %v1676 = vpack.c.b16 %v1616, %v1612
    %v1677 = vpack.c.b16 %v1617, %v1613
    %v1678 = vpack.c.b16 %v1618, %v1614
    %v1679 = vpack.c.b16 %v1619, %v1615
    %v1680 = vpack.c.b16 %v1624, %v1620
    %v1681 = vpack.c.b16 %v1625, %v1621
    %v1682 = vpack.c.b16 %v1626, %v1622
    %v1683 = vpack.c.b16 %v1627, %v1623
    %v1684 = vpack.c.b16 %v1632, %v1628
    %v1685 = vpack.c.b16 %v1633, %v1629
    %v1686 = vpack.c.b16 %v1634, %v1630
    %v1687 = vpack.c.b16 %v1635, %v1631
    %v1688 = vpack.c.b16 %v1640, %v1636
    %v1689 = vpack.c.b16 %v1641, %v1637
    %v1690 = vpack.c.b16 %v1642, %v1638
    %v1691 = vpack.c.b16 %v1643, %v1639
    %v1692 = vpack.c.b16 %v1648, %v1644
    %v1693 = vpack.c.b16 %v1649, %v1645
    %v1694 = vpack.c.b16 %v1650, %v1646
    %v1695 = vpack.c.b16 %v1651, %v1647
    %v1696 = vpack.c.b16 %v1656, %v1652
    %v1697 = vpack.c.b16 %v1657, %v1653
    %v1698 = vpack.c.b16 %v1658, %v1654
    %v1699 = vpack.c.b16 %v1659, %v1655
    %v1700 = vpack.c.b16 %v1664, %v1660
    %v1701 = vpack.c.b16 %v1665, %v1661
    %v1702 = vpack.c.b16 %v1666, %v1662
    %v1703 = vpack.c.b16 %v1667, %v1663
    %v1704 = vpack.c.b16 %v1672, %v1668
    %v1705 = vpack.c.b16 %v1673, %v1669
    %v1706 = vpack.c.b16 %v1674, %v1670
    %v1707 = vpack.c.b16 %v1675, %v1671
    %1740 = vmatprep.subr.bf16.mxu0 %v1677
    %1741 = vmatpush1.bf16.msra.mxu0 %v1676
    %1742 = vmatprep.subr.bf16.mxu0 %v1681
    %1743 = vmatpush1.bf16.msra.mxu0 %v1680
    %1744 = vmatprep.subr.bf16.mxu0 %v1685
    %1745 = vmatpush1.bf16.msra.mxu0 %v1684
    %1746 = vmatprep.subr.bf16.mxu0 %v1689
    %1747 = vmatpush1.bf16.msra.mxu0 %v1688
    %1748 = vmatprep.subr.bf16.mxu0 %v1693
    %1749 = vmatpush1.bf16.msra.mxu0 %v1692
    %1750 = vmatprep.subr.bf16.mxu0 %v1697
    %1751 = vmatpush1.bf16.msra.mxu0 %v1696
    %1752 = vmatprep.subr.bf16.mxu0 %v1701
    %1753 = vmatpush1.bf16.msra.mxu0 %v1700
    %1754 = vmatprep.subr.bf16.mxu0 %v1705
    %1755 = vmatpush1.bf16.msra.mxu0 %v1704
    %1756 = vmatprep.subr.bf16.mxu0 0
    %1757 = vmatpush1.bf16.msra.mxu0 0
    %1758 = vmatprep.subr.bf16.mxu0 0
    %1759 = vmatpush1.bf16.msra.mxu0 0
    %1760 = vmatprep.subr.bf16.mxu0 0
    %1761 = vmatpush1.bf16.msra.mxu0 0
    %1762 = vmatprep.subr.bf16.mxu0 0
    %1763 = vmatpush1.bf16.msra.mxu0 0
    %1764 = vmatprep.subr.bf16.mxu0 0
    %1765 = vmatpush1.bf16.msra.mxu0 0
    %1766 = vmatprep.subr.bf16.mxu0 0
    %1767 = vmatpush1.bf16.msra.mxu0 0
    %1768 = vmatprep.subr.bf16.mxu0 0
    %1769 = vmatpush1.bf16.msra.mxu0 0
    %1770 = vmatprep.subr.bf16.mxu0 0
    %1771 = vmatpush1.bf16.msra.mxu0 0
    %1772 = vmatprep.mubr.bf16.mxu0 0
    %1773 = vmatmul.mubr.bf16.gmra.mrb[0].mxu0 %v1547
    %v1774 = vpop.f32.mrb[0].mxu0
    %v1775 = vadd.f32 0.0, %v1774
    %v1776 = vpop.f32.mrb[0].mxu0
    %v1777 = vadd.f32 0.0, %v1776
    %v1778 = vpop.f32.mrb[0].mxu0
    %v1779 = vpop.f32.mrb[0].mxu0
    %1780 = vdwg.mxu0
    %1781 = vmatprep.subr.bf16.mxu0 %v1679
    %1782 = vmatpush1.bf16.msra.mxu0 %v1678
    %1783 = vmatprep.subr.bf16.mxu0 %v1683
    %1784 = vmatpush1.bf16.msra.mxu0 %v1682
    %1785 = vmatprep.subr.bf16.mxu0 %v1687
    %1786 = vmatpush1.bf16.msra.mxu0 %v1686
    %1787 = vmatprep.subr.bf16.mxu0 %v1691
    %1788 = vmatpush1.bf16.msra.mxu0 %v1690
    %1789 = vmatprep.subr.bf16.mxu0 %v1695
    %1790 = vmatpush1.bf16.msra.mxu0 %v1694
    %1791 = vmatprep.subr.bf16.mxu0 %v1699
    %1792 = vmatpush1.bf16.msra.mxu0 %v1698
    %1793 = vmatprep.subr.bf16.mxu0 %v1703
    %1794 = vmatpush1.bf16.msra.mxu0 %v1702
    %1795 = vmatprep.subr.bf16.mxu0 %v1707
    %1796 = vmatpush1.bf16.msra.mxu0 %v1706
    %1797 = vmatprep.subr.bf16.mxu0 0
    %1798 = vmatpush1.bf16.msra.mxu0 0
    %1799 = vmatprep.subr.bf16.mxu0 0
    %1800 = vmatpush1.bf16.msra.mxu0 0
    %1801 = vmatprep.subr.bf16.mxu0 0
    %1802 = vmatpush1.bf16.msra.mxu0 0
    %1803 = vmatprep.subr.bf16.mxu0 0
    %1804 = vmatpush1.bf16.msra.mxu0 0
    %1805 = vmatprep.subr.bf16.mxu0 0
    %1806 = vmatpush1.bf16.msra.mxu0 0
    %1807 = vmatprep.subr.bf16.mxu0 0
    %1808 = vmatpush1.bf16.msra.mxu0 0
    %1809 = vmatprep.subr.bf16.mxu0 0
    %1810 = vmatpush1.bf16.msra.mxu0 0
    %1811 = vmatprep.subr.bf16.mxu0 0
    %1812 = vmatpush1.bf16.msra.mxu0 0
    %1813 = vmatprep.mubr.bf16.mxu0 0
    %1814 = vmatmul.mubr.bf16.gmra.mrb[0].mxu0 %v1547
    %v1815 = vpop.f32.mrb[0].mxu0
    %v1816 = vadd.f32 0.0, %v1815
    %v1817 = vpop.f32.mrb[0].mxu0
    %v1818 = vadd.f32 0.0, %v1817
    %v1819 = vpop.f32.mrb[0].mxu0
    %v1820 = vpop.f32.mrb[0].mxu0
    %1821 = vdwg.mxu0
    %v1822 = vadd.f32 %v1543, %v1775
    %v1823 = vadd.f32 %v1544, %v1777
    %v1824 = vadd.f32 %v1545, %v1816
    %v1825 = vadd.f32 %v1546, %v1818
    %v1826 = vmul.f32 %v1822, 0.5
    %v1827 = vtanh.pop %v1826
    %v1828 = vmul.f32 %v1827, 0.5
    %v1829 = vadd.f32 %v1828, 0.5
    %v1830 = vmul.f32 %v1823, 0.5
    %v1831 = vtanh.pop %v1830
    %v1832 = vmul.f32 %v1831, 0.5
    %v1833 = vadd.f32 %v1832, 0.5
    %v1834 = vtanh.pop %v1824
    %v1835 = vmul.f32 %v1825, 0.5
    %v1836 = vtanh.pop %v1835
    %v1837 = vmul.f32 %v1836, 0.5
    %v1838 = vadd.f32 %v1837, 0.5
    %v1839 = vmul.f32 %v1833, %v1535
    %v1840 = vmul.f32 %v1829, %v1834
    %v1841 = vadd.f32 %v1839, %v1840
    %v1842 = vtanh.pop %v1841
    %v1843 = vmul.f32 %v1838, %v1842
    %s1844 = scalar_lea.vmem [#allocation5], 32
    %1845 = vst [vmem:[%s1844] sm:$0xff] %v1843
    %s1846 = smul.u32 5, 4
    %s1847 = smul.addr %s1846, 8
    %s1848 = scalar_lea.vmem [#allocation4], %s1847
    %v1849 = vld [vmem:[%s1848] sm:$0xff]
    %v1850 = vld [vmem:[%s1848 + $0x8] sm:$0xff]
    %v1851 = vld [vmem:[%s1848 + $0x10] sm:$0xff]
    %v1852 = vld [vmem:[%s1848 + $0x18] sm:$0xff]
    %v1853 = vpack.c.bf16 %v1843, %v1843
    %v1854 = vld [vmem:[#allocation8] sm:$0xff]
    %v1855 = vld [vmem:[#allocation8 + $0x8] sm:$0xff]
    %v1856 = vld [vmem:[#allocation8 + $0x10] sm:$0xff]
    %v1857 = vld [vmem:[#allocation8 + $0x18] sm:$0xff]
    %v1858 = vld [vmem:[#allocation8 + $0x20] sm:$0xff]
    %v1859 = vld [vmem:[#allocation8 + $0x28] sm:$0xff]
    %v1860 = vld [vmem:[#allocation8 + $0x30] sm:$0xff]
    %v1861 = vld [vmem:[#allocation8 + $0x38] sm:$0xff]
    %v1862 = vld [vmem:[#allocation8 + $0x40] sm:$0xff]
    %v1863 = vld [vmem:[#allocation8 + $0x48] sm:$0xff]
    %v1864 = vld [vmem:[#allocation8 + $0x50] sm:$0xff]
    %v1865 = vld [vmem:[#allocation8 + $0x58] sm:$0xff]
    %v1866 = vld [vmem:[#allocation8 + $0x60] sm:$0xff]
    %v1867 = vld [vmem:[#allocation8 + $0x68] sm:$0xff]
    %v1868 = vld [vmem:[#allocation8 + $0x70] sm:$0xff]
    %v1869 = vld [vmem:[#allocation8 + $0x78] sm:$0xff]
    %v1870 = vld [vmem:[#allocation8 + $0x80] sm:$0xff]
    %v1871 = vld [vmem:[#allocation8 + $0x88] sm:$0xff]
    %v1872 = vld [vmem:[#allocation8 + $0x90] sm:$0xff]
    %v1873 = vld [vmem:[#allocation8 + $0x98] sm:$0xff]
    %v1874 = vld [vmem:[#allocation8 + $0xa0] sm:$0xff]
    %v1875 = vld [vmem:[#allocation8 + $0xa8] sm:$0xff]
    %v1876 = vld [vmem:[#allocation8 + $0xb0] sm:$0xff]
    %v1877 = vld [vmem:[#allocation8 + $0xb8] sm:$0xff]
    %v1878 = vld [vmem:[#allocation8 + $0xc0] sm:$0xff]
    %v1879 = vld [vmem:[#allocation8 + $0xc8] sm:$0xff]
    %v1880 = vld [vmem:[#allocation8 + $0xd0] sm:$0xff]
    %v1881 = vld [vmem:[#allocation8 + $0xd8] sm:$0xff]
    %v1882 = vld [vmem:[#allocation8 + $0xe0] sm:$0xff]
    %v1883 = vld [vmem:[#allocation8 + $0xe8] sm:$0xff]
    %v1884 = vld [vmem:[#allocation8 + $0xf0] sm:$0xff]
    %v1885 = vld [vmem:[#allocation8 + $0xf8] sm:$0xff]
    %v1918 = vunpack.c.l.b16 %v1854
    %v1919 = vunpack.c.h.b16 %v1854
    %v1920 = vunpack.c.l.b16 %v1855
    %v1921 = vunpack.c.h.b16 %v1855
    %v1922 = vunpack.c.l.b16 %v1856
    %v1923 = vunpack.c.h.b16 %v1856
    %v1924 = vunpack.c.l.b16 %v1857
    %v1925 = vunpack.c.h.b16 %v1857
    %v1926 = vunpack.c.l.b16 %v1858
    %v1927 = vunpack.c.h.b16 %v1858
    %v1928 = vunpack.c.l.b16 %v1859
    %v1929 = vunpack.c.h.b16 %v1859
    %v1930 = vunpack.c.l.b16 %v1860
    %v1931 = vunpack.c.h.b16 %v1860
    %v1932 = vunpack.c.l.b16 %v1861
    %v1933 = vunpack.c.h.b16 %v1861
    %v1934 = vunpack.c.l.b16 %v1862
    %v1935 = vunpack.c.h.b16 %v1862
    %v1936 = vunpack.c.l.b16 %v1863
    %v1937 = vunpack.c.h.b16 %v1863
    %v1938 = vunpack.c.l.b16 %v1864
    %v1939 = vunpack.c.h.b16 %v1864
    %v1940 = vunpack.c.l.b16 %v1865
    %v1941 = vunpack.c.h.b16 %v1865
    %v1942 = vunpack.c.l.b16 %v1866
    %v1943 = vunpack.c.h.b16 %v1866
    %v1944 = vunpack.c.l.b16 %v1867
    %v1945 = vunpack.c.h.b16 %v1867
    %v1946 = vunpack.c.l.b16 %v1868
    %v1947 = vunpack.c.h.b16 %v1868
    %v1948 = vunpack.c.l.b16 %v1869
    %v1949 = vunpack.c.h.b16 %v1869
    %v1950 = vunpack.c.l.b16 %v1870
    %v1951 = vunpack.c.h.b16 %v1870
    %v1952 = vunpack.c.l.b16 %v1871
    %v1953 = vunpack.c.h.b16 %v1871
    %v1954 = vunpack.c.l.b16 %v1872
    %v1955 = vunpack.c.h.b16 %v1872
    %v1956 = vunpack.c.l.b16 %v1873
    %v1957 = vunpack.c.h.b16 %v1873
    %v1958 = vunpack.c.l.b16 %v1874
    %v1959 = vunpack.c.h.b16 %v1874
    %v1960 = vunpack.c.l.b16 %v1875
    %v1961 = vunpack.c.h.b16 %v1875
    %v1962 = vunpack.c.l.b16 %v1876
    %v1963 = vunpack.c.h.b16 %v1876
    %v1964 = vunpack.c.l.b16 %v1877
    %v1965 = vunpack.c.h.b16 %v1877
    %v1966 = vunpack.c.l.b16 %v1878
    %v1967 = vunpack.c.h.b16 %v1878
    %v1968 = vunpack.c.l.b16 %v1879
    %v1969 = vunpack.c.h.b16 %v1879
    %v1970 = vunpack.c.l.b16 %v1880
    %v1971 = vunpack.c.h.b16 %v1880
    %v1972 = vunpack.c.l.b16 %v1881
    %v1973 = vunpack.c.h.b16 %v1881
    %v1974 = vunpack.c.l.b16 %v1882
    %v1975 = vunpack.c.h.b16 %v1882
    %v1976 = vunpack.c.l.b16 %v1883
    %v1977 = vunpack.c.h.b16 %v1883
    %v1978 = vunpack.c.l.b16 %v1884
    %v1979 = vunpack.c.h.b16 %v1884
    %v1980 = vunpack.c.l.b16 %v1885
    %v1981 = vunpack.c.h.b16 %v1885
    %v1982 = vpack.c.b16 %v1922, %v1918
    %v1983 = vpack.c.b16 %v1923, %v1919
    %v1984 = vpack.c.b16 %v1924, %v1920
    %v1985 = vpack.c.b16 %v1925, %v1921
    %v1986 = vpack.c.b16 %v1930, %v1926
    %v1987 = vpack.c.b16 %v1931, %v1927
    %v1988 = vpack.c.b16 %v1932, %v1928
    %v1989 = vpack.c.b16 %v1933, %v1929
    %v1990 = vpack.c.b16 %v1938, %v1934
    %v1991 = vpack.c.b16 %v1939, %v1935
    %v1992 = vpack.c.b16 %v1940, %v1936
    %v1993 = vpack.c.b16 %v1941, %v1937
    %v1994 = vpack.c.b16 %v1946, %v1942
    %v1995 = vpack.c.b16 %v1947, %v1943
    %v1996 = vpack.c.b16 %v1948, %v1944
    %v1997 = vpack.c.b16 %v1949, %v1945
    %v1998 = vpack.c.b16 %v1954, %v1950
    %v1999 = vpack.c.b16 %v1955, %v1951
    %v2000 = vpack.c.b16 %v1956, %v1952
    %v2001 = vpack.c.b16 %v1957, %v1953
    %v2002 = vpack.c.b16 %v1962, %v1958
    %v2003 = vpack.c.b16 %v1963, %v1959
    %v2004 = vpack.c.b16 %v1964, %v1960
    %v2005 = vpack.c.b16 %v1965, %v1961
    %v2006 = vpack.c.b16 %v1970, %v1966
    %v2007 = vpack.c.b16 %v1971, %v1967
    %v2008 = vpack.c.b16 %v1972, %v1968
    %v2009 = vpack.c.b16 %v1973, %v1969
    %v2010 = vpack.c.b16 %v1978, %v1974
    %v2011 = vpack.c.b16 %v1979, %v1975
    %v2012 = vpack.c.b16 %v1980, %v1976
    %v2013 = vpack.c.b16 %v1981, %v1977
    %2046 = vmatprep.subr.bf16.mxu0 %v1983
    %2047 = vmatpush1.bf16.msra.mxu0 %v1982
    %2048 = vmatprep.subr.bf16.mxu0 %v1987
    %2049 = vmatpush1.bf16.msra.mxu0 %v1986
    %2050 = vmatprep.subr.bf16.mxu0 %v1991
    %2051 = vmatpush1.bf16.msra.mxu0 %v1990
    %2052 = vmatprep.subr.bf16.mxu0 %v1995
    %2053 = vmatpush1.bf16.msra.mxu0 %v1994
    %2054 = vmatprep.subr.bf16.mxu0 %v1999
    %2055 = vmatpush1.bf16.msra.mxu0 %v1998
    %2056 = vmatprep.subr.bf16.mxu0 %v2003
    %2057 = vmatpush1.bf16.msra.mxu0 %v2002
    %2058 = vmatprep.subr.bf16.mxu0 %v2007
    %2059 = vmatpush1.bf16.msra.mxu0 %v2006
    %2060 = vmatprep.subr.bf16.mxu0 %v2011
    %2061 = vmatpush1.bf16.msra.mxu0 %v2010
    %2062 = vmatprep.subr.bf16.mxu0 0
    %2063 = vmatpush1.bf16.msra.mxu0 0
    %2064 = vmatprep.subr.bf16.mxu0 0
    %2065 = vmatpush1.bf16.msra.mxu0 0
    %2066 = vmatprep.subr.bf16.mxu0 0
    %2067 = vmatpush1.bf16.msra.mxu0 0
    %2068 = vmatprep.subr.bf16.mxu0 0
    %2069 = vmatpush1.bf16.msra.mxu0 0
    %2070 = vmatprep.subr.bf16.mxu0 0
    %2071 = vmatpush1.bf16.msra.mxu0 0
    %2072 = vmatprep.subr.bf16.mxu0 0
    %2073 = vmatpush1.bf16.msra.mxu0 0
    %2074 = vmatprep.subr.bf16.mxu0 0
    %2075 = vmatpush1.bf16.msra.mxu0 0
    %2076 = vmatprep.subr.bf16.mxu0 0
    %2077 = vmatpush1.bf16.msra.mxu0 0
    %2078 = vmatprep.mubr.bf16.mxu0 0
    %2079 = vmatmul.mubr.bf16.gmra.mrb[0].mxu0 %v1853
    %v2080 = vpop.f32.mrb[0].mxu0
    %v2081 = vadd.f32 0.0, %v2080
    %v2082 = vpop.f32.mrb[0].mxu0
    %v2083 = vadd.f32 0.0, %v2082
    %v2084 = vpop.f32.mrb[0].mxu0
    %v2085 = vpop.f32.mrb[0].mxu0
    %2086 = vdwg.mxu0
    %2087 = vmatprep.subr.bf16.mxu0 %v1985
    %2088 = vmatpush1.bf16.msra.mxu0 %v1984
    %2089 = vmatprep.subr.bf16.mxu0 %v1989
    %2090 = vmatpush1.bf16.msra.mxu0 %v1988
    %2091 = vmatprep.subr.bf16.mxu0 %v1993
    %2092 = vmatpush1.bf16.msra.mxu0 %v1992
    %2093 = vmatprep.subr.bf16.mxu0 %v1997
    %2094 = vmatpush1.bf16.msra.mxu0 %v1996
    %2095 = vmatprep.subr.bf16.mxu0 %v2001
    %2096 = vmatpush1.bf16.msra.mxu0 %v2000
    %2097 = vmatprep.subr.bf16.mxu0 %v2005
    %2098 = vmatpush1.bf16.msra.mxu0 %v2004
    %2099 = vmatprep.subr.bf16.mxu0 %v2009
    %2100 = vmatpush1.bf16.msra.mxu0 %v2008
    %2101 = vmatprep.subr.bf16.mxu0 %v2013
    %2102 = vmatpush1.bf16.msra.mxu0 %v2012
    %2103 = vmatprep.subr.bf16.mxu0 0
    %2104 = vmatpush1.bf16.msra.mxu0 0
    %2105 = vmatprep.subr.bf16.mxu0 0
    %2106 = vmatpush1.bf16.msra.mxu0 0
    %2107 = vmatprep.subr.bf16.mxu0 0
    %2108 = vmatpush1.bf16.msra.mxu0 0
    %2109 = vmatprep.subr.bf16.mxu0 0
    %2110 = vmatpush1.bf16.msra.mxu0 0
    %2111 = vmatprep.subr.bf16.mxu0 0
    %2112 = vmatpush1.bf16.msra.mxu0 0
    %2113 = vmatprep.subr.bf16.mxu0 0
    %2114 = vmatpush1.bf16.msra.mxu0 0
    %2115 = vmatprep.subr.bf16.mxu0 0
    %2116 = vmatpush1.bf16.msra.mxu0 0
    %2117 = vmatprep.subr.bf16.mxu0 0
    %2118 = vmatpush1.bf16.msra.mxu0 0
    %2119 = vmatprep.mubr.bf16.mxu0 0
    %2120 = vmatmul.mubr.bf16.gmra.mrb[0].mxu0 %v1853
    %v2121 = vpop.f32.mrb[0].mxu0
    %v2122 = vadd.f32 0.0, %v2121
    %v2123 = vpop.f32.mrb[0].mxu0
    %v2124 = vadd.f32 0.0, %v2123
    %v2125 = vpop.f32.mrb[0].mxu0
    %v2126 = vpop.f32.mrb[0].mxu0
    %2127 = vdwg.mxu0
    %v2128 = vadd.f32 %v1849, %v2081
    %v2129 = vadd.f32 %v1850, %v2083
    %v2130 = vadd.f32 %v1851, %v2122
    %v2131 = vadd.f32 %v1852, %v2124
    %v2132 = vmul.f32 %v2128, 0.5
    %v2133 = vtanh.pop %v2132
    %v2134 = vmul.f32 %v2133, 0.5
    %v2135 = vadd.f32 %v2134, 0.5
    %v2136 = vmul.f32 %v2129, 0.5
    %v2137 = vtanh.pop %v2136
    %v2138 = vmul.f32 %v2137, 0.5
    %v2139 = vadd.f32 %v2138, 0.5
    %v2140 = vtanh.pop %v2130
    %v2141 = vmul.f32 %v2131, 0.5
    %v2142 = vtanh.pop %v2141
    %v2143 = vmul.f32 %v2142, 0.5
    %v2144 = vadd.f32 %v2143, 0.5
    %v2145 = vmul.f32 %v2139, %v1841
    %v2146 = vmul.f32 %v2135, %v2140
    %v2147 = vadd.f32 %v2145, %v2146
    %v2148 = vtanh.pop %v2147
    %v2149 = vmul.f32 %v2144, %v2148
    %s2150 = scalar_lea.vmem [#allocation5], 40
    %2151 = vst [vmem:[%s2150] sm:$0xff] %v2149
    %s2152 = smul.u32 6, 4
    %s2153 = smul.addr %s2152, 8
    %s2154 = scalar_lea.vmem [#allocation4], %s2153
    %v2155 = vld [vmem:[%s2154] sm:$0xff]
    %v2156 = vld [vmem:[%s2154 + $0x8] sm:$0xff]
    %v2157 = vld [vmem:[%s2154 + $0x10] sm:$0xff]
    %v2158 = vld [vmem:[%s2154 + $0x18] sm:$0xff]
    %v2159 = vpack.c.bf16 %v2149, %v2149
    %v2160 = vld [vmem:[#allocation8] sm:$0xff]
    %v2161 = vld [vmem:[#allocation8 + $0x8] sm:$0xff]
    %v2162 = vld [vmem:[#allocation8 + $0x10] sm:$0xff]
    %v2163 = vld [vmem:[#allocation8 + $0x18] sm:$0xff]
    %v2164 = vld [vmem:[#allocation8 + $0x20] sm:$0xff]
    %v2165 = vld [vmem:[#allocation8 + $0x28] sm:$0xff]
    %v2166 = vld [vmem:[#allocation8 + $0x30] sm:$0xff]
    %v2167 = vld [vmem:[#allocation8 + $0x38] sm:$0xff]
    %v2168 = vld [vmem:[#allocation8 + $0x40] sm:$0xff]
    %v2169 = vld [vmem:[#allocation8 + $0x48] sm:$0xff]
    %v2170 = vld [vmem:[#allocation8 + $0x50] sm:$0xff]
    %v2171 = vld [vmem:[#allocation8 + $0x58] sm:$0xff]
    %v2172 = vld [vmem:[#allocation8 + $0x60] sm:$0xff]
    %v2173 = vld [vmem:[#allocation8 + $0x68] sm:$0xff]
    %v2174 = vld [vmem:[#allocation8 + $0x70] sm:$0xff]
    %v2175 = vld [vmem:[#allocation8 + $0x78] sm:$0xff]
    %v2176 = vld [vmem:[#allocation8 + $0x80] sm:$0xff]
    %v2177 = vld [vmem:[#allocation8 + $0x88] sm:$0xff]
    %v2178 = vld [vmem:[#allocation8 + $0x90] sm:$0xff]
    %v2179 = vld [vmem:[#allocation8 + $0x98] sm:$0xff]
    %v2180 = vld [vmem:[#allocation8 + $0xa0] sm:$0xff]
    %v2181 = vld [vmem:[#allocation8 + $0xa8] sm:$0xff]
    %v2182 = vld [vmem:[#allocation8 + $0xb0] sm:$0xff]
    %v2183 = vld [vmem:[#allocation8 + $0xb8] sm:$0xff]
    %v2184 = vld [vmem:[#allocation8 + $0xc0] sm:$0xff]
    %v2185 = vld [vmem:[#allocation8 + $0xc8] sm:$0xff]
    %v2186 = vld [vmem:[#allocation8 + $0xd0] sm:$0xff]
    %v2187 = vld [vmem:[#allocation8 + $0xd8] sm:$0xff]
    %v2188 = vld [vmem:[#allocation8 + $0xe0] sm:$0xff]
    %v2189 = vld [vmem:[#allocation8 + $0xe8] sm:$0xff]
    %v2190 = vld [vmem:[#allocation8 + $0xf0] sm:$0xff]
    %v2191 = vld [vmem:[#allocation8 + $0xf8] sm:$0xff]
    %v2224 = vunpack.c.l.b16 %v2160
    %v2225 = vunpack.c.h.b16 %v2160
    %v2226 = vunpack.c.l.b16 %v2161
    %v2227 = vunpack.c.h.b16 %v2161
    %v2228 = vunpack.c.l.b16 %v2162
    %v2229 = vunpack.c.h.b16 %v2162
    %v2230 = vunpack.c.l.b16 %v2163
    %v2231 = vunpack.c.h.b16 %v2163
    %v2232 = vunpack.c.l.b16 %v2164
    %v2233 = vunpack.c.h.b16 %v2164
    %v2234 = vunpack.c.l.b16 %v2165
    %v2235 = vunpack.c.h.b16 %v2165
    %v2236 = vunpack.c.l.b16 %v2166
    %v2237 = vunpack.c.h.b16 %v2166
    %v2238 = vunpack.c.l.b16 %v2167
    %v2239 = vunpack.c.h.b16 %v2167
    %v2240 = vunpack.c.l.b16 %v2168
    %v2241 = vunpack.c.h.b16 %v2168
    %v2242 = vunpack.c.l.b16 %v2169
    %v2243 = vunpack.c.h.b16 %v2169
    %v2244 = vunpack.c.l.b16 %v2170
    %v2245 = vunpack.c.h.b16 %v2170
    %v2246 = vunpack.c.l.b16 %v2171
    %v2247 = vunpack.c.h.b16 %v2171
    %v2248 = vunpack.c.l.b16 %v2172
    %v2249 = vunpack.c.h.b16 %v2172
    %v2250 = vunpack.c.l.b16 %v2173
    %v2251 = vunpack.c.h.b16 %v2173
    %v2252 = vunpack.c.l.b16 %v2174
    %v2253 = vunpack.c.h.b16 %v2174
    %v2254 = vunpack.c.l.b16 %v2175
    %v2255 = vunpack.c.h.b16 %v2175
    %v2256 = vunpack.c.l.b16 %v2176
    %v2257 = vunpack.c.h.b16 %v2176
    %v2258 = vunpack.c.l.b16 %v2177
    %v2259 = vunpack.c.h.b16 %v2177
    %v2260 = vunpack.c.l.b16 %v2178
    %v2261 = vunpack.c.h.b16 %v2178
    %v2262 = vunpack.c.l.b16 %v2179
    %v2263 = vunpack.c.h.b16 %v2179
    %v2264 = vunpack.c.l.b16 %v2180
    %v2265 = vunpack.c.h.b16 %v2180
    %v2266 = vunpack.c.l.b16 %v2181
    %v2267 = vunpack.c.h.b16 %v2181
    %v2268 = vunpack.c.l.b16 %v2182
    %v2269 = vunpack.c.h.b16 %v2182
    %v2270 = vunpack.c.l.b16 %v2183
    %v2271 = vunpack.c.h.b16 %v2183
    %v2272 = vunpack.c.l.b16 %v2184
    %v2273 = vunpack.c.h.b16 %v2184
    %v2274 = vunpack.c.l.b16 %v2185
    %v2275 = vunpack.c.h.b16 %v2185
    %v2276 = vunpack.c.l.b16 %v2186
    %v2277 = vunpack.c.h.b16 %v2186
    %v2278 = vunpack.c.l.b16 %v2187
    %v2279 = vunpack.c.h.b16 %v2187
    %v2280 = vunpack.c.l.b16 %v2188
    %v2281 = vunpack.c.h.b16 %v2188
    %v2282 = vunpack.c.l.b16 %v2189
    %v2283 = vunpack.c.h.b16 %v2189
    %v2284 = vunpack.c.l.b16 %v2190
    %v2285 = vunpack.c.h.b16 %v2190
    %v2286 = vunpack.c.l.b16 %v2191
    %v2287 = vunpack.c.h.b16 %v2191
    %v2288 = vpack.c.b16 %v2228, %v2224
    %v2289 = vpack.c.b16 %v2229, %v2225
    %v2290 = vpack.c.b16 %v2230, %v2226
    %v2291 = vpack.c.b16 %v2231, %v2227
    %v2292 = vpack.c.b16 %v2236, %v2232
    %v2293 = vpack.c.b16 %v2237, %v2233
    %v2294 = vpack.c.b16 %v2238, %v2234
    %v2295 = vpack.c.b16 %v2239, %v2235
    %v2296 = vpack.c.b16 %v2244, %v2240
    %v2297 = vpack.c.b16 %v2245, %v2241
    %v2298 = vpack.c.b16 %v2246, %v2242
    %v2299 = vpack.c.b16 %v2247, %v2243
    %v2300 = vpack.c.b16 %v2252, %v2248
    %v2301 = vpack.c.b16 %v2253, %v2249
    %v2302 = vpack.c.b16 %v2254, %v2250
    %v2303 = vpack.c.b16 %v2255, %v2251
    %v2304 = vpack.c.b16 %v2260, %v2256
    %v2305 = vpack.c.b16 %v2261, %v2257
    %v2306 = vpack.c.b16 %v2262, %v2258
    %v2307 = vpack.c.b16 %v2263, %v2259
    %v2308 = vpack.c.b16 %v2268, %v2264
    %v2309 = vpack.c.b16 %v2269, %v2265
    %v2310 = vpack.c.b16 %v2270, %v2266
    %v2311 = vpack.c.b16 %v2271, %v2267
    %v2312 = vpack.c.b16 %v2276, %v2272
    %v2313 = vpack.c.b16 %v2277, %v2273
    %v2314 = vpack.c.b16 %v2278, %v2274
    %v2315 = vpack.c.b16 %v2279, %v2275
    %v2316 = vpack.c.b16 %v2284, %v2280
    %v2317 = vpack.c.b16 %v2285, %v2281
    %v2318 = vpack.c.b16 %v2286, %v2282
    %v2319 = vpack.c.b16 %v2287, %v2283
    %2352 = vmatprep.subr.bf16.mxu0 %v2289
    %2353 = vmatpush1.bf16.msra.mxu0 %v2288
    %2354 = vmatprep.subr.bf16.mxu0 %v2293
    %2355 = vmatpush1.bf16.msra.mxu0 %v2292
    %2356 = vmatprep.subr.bf16.mxu0 %v2297
    %2357 = vmatpush1.bf16.msra.mxu0 %v2296
    %2358 = vmatprep.subr.bf16.mxu0 %v2301
    %2359 = vmatpush1.bf16.msra.mxu0 %v2300
    %2360 = vmatprep.subr.bf16.mxu0 %v2305
    %2361 = vmatpush1.bf16.msra.mxu0 %v2304
    %2362 = vmatprep.subr.bf16.mxu0 %v2309
    %2363 = vmatpush1.bf16.msra.mxu0 %v2308
    %2364 = vmatprep.subr.bf16.mxu0 %v2313
    %2365 = vmatpush1.bf16.msra.mxu0 %v2312
    %2366 = vmatprep.subr.bf16.mxu0 %v2317
    %2367 = vmatpush1.bf16.msra.mxu0 %v2316
    %2368 = vmatprep.subr.bf16.mxu0 0
    %2369 = vmatpush1.bf16.msra.mxu0 0
    %2370 = vmatprep.subr.bf16.mxu0 0
    %2371 = vmatpush1.bf16.msra.mxu0 0
    %2372 = vmatprep.subr.bf16.mxu0 0
    %2373 = vmatpush1.bf16.msra.mxu0 0
    %2374 = vmatprep.subr.bf16.mxu0 0
    %2375 = vmatpush1.bf16.msra.mxu0 0
    %2376 = vmatprep.subr.bf16.mxu0 0
    %2377 = vmatpush1.bf16.msra.mxu0 0
    %2378 = vmatprep.subr.bf16.mxu0 0
    %2379 = vmatpush1.bf16.msra.mxu0 0
    %2380 = vmatprep.subr.bf16.mxu0 0
    %2381 = vmatpush1.bf16.msra.mxu0 0
    %2382 = vmatprep.subr.bf16.mxu0 0
    %2383 = vmatpush1.bf16.msra.mxu0 0
    %2384 = vmatprep.mubr.bf16.mxu0 0
    %2385 = vmatmul.mubr.bf16.gmra.mrb[0].mxu0 %v2159
    %v2386 = vpop.f32.mrb[0].mxu0
    %v2387 = vadd.f32 0.0, %v2386
    %v2388 = vpop.f32.mrb[0].mxu0
    %v2389 = vadd.f32 0.0, %v2388
    %v2390 = vpop.f32.mrb[0].mxu0
    %v2391 = vpop.f32.mrb[0].mxu0
    %2392 = vdwg.mxu0
    %2393 = vmatprep.subr.bf16.mxu0 %v2291
    %2394 = vmatpush1.bf16.msra.mxu0 %v2290
    %2395 = vmatprep.subr.bf16.mxu0 %v2295
    %2396 = vmatpush1.bf16.msra.mxu0 %v2294
    %2397 = vmatprep.subr.bf16.mxu0 %v2299
    %2398 = vmatpush1.bf16.msra.mxu0 %v2298
    %2399 = vmatprep.subr.bf16.mxu0 %v2303
    %2400 = vmatpush1.bf16.msra.mxu0 %v2302
    %2401 = vmatprep.subr.bf16.mxu0 %v2307
    %2402 = vmatpush1.bf16.msra.mxu0 %v2306
    %2403 = vmatprep.subr.bf16.mxu0 %v2311
    %2404 = vmatpush1.bf16.msra.mxu0 %v2310
    %2405 = vmatprep.subr.bf16.mxu0 %v2315
    %2406 = vmatpush1.bf16.msra.mxu0 %v2314
    %2407 = vmatprep.subr.bf16.mxu0 %v2319
    %2408 = vmatpush1.bf16.msra.mxu0 %v2318
    %2409 = vmatprep.subr.bf16.mxu0 0
    %2410 = vmatpush1.bf16.msra.mxu0 0
    %2411 = vmatprep.subr.bf16.mxu0 0
    %2412 = vmatpush1.bf16.msra.mxu0 0
    %2413 = vmatprep.subr.bf16.mxu0 0
    %2414 = vmatpush1.bf16.msra.mxu0 0
    %2415 = vmatprep.subr.bf16.mxu0 0
    %2416 = vmatpush1.bf16.msra.mxu0 0
    %2417 = vmatprep.subr.bf16.mxu0 0
    %2418 = vmatpush1.bf16.msra.mxu0 0
    %2419 = vmatprep.subr.bf16.mxu0 0
    %2420 = vmatpush1.bf16.msra.mxu0 0
    %2421 = vmatprep.subr.bf16.mxu0 0
    %2422 = vmatpush1.bf16.msra.mxu0 0
    %2423 = vmatprep.subr.bf16.mxu0 0
    %2424 = vmatpush1.bf16.msra.mxu0 0
    %2425 = vmatprep.mubr.bf16.mxu0 0
    %2426 = vmatmul.mubr.bf16.gmra.mrb[0].mxu0 %v2159
    %v2427 = vpop.f32.mrb[0].mxu0
    %v2428 = vadd.f32 0.0, %v2427
    %v2429 = vpop.f32.mrb[0].mxu0
    %v2430 = vadd.f32 0.0, %v2429
    %v2431 = vpop.f32.mrb[0].mxu0
    %v2432 = vpop.f32.mrb[0].mxu0
    %2433 = vdwg.mxu0
    %v2434 = vadd.f32 %v2155, %v2387
    %v2435 = vadd.f32 %v2156, %v2389
    %v2436 = vadd.f32 %v2157, %v2428
    %v2437 = vadd.f32 %v2158, %v2430
    %v2438 = vmul.f32 %v2434, 0.5
    %v2439 = vtanh.pop %v2438
    %v2440 = vmul.f32 %v2439, 0.5
    %v2441 = vadd.f32 %v2440, 0.5
    %v2442 = vmul.f32 %v2435, 0.5
    %v2443 = vtanh.pop %v2442
    %v2444 = vmul.f32 %v2443, 0.5
    %v2445 = vadd.f32 %v2444, 0.5
    %v2446 = vtanh.pop %v2436
    %v2447 = vmul.f32 %v2437, 0.5
    %v2448 = vtanh.pop %v2447
    %v2449 = vmul.f32 %v2448, 0.5
    %v2450 = vadd.f32 %v2449, 0.5
    %v2451 = vmul.f32 %v2445, %v2147
    %v2452 = vmul.f32 %v2441, %v2446
    %v2453 = vadd.f32 %v2451, %v2452
    %v2454 = vtanh.pop %v2453
    %v2455 = vmul.f32 %v2450, %v2454
    %s2456 = scalar_lea.vmem [#allocation5], 48
    %2457 = vst [vmem:[%s2456] sm:$0xff] %v2455
    %s2458 = smul.u32 7, 4
    %s2459 = smul.addr %s2458, 8
    %s2460 = scalar_lea.vmem [#allocation4], %s2459
    %v2461 = vld [vmem:[%s2460] sm:$0xff]
    %v2462 = vld [vmem:[%s2460 + $0x8] sm:$0xff]
    %v2463 = vld [vmem:[%s2460 + $0x10] sm:$0xff]
    %v2464 = vld [vmem:[%s2460 + $0x18] sm:$0xff]
    %v2465 = vpack.c.bf16 %v2455, %v2455
    %v2466 = vld [vmem:[#allocation8] sm:$0xff]
    %v2467 = vld [vmem:[#allocation8 + $0x8] sm:$0xff]
    %v2468 = vld [vmem:[#allocation8 + $0x10] sm:$0xff]
    %v2469 = vld [vmem:[#allocation8 + $0x18] sm:$0xff]
    %v2470 = vld [vmem:[#allocation8 + $0x20] sm:$0xff]
    %v2471 = vld [vmem:[#allocation8 + $0x28] sm:$0xff]
    %v2472 = vld [vmem:[#allocation8 + $0x30] sm:$0xff]
    %v2473 = vld [vmem:[#allocation8 + $0x38] sm:$0xff]
    %v2474 = vld [vmem:[#allocation8 + $0x40] sm:$0xff]
    %v2475 = vld [vmem:[#allocation8 + $0x48] sm:$0xff]
    %v2476 = vld [vmem:[#allocation8 + $0x50] sm:$0xff]
    %v2477 = vld [vmem:[#allocation8 + $0x58] sm:$0xff]
    %v2478 = vld [vmem:[#allocation8 + $0x60] sm:$0xff]
    %v2479 = vld [vmem:[#allocation8 + $0x68] sm:$0xff]
    %v2480 = vld [vmem:[#allocation8 + $0x70] sm:$0xff]
    %v2481 = vld [vmem:[#allocation8 + $0x78] sm:$0xff]
    %v2482 = vld [vmem:[#allocation8 + $0x80] sm:$0xff]
    %v2483 = vld [vmem:[#allocation8 + $0x88] sm:$0xff]
    %v2484 = vld [vmem:[#allocation8 + $0x90] sm:$0xff]
    %v2485 = vld [vmem:[#allocation8 + $0x98] sm:$0xff]
    %v2486 = vld [vmem:[#allocation8 + $0xa0] sm:$0xff]
    %v2487 = vld [vmem:[#allocation8 + $0xa8] sm:$0xff]
    %v2488 = vld [vmem:[#allocation8 + $0xb0] sm:$0xff]
    %v2489 = vld [vmem:[#allocation8 + $0xb8] sm:$0xff]
    %v2490 = vld [vmem:[#allocation8 + $0xc0] sm:$0xff]
    %v2491 = vld [vmem:[#allocation8 + $0xc8] sm:$0xff]
    %v2492 = vld [vmem:[#allocation8 + $0xd0] sm:$0xff]
    %v2493 = vld [vmem:[#allocation8 + $0xd8] sm:$0xff]
    %v2494 = vld [vmem:[#allocation8 + $0xe0] sm:$0xff]
    %v2495 = vld [vmem:[#allocation8 + $0xe8] sm:$0xff]
    %v2496 = vld [vmem:[#allocation8 + $0xf0] sm:$0xff]
    %v2497 = vld [vmem:[#allocation8 + $0xf8] sm:$0xff]
    %v2530 = vunpack.c.l.b16 %v2466
    %v2531 = vunpack.c.h.b16 %v2466
    %v2532 = vunpack.c.l.b16 %v2467
    %v2533 = vunpack.c.h.b16 %v2467
    %v2534 = vunpack.c.l.b16 %v2468
    %v2535 = vunpack.c.h.b16 %v2468
    %v2536 = vunpack.c.l.b16 %v2469
    %v2537 = vunpack.c.h.b16 %v2469
    %v2538 = vunpack.c.l.b16 %v2470
    %v2539 = vunpack.c.h.b16 %v2470
    %v2540 = vunpack.c.l.b16 %v2471
    %v2541 = vunpack.c.h.b16 %v2471
    %v2542 = vunpack.c.l.b16 %v2472
    %v2543 = vunpack.c.h.b16 %v2472
    %v2544 = vunpack.c.l.b16 %v2473
    %v2545 = vunpack.c.h.b16 %v2473
    %v2546 = vunpack.c.l.b16 %v2474
    %v2547 = vunpack.c.h.b16 %v2474
    %v2548 = vunpack.c.l.b16 %v2475
    %v2549 = vunpack.c.h.b16 %v2475
    %v2550 = vunpack.c.l.b16 %v2476
    %v2551 = vunpack.c.h.b16 %v2476
    %v2552 = vunpack.c.l.b16 %v2477
    %v2553 = vunpack.c.h.b16 %v2477
    %v2554 = vunpack.c.l.b16 %v2478
    %v2555 = vunpack.c.h.b16 %v2478
    %v2556 = vunpack.c.l.b16 %v2479
    %v2557 = vunpack.c.h.b16 %v2479
    %v2558 = vunpack.c.l.b16 %v2480
    %v2559 = vunpack.c.h.b16 %v2480
    %v2560 = vunpack.c.l.b16 %v2481
    %v2561 = vunpack.c.h.b16 %v2481
    %v2562 = vunpack.c.l.b16 %v2482
    %v2563 = vunpack.c.h.b16 %v2482
    %v2564 = vunpack.c.l.b16 %v2483
    %v2565 = vunpack.c.h.b16 %v2483
    %v2566 = vunpack.c.l.b16 %v2484
    %v2567 = vunpack.c.h.b16 %v2484
    %v2568 = vunpack.c.l.b16 %v2485
    %v2569 = vunpack.c.h.b16 %v2485
    %v2570 = vunpack.c.l.b16 %v2486
    %v2571 = vunpack.c.h.b16 %v2486
    %v2572 = vunpack.c.l.b16 %v2487
    %v2573 = vunpack.c.h.b16 %v2487
    %v2574 = vunpack.c.l.b16 %v2488
    %v2575 = vunpack.c.h.b16 %v2488
    %v2576 = vunpack.c.l.b16 %v2489
    %v2577 = vunpack.c.h.b16 %v2489
    %v2578 = vunpack.c.l.b16 %v2490
    %v2579 = vunpack.c.h.b16 %v2490
    %v2580 = vunpack.c.l.b16 %v2491
    %v2581 = vunpack.c.h.b16 %v2491
    %v2582 = vunpack.c.l.b16 %v2492
    %v2583 = vunpack.c.h.b16 %v2492
    %v2584 = vunpack.c.l.b16 %v2493
    %v2585 = vunpack.c.h.b16 %v2493
    %v2586 = vunpack.c.l.b16 %v2494
    %v2587 = vunpack.c.h.b16 %v2494
    %v2588 = vunpack.c.l.b16 %v2495
    %v2589 = vunpack.c.h.b16 %v2495
    %v2590 = vunpack.c.l.b16 %v2496
    %v2591 = vunpack.c.h.b16 %v2496
    %v2592 = vunpack.c.l.b16 %v2497
    %v2593 = vunpack.c.h.b16 %v2497
    %v2594 = vpack.c.b16 %v2534, %v2530
    %v2595 = vpack.c.b16 %v2535, %v2531
    %v2596 = vpack.c.b16 %v2536, %v2532
    %v2597 = vpack.c.b16 %v2537, %v2533
    %v2598 = vpack.c.b16 %v2542, %v2538
    %v2599 = vpack.c.b16 %v2543, %v2539
    %v2600 = vpack.c.b16 %v2544, %v2540
    %v2601 = vpack.c.b16 %v2545, %v2541
    %v2602 = vpack.c.b16 %v2550, %v2546
    %v2603 = vpack.c.b16 %v2551, %v2547
    %v2604 = vpack.c.b16 %v2552, %v2548
    %v2605 = vpack.c.b16 %v2553, %v2549
    %v2606 = vpack.c.b16 %v2558, %v2554
    %v2607 = vpack.c.b16 %v2559, %v2555
    %v2608 = vpack.c.b16 %v2560, %v2556
    %v2609 = vpack.c.b16 %v2561, %v2557
    %v2610 = vpack.c.b16 %v2566, %v2562
    %v2611 = vpack.c.b16 %v2567, %v2563
    %v2612 = vpack.c.b16 %v2568, %v2564
    %v2613 = vpack.c.b16 %v2569, %v2565
    %v2614 = vpack.c.b16 %v2574, %v2570
    %v2615 = vpack.c.b16 %v2575, %v2571
    %v2616 = vpack.c.b16 %v2576, %v2572
    %v2617 = vpack.c.b16 %v2577, %v2573
    %v2618 = vpack.c.b16 %v2582, %v2578
    %v2619 = vpack.c.b16 %v2583, %v2579
    %v2620 = vpack.c.b16 %v2584, %v2580
    %v2621 = vpack.c.b16 %v2585, %v2581
    %v2622 = vpack.c.b16 %v2590, %v2586
    %v2623 = vpack.c.b16 %v2591, %v2587
    %v2624 = vpack.c.b16 %v2592, %v2588
    %v2625 = vpack.c.b16 %v2593, %v2589
    %2658 = vmatprep.subr.bf16.mxu0 %v2595
    %2659 = vmatpush1.bf16.msra.mxu0 %v2594
    %2660 = vmatprep.subr.bf16.mxu0 %v2599
    %2661 = vmatpush1.bf16.msra.mxu0 %v2598
    %2662 = vmatprep.subr.bf16.mxu0 %v2603
    %2663 = vmatpush1.bf16.msra.mxu0 %v2602
    %2664 = vmatprep.subr.bf16.mxu0 %v2607
    %2665 = vmatpush1.bf16.msra.mxu0 %v2606
    %2666 = vmatprep.subr.bf16.mxu0 %v2611
    %2667 = vmatpush1.bf16.msra.mxu0 %v2610
    %2668 = vmatprep.subr.bf16.mxu0 %v2615
    %2669 = vmatpush1.bf16.msra.mxu0 %v2614
    %2670 = vmatprep.subr.bf16.mxu0 %v2619
    %2671 = vmatpush1.bf16.msra.mxu0 %v2618
    %2672 = vmatprep.subr.bf16.mxu0 %v2623
    %2673 = vmatpush1.bf16.msra.mxu0 %v2622
    %2674 = vmatprep.subr.bf16.mxu0 0
    %2675 = vmatpush1.bf16.msra.mxu0 0
    %2676 = vmatprep.subr.bf16.mxu0 0
    %2677 = vmatpush1.bf16.msra.mxu0 0
    %2678 = vmatprep.subr.bf16.mxu0 0
    %2679 = vmatpush1.bf16.msra.mxu0 0
    %2680 = vmatprep.subr.bf16.mxu0 0
    %2681 = vmatpush1.bf16.msra.mxu0 0
    %2682 = vmatprep.subr.bf16.mxu0 0
    %2683 = vmatpush1.bf16.msra.mxu0 0
    %2684 = vmatprep.subr.bf16.mxu0 0
    %2685 = vmatpush1.bf16.msra.mxu0 0
    %2686 = vmatprep.subr.bf16.mxu0 0
    %2687 = vmatpush1.bf16.msra.mxu0 0
    %2688 = vmatprep.subr.bf16.mxu0 0
    %2689 = vmatpush1.bf16.msra.mxu0 0
    %2690 = vmatprep.mubr.bf16.mxu0 0
    %2691 = vmatmul.mubr.bf16.gmra.mrb[0].mxu0 %v2465
    %v2692 = vpop.f32.mrb[0].mxu0
    %v2693 = vadd.f32 0.0, %v2692
    %v2694 = vpop.f32.mrb[0].mxu0
    %v2695 = vadd.f32 0.0, %v2694
    %v2696 = vpop.f32.mrb[0].mxu0
    %v2697 = vpop.f32.mrb[0].mxu0
    %2698 = vdwg.mxu0
    %2699 = vmatprep.subr.bf16.mxu0 %v2597
    %2700 = vmatpush1.bf16.msra.mxu0 %v2596
    %2701 = vmatprep.subr.bf16.mxu0 %v2601
    %2702 = vmatpush1.bf16.msra.mxu0 %v2600
    %2703 = vmatprep.subr.bf16.mxu0 %v2605
    %2704 = vmatpush1.bf16.msra.mxu0 %v2604
    %2705 = vmatprep.subr.bf16.mxu0 %v2609
    %2706 = vmatpush1.bf16.msra.mxu0 %v2608
    %2707 = vmatprep.subr.bf16.mxu0 %v2613
    %2708 = vmatpush1.bf16.msra.mxu0 %v2612
    %2709 = vmatprep.subr.bf16.mxu0 %v2617
    %2710 = vmatpush1.bf16.msra.mxu0 %v2616
    %2711 = vmatprep.subr.bf16.mxu0 %v2621
    %2712 = vmatpush1.bf16.msra.mxu0 %v2620
    %2713 = vmatprep.subr.bf16.mxu0 %v2625
    %2714 = vmatpush1.bf16.msra.mxu0 %v2624
    %2715 = vmatprep.subr.bf16.mxu0 0
    %2716 = vmatpush1.bf16.msra.mxu0 0
    %2717 = vmatprep.subr.bf16.mxu0 0
    %2718 = vmatpush1.bf16.msra.mxu0 0
    %2719 = vmatprep.subr.bf16.mxu0 0
    %2720 = vmatpush1.bf16.msra.mxu0 0
    %2721 = vmatprep.subr.bf16.mxu0 0
    %2722 = vmatpush1.bf16.msra.mxu0 0
    %2723 = vmatprep.subr.bf16.mxu0 0
    %2724 = vmatpush1.bf16.msra.mxu0 0
    %2725 = vmatprep.subr.bf16.mxu0 0
    %2726 = vmatpush1.bf16.msra.mxu0 0
    %2727 = vmatprep.subr.bf16.mxu0 0
    %2728 = vmatpush1.bf16.msra.mxu0 0
    %2729 = vmatprep.subr.bf16.mxu0 0
    %2730 = vmatpush1.bf16.msra.mxu0 0
    %2731 = vmatprep.mubr.bf16.mxu0 0
    %2732 = vmatmul.mubr.bf16.gmra.mrb[0].mxu0 %v2465
    %v2733 = vpop.f32.mrb[0].mxu0
    %v2734 = vadd.f32 0.0, %v2733
    %v2735 = vpop.f32.mrb[0].mxu0
    %v2736 = vadd.f32 0.0, %v2735
    %v2737 = vpop.f32.mrb[0].mxu0
    %v2738 = vpop.f32.mrb[0].mxu0
    %2739 = vdwg.mxu0
    %v2740 = vadd.f32 %v2461, %v2693
    %v2741 = vadd.f32 %v2462, %v2695
    %v2742 = vadd.f32 %v2463, %v2734
    %v2743 = vadd.f32 %v2464, %v2736
    %v2744 = vmul.f32 %v2740, 0.5
    %v2745 = vtanh.pop %v2744
    %v2746 = vmul.f32 %v2745, 0.5
    %v2747 = vadd.f32 %v2746, 0.5
    %v2748 = vmul.f32 %v2741, 0.5
    %v2749 = vtanh.pop %v2748
    %v2750 = vmul.f32 %v2749, 0.5
    %v2751 = vadd.f32 %v2750, 0.5
    %v2752 = vtanh.pop %v2742
    %v2753 = vmul.f32 %v2743, 0.5
    %v2754 = vtanh.pop %v2753
    %v2755 = vmul.f32 %v2754, 0.5
    %v2756 = vadd.f32 %v2755, 0.5
    %v2757 = vmul.f32 %v2751, %v2453
    %v2758 = vmul.f32 %v2747, %v2752
    %v2759 = vadd.f32 %v2757, %v2758
    %v2760 = vtanh.pop %v2759
    %v2761 = vmul.f32 %v2756, %v2760
    %s2762 = scalar_lea.vmem [#allocation5], 56
    %2763 = vst [vmem:[%s2762] sm:$0xff] %v2761
    %v2764 = vld [vmem:[#allocation5] sm:$0xff]
    %v2765 = vld [vmem:[#allocation5 + $0x8] sm:$0xff]
    %v2766 = vld [vmem:[#allocation5 + $0x10] sm:$0xff]
    %v2767 = vld [vmem:[#allocation5 + $0x18] sm:$0xff]
    %v2768 = vld [vmem:[#allocation5 + $0x20] sm:$0xff]
    %v2769 = vld [vmem:[#allocation5 + $0x28] sm:$0xff]
    %v2770 = vld [vmem:[#allocation5 + $0x30] sm:$0xff]
    %v2771 = vld [vmem:[#allocation5 + $0x38] sm:$0xff]
    %v2772 = vpack.c.bf16 %v2765, %v2764
    %v2773 = vpack.c.bf16 %v2767, %v2766
    %v2774 = vpack.c.bf16 %v2769, %v2768
    %v2775 = vpack.c.bf16 %v2771, %v2770
    %v2780 = vunpack.c.l.b16 %v2772
    %v2781 = vunpack.c.h.b16 %v2772
    %v2782 = vunpack.c.l.b16 %v2773
    %v2783 = vunpack.c.h.b16 %v2773
    %v2784 = vunpack.c.l.b16 %v2774
    %v2785 = vunpack.c.h.b16 %v2774
    %v2786 = vunpack.c.l.b16 %v2775
    %v2787 = vunpack.c.h.b16 %v2775
    %v2788 = vpack.c.b16 %v2780, %v2780
    %v2789 = vpack.c.b16 %v2781, %v2781
    %v2790 = vpack.c.b16 %v2782, %v2782
    %v2791 = vpack.c.b16 %v2783, %v2783
    %v2792 = vpack.c.b16 %v2784, %v2784
    %v2793 = vpack.c.b16 %v2785, %v2785
    %v2794 = vpack.c.b16 %v2786, %v2786
    %v2795 = vpack.c.b16 %v2787, %v2787
    %2804 = vst [vmem:[%s4] sm:$0xf] %v2788
    %2805 = vst [vmem:[%s4 + $0x4] sm:$0xf] %v2789
    %2806 = vst [vmem:[%s4 + $0x8] sm:$0xf] %v2790
    %2807 = vst [vmem:[%s4 + $0xc] sm:$0xf] %v2791
    %2808 = vst [vmem:[%s4 + $0x10] sm:$0xf] %v2792
    %2809 = vst [vmem:[%s4 + $0x14] sm:$0xf] %v2793
    %2810 = vst [vmem:[%s4 + $0x18] sm:$0xf] %v2794
    %2811 = vst [vmem:[%s4 + $0x1c] sm:$0xf] %v2795
    %2812 = vst [vmem:[#allocation2] sm:$0xff] %v2761
    %2813 = vst [vmem:[#allocation3] sm:$0xff] %v2759
    // Predicated region
    $region34: #{encoder_forward.2} parent=1 // pred_check
      %p2814 = pneg %p60
    $region35: #{encoder_forward.2} parent=1 // pred_check_branch
      %2816 = sbr.rel (%p2814) target = $region37
    $region36: #{encoder_forward.2} parent=1 // pred_region
      %2817 = vst [vmem:[%s5] sm:$0xff] %v2761
      %2818 = vst [vmem:[%s6] sm:$0xff] %v2759
    $region37: #{encoder_forward.2} parent=1 // pred_fallthru
      _
    // Predicated region
    $region38: #{encoder_forward.2} parent=1 // pred_check
      _
    $region39: #{encoder_forward.2} parent=1 // pred_check_branch
      %2820 = sbr.rel (0) target = $region41
    $region40: #{encoder_forward.2} parent=1 // pred_region
      _
    $region41: #{encoder_forward.2} parent=1 // pred_fallthru
      _
    // Predicated region
    $region42: #{encoder_forward.2} parent=1 // pred_check
      _
    $region43: #{encoder_forward.2} parent=1 // pred_check_branch
      %2822 = sbr.rel (0) target = $region45
    $region44: #{encoder_forward.2} parent=1 // pred_region
      _
    $region45: #{encoder_forward.2} parent=1 // pred_fallthru
      _
    // Predicated region
    $region46: #{encoder_forward.2} parent=1 // pred_check
      _
    $region47: #{encoder_forward.2} parent=1 // pred_check_branch
      %2824 = sbr.rel (0) target = $region49
    $region48: #{encoder_forward.2} parent=1 // pred_region
      _
    $region49: #{encoder_forward.2} parent=1 // pred_fallthru
      _
    // Predicated region
    $region50: #{encoder_forward.2} parent=1 // pred_check
      _
    $region51: #{encoder_forward.2} parent=1 // pred_check_branch
      %2826 = sbr.rel (0) target = $region53
    $region52: #{encoder_forward.2} parent=1 // pred_region
      _
    $region53: #{encoder_forward.2} parent=1 // pred_fallthru
      _
    // Predicated region
    $region54: #{encoder_forward.2} parent=1 // pred_check
      _
    $region55: #{encoder_forward.2} parent=1 // pred_check_branch
      %2828 = sbr.rel (0) target = $region57
    $region56: #{encoder_forward.2} parent=1 // pred_region
      _
    $region57: #{encoder_forward.2} parent=1 // pred_fallthru
      _
    // Predicated region
    $region58: #{encoder_forward.2} parent=1 // pred_check
      _
    $region59: #{encoder_forward.2} parent=1 // pred_check_branch
      %2830 = sbr.rel (0) target = $region61
    $region60: #{encoder_forward.2} parent=1 // pred_region
      _
    $region61: #{encoder_forward.2} parent=1 // pred_fallthru
      _
    %2831 = vsyncpa [#allocation7], 1
    %2832 = vsyncpa [#allocation9], 1

// kernel: encoder_forward.3
$region0: #{encoder_forward.3}
  #allocation0 [shape = 'u32[]', space=smem, size = 0x4, offset = 0x4, fixed_abs, tag = 'smem constant byte address 0x4 - core index']
  #allocation1 [shape = 'u32[144,128]{1,0:T(1,128)}', space=vmem, size = 0x12000, scoped, tag = 'internal scratch']
  #allocation2 [shape = 'f32[8,128]{1,0:T(8,128)}', space=vmem, size = 0x1000, scoped, tag = 'scratch operand']
  #allocation3 [shape = 'f32[8,128]{1,0:T(8,128)}', space=vmem, size = 0x1000, scoped, tag = 'scratch operand']
  #allocation4 [shape = 'f32[64,512]{1,0:T(8,128)}', space=vmem, size = 0x20000, scoped, tag = 'scratch operand']
  #allocation5 [shape = 'f32[64,128]{1,0:T(8,128)}', space=vmem, size = 0x8000, scoped, tag = 'scratch operand']
  %s0 = inlined_call_operand.vmem [shape: bf16[64,128], index: 0, kind: input, shape index: {}]
  %s1 = inlined_call_operand.vmem [shape: bf16[128,512], index: 1, kind: input, shape index: {}]
  %s2 = inlined_call_operand.vmem [shape: bf16[128,512], index: 2, kind: input, shape index: {}]
  %s3 = inlined_call_operand.vmem [shape: f32[1,512], index: 3, kind: input, shape index: {}]
  %s4 = inlined_call_operand.vmem [shape: f32[64,128], index: 4, kind: output, shape index: {0}]
  %s5 = inlined_call_operand.vmem [shape: f32[8,128], index: 5, kind: output, shape index: {1}]
  %s6 = inlined_call_operand.vmem [shape: f32[8,128], index: 6, kind: output, shape index: {2}]
  %7 = xla_tuple %s4, %s5, %s6
  %s8 = sld [smem:[#allocation0]]
  $region50: #{encoder_forward.3} parent=0
    _
  %s10 = ssub.s32 1, %s8
  %s11 = scalar_select 0, %s10, %s8
  // Predicated region
  $region2: #{encoder_forward.3} parent=0 // pred_check
    _
  $region3: #{encoder_forward.3} parent=0 // pred_check_branch
    %13 = sbr.rel (0) target = $region5
  $region4: #{encoder_forward.3} parent=0 // pred_region
    _
  $region5: #{encoder_forward.3} parent=0 // pred_fallthru
    _
  // Predicated region
  $region6: #{encoder_forward.3} parent=0 // pred_check
    _
  $region7: #{encoder_forward.3} parent=0 // pred_check_branch
    %15 = sbr.rel (0) target = $region9
  $region8: #{encoder_forward.3} parent=0 // pred_region
    _
  $region9: #{encoder_forward.3} parent=0 // pred_fallthru
    _
  // Predicated region
  $region10: #{encoder_forward.3} parent=0 // pred_check
    _
  $region11: #{encoder_forward.3} parent=0 // pred_check_branch
    %17 = sbr.rel (0) target = $region13
  $region12: #{encoder_forward.3} parent=0 // pred_region
    _
  $region13: #{encoder_forward.3} parent=0 // pred_fallthru
    _
  // Predicated region
  $region14: #{encoder_forward.3} parent=0 // pred_check
    _
  $region15: #{encoder_forward.3} parent=0 // pred_check_branch
    %19 = sbr.rel (0) target = $region17
  $region16: #{encoder_forward.3} parent=0 // pred_region
    _
  $region17: #{encoder_forward.3} parent=0 // pred_fallthru
    _
  %p21 = scmp.eq.s32.totalorder 0, 0
  // Predicated region
  $region18: #{encoder_forward.3} parent=0 // pred_check
    %p22 = pneg %p21
  $region19: #{encoder_forward.3} parent=0 // pred_check_branch
    %24 = sbr.rel (%p22) target = $region21
  $region20: #{encoder_forward.3} parent=0 // pred_region
    %25 = vst [vmem:[#allocation2] sm:$0xff] 0.0
    %26 = vst [vmem:[#allocation3] sm:$0xff] 0.0
  $region21: #{encoder_forward.3} parent=0 // pred_fallthru
    _
  %v27 = vld [vmem:[%s0] sm:$0xf]
  %v28 = vld [vmem:[%s0 + $0x4] sm:$0xf]
  %v29 = vld [vmem:[%s0 + $0x8] sm:$0xf]
  %v30 = vld [vmem:[%s0 + $0xc] sm:$0xf]
  %v31 = vld [vmem:[%s0 + $0x10] sm:$0xf]
  %v32 = vld [vmem:[%s0 + $0x14] sm:$0xf]
  %v33 = vld [vmem:[%s0 + $0x18] sm:$0xf]
  %v34 = vld [vmem:[%s0 + $0x1c] sm:$0xf]
  %v35 = vld [vmem:[%s1] sm:$0xff]
  %v36 = vld [vmem:[%s1 + $0x8] sm:$0xff]
  %v37 = vld [vmem:[%s1 + $0x10] sm:$0xff]
  %v38 = vld [vmem:[%s1 + $0x18] sm:$0xff]
  %v39 = vld [vmem:[%s1 + $0x20] sm:$0xff]
  %v40 = vld [vmem:[%s1 + $0x28] sm:$0xff]
  %v41 = vld [vmem:[%s1 + $0x30] sm:$0xff]
  %v42 = vld [vmem:[%s1 + $0x38] sm:$0xff]
  %v43 = vld [vmem:[%s1 + $0x40] sm:$0xff]
  %v44 = vld [vmem:[%s1 + $0x48] sm:$0xff]
  %v45 = vld [vmem:[%s1 + $0x50] sm:$0xff]
  %v46 = vld [vmem:[%s1 + $0x58] sm:$0xff]
  %v47 = vld [vmem:[%s1 + $0x60] sm:$0xff]
  %v48 = vld [vmem:[%s1 + $0x68] sm:$0xff]
  %v49 = vld [vmem:[%s1 + $0x70] sm:$0xff]
  %v50 = vld [vmem:[%s1 + $0x78] sm:$0xff]
  %v51 = vld [vmem:[%s1 + $0x80] sm:$0xff]
  %v52 = vld [vmem:[%s1 + $0x88] sm:$0xff]
  %v53 = vld [vmem:[%s1 + $0x90] sm:$0xff]
  %v54 = vld [vmem:[%s1 + $0x98] sm:$0xff]
  %v55 = vld [vmem:[%s1 + $0xa0] sm:$0xff]
  %v56 = vld [vmem:[%s1 + $0xa8] sm:$0xff]
  %v57 = vld [vmem:[%s1 + $0xb0] sm:$0xff]
  %v58 = vld [vmem:[%s1 + $0xb8] sm:$0xff]
  %v59 = vld [vmem:[%s1 + $0xc0] sm:$0xff]
  %v60 = vld [vmem:[%s1 + $0xc8] sm:$0xff]
  %v61 = vld [vmem:[%s1 + $0xd0] sm:$0xff]
  %v62 = vld [vmem:[%s1 + $0xd8] sm:$0xff]
  %v63 = vld [vmem:[%s1 + $0xe0] sm:$0xff]
  %v64 = vld [vmem:[%s1 + $0xe8] sm:$0xff]
  %v65 = vld [vmem:[%s1 + $0xf0] sm:$0xff]
  %v66 = vld [vmem:[%s1 + $0xf8] sm:$0xff]
  %v67 = vld [vmem:[%s3] sm:$0xf]
  %v69 = vlaneseq
  %v70 = vshrl.u32 %v69, 7
  %v71 = vsub.s32 0, %v70
  %v72 = vrot.slane %v67, %v71
  %v73 = vlaneseq
  %v74 = vshrl.u32 %v73, 7
  %v75 = vsub.s32 1, %v74
  %v76 = vrot.slane %v67, %v75
  %v77 = vlaneseq
  %v78 = vshrl.u32 %v77, 7
  %v79 = vsub.s32 2, %v78
  %v80 = vrot.slane %v67, %v79
  %v81 = vlaneseq
  %v82 = vshrl.u32 %v81, 7
  %v83 = vsub.s32 3, %v82
  %v84 = vrot.slane %v67, %v83
  %v97 = vunpack.c.l.b16 %v27
  %v98 = vunpack.c.l.b16 %v28
  %v99 = vunpack.c.l.b16 %v29
  %v100 = vunpack.c.l.b16 %v30
  %v101 = vunpack.c.l.b16 %v31
  %v102 = vunpack.c.l.b16 %v32
  %v103 = vunpack.c.l.b16 %v33
  %v104 = vunpack.c.l.b16 %v34
  %v105 = vpack.c.b16 %v98, %v97
  %v106 = vpack.c.b16 %v100, %v99
  %v107 = vpack.c.b16 %v102, %v101
  %v108 = vpack.c.b16 %v104, %v103
  %v145 = vunpack.c.l.b16 %v35
  %v146 = vunpack.c.h.b16 %v35
  %v147 = vunpack.c.l.b16 %v36
  %v148 = vunpack.c.h.b16 %v36
  %v149 = vunpack.c.l.b16 %v37
  %v150 = vunpack.c.h.b16 %v37
  %v151 = vunpack.c.l.b16 %v38
  %v152 = vunpack.c.h.b16 %v38
  %v153 = vunpack.c.l.b16 %v39
  %v154 = vunpack.c.h.b16 %v39
  %v155 = vunpack.c.l.b16 %v40
  %v156 = vunpack.c.h.b16 %v40
  %v157 = vunpack.c.l.b16 %v41
  %v158 = vunpack.c.h.b16 %v41
  %v159 = vunpack.c.l.b16 %v42
  %v160 = vunpack.c.h.b16 %v42
  %v161 = vunpack.c.l.b16 %v43
  %v162 = vunpack.c.h.b16 %v43
  %v163 = vunpack.c.l.b16 %v44
  %v164 = vunpack.c.h.b16 %v44
  %v165 = vunpack.c.l.b16 %v45
  %v166 = vunpack.c.h.b16 %v45
  %v167 = vunpack.c.l.b16 %v46
  %v168 = vunpack.c.h.b16 %v46
  %v169 = vunpack.c.l.b16 %v47
  %v170 = vunpack.c.h.b16 %v47
  %v171 = vunpack.c.l.b16 %v48
  %v172 = vunpack.c.h.b16 %v48
  %v173 = vunpack.c.l.b16 %v49
  %v174 = vunpack.c.h.b16 %v49
  %v175 = vunpack.c.l.b16 %v50
  %v176 = vunpack.c.h.b16 %v50
  %v177 = vunpack.c.l.b16 %v51
  %v178 = vunpack.c.h.b16 %v51
  %v179 = vunpack.c.l.b16 %v52
  %v180 = vunpack.c.h.b16 %v52
  %v181 = vunpack.c.l.b16 %v53
  %v182 = vunpack.c.h.b16 %v53
  %v183 = vunpack.c.l.b16 %v54
  %v184 = vunpack.c.h.b16 %v54
  %v185 = vunpack.c.l.b16 %v55
  %v186 = vunpack.c.h.b16 %v55
  %v187 = vunpack.c.l.b16 %v56
  %v188 = vunpack.c.h.b16 %v56
  %v189 = vunpack.c.l.b16 %v57
  %v190 = vunpack.c.h.b16 %v57
  %v191 = vunpack.c.l.b16 %v58
  %v192 = vunpack.c.h.b16 %v58
  %v193 = vunpack.c.l.b16 %v59
  %v194 = vunpack.c.h.b16 %v59
  %v195 = vunpack.c.l.b16 %v60
  %v196 = vunpack.c.h.b16 %v60
  %v197 = vunpack.c.l.b16 %v61
  %v198 = vunpack.c.h.b16 %v61
  %v199 = vunpack.c.l.b16 %v62
  %v200 = vunpack.c.h.b16 %v62
  %v201 = vunpack.c.l.b16 %v63
  %v202 = vunpack.c.h.b16 %v63
  %v203 = vunpack.c.l.b16 %v64
  %v204 = vunpack.c.h.b16 %v64
  %v205 = vunpack.c.l.b16 %v65
  %v206 = vunpack.c.h.b16 %v65
  %v207 = vunpack.c.l.b16 %v66
  %v208 = vunpack.c.h.b16 %v66
  %v209 = vpack.c.b16 %v149, %v145
  %v210 = vpack.c.b16 %v150, %v146
  %v211 = vpack.c.b16 %v151, %v147
  %v212 = vpack.c.b16 %v152, %v148
  %v213 = vpack.c.b16 %v157, %v153
  %v214 = vpack.c.b16 %v158, %v154
  %v215 = vpack.c.b16 %v159, %v155
  %v216 = vpack.c.b16 %v160, %v156
  %v217 = vpack.c.b16 %v165, %v161
  %v218 = vpack.c.b16 %v166, %v162
  %v219 = vpack.c.b16 %v167, %v163
  %v220 = vpack.c.b16 %v168, %v164
  %v221 = vpack.c.b16 %v173, %v169
  %v222 = vpack.c.b16 %v174, %v170
  %v223 = vpack.c.b16 %v175, %v171
  %v224 = vpack.c.b16 %v176, %v172
  %v225 = vpack.c.b16 %v181, %v177
  %v226 = vpack.c.b16 %v182, %v178
  %v227 = vpack.c.b16 %v183, %v179
  %v228 = vpack.c.b16 %v184, %v180
  %v229 = vpack.c.b16 %v189, %v185
  %v230 = vpack.c.b16 %v190, %v186
  %v231 = vpack.c.b16 %v191, %v187
  %v232 = vpack.c.b16 %v192, %v188
  %v233 = vpack.c.b16 %v197, %v193
  %v234 = vpack.c.b16 %v198, %v194
  %v235 = vpack.c.b16 %v199, %v195
  %v236 = vpack.c.b16 %v200, %v196
  %v237 = vpack.c.b16 %v205, %v201
  %v238 = vpack.c.b16 %v206, %v202
  %v239 = vpack.c.b16 %v207, %v203
  %v240 = vpack.c.b16 %v208, %v204
  %273 = vmatprep.subr.bf16.mxu0 %v210
  %274 = vmatpush1.bf16.msra.mxu0 %v209
  %275 = vmatprep.subr.bf16.mxu0 %v214
  %276 = vmatpush1.bf16.msra.mxu0 %v213
  %277 = vmatprep.subr.bf16.mxu0 %v218
  %278 = vmatpush1.bf16.msra.mxu0 %v217
  %279 = vmatprep.subr.bf16.mxu0 %v222
  %280 = vmatpush1.bf16.msra.mxu0 %v221
  %281 = vmatprep.subr.bf16.mxu0 %v226
  %282 = vmatpush1.bf16.msra.mxu0 %v225
  %283 = vmatprep.subr.bf16.mxu0 %v230
  %284 = vmatpush1.bf16.msra.mxu0 %v229
  %285 = vmatprep.subr.bf16.mxu0 %v234
  %286 = vmatpush1.bf16.msra.mxu0 %v233
  %287 = vmatprep.subr.bf16.mxu0 %v238
  %288 = vmatpush1.bf16.msra.mxu0 %v237
  %289 = vmatprep.subr.bf16.mxu0 0
  %290 = vmatpush1.bf16.msra.mxu0 0
  %291 = vmatprep.subr.bf16.mxu0 0
  %292 = vmatpush1.bf16.msra.mxu0 0
  %293 = vmatprep.subr.bf16.mxu0 0
  %294 = vmatpush1.bf16.msra.mxu0 0
  %295 = vmatprep.subr.bf16.mxu0 0
  %296 = vmatpush1.bf16.msra.mxu0 0
  %297 = vmatprep.subr.bf16.mxu0 0
  %298 = vmatpush1.bf16.msra.mxu0 0
  %299 = vmatprep.subr.bf16.mxu0 0
  %300 = vmatpush1.bf16.msra.mxu0 0
  %301 = vmatprep.subr.bf16.mxu0 0
  %302 = vmatpush1.bf16.msra.mxu0 0
  %303 = vmatprep.subr.bf16.mxu0 0
  %304 = vmatpush1.bf16.msra.mxu0 0
  %305 = vmatprep.mubr.bf16.mxu0 0
  %306 = vmatmul.mubr.bf16.gmra.mrb[0].mxu0 %v105
  %v307 = vpop.f32.mrb[0].mxu0
  %v308 = vadd.f32 %v72, %v307
  %v309 = vpop.f32.mrb[0].mxu0
  %v310 = vadd.f32 %v76, %v309
  %v311 = vpop.f32.mrb[0].mxu0
  %v312 = vadd.f32 %v72, %v311
  %v313 = vpop.f32.mrb[0].mxu0
  %v314 = vadd.f32 %v76, %v313
  %315 = vmatprep.mubr.bf16.mxu0 0
  %316 = vmatmul.mubr.bf16.gmra.mrb[0].mxu0 %v106
  %v317 = vpop.f32.mrb[0].mxu0
  %v318 = vadd.f32 %v72, %v317
  %v319 = vpop.f32.mrb[0].mxu0
  %v320 = vadd.f32 %v76, %v319
  %v321 = vpop.f32.mrb[0].mxu0
  %v322 = vadd.f32 %v72, %v321
  %v323 = vpop.f32.mrb[0].mxu0
  %v324 = vadd.f32 %v76, %v323
  %325 = vmatprep.mubr.bf16.mxu0 0
  %326 = vmatmul.mubr.bf16.gmra.mrb[0].mxu0 %v107
  %v327 = vpop.f32.mrb[0].mxu0
  %v328 = vadd.f32 %v72, %v327
  %v329 = vpop.f32.mrb[0].mxu0
  %v330 = vadd.f32 %v76, %v329
  %v331 = vpop.f32.mrb[0].mxu0
  %v332 = vadd.f32 %v72, %v331
  %v333 = vpop.f32.mrb[0].mxu0
  %v334 = vadd.f32 %v76, %v333
  %335 = vmatprep.mubr.bf16.mxu0 0
  %336 = vmatmul.mubr.bf16.gmra.mrb[0].mxu0 %v108
  %v337 = vpop.f32.mrb[0].mxu0
  %v338 = vadd.f32 %v72, %v337
  %v339 = vpop.f32.mrb[0].mxu0
  %v340 = vadd.f32 %v76, %v339
  %v341 = vpop.f32.mrb[0].mxu0
  %v342 = vadd.f32 %v72, %v341
  %v343 = vpop.f32.mrb[0].mxu0
  %v344 = vadd.f32 %v76, %v343
  %345 = vdwg.mxu0
  %346 = vmatprep.subr.bf16.mxu0 %v212
  %347 = vmatpush1.bf16.msra.mxu0 %v211
  %348 = vmatprep.subr.bf16.mxu0 %v216
  %349 = vmatpush1.bf16.msra.mxu0 %v215
  %350 = vmatprep.subr.bf16.mxu0 %v220
  %351 = vmatpush1.bf16.msra.mxu0 %v219
  %352 = vmatprep.subr.bf16.mxu0 %v224
  %353 = vmatpush1.bf16.msra.mxu0 %v223
  %354 = vmatprep.subr.bf16.mxu0 %v228
  %355 = vmatpush1.bf16.msra.mxu0 %v227
  %356 = vmatprep.subr.bf16.mxu0 %v232
  %357 = vmatpush1.bf16.msra.mxu0 %v231
  %358 = vmatprep.subr.bf16.mxu0 %v236
  %359 = vmatpush1.bf16.msra.mxu0 %v235
  %360 = vmatprep.subr.bf16.mxu0 %v240
  %361 = vmatpush1.bf16.msra.mxu0 %v239
  %362 = vmatprep.subr.bf16.mxu0 0
  %363 = vmatpush1.bf16.msra.mxu0 0
  %364 = vmatprep.subr.bf16.mxu0 0
  %365 = vmatpush1.bf16.msra.mxu0 0
  %366 = vmatprep.subr.bf16.mxu0 0
  %367 = vmatpush1.bf16.msra.mxu0 0
  %368 = vmatprep.subr.bf16.mxu0 0
  %369 = vmatpush1.bf16.msra.mxu0 0
  %370 = vmatprep.subr.bf16.mxu0 0
  %371 = vmatpush1.bf16.msra.mxu0 0
  %372 = vmatprep.subr.bf16.mxu0 0
  %373 = vmatpush1.bf16.msra.mxu0 0
  %374 = vmatprep.subr.bf16.mxu0 0
  %375 = vmatpush1.bf16.msra.mxu0 0
  %376 = vmatprep.subr.bf16.mxu0 0
  %377 = vmatpush1.bf16.msra.mxu0 0
  %378 = vmatprep.mubr.bf16.mxu0 0
  %379 = vmatmul.mubr.bf16.gmra.mrb[0].mxu0 %v105
  %v380 = vpop.f32.mrb[0].mxu0
  %v381 = vadd.f32 %v80, %v380
  %v382 = vpop.f32.mrb[0].mxu0
  %v383 = vadd.f32 %v84, %v382
  %v384 = vpop.f32.mrb[0].mxu0
  %v385 = vadd.f32 %v80, %v384
  %v386 = vpop.f32.mrb[0].mxu0
  %v387 = vadd.f32 %v84, %v386
  %388 = vmatprep.mubr.bf16.mxu0 0
  %389 = vmatmul.mubr.bf16.gmra.mrb[0].mxu0 %v106
  %v390 = vpop.f32.mrb[0].mxu0
  %v391 = vadd.f32 %v80, %v390
  %v392 = vpop.f32.mrb[0].mxu0
  %v393 = vadd.f32 %v84, %v392
  %v394 = vpop.f32.mrb[0].mxu0
  %v395 = vadd.f32 %v80, %v394
  %v396 = vpop.f32.mrb[0].mxu0
  %v397 = vadd.f32 %v84, %v396
  %398 = vmatprep.mubr.bf16.mxu0 0
  %399 = vmatmul.mubr.bf16.gmra.mrb[0].mxu0 %v107
  %v400 = vpop.f32.mrb[0].mxu0
  %v401 = vadd.f32 %v80, %v400
  %v402 = vpop.f32.mrb[0].mxu0
  %v403 = vadd.f32 %v84, %v402
  %v404 = vpop.f32.mrb[0].mxu0
  %v405 = vadd.f32 %v80, %v404
  %v406 = vpop.f32.mrb[0].mxu0
  %v407 = vadd.f32 %v84, %v406
  %408 = vmatprep.mubr.bf16.mxu0 0
  %409 = vmatmul.mubr.bf16.gmra.mrb[0].mxu0 %v108
  %v410 = vpop.f32.mrb[0].mxu0
  %v411 = vadd.f32 %v80, %v410
  %v412 = vpop.f32.mrb[0].mxu0
  %v413 = vadd.f32 %v84, %v412
  %v414 = vpop.f32.mrb[0].mxu0
  %v415 = vadd.f32 %v80, %v414
  %v416 = vpop.f32.mrb[0].mxu0
  %v417 = vadd.f32 %v84, %v416
  %418 = vdwg.mxu0
  %419 = vst [vmem:[#allocation4] sm:$0xff] %v308
  %420 = vst [vmem:[#allocation4 + $0x8] sm:$0xff] %v310
  %421 = vst [vmem:[#allocation4 + $0x10] sm:$0xff] %v381
  %422 = vst [vmem:[#allocation4 + $0x18] sm:$0xff] %v383
  %423 = vst [vmem:[#allocation4 + $0x20] sm:$0xff] %v312
  %424 = vst [vmem:[#allocation4 + $0x28] sm:$0xff] %v314
  %425 = vst [vmem:[#allocation4 + $0x30] sm:$0xff] %v385
  %426 = vst [vmem:[#allocation4 + $0x38] sm:$0xff] %v387
  %427 = vst [vmem:[#allocation4 + $0x40] sm:$0xff] %v318
  %428 = vst [vmem:[#allocation4 + $0x48] sm:$0xff] %v320
  %429 = vst [vmem:[#allocation4 + $0x50] sm:$0xff] %v391
  %430 = vst [vmem:[#allocation4 + $0x58] sm:$0xff] %v393
  %431 = vst [vmem:[#allocation4 + $0x60] sm:$0xff] %v322
  %432 = vst [vmem:[#allocation4 + $0x68] sm:$0xff] %v324
  %433 = vst [vmem:[#allocation4 + $0x70] sm:$0xff] %v395
  %434 = vst [vmem:[#allocation4 + $0x78] sm:$0xff] %v397
  %435 = vst [vmem:[#allocation4 + $0x80] sm:$0xff] %v328
  %436 = vst [vmem:[#allocation4 + $0x88] sm:$0xff] %v330
  %437 = vst [vmem:[#allocation4 + $0x90] sm:$0xff] %v401
  %438 = vst [vmem:[#allocation4 + $0x98] sm:$0xff] %v403
  %439 = vst [vmem:[#allocation4 + $0xa0] sm:$0xff] %v332
  %440 = vst [vmem:[#allocation4 + $0xa8] sm:$0xff] %v334
  %441 = vst [vmem:[#allocation4 + $0xb0] sm:$0xff] %v405
  %442 = vst [vmem:[#allocation4 + $0xb8] sm:$0xff] %v407
  %443 = vst [vmem:[#allocation4 + $0xc0] sm:$0xff] %v338
  %444 = vst [vmem:[#allocation4 + $0xc8] sm:$0xff] %v340
  %445 = vst [vmem:[#allocation4 + $0xd0] sm:$0xff] %v411
  %446 = vst [vmem:[#allocation4 + $0xd8] sm:$0xff] %v413
  %447 = vst [vmem:[#allocation4 + $0xe0] sm:$0xff] %v342
  %448 = vst [vmem:[#allocation4 + $0xe8] sm:$0xff] %v344
  %449 = vst [vmem:[#allocation4 + $0xf0] sm:$0xff] %v415
  %450 = vst [vmem:[#allocation4 + $0xf8] sm:$0xff] %v417
  %v451 = vld [vmem:[#allocation2] sm:$0xff]
  %v452 = vld [vmem:[#allocation3] sm:$0xff]
  %s453 = smul.u32 0, 4
  %s454 = smul.addr %s453, 8
  %s455 = scalar_lea.vmem [#allocation4], %s454
  %v456 = vld [vmem:[%s455] sm:$0xff]
  %v457 = vld [vmem:[%s455 + $0x8] sm:$0xff]
  %v458 = vld [vmem:[%s455 + $0x10] sm:$0xff]
  %v459 = vld [vmem:[%s455 + $0x18] sm:$0xff]
  %v460 = vpack.c.bf16 %v451, %v451
  %v461 = vld [vmem:[%s2] sm:$0xff]
  %v462 = vld [vmem:[%s2 + $0x8] sm:$0xff]
  %v463 = vld [vmem:[%s2 + $0x10] sm:$0xff]
  %v464 = vld [vmem:[%s2 + $0x18] sm:$0xff]
  %v465 = vld [vmem:[%s2 + $0x20] sm:$0xff]
  %v466 = vld [vmem:[%s2 + $0x28] sm:$0xff]
  %v467 = vld [vmem:[%s2 + $0x30] sm:$0xff]
  %v468 = vld [vmem:[%s2 + $0x38] sm:$0xff]
  %v469 = vld [vmem:[%s2 + $0x40] sm:$0xff]
  %v470 = vld [vmem:[%s2 + $0x48] sm:$0xff]
  %v471 = vld [vmem:[%s2 + $0x50] sm:$0xff]
  %v472 = vld [vmem:[%s2 + $0x58] sm:$0xff]
  %v473 = vld [vmem:[%s2 + $0x60] sm:$0xff]
  %v474 = vld [vmem:[%s2 + $0x68] sm:$0xff]
  %v475 = vld [vmem:[%s2 + $0x70] sm:$0xff]
  %v476 = vld [vmem:[%s2 + $0x78] sm:$0xff]
  %v477 = vld [vmem:[%s2 + $0x80] sm:$0xff]
  %v478 = vld [vmem:[%s2 + $0x88] sm:$0xff]
  %v479 = vld [vmem:[%s2 + $0x90] sm:$0xff]
  %v480 = vld [vmem:[%s2 + $0x98] sm:$0xff]
  %v481 = vld [vmem:[%s2 + $0xa0] sm:$0xff]
  %v482 = vld [vmem:[%s2 + $0xa8] sm:$0xff]
  %v483 = vld [vmem:[%s2 + $0xb0] sm:$0xff]
  %v484 = vld [vmem:[%s2 + $0xb8] sm:$0xff]
  %v485 = vld [vmem:[%s2 + $0xc0] sm:$0xff]
  %v486 = vld [vmem:[%s2 + $0xc8] sm:$0xff]
  %v487 = vld [vmem:[%s2 + $0xd0] sm:$0xff]
  %v488 = vld [vmem:[%s2 + $0xd8] sm:$0xff]
  %v489 = vld [vmem:[%s2 + $0xe0] sm:$0xff]
  %v490 = vld [vmem:[%s2 + $0xe8] sm:$0xff]
  %v491 = vld [vmem:[%s2 + $0xf0] sm:$0xff]
  %v492 = vld [vmem:[%s2 + $0xf8] sm:$0xff]
  %v525 = vunpack.c.l.b16 %v461
  %v526 = vunpack.c.h.b16 %v461
  %v527 = vunpack.c.l.b16 %v462
  %v528 = vunpack.c.h.b16 %v462
  %v529 = vunpack.c.l.b16 %v463
  %v530 = vunpack.c.h.b16 %v463
  %v531 = vunpack.c.l.b16 %v464
  %v532 = vunpack.c.h.b16 %v464
  %v533 = vunpack.c.l.b16 %v465
  %v534 = vunpack.c.h.b16 %v465
  %v535 = vunpack.c.l.b16 %v466
  %v536 = vunpack.c.h.b16 %v466
  %v537 = vunpack.c.l.b16 %v467
  %v538 = vunpack.c.h.b16 %v467
  %v539 = vunpack.c.l.b16 %v468
  %v540 = vunpack.c.h.b16 %v468
  %v541 = vunpack.c.l.b16 %v469
  %v542 = vunpack.c.h.b16 %v469
  %v543 = vunpack.c.l.b16 %v470
  %v544 = vunpack.c.h.b16 %v470
  %v545 = vunpack.c.l.b16 %v471
  %v546 = vunpack.c.h.b16 %v471
  %v547 = vunpack.c.l.b16 %v472
  %v548 = vunpack.c.h.b16 %v472
  %v549 = vunpack.c.l.b16 %v473
  %v550 = vunpack.c.h.b16 %v473
  %v551 = vunpack.c.l.b16 %v474
  %v552 = vunpack.c.h.b16 %v474
  %v553 = vunpack.c.l.b16 %v475
  %v554 = vunpack.c.h.b16 %v475
  %v555 = vunpack.c.l.b16 %v476
  %v556 = vunpack.c.h.b16 %v476
  %v557 = vunpack.c.l.b16 %v477
  %v558 = vunpack.c.h.b16 %v477
  %v559 = vunpack.c.l.b16 %v478
  %v560 = vunpack.c.h.b16 %v478
  %v561 = vunpack.c.l.b16 %v479
  %v562 = vunpack.c.h.b16 %v479
  %v563 = vunpack.c.l.b16 %v480
  %v564 = vunpack.c.h.b16 %v480
  %v565 = vunpack.c.l.b16 %v481
  %v566 = vunpack.c.h.b16 %v481
  %v567 = vunpack.c.l.b16 %v482
  %v568 = vunpack.c.h.b16 %v482
  %v569 = vunpack.c.l.b16 %v483
  %v570 = vunpack.c.h.b16 %v483
  %v571 = vunpack.c.l.b16 %v484
  %v572 = vunpack.c.h.b16 %v484
  %v573 = vunpack.c.l.b16 %v485
  %v574 = vunpack.c.h.b16 %v485
  %v575 = vunpack.c.l.b16 %v486
  %v576 = vunpack.c.h.b16 %v486
  %v577 = vunpack.c.l.b16 %v487
  %v578 = vunpack.c.h.b16 %v487
  %v579 = vunpack.c.l.b16 %v488
  %v580 = vunpack.c.h.b16 %v488
  %v581 = vunpack.c.l.b16 %v489
  %v582 = vunpack.c.h.b16 %v489
  %v583 = vunpack.c.l.b16 %v490
  %v584 = vunpack.c.h.b16 %v490
  %v585 = vunpack.c.l.b16 %v491
  %v586 = vunpack.c.h.b16 %v491
  %v587 = vunpack.c.l.b16 %v492
  %v588 = vunpack.c.h.b16 %v492
  %v589 = vpack.c.b16 %v529, %v525
  %v590 = vpack.c.b16 %v530, %v526
  %v591 = vpack.c.b16 %v531, %v527
  %v592 = vpack.c.b16 %v532, %v528
  %v593 = vpack.c.b16 %v537, %v533
  %v594 = vpack.c.b16 %v538, %v534
  %v595 = vpack.c.b16 %v539, %v535
  %v596 = vpack.c.b16 %v540, %v536
  %v597 = vpack.c.b16 %v545, %v541
  %v598 = vpack.c.b16 %v546, %v542
  %v599 = vpack.c.b16 %v547, %v543
  %v600 = vpack.c.b16 %v548, %v544
  %v601 = vpack.c.b16 %v553, %v549
  %v602 = vpack.c.b16 %v554, %v550
  %v603 = vpack.c.b16 %v555, %v551
  %v604 = vpack.c.b16 %v556, %v552
  %v605 = vpack.c.b16 %v561, %v557
  %v606 = vpack.c.b16 %v562, %v558
  %v607 = vpack.c.b16 %v563, %v559
  %v608 = vpack.c.b16 %v564, %v560
  %v609 = vpack.c.b16 %v569, %v565
  %v610 = vpack.c.b16 %v570, %v566
  %v611 = vpack.c.b16 %v571, %v567
  %v612 = vpack.c.b16 %v572, %v568
  %v613 = vpack.c.b16 %v577, %v573
  %v614 = vpack.c.b16 %v578, %v574
  %v615 = vpack.c.b16 %v579, %v575
  %v616 = vpack.c.b16 %v580, %v576
  %v617 = vpack.c.b16 %v585, %v581
  %v618 = vpack.c.b16 %v586, %v582
  %v619 = vpack.c.b16 %v587, %v583
  %v620 = vpack.c.b16 %v588, %v584
  %653 = vmatprep.subr.bf16.mxu0 %v590
  %654 = vmatpush1.bf16.msra.mxu0 %v589
  %655 = vmatprep.subr.bf16.mxu0 %v594
  %656 = vmatpush1.bf16.msra.mxu0 %v593
  %657 = vmatprep.subr.bf16.mxu0 %v598
  %658 = vmatpush1.bf16.msra.mxu0 %v597
  %659 = vmatprep.subr.bf16.mxu0 %v602
  %660 = vmatpush1.bf16.msra.mxu0 %v601
  %661 = vmatprep.subr.bf16.mxu0 %v606
  %662 = vmatpush1.bf16.msra.mxu0 %v605
  %663 = vmatprep.subr.bf16.mxu0 %v610
  %664 = vmatpush1.bf16.msra.mxu0 %v609
  %665 = vmatprep.subr.bf16.mxu0 %v614
  %666 = vmatpush1.bf16.msra.mxu0 %v613
  %667 = vmatprep.subr.bf16.mxu0 %v618
  %668 = vmatpush1.bf16.msra.mxu0 %v617
  %669 = vmatprep.subr.bf16.mxu0 0
  %670 = vmatpush1.bf16.msra.mxu0 0
  %671 = vmatprep.subr.bf16.mxu0 0
  %672 = vmatpush1.bf16.msra.mxu0 0
  %673 = vmatprep.subr.bf16.mxu0 0
  %674 = vmatpush1.bf16.msra.mxu0 0
  %675 = vmatprep.subr.bf16.mxu0 0
  %676 = vmatpush1.bf16.msra.mxu0 0
  %677 = vmatprep.subr.bf16.mxu0 0
  %678 = vmatpush1.bf16.msra.mxu0 0
  %679 = vmatprep.subr.bf16.mxu0 0
  %680 = vmatpush1.bf16.msra.mxu0 0
  %681 = vmatprep.subr.bf16.mxu0 0
  %682 = vmatpush1.bf16.msra.mxu0 0
  %683 = vmatprep.subr.bf16.mxu0 0
  %684 = vmatpush1.bf16.msra.mxu0 0
  %685 = vmatprep.mubr.bf16.mxu0 0
  %686 = vmatmul.mubr.bf16.gmra.mrb[0].mxu0 %v460
  %v687 = vpop.f32.mrb[0].mxu0
  %v688 = vadd.f32 0.0, %v687
  %v689 = vpop.f32.mrb[0].mxu0
  %v690 = vadd.f32 0.0, %v689
  %v691 = vpop.f32.mrb[0].mxu0
  %v692 = vpop.f32.mrb[0].mxu0
  %693 = vdwg.mxu0
  %694 = vmatprep.subr.bf16.mxu0 %v592
  %695 = vmatpush1.bf16.msra.mxu0 %v591
  %696 = vmatprep.subr.bf16.mxu0 %v596
  %697 = vmatpush1.bf16.msra.mxu0 %v595
  %698 = vmatprep.subr.bf16.mxu0 %v600
  %699 = vmatpush1.bf16.msra.mxu0 %v599
  %700 = vmatprep.subr.bf16.mxu0 %v604
  %701 = vmatpush1.bf16.msra.mxu0 %v603
  %702 = vmatprep.subr.bf16.mxu0 %v608
  %703 = vmatpush1.bf16.msra.mxu0 %v607
  %704 = vmatprep.subr.bf16.mxu0 %v612
  %705 = vmatpush1.bf16.msra.mxu0 %v611
  %706 = vmatprep.subr.bf16.mxu0 %v616
  %707 = vmatpush1.bf16.msra.mxu0 %v615
  %708 = vmatprep.subr.bf16.mxu0 %v620
  %709 = vmatpush1.bf16.msra.mxu0 %v619
  %710 = vmatprep.subr.bf16.mxu0 0
  %711 = vmatpush1.bf16.msra.mxu0 0
  %712 = vmatprep.subr.bf16.mxu0 0
  %713 = vmatpush1.bf16.msra.mxu0 0
  %714 = vmatprep.subr.bf16.mxu0 0
  %715 = vmatpush1.bf16.msra.mxu0 0
  %716 = vmatprep.subr.bf16.mxu0 0
  %717 = vmatpush1.bf16.msra.mxu0 0
  %718 = vmatprep.subr.bf16.mxu0 0
  %719 = vmatpush1.bf16.msra.mxu0 0
  %720 = vmatprep.subr.bf16.mxu0 0
  %721 = vmatpush1.bf16.msra.mxu0 0
  %722 = vmatprep.subr.bf16.mxu0 0
  %723 = vmatpush1.bf16.msra.mxu0 0
  %724 = vmatprep.subr.bf16.mxu0 0
  %725 = vmatpush1.bf16.msra.mxu0 0
  %726 = vmatprep.mubr.bf16.mxu0 0
  %727 = vmatmul.mubr.bf16.gmra.mrb[0].mxu0 %v460
  %v728 = vpop.f32.mrb[0].mxu0
  %v729 = vadd.f32 0.0, %v728
  %v730 = vpop.f32.mrb[0].mxu0
  %v731 = vadd.f32 0.0, %v730
  %v732 = vpop.f32.mrb[0].mxu0
  %v733 = vpop.f32.mrb[0].mxu0
  %734 = vdwg.mxu0
  %v735 = vadd.f32 %v456, %v688
  %v736 = vadd.f32 %v457, %v690
  %v737 = vadd.f32 %v458, %v729
  %v738 = vadd.f32 %v459, %v731
  %v739 = vmul.f32 %v735, 0.5
  %v740 = vtanh.pop %v739
  %v741 = vmul.f32 %v740, 0.5
  %v742 = vadd.f32 %v741, 0.5
  %v743 = vmul.f32 %v736, 0.5
  %v744 = vtanh.pop %v743
  %v745 = vmul.f32 %v744, 0.5
  %v746 = vadd.f32 %v745, 0.5
  %v747 = vtanh.pop %v737
  %v748 = vmul.f32 %v738, 0.5
  %v749 = vtanh.pop %v748
  %v750 = vmul.f32 %v749, 0.5
  %v751 = vadd.f32 %v750, 0.5
  %v752 = vmul.f32 %v746, %v452
  %v753 = vmul.f32 %v742, %v747
  %v754 = vadd.f32 %v752, %v753
  %v755 = vtanh.pop %v754
  %v756 = vmul.f32 %v751, %v755
  %757 = vst [vmem:[#allocation5] sm:$0xff] %v756
  %s758 = smul.u32 1, 4
  %s759 = smul.addr %s758, 8
  %s760 = scalar_lea.vmem [#allocation4], %s759
  %v761 = vld [vmem:[%s760] sm:$0xff]
  %v762 = vld [vmem:[%s760 + $0x8] sm:$0xff]
  %v763 = vld [vmem:[%s760 + $0x10] sm:$0xff]
  %v764 = vld [vmem:[%s760 + $0x18] sm:$0xff]
  %v765 = vpack.c.bf16 %v756, %v756
  %v766 = vld [vmem:[%s2] sm:$0xff]
  %v767 = vld [vmem:[%s2 + $0x8] sm:$0xff]
  %v768 = vld [vmem:[%s2 + $0x10] sm:$0xff]
  %v769 = vld [vmem:[%s2 + $0x18] sm:$0xff]
  %v770 = vld [vmem:[%s2 + $0x20] sm:$0xff]
  %v771 = vld [vmem:[%s2 + $0x28] sm:$0xff]
  %v772 = vld [vmem:[%s2 + $0x30] sm:$0xff]
  %v773 = vld [vmem:[%s2 + $0x38] sm:$0xff]
  %v774 = vld [vmem:[%s2 + $0x40] sm:$0xff]
  %v775 = vld [vmem:[%s2 + $0x48] sm:$0xff]
  %v776 = vld [vmem:[%s2 + $0x50] sm:$0xff]
  %v777 = vld [vmem:[%s2 + $0x58] sm:$0xff]
  %v778 = vld [vmem:[%s2 + $0x60] sm:$0xff]
  %v779 = vld [vmem:[%s2 + $0x68] sm:$0xff]
  %v780 = vld [vmem:[%s2 + $0x70] sm:$0xff]
  %v781 = vld [vmem:[%s2 + $0x78] sm:$0xff]
  %v782 = vld [vmem:[%s2 + $0x80] sm:$0xff]
  %v783 = vld [vmem:[%s2 + $0x88] sm:$0xff]
  %v784 = vld [vmem:[%s2 + $0x90] sm:$0xff]
  %v785 = vld [vmem:[%s2 + $0x98] sm:$0xff]
  %v786 = vld [vmem:[%s2 + $0xa0] sm:$0xff]
  %v787 = vld [vmem:[%s2 + $0xa8] sm:$0xff]
  %v788 = vld [vmem:[%s2 + $0xb0] sm:$0xff]
  %v789 = vld [vmem:[%s2 + $0xb8] sm:$0xff]
  %v790 = vld [vmem:[%s2 + $0xc0] sm:$0xff]
  %v791 = vld [vmem:[%s2 + $0xc8] sm:$0xff]
  %v792 = vld [vmem:[%s2 + $0xd0] sm:$0xff]
  %v793 = vld [vmem:[%s2 + $0xd8] sm:$0xff]
  %v794 = vld [vmem:[%s2 + $0xe0] sm:$0xff]
  %v795 = vld [vmem:[%s2 + $0xe8] sm:$0xff]
  %v796 = vld [vmem:[%s2 + $0xf0] sm:$0xff]
  %v797 = vld [vmem:[%s2 + $0xf8] sm:$0xff]
  %v830 = vunpack.c.l.b16 %v766
  %v831 = vunpack.c.h.b16 %v766
  %v832 = vunpack.c.l.b16 %v767
  %v833 = vunpack.c.h.b16 %v767
  %v834 = vunpack.c.l.b16 %v768
  %v835 = vunpack.c.h.b16 %v768
  %v836 = vunpack.c.l.b16 %v769
  %v837 = vunpack.c.h.b16 %v769
  %v838 = vunpack.c.l.b16 %v770
  %v839 = vunpack.c.h.b16 %v770
  %v840 = vunpack.c.l.b16 %v771
  %v841 = vunpack.c.h.b16 %v771
  %v842 = vunpack.c.l.b16 %v772
  %v843 = vunpack.c.h.b16 %v772
  %v844 = vunpack.c.l.b16 %v773
  %v845 = vunpack.c.h.b16 %v773
  %v846 = vunpack.c.l.b16 %v774
  %v847 = vunpack.c.h.b16 %v774
  %v848 = vunpack.c.l.b16 %v775
  %v849 = vunpack.c.h.b16 %v775
  %v850 = vunpack.c.l.b16 %v776
  %v851 = vunpack.c.h.b16 %v776
  %v852 = vunpack.c.l.b16 %v777
  %v853 = vunpack.c.h.b16 %v777
  %v854 = vunpack.c.l.b16 %v778
  %v855 = vunpack.c.h.b16 %v778
  %v856 = vunpack.c.l.b16 %v779
  %v857 = vunpack.c.h.b16 %v779
  %v858 = vunpack.c.l.b16 %v780
  %v859 = vunpack.c.h.b16 %v780
  %v860 = vunpack.c.l.b16 %v781
  %v861 = vunpack.c.h.b16 %v781
  %v862 = vunpack.c.l.b16 %v782
  %v863 = vunpack.c.h.b16 %v782
  %v864 = vunpack.c.l.b16 %v783
  %v865 = vunpack.c.h.b16 %v783
  %v866 = vunpack.c.l.b16 %v784
  %v867 = vunpack.c.h.b16 %v784
  %v868 = vunpack.c.l.b16 %v785
  %v869 = vunpack.c.h.b16 %v785
  %v870 = vunpack.c.l.b16 %v786
  %v871 = vunpack.c.h.b16 %v786
  %v872 = vunpack.c.l.b16 %v787
  %v873 = vunpack.c.h.b16 %v787
  %v874 = vunpack.c.l.b16 %v788
  %v875 = vunpack.c.h.b16 %v788
  %v876 = vunpack.c.l.b16 %v789
  %v877 = vunpack.c.h.b16 %v789
  %v878 = vunpack.c.l.b16 %v790
  %v879 = vunpack.c.h.b16 %v790
  %v880 = vunpack.c.l.b16 %v791
  %v881 = vunpack.c.h.b16 %v791
  %v882 = vunpack.c.l.b16 %v792
  %v883 = vunpack.c.h.b16 %v792
  %v884 = vunpack.c.l.b16 %v793
  %v885 = vunpack.c.h.b16 %v793
  %v886 = vunpack.c.l.b16 %v794
  %v887 = vunpack.c.h.b16 %v794
  %v888 = vunpack.c.l.b16 %v795
  %v889 = vunpack.c.h.b16 %v795
  %v890 = vunpack.c.l.b16 %v796
  %v891 = vunpack.c.h.b16 %v796
  %v892 = vunpack.c.l.b16 %v797
  %v893 = vunpack.c.h.b16 %v797
  %v894 = vpack.c.b16 %v834, %v830
  %v895 = vpack.c.b16 %v835, %v831
  %v896 = vpack.c.b16 %v836, %v832
  %v897 = vpack.c.b16 %v837, %v833
  %v898 = vpack.c.b16 %v842, %v838
  %v899 = vpack.c.b16 %v843, %v839
  %v900 = vpack.c.b16 %v844, %v840
  %v901 = vpack.c.b16 %v845, %v841
  %v902 = vpack.c.b16 %v850, %v846
  %v903 = vpack.c.b16 %v851, %v847
  %v904 = vpack.c.b16 %v852, %v848
  %v905 = vpack.c.b16 %v853, %v849
  %v906 = vpack.c.b16 %v858, %v854
  %v907 = vpack.c.b16 %v859, %v855
  %v908 = vpack.c.b16 %v860, %v856
  %v909 = vpack.c.b16 %v861, %v857
  %v910 = vpack.c.b16 %v866, %v862
  %v911 = vpack.c.b16 %v867, %v863
  %v912 = vpack.c.b16 %v868, %v864
  %v913 = vpack.c.b16 %v869, %v865
  %v914 = vpack.c.b16 %v874, %v870
  %v915 = vpack.c.b16 %v875, %v871
  %v916 = vpack.c.b16 %v876, %v872
  %v917 = vpack.c.b16 %v877, %v873
  %v918 = vpack.c.b16 %v882, %v878
  %v919 = vpack.c.b16 %v883, %v879
  %v920 = vpack.c.b16 %v884, %v880
  %v921 = vpack.c.b16 %v885, %v881
  %v922 = vpack.c.b16 %v890, %v886
  %v923 = vpack.c.b16 %v891, %v887
  %v924 = vpack.c.b16 %v892, %v888
  %v925 = vpack.c.b16 %v893, %v889
  %958 = vmatprep.subr.bf16.mxu0 %v895
  %959 = vmatpush1.bf16.msra.mxu0 %v894
  %960 = vmatprep.subr.bf16.mxu0 %v899
  %961 = vmatpush1.bf16.msra.mxu0 %v898
  %962 = vmatprep.subr.bf16.mxu0 %v903
  %963 = vmatpush1.bf16.msra.mxu0 %v902
  %964 = vmatprep.subr.bf16.mxu0 %v907
  %965 = vmatpush1.bf16.msra.mxu0 %v906
  %966 = vmatprep.subr.bf16.mxu0 %v911
  %967 = vmatpush1.bf16.msra.mxu0 %v910
  %968 = vmatprep.subr.bf16.mxu0 %v915
  %969 = vmatpush1.bf16.msra.mxu0 %v914
  %970 = vmatprep.subr.bf16.mxu0 %v919
  %971 = vmatpush1.bf16.msra.mxu0 %v918
  %972 = vmatprep.subr.bf16.mxu0 %v923
  %973 = vmatpush1.bf16.msra.mxu0 %v922
  %974 = vmatprep.subr.bf16.mxu0 0
  %975 = vmatpush1.bf16.msra.mxu0 0
  %976 = vmatprep.subr.bf16.mxu0 0
  %977 = vmatpush1.bf16.msra.mxu0 0
  %978 = vmatprep.subr.bf16.mxu0 0
  %979 = vmatpush1.bf16.msra.mxu0 0
  %980 = vmatprep.subr.bf16.mxu0 0
  %981 = vmatpush1.bf16.msra.mxu0 0
  %982 = vmatprep.subr.bf16.mxu0 0
  %983 = vmatpush1.bf16.msra.mxu0 0
  %984 = vmatprep.subr.bf16.mxu0 0
  %985 = vmatpush1.bf16.msra.mxu0 0
  %986 = vmatprep.subr.bf16.mxu0 0
  %987 = vmatpush1.bf16.msra.mxu0 0
  %988 = vmatprep.subr.bf16.mxu0 0
  %989 = vmatpush1.bf16.msra.mxu0 0
  %990 = vmatprep.mubr.bf16.mxu0 0
  %991 = vmatmul.mubr.bf16.gmra.mrb[0].mxu0 %v765
  %v992 = vpop.f32.mrb[0].mxu0
  %v993 = vadd.f32 0.0, %v992
  %v994 = vpop.f32.mrb[0].mxu0
  %v995 = vadd.f32 0.0, %v994
  %v996 = vpop.f32.mrb[0].mxu0
  %v997 = vpop.f32.mrb[0].mxu0
  %998 = vdwg.mxu0
  %999 = vmatprep.subr.bf16.mxu0 %v897
  %1000 = vmatpush1.bf16.msra.mxu0 %v896
  %1001 = vmatprep.subr.bf16.mxu0 %v901
  %1002 = vmatpush1.bf16.msra.mxu0 %v900
  %1003 = vmatprep.subr.bf16.mxu0 %v905
  %1004 = vmatpush1.bf16.msra.mxu0 %v904
  %1005 = vmatprep.subr.bf16.mxu0 %v909
  %1006 = vmatpush1.bf16.msra.mxu0 %v908
  %1007 = vmatprep.subr.bf16.mxu0 %v913
  %1008 = vmatpush1.bf16.msra.mxu0 %v912
  %1009 = vmatprep.subr.bf16.mxu0 %v917
  %1010 = vmatpush1.bf16.msra.mxu0 %v916
  %1011 = vmatprep.subr.bf16.mxu0 %v921
  %1012 = vmatpush1.bf16.msra.mxu0 %v920
  %1013 = vmatprep.subr.bf16.mxu0 %v925
  %1014 = vmatpush1.bf16.msra.mxu0 %v924
  %1015 = vmatprep.subr.bf16.mxu0 0
  %1016 = vmatpush1.bf16.msra.mxu0 0
  %1017 = vmatprep.subr.bf16.mxu0 0
  %1018 = vmatpush1.bf16.msra.mxu0 0
  %1019 = vmatprep.subr.bf16.mxu0 0
  %1020 = vmatpush1.bf16.msra.mxu0 0
  %1021 = vmatprep.subr.bf16.mxu0 0
  %1022 = vmatpush1.bf16.msra.mxu0 0
  %1023 = vmatprep.subr.bf16.mxu0 0
  %1024 = vmatpush1.bf16.msra.mxu0 0
  %1025 = vmatprep.subr.bf16.mxu0 0
  %1026 = vmatpush1.bf16.msra.mxu0 0
  %1027 = vmatprep.subr.bf16.mxu0 0
  %1028 = vmatpush1.bf16.msra.mxu0 0
  %1029 = vmatprep.subr.bf16.mxu0 0
  %1030 = vmatpush1.bf16.msra.mxu0 0
  %1031 = vmatprep.mubr.bf16.mxu0 0
  %1032 = vmatmul.mubr.bf16.gmra.mrb[0].mxu0 %v765
  %v1033 = vpop.f32.mrb[0].mxu0
  %v1034 = vadd.f32 0.0, %v1033
  %v1035 = vpop.f32.mrb[0].mxu0
  %v1036 = vadd.f32 0.0, %v1035
  %v1037 = vpop.f32.mrb[0].mxu0
  %v1038 = vpop.f32.mrb[0].mxu0
  %1039 = vdwg.mxu0
  %v1040 = vadd.f32 %v761, %v993
  %v1041 = vadd.f32 %v762, %v995
  %v1042 = vadd.f32 %v763, %v1034
  %v1043 = vadd.f32 %v764, %v1036
  %v1044 = vmul.f32 %v1040, 0.5
  %v1045 = vtanh.pop %v1044
  %v1046 = vmul.f32 %v1045, 0.5
  %v1047 = vadd.f32 %v1046, 0.5
  %v1048 = vmul.f32 %v1041, 0.5
  %v1049 = vtanh.pop %v1048
  %v1050 = vmul.f32 %v1049, 0.5
  %v1051 = vadd.f32 %v1050, 0.5
  %v1052 = vtanh.pop %v1042
  %v1053 = vmul.f32 %v1043, 0.5
  %v1054 = vtanh.pop %v1053
  %v1055 = vmul.f32 %v1054, 0.5
  %v1056 = vadd.f32 %v1055, 0.5
  %v1057 = vmul.f32 %v1051, %v754
  %v1058 = vmul.f32 %v1047, %v1052
  %v1059 = vadd.f32 %v1057, %v1058
  %v1060 = vtanh.pop %v1059
  %v1061 = vmul.f32 %v1056, %v1060
  %s1062 = scalar_lea.vmem [#allocation5], 8
  %1063 = vst [vmem:[%s1062] sm:$0xff] %v1061
  %s1064 = smul.u32 2, 4
  %s1065 = smul.addr %s1064, 8
  %s1066 = scalar_lea.vmem [#allocation4], %s1065
  %v1067 = vld [vmem:[%s1066] sm:$0xff]
  %v1068 = vld [vmem:[%s1066 + $0x8] sm:$0xff]
  %v1069 = vld [vmem:[%s1066 + $0x10] sm:$0xff]
  %v1070 = vld [vmem:[%s1066 + $0x18] sm:$0xff]
  %v1071 = vpack.c.bf16 %v1061, %v1061
  %v1072 = vld [vmem:[%s2] sm:$0xff]
  %v1073 = vld [vmem:[%s2 + $0x8] sm:$0xff]
  %v1074 = vld [vmem:[%s2 + $0x10] sm:$0xff]
  %v1075 = vld [vmem:[%s2 + $0x18] sm:$0xff]
  %v1076 = vld [vmem:[%s2 + $0x20] sm:$0xff]
  %v1077 = vld [vmem:[%s2 + $0x28] sm:$0xff]
  %v1078 = vld [vmem:[%s2 + $0x30] sm:$0xff]
  %v1079 = vld [vmem:[%s2 + $0x38] sm:$0xff]
  %v1080 = vld [vmem:[%s2 + $0x40] sm:$0xff]
  %v1081 = vld [vmem:[%s2 + $0x48] sm:$0xff]
  %v1082 = vld [vmem:[%s2 + $0x50] sm:$0xff]
  %v1083 = vld [vmem:[%s2 + $0x58] sm:$0xff]
  %v1084 = vld [vmem:[%s2 + $0x60] sm:$0xff]
  %v1085 = vld [vmem:[%s2 + $0x68] sm:$0xff]
  %v1086 = vld [vmem:[%s2 + $0x70] sm:$0xff]
  %v1087 = vld [vmem:[%s2 + $0x78] sm:$0xff]
  %v1088 = vld [vmem:[%s2 + $0x80] sm:$0xff]
  %v1089 = vld [vmem:[%s2 + $0x88] sm:$0xff]
  %v1090 = vld [vmem:[%s2 + $0x90] sm:$0xff]
  %v1091 = vld [vmem:[%s2 + $0x98] sm:$0xff]
  %v1092 = vld [vmem:[%s2 + $0xa0] sm:$0xff]
  %v1093 = vld [vmem:[%s2 + $0xa8] sm:$0xff]
  %v1094 = vld [vmem:[%s2 + $0xb0] sm:$0xff]
  %v1095 = vld [vmem:[%s2 + $0xb8] sm:$0xff]
  %v1096 = vld [vmem:[%s2 + $0xc0] sm:$0xff]
  %v1097 = vld [vmem:[%s2 + $0xc8] sm:$0xff]
  %v1098 = vld [vmem:[%s2 + $0xd0] sm:$0xff]
  %v1099 = vld [vmem:[%s2 + $0xd8] sm:$0xff]
  %v1100 = vld [vmem:[%s2 + $0xe0] sm:$0xff]
  %v1101 = vld [vmem:[%s2 + $0xe8] sm:$0xff]
  %v1102 = vld [vmem:[%s2 + $0xf0] sm:$0xff]
  %v1103 = vld [vmem:[%s2 + $0xf8] sm:$0xff]
  %v1136 = vunpack.c.l.b16 %v1072
  %v1137 = vunpack.c.h.b16 %v1072
  %v1138 = vunpack.c.l.b16 %v1073
  %v1139 = vunpack.c.h.b16 %v1073
  %v1140 = vunpack.c.l.b16 %v1074
  %v1141 = vunpack.c.h.b16 %v1074
  %v1142 = vunpack.c.l.b16 %v1075
  %v1143 = vunpack.c.h.b16 %v1075
  %v1144 = vunpack.c.l.b16 %v1076
  %v1145 = vunpack.c.h.b16 %v1076
  %v1146 = vunpack.c.l.b16 %v1077
  %v1147 = vunpack.c.h.b16 %v1077
  %v1148 = vunpack.c.l.b16 %v1078
  %v1149 = vunpack.c.h.b16 %v1078
  %v1150 = vunpack.c.l.b16 %v1079
  %v1151 = vunpack.c.h.b16 %v1079
  %v1152 = vunpack.c.l.b16 %v1080
  %v1153 = vunpack.c.h.b16 %v1080
  %v1154 = vunpack.c.l.b16 %v1081
  %v1155 = vunpack.c.h.b16 %v1081
  %v1156 = vunpack.c.l.b16 %v1082
  %v1157 = vunpack.c.h.b16 %v1082
  %v1158 = vunpack.c.l.b16 %v1083
  %v1159 = vunpack.c.h.b16 %v1083
  %v1160 = vunpack.c.l.b16 %v1084
  %v1161 = vunpack.c.h.b16 %v1084
  %v1162 = vunpack.c.l.b16 %v1085
  %v1163 = vunpack.c.h.b16 %v1085
  %v1164 = vunpack.c.l.b16 %v1086
  %v1165 = vunpack.c.h.b16 %v1086
  %v1166 = vunpack.c.l.b16 %v1087
  %v1167 = vunpack.c.h.b16 %v1087
  %v1168 = vunpack.c.l.b16 %v1088
  %v1169 = vunpack.c.h.b16 %v1088
  %v1170 = vunpack.c.l.b16 %v1089
  %v1171 = vunpack.c.h.b16 %v1089
  %v1172 = vunpack.c.l.b16 %v1090
  %v1173 = vunpack.c.h.b16 %v1090
  %v1174 = vunpack.c.l.b16 %v1091
  %v1175 = vunpack.c.h.b16 %v1091
  %v1176 = vunpack.c.l.b16 %v1092
  %v1177 = vunpack.c.h.b16 %v1092
  %v1178 = vunpack.c.l.b16 %v1093
  %v1179 = vunpack.c.h.b16 %v1093
  %v1180 = vunpack.c.l.b16 %v1094
  %v1181 = vunpack.c.h.b16 %v1094
  %v1182 = vunpack.c.l.b16 %v1095
  %v1183 = vunpack.c.h.b16 %v1095
  %v1184 = vunpack.c.l.b16 %v1096
  %v1185 = vunpack.c.h.b16 %v1096
  %v1186 = vunpack.c.l.b16 %v1097
  %v1187 = vunpack.c.h.b16 %v1097
  %v1188 = vunpack.c.l.b16 %v1098
  %v1189 = vunpack.c.h.b16 %v1098
  %v1190 = vunpack.c.l.b16 %v1099
  %v1191 = vunpack.c.h.b16 %v1099
  %v1192 = vunpack.c.l.b16 %v1100
  %v1193 = vunpack.c.h.b16 %v1100
  %v1194 = vunpack.c.l.b16 %v1101
  %v1195 = vunpack.c.h.b16 %v1101
  %v1196 = vunpack.c.l.b16 %v1102
  %v1197 = vunpack.c.h.b16 %v1102
  %v1198 = vunpack.c.l.b16 %v1103
  %v1199 = vunpack.c.h.b16 %v1103
  %v1200 = vpack.c.b16 %v1140, %v1136
  %v1201 = vpack.c.b16 %v1141, %v1137
  %v1202 = vpack.c.b16 %v1142, %v1138
  %v1203 = vpack.c.b16 %v1143, %v1139
  %v1204 = vpack.c.b16 %v1148, %v1144
  %v1205 = vpack.c.b16 %v1149, %v1145
  %v1206 = vpack.c.b16 %v1150, %v1146
  %v1207 = vpack.c.b16 %v1151, %v1147
  %v1208 = vpack.c.b16 %v1156, %v1152
  %v1209 = vpack.c.b16 %v1157, %v1153
  %v1210 = vpack.c.b16 %v1158, %v1154
  %v1211 = vpack.c.b16 %v1159, %v1155
  %v1212 = vpack.c.b16 %v1164, %v1160
  %v1213 = vpack.c.b16 %v1165, %v1161
  %v1214 = vpack.c.b16 %v1166, %v1162
  %v1215 = vpack.c.b16 %v1167, %v1163
  %v1216 = vpack.c.b16 %v1172, %v1168
  %v1217 = vpack.c.b16 %v1173, %v1169
  %v1218 = vpack.c.b16 %v1174, %v1170
  %v1219 = vpack.c.b16 %v1175, %v1171
  %v1220 = vpack.c.b16 %v1180, %v1176
  %v1221 = vpack.c.b16 %v1181, %v1177
  %v1222 = vpack.c.b16 %v1182, %v1178
  %v1223 = vpack.c.b16 %v1183, %v1179
  %v1224 = vpack.c.b16 %v1188, %v1184
  %v1225 = vpack.c.b16 %v1189, %v1185
  %v1226 = vpack.c.b16 %v1190, %v1186
  %v1227 = vpack.c.b16 %v1191, %v1187
  %v1228 = vpack.c.b16 %v1196, %v1192
  %v1229 = vpack.c.b16 %v1197, %v1193
  %v1230 = vpack.c.b16 %v1198, %v1194
  %v1231 = vpack.c.b16 %v1199, %v1195
  %1264 = vmatprep.subr.bf16.mxu0 %v1201
  %1265 = vmatpush1.bf16.msra.mxu0 %v1200
  %1266 = vmatprep.subr.bf16.mxu0 %v1205
  %1267 = vmatpush1.bf16.msra.mxu0 %v1204
  %1268 = vmatprep.subr.bf16.mxu0 %v1209
  %1269 = vmatpush1.bf16.msra.mxu0 %v1208
  %1270 = vmatprep.subr.bf16.mxu0 %v1213
  %1271 = vmatpush1.bf16.msra.mxu0 %v1212
  %1272 = vmatprep.subr.bf16.mxu0 %v1217
  %1273 = vmatpush1.bf16.msra.mxu0 %v1216
  %1274 = vmatprep.subr.bf16.mxu0 %v1221
  %1275 = vmatpush1.bf16.msra.mxu0 %v1220
  %1276 = vmatprep.subr.bf16.mxu0 %v1225
  %1277 = vmatpush1.bf16.msra.mxu0 %v1224
  %1278 = vmatprep.subr.bf16.mxu0 %v1229
  %1279 = vmatpush1.bf16.msra.mxu0 %v1228
  %1280 = vmatprep.subr.bf16.mxu0 0
  %1281 = vmatpush1.bf16.msra.mxu0 0
  %1282 = vmatprep.subr.bf16.mxu0 0
  %1283 = vmatpush1.bf16.msra.mxu0 0
  %1284 = vmatprep.subr.bf16.mxu0 0
  %1285 = vmatpush1.bf16.msra.mxu0 0
  %1286 = vmatprep.subr.bf16.mxu0 0
  %1287 = vmatpush1.bf16.msra.mxu0 0
  %1288 = vmatprep.subr.bf16.mxu0 0
  %1289 = vmatpush1.bf16.msra.mxu0 0
  %1290 = vmatprep.subr.bf16.mxu0 0
  %1291 = vmatpush1.bf16.msra.mxu0 0
  %1292 = vmatprep.subr.bf16.mxu0 0
  %1293 = vmatpush1.bf16.msra.mxu0 0
  %1294 = vmatprep.subr.bf16.mxu0 0
  %1295 = vmatpush1.bf16.msra.mxu0 0
  %1296 = vmatprep.mubr.bf16.mxu0 0
  %1297 = vmatmul.mubr.bf16.gmra.mrb[0].mxu0 %v1071
  %v1298 = vpop.f32.mrb[0].mxu0
  %v1299 = vadd.f32 0.0, %v1298
  %v1300 = vpop.f32.mrb[0].mxu0
  %v1301 = vadd.f32 0.0, %v1300
  %v1302 = vpop.f32.mrb[0].mxu0
  %v1303 = vpop.f32.mrb[0].mxu0
  %1304 = vdwg.mxu0
  %1305 = vmatprep.subr.bf16.mxu0 %v1203
  %1306 = vmatpush1.bf16.msra.mxu0 %v1202
  %1307 = vmatprep.subr.bf16.mxu0 %v1207
  %1308 = vmatpush1.bf16.msra.mxu0 %v1206
  %1309 = vmatprep.subr.bf16.mxu0 %v1211
  %1310 = vmatpush1.bf16.msra.mxu0 %v1210
  %1311 = vmatprep.subr.bf16.mxu0 %v1215
  %1312 = vmatpush1.bf16.msra.mxu0 %v1214
  %1313 = vmatprep.subr.bf16.mxu0 %v1219
  %1314 = vmatpush1.bf16.msra.mxu0 %v1218
  %1315 = vmatprep.subr.bf16.mxu0 %v1223
  %1316 = vmatpush1.bf16.msra.mxu0 %v1222
  %1317 = vmatprep.subr.bf16.mxu0 %v1227
  %1318 = vmatpush1.bf16.msra.mxu0 %v1226
  %1319 = vmatprep.subr.bf16.mxu0 %v1231
  %1320 = vmatpush1.bf16.msra.mxu0 %v1230
  %1321 = vmatprep.subr.bf16.mxu0 0
  %1322 = vmatpush1.bf16.msra.mxu0 0
  %1323 = vmatprep.subr.bf16.mxu0 0
  %1324 = vmatpush1.bf16.msra.mxu0 0
  %1325 = vmatprep.subr.bf16.mxu0 0
  %1326 = vmatpush1.bf16.msra.mxu0 0
  %1327 = vmatprep.subr.bf16.mxu0 0
  %1328 = vmatpush1.bf16.msra.mxu0 0
  %1329 = vmatprep.subr.bf16.mxu0 0
  %1330 = vmatpush1.bf16.msra.mxu0 0
  %1331 = vmatprep.subr.bf16.mxu0 0
  %1332 = vmatpush1.bf16.msra.mxu0 0
  %1333 = vmatprep.subr.bf16.mxu0 0
  %1334 = vmatpush1.bf16.msra.mxu0 0
  %1335 = vmatprep.subr.bf16.mxu0 0
  %1336 = vmatpush1.bf16.msra.mxu0 0
  %1337 = vmatprep.mubr.bf16.mxu0 0
  %1338 = vmatmul.mubr.bf16.gmra.mrb[0].mxu0 %v1071
  %v1339 = vpop.f32.mrb[0].mxu0
  %v1340 = vadd.f32 0.0, %v1339
  %v1341 = vpop.f32.mrb[0].mxu0
  %v1342 = vadd.f32 0.0, %v1341
  %v1343 = vpop.f32.mrb[0].mxu0
  %v1344 = vpop.f32.mrb[0].mxu0
  %1345 = vdwg.mxu0
  %v1346 = vadd.f32 %v1067, %v1299
  %v1347 = vadd.f32 %v1068, %v1301
  %v1348 = vadd.f32 %v1069, %v1340
  %v1349 = vadd.f32 %v1070, %v1342
  %v1350 = vmul.f32 %v1346, 0.5
  %v1351 = vtanh.pop %v1350
  %v1352 = vmul.f32 %v1351, 0.5
  %v1353 = vadd.f32 %v1352, 0.5
  %v1354 = vmul.f32 %v1347, 0.5
  %v1355 = vtanh.pop %v1354
  %v1356 = vmul.f32 %v1355, 0.5
  %v1357 = vadd.f32 %v1356, 0.5
  %v1358 = vtanh.pop %v1348
  %v1359 = vmul.f32 %v1349, 0.5
  %v1360 = vtanh.pop %v1359
  %v1361 = vmul.f32 %v1360, 0.5
  %v1362 = vadd.f32 %v1361, 0.5
  %v1363 = vmul.f32 %v1357, %v1059
  %v1364 = vmul.f32 %v1353, %v1358
  %v1365 = vadd.f32 %v1363, %v1364
  %v1366 = vtanh.pop %v1365
  %v1367 = vmul.f32 %v1362, %v1366
  %s1368 = scalar_lea.vmem [#allocation5], 16
  %1369 = vst [vmem:[%s1368] sm:$0xff] %v1367
  %s1370 = smul.u32 3, 4
  %s1371 = smul.addr %s1370, 8
  %s1372 = scalar_lea.vmem [#allocation4], %s1371
  %v1373 = vld [vmem:[%s1372] sm:$0xff]
  %v1374 = vld [vmem:[%s1372 + $0x8] sm:$0xff]
  %v1375 = vld [vmem:[%s1372 + $0x10] sm:$0xff]
  %v1376 = vld [vmem:[%s1372 + $0x18] sm:$0xff]
  %v1377 = vpack.c.bf16 %v1367, %v1367
  %v1378 = vld [vmem:[%s2] sm:$0xff]
  %v1379 = vld [vmem:[%s2 + $0x8] sm:$0xff]
  %v1380 = vld [vmem:[%s2 + $0x10] sm:$0xff]
  %v1381 = vld [vmem:[%s2 + $0x18] sm:$0xff]
  %v1382 = vld [vmem:[%s2 + $0x20] sm:$0xff]
  %v1383 = vld [vmem:[%s2 + $0x28] sm:$0xff]
  %v1384 = vld [vmem:[%s2 + $0x30] sm:$0xff]
  %v1385 = vld [vmem:[%s2 + $0x38] sm:$0xff]
  %v1386 = vld [vmem:[%s2 + $0x40] sm:$0xff]
  %v1387 = vld [vmem:[%s2 + $0x48] sm:$0xff]
  %v1388 = vld [vmem:[%s2 + $0x50] sm:$0xff]
  %v1389 = vld [vmem:[%s2 + $0x58] sm:$0xff]
  %v1390 = vld [vmem:[%s2 + $0x60] sm:$0xff]
  %v1391 = vld [vmem:[%s2 + $0x68] sm:$0xff]
  %v1392 = vld [vmem:[%s2 + $0x70] sm:$0xff]
  %v1393 = vld [vmem:[%s2 + $0x78] sm:$0xff]
  %v1394 = vld [vmem:[%s2 + $0x80] sm:$0xff]
  %v1395 = vld [vmem:[%s2 + $0x88] sm:$0xff]
  %v1396 = vld [vmem:[%s2 + $0x90] sm:$0xff]
  %v1397 = vld [vmem:[%s2 + $0x98] sm:$0xff]
  %v1398 = vld [vmem:[%s2 + $0xa0] sm:$0xff]
  %v1399 = vld [vmem:[%s2 + $0xa8] sm:$0xff]
  %v1400 = vld [vmem:[%s2 + $0xb0] sm:$0xff]
  %v1401 = vld [vmem:[%s2 + $0xb8] sm:$0xff]
  %v1402 = vld [vmem:[%s2 + $0xc0] sm:$0xff]
  %v1403 = vld [vmem:[%s2 + $0xc8] sm:$0xff]
  %v1404 = vld [vmem:[%s2 + $0xd0] sm:$0xff]
  %v1405 = vld [vmem:[%s2 + $0xd8] sm:$0xff]
  %v1406 = vld [vmem:[%s2 + $0xe0] sm:$0xff]
  %v1407 = vld [vmem:[%s2 + $0xe8] sm:$0xff]
  %v1408 = vld [vmem:[%s2 + $0xf0] sm:$0xff]
  %v1409 = vld [vmem:[%s2 + $0xf8] sm:$0xff]
  %v1442 = vunpack.c.l.b16 %v1378
  %v1443 = vunpack.c.h.b16 %v1378
  %v1444 = vunpack.c.l.b16 %v1379
  %v1445 = vunpack.c.h.b16 %v1379
  %v1446 = vunpack.c.l.b16 %v1380
  %v1447 = vunpack.c.h.b16 %v1380
  %v1448 = vunpack.c.l.b16 %v1381
  %v1449 = vunpack.c.h.b16 %v1381
  %v1450 = vunpack.c.l.b16 %v1382
  %v1451 = vunpack.c.h.b16 %v1382
  %v1452 = vunpack.c.l.b16 %v1383
  %v1453 = vunpack.c.h.b16 %v1383
  %v1454 = vunpack.c.l.b16 %v1384
  %v1455 = vunpack.c.h.b16 %v1384
  %v1456 = vunpack.c.l.b16 %v1385
  %v1457 = vunpack.c.h.b16 %v1385
  %v1458 = vunpack.c.l.b16 %v1386
  %v1459 = vunpack.c.h.b16 %v1386
  %v1460 = vunpack.c.l.b16 %v1387
  %v1461 = vunpack.c.h.b16 %v1387
  %v1462 = vunpack.c.l.b16 %v1388
  %v1463 = vunpack.c.h.b16 %v1388
  %v1464 = vunpack.c.l.b16 %v1389
  %v1465 = vunpack.c.h.b16 %v1389
  %v1466 = vunpack.c.l.b16 %v1390
  %v1467 = vunpack.c.h.b16 %v1390
  %v1468 = vunpack.c.l.b16 %v1391
  %v1469 = vunpack.c.h.b16 %v1391
  %v1470 = vunpack.c.l.b16 %v1392
  %v1471 = vunpack.c.h.b16 %v1392
  %v1472 = vunpack.c.l.b16 %v1393
  %v1473 = vunpack.c.h.b16 %v1393
  %v1474 = vunpack.c.l.b16 %v1394
  %v1475 = vunpack.c.h.b16 %v1394
  %v1476 = vunpack.c.l.b16 %v1395
  %v1477 = vunpack.c.h.b16 %v1395
  %v1478 = vunpack.c.l.b16 %v1396
  %v1479 = vunpack.c.h.b16 %v1396
  %v1480 = vunpack.c.l.b16 %v1397
  %v1481 = vunpack.c.h.b16 %v1397
  %v1482 = vunpack.c.l.b16 %v1398
  %v1483 = vunpack.c.h.b16 %v1398
  %v1484 = vunpack.c.l.b16 %v1399
  %v1485 = vunpack.c.h.b16 %v1399
  %v1486 = vunpack.c.l.b16 %v1400
  %v1487 = vunpack.c.h.b16 %v1400
  %v1488 = vunpack.c.l.b16 %v1401
  %v1489 = vunpack.c.h.b16 %v1401
  %v1490 = vunpack.c.l.b16 %v1402
  %v1491 = vunpack.c.h.b16 %v1402
  %v1492 = vunpack.c.l.b16 %v1403
  %v1493 = vunpack.c.h.b16 %v1403
  %v1494 = vunpack.c.l.b16 %v1404
  %v1495 = vunpack.c.h.b16 %v1404
  %v1496 = vunpack.c.l.b16 %v1405
  %v1497 = vunpack.c.h.b16 %v1405
  %v1498 = vunpack.c.l.b16 %v1406
  %v1499 = vunpack.c.h.b16 %v1406
  %v1500 = vunpack.c.l.b16 %v1407
  %v1501 = vunpack.c.h.b16 %v1407
  %v1502 = vunpack.c.l.b16 %v1408
  %v1503 = vunpack.c.h.b16 %v1408
  %v1504 = vunpack.c.l.b16 %v1409
  %v1505 = vunpack.c.h.b16 %v1409
  %v1506 = vpack.c.b16 %v1446, %v1442
  %v1507 = vpack.c.b16 %v1447, %v1443
  %v1508 = vpack.c.b16 %v1448, %v1444
  %v1509 = vpack.c.b16 %v1449, %v1445
  %v1510 = vpack.c.b16 %v1454, %v1450
  %v1511 = vpack.c.b16 %v1455, %v1451
  %v1512 = vpack.c.b16 %v1456, %v1452
  %v1513 = vpack.c.b16 %v1457, %v1453
  %v1514 = vpack.c.b16 %v1462, %v1458
  %v1515 = vpack.c.b16 %v1463, %v1459
  %v1516 = vpack.c.b16 %v1464, %v1460
  %v1517 = vpack.c.b16 %v1465, %v1461
  %v1518 = vpack.c.b16 %v1470, %v1466
  %v1519 = vpack.c.b16 %v1471, %v1467
  %v1520 = vpack.c.b16 %v1472, %v1468
  %v1521 = vpack.c.b16 %v1473, %v1469
  %v1522 = vpack.c.b16 %v1478, %v1474
  %v1523 = vpack.c.b16 %v1479, %v1475
  %v1524 = vpack.c.b16 %v1480, %v1476
  %v1525 = vpack.c.b16 %v1481, %v1477
  %v1526 = vpack.c.b16 %v1486, %v1482
  %v1527 = vpack.c.b16 %v1487, %v1483
  %v1528 = vpack.c.b16 %v1488, %v1484
  %v1529 = vpack.c.b16 %v1489, %v1485
  %v1530 = vpack.c.b16 %v1494, %v1490
  %v1531 = vpack.c.b16 %v1495, %v1491
  %v1532 = vpack.c.b16 %v1496, %v1492
  %v1533 = vpack.c.b16 %v1497, %v1493
  %v1534 = vpack.c.b16 %v1502, %v1498
  %v1535 = vpack.c.b16 %v1503, %v1499
  %v1536 = vpack.c.b16 %v1504, %v1500
  %v1537 = vpack.c.b16 %v1505, %v1501
  %1570 = vmatprep.subr.bf16.mxu0 %v1507
  %1571 = vmatpush1.bf16.msra.mxu0 %v1506
  %1572 = vmatprep.subr.bf16.mxu0 %v1511
  %1573 = vmatpush1.bf16.msra.mxu0 %v1510
  %1574 = vmatprep.subr.bf16.mxu0 %v1515
  %1575 = vmatpush1.bf16.msra.mxu0 %v1514
  %1576 = vmatprep.subr.bf16.mxu0 %v1519
  %1577 = vmatpush1.bf16.msra.mxu0 %v1518
  %1578 = vmatprep.subr.bf16.mxu0 %v1523
  %1579 = vmatpush1.bf16.msra.mxu0 %v1522
  %1580 = vmatprep.subr.bf16.mxu0 %v1527
  %1581 = vmatpush1.bf16.msra.mxu0 %v1526
  %1582 = vmatprep.subr.bf16.mxu0 %v1531
  %1583 = vmatpush1.bf16.msra.mxu0 %v1530
  %1584 = vmatprep.subr.bf16.mxu0 %v1535
  %1585 = vmatpush1.bf16.msra.mxu0 %v1534
  %1586 = vmatprep.subr.bf16.mxu0 0
  %1587 = vmatpush1.bf16.msra.mxu0 0
  %1588 = vmatprep.subr.bf16.mxu0 0
  %1589 = vmatpush1.bf16.msra.mxu0 0
  %1590 = vmatprep.subr.bf16.mxu0 0
  %1591 = vmatpush1.bf16.msra.mxu0 0
  %1592 = vmatprep.subr.bf16.mxu0 0
  %1593 = vmatpush1.bf16.msra.mxu0 0
  %1594 = vmatprep.subr.bf16.mxu0 0
  %1595 = vmatpush1.bf16.msra.mxu0 0
  %1596 = vmatprep.subr.bf16.mxu0 0
  %1597 = vmatpush1.bf16.msra.mxu0 0
  %1598 = vmatprep.subr.bf16.mxu0 0
  %1599 = vmatpush1.bf16.msra.mxu0 0
  %1600 = vmatprep.subr.bf16.mxu0 0
  %1601 = vmatpush1.bf16.msra.mxu0 0
  %1602 = vmatprep.mubr.bf16.mxu0 0
  %1603 = vmatmul.mubr.bf16.gmra.mrb[0].mxu0 %v1377
  %v1604 = vpop.f32.mrb[0].mxu0
  %v1605 = vadd.f32 0.0, %v1604
  %v1606 = vpop.f32.mrb[0].mxu0
  %v1607 = vadd.f32 0.0, %v1606
  %v1608 = vpop.f32.mrb[0].mxu0
  %v1609 = vpop.f32.mrb[0].mxu0
  %1610 = vdwg.mxu0
  %1611 = vmatprep.subr.bf16.mxu0 %v1509
  %1612 = vmatpush1.bf16.msra.mxu0 %v1508
  %1613 = vmatprep.subr.bf16.mxu0 %v1513
  %1614 = vmatpush1.bf16.msra.mxu0 %v1512
  %1615 = vmatprep.subr.bf16.mxu0 %v1517
  %1616 = vmatpush1.bf16.msra.mxu0 %v1516
  %1617 = vmatprep.subr.bf16.mxu0 %v1521
  %1618 = vmatpush1.bf16.msra.mxu0 %v1520
  %1619 = vmatprep.subr.bf16.mxu0 %v1525
  %1620 = vmatpush1.bf16.msra.mxu0 %v1524
  %1621 = vmatprep.subr.bf16.mxu0 %v1529
  %1622 = vmatpush1.bf16.msra.mxu0 %v1528
  %1623 = vmatprep.subr.bf16.mxu0 %v1533
  %1624 = vmatpush1.bf16.msra.mxu0 %v1532
  %1625 = vmatprep.subr.bf16.mxu0 %v1537
  %1626 = vmatpush1.bf16.msra.mxu0 %v1536
  %1627 = vmatprep.subr.bf16.mxu0 0
  %1628 = vmatpush1.bf16.msra.mxu0 0
  %1629 = vmatprep.subr.bf16.mxu0 0
  %1630 = vmatpush1.bf16.msra.mxu0 0
  %1631 = vmatprep.subr.bf16.mxu0 0
  %1632 = vmatpush1.bf16.msra.mxu0 0
  %1633 = vmatprep.subr.bf16.mxu0 0
  %1634 = vmatpush1.bf16.msra.mxu0 0
  %1635 = vmatprep.subr.bf16.mxu0 0
  %1636 = vmatpush1.bf16.msra.mxu0 0
  %1637 = vmatprep.subr.bf16.mxu0 0
  %1638 = vmatpush1.bf16.msra.mxu0 0
  %1639 = vmatprep.subr.bf16.mxu0 0
  %1640 = vmatpush1.bf16.msra.mxu0 0
  %1641 = vmatprep.subr.bf16.mxu0 0
  %1642 = vmatpush1.bf16.msra.mxu0 0
  %1643 = vmatprep.mubr.bf16.mxu0 0
  %1644 = vmatmul.mubr.bf16.gmra.mrb[0].mxu0 %v1377
  %v1645 = vpop.f32.mrb[0].mxu0
  %v1646 = vadd.f32 0.0, %v1645
  %v1647 = vpop.f32.mrb[0].mxu0
  %v1648 = vadd.f32 0.0, %v1647
  %v1649 = vpop.f32.mrb[0].mxu0
  %v1650 = vpop.f32.mrb[0].mxu0
  %1651 = vdwg.mxu0
  %v1652 = vadd.f32 %v1373, %v1605
  %v1653 = vadd.f32 %v1374, %v1607
  %v1654 = vadd.f32 %v1375, %v1646
  %v1655 = vadd.f32 %v1376, %v1648
  %v1656 = vmul.f32 %v1652, 0.5
  %v1657 = vtanh.pop %v1656
  %v1658 = vmul.f32 %v1657, 0.5
  %v1659 = vadd.f32 %v1658, 0.5
  %v1660 = vmul.f32 %v1653, 0.5
  %v1661 = vtanh.pop %v1660
  %v1662 = vmul.f32 %v1661, 0.5
  %v1663 = vadd.f32 %v1662, 0.5
  %v1664 = vtanh.pop %v1654
  %v1665 = vmul.f32 %v1655, 0.5
  %v1666 = vtanh.pop %v1665
  %v1667 = vmul.f32 %v1666, 0.5
  %v1668 = vadd.f32 %v1667, 0.5
  %v1669 = vmul.f32 %v1663, %v1365
  %v1670 = vmul.f32 %v1659, %v1664
  %v1671 = vadd.f32 %v1669, %v1670
  %v1672 = vtanh.pop %v1671
  %v1673 = vmul.f32 %v1668, %v1672
  %s1674 = scalar_lea.vmem [#allocation5], 24
  %1675 = vst [vmem:[%s1674] sm:$0xff] %v1673
  %s1676 = smul.u32 4, 4
  %s1677 = smul.addr %s1676, 8
  %s1678 = scalar_lea.vmem [#allocation4], %s1677
  %v1679 = vld [vmem:[%s1678] sm:$0xff]
  %v1680 = vld [vmem:[%s1678 + $0x8] sm:$0xff]
  %v1681 = vld [vmem:[%s1678 + $0x10] sm:$0xff]
  %v1682 = vld [vmem:[%s1678 + $0x18] sm:$0xff]
  %v1683 = vpack.c.bf16 %v1673, %v1673
  %v1684 = vld [vmem:[%s2] sm:$0xff]
  %v1685 = vld [vmem:[%s2 + $0x8] sm:$0xff]
  %v1686 = vld [vmem:[%s2 + $0x10] sm:$0xff]
  %v1687 = vld [vmem:[%s2 + $0x18] sm:$0xff]
  %v1688 = vld [vmem:[%s2 + $0x20] sm:$0xff]
  %v1689 = vld [vmem:[%s2 + $0x28] sm:$0xff]
  %v1690 = vld [vmem:[%s2 + $0x30] sm:$0xff]
  %v1691 = vld [vmem:[%s2 + $0x38] sm:$0xff]
  %v1692 = vld [vmem:[%s2 + $0x40] sm:$0xff]
  %v1693 = vld [vmem:[%s2 + $0x48] sm:$0xff]
  %v1694 = vld [vmem:[%s2 + $0x50] sm:$0xff]
  %v1695 = vld [vmem:[%s2 + $0x58] sm:$0xff]
  %v1696 = vld [vmem:[%s2 + $0x60] sm:$0xff]
  %v1697 = vld [vmem:[%s2 + $0x68] sm:$0xff]
  %v1698 = vld [vmem:[%s2 + $0x70] sm:$0xff]
  %v1699 = vld [vmem:[%s2 + $0x78] sm:$0xff]
  %v1700 = vld [vmem:[%s2 + $0x80] sm:$0xff]
  %v1701 = vld [vmem:[%s2 + $0x88] sm:$0xff]
  %v1702 = vld [vmem:[%s2 + $0x90] sm:$0xff]
  %v1703 = vld [vmem:[%s2 + $0x98] sm:$0xff]
  %v1704 = vld [vmem:[%s2 + $0xa0] sm:$0xff]
  %v1705 = vld [vmem:[%s2 + $0xa8] sm:$0xff]
  %v1706 = vld [vmem:[%s2 + $0xb0] sm:$0xff]
  %v1707 = vld [vmem:[%s2 + $0xb8] sm:$0xff]
  %v1708 = vld [vmem:[%s2 + $0xc0] sm:$0xff]
  %v1709 = vld [vmem:[%s2 + $0xc8] sm:$0xff]
  %v1710 = vld [vmem:[%s2 + $0xd0] sm:$0xff]
  %v1711 = vld [vmem:[%s2 + $0xd8] sm:$0xff]
  %v1712 = vld [vmem:[%s2 + $0xe0] sm:$0xff]
  %v1713 = vld [vmem:[%s2 + $0xe8] sm:$0xff]
  %v1714 = vld [vmem:[%s2 + $0xf0] sm:$0xff]
  %v1715 = vld [vmem:[%s2 + $0xf8] sm:$0xff]
  %v1748 = vunpack.c.l.b16 %v1684
  %v1749 = vunpack.c.h.b16 %v1684
  %v1750 = vunpack.c.l.b16 %v1685
  %v1751 = vunpack.c.h.b16 %v1685
  %v1752 = vunpack.c.l.b16 %v1686
  %v1753 = vunpack.c.h.b16 %v1686
  %v1754 = vunpack.c.l.b16 %v1687
  %v1755 = vunpack.c.h.b16 %v1687
  %v1756 = vunpack.c.l.b16 %v1688
  %v1757 = vunpack.c.h.b16 %v1688
  %v1758 = vunpack.c.l.b16 %v1689
  %v1759 = vunpack.c.h.b16 %v1689
  %v1760 = vunpack.c.l.b16 %v1690
  %v1761 = vunpack.c.h.b16 %v1690
  %v1762 = vunpack.c.l.b16 %v1691
  %v1763 = vunpack.c.h.b16 %v1691
  %v1764 = vunpack.c.l.b16 %v1692
  %v1765 = vunpack.c.h.b16 %v1692
  %v1766 = vunpack.c.l.b16 %v1693
  %v1767 = vunpack.c.h.b16 %v1693
  %v1768 = vunpack.c.l.b16 %v1694
  %v1769 = vunpack.c.h.b16 %v1694
  %v1770 = vunpack.c.l.b16 %v1695
  %v1771 = vunpack.c.h.b16 %v1695
  %v1772 = vunpack.c.l.b16 %v1696
  %v1773 = vunpack.c.h.b16 %v1696
  %v1774 = vunpack.c.l.b16 %v1697
  %v1775 = vunpack.c.h.b16 %v1697
  %v1776 = vunpack.c.l.b16 %v1698
  %v1777 = vunpack.c.h.b16 %v1698
  %v1778 = vunpack.c.l.b16 %v1699
  %v1779 = vunpack.c.h.b16 %v1699
  %v1780 = vunpack.c.l.b16 %v1700
  %v1781 = vunpack.c.h.b16 %v1700
  %v1782 = vunpack.c.l.b16 %v1701
  %v1783 = vunpack.c.h.b16 %v1701
  %v1784 = vunpack.c.l.b16 %v1702
  %v1785 = vunpack.c.h.b16 %v1702
  %v1786 = vunpack.c.l.b16 %v1703
  %v1787 = vunpack.c.h.b16 %v1703
  %v1788 = vunpack.c.l.b16 %v1704
  %v1789 = vunpack.c.h.b16 %v1704
  %v1790 = vunpack.c.l.b16 %v1705
  %v1791 = vunpack.c.h.b16 %v1705
  %v1792 = vunpack.c.l.b16 %v1706
  %v1793 = vunpack.c.h.b16 %v1706
  %v1794 = vunpack.c.l.b16 %v1707
  %v1795 = vunpack.c.h.b16 %v1707
  %v1796 = vunpack.c.l.b16 %v1708
  %v1797 = vunpack.c.h.b16 %v1708
  %v1798 = vunpack.c.l.b16 %v1709
  %v1799 = vunpack.c.h.b16 %v1709
  %v1800 = vunpack.c.l.b16 %v1710
  %v1801 = vunpack.c.h.b16 %v1710
  %v1802 = vunpack.c.l.b16 %v1711
  %v1803 = vunpack.c.h.b16 %v1711
  %v1804 = vunpack.c.l.b16 %v1712
  %v1805 = vunpack.c.h.b16 %v1712
  %v1806 = vunpack.c.l.b16 %v1713
  %v1807 = vunpack.c.h.b16 %v1713
  %v1808 = vunpack.c.l.b16 %v1714
  %v1809 = vunpack.c.h.b16 %v1714
  %v1810 = vunpack.c.l.b16 %v1715
  %v1811 = vunpack.c.h.b16 %v1715
  %v1812 = vpack.c.b16 %v1752, %v1748
  %v1813 = vpack.c.b16 %v1753, %v1749
  %v1814 = vpack.c.b16 %v1754, %v1750
  %v1815 = vpack.c.b16 %v1755, %v1751
  %v1816 = vpack.c.b16 %v1760, %v1756
  %v1817 = vpack.c.b16 %v1761, %v1757
  %v1818 = vpack.c.b16 %v1762, %v1758
  %v1819 = vpack.c.b16 %v1763, %v1759
  %v1820 = vpack.c.b16 %v1768, %v1764
  %v1821 = vpack.c.b16 %v1769, %v1765
  %v1822 = vpack.c.b16 %v1770, %v1766
  %v1823 = vpack.c.b16 %v1771, %v1767
  %v1824 = vpack.c.b16 %v1776, %v1772
  %v1825 = vpack.c.b16 %v1777, %v1773
  %v1826 = vpack.c.b16 %v1778, %v1774
  %v1827 = vpack.c.b16 %v1779, %v1775
  %v1828 = vpack.c.b16 %v1784, %v1780
  %v1829 = vpack.c.b16 %v1785, %v1781
  %v1830 = vpack.c.b16 %v1786, %v1782
  %v1831 = vpack.c.b16 %v1787, %v1783
  %v1832 = vpack.c.b16 %v1792, %v1788
  %v1833 = vpack.c.b16 %v1793, %v1789
  %v1834 = vpack.c.b16 %v1794, %v1790
  %v1835 = vpack.c.b16 %v1795, %v1791
  %v1836 = vpack.c.b16 %v1800, %v1796
  %v1837 = vpack.c.b16 %v1801, %v1797
  %v1838 = vpack.c.b16 %v1802, %v1798
  %v1839 = vpack.c.b16 %v1803, %v1799
  %v1840 = vpack.c.b16 %v1808, %v1804
  %v1841 = vpack.c.b16 %v1809, %v1805
  %v1842 = vpack.c.b16 %v1810, %v1806
  %v1843 = vpack.c.b16 %v1811, %v1807
  %1876 = vmatprep.subr.bf16.mxu0 %v1813
  %1877 = vmatpush1.bf16.msra.mxu0 %v1812
  %1878 = vmatprep.subr.bf16.mxu0 %v1817
  %1879 = vmatpush1.bf16.msra.mxu0 %v1816
  %1880 = vmatprep.subr.bf16.mxu0 %v1821
  %1881 = vmatpush1.bf16.msra.mxu0 %v1820
  %1882 = vmatprep.subr.bf16.mxu0 %v1825
  %1883 = vmatpush1.bf16.msra.mxu0 %v1824
  %1884 = vmatprep.subr.bf16.mxu0 %v1829
  %1885 = vmatpush1.bf16.msra.mxu0 %v1828
  %1886 = vmatprep.subr.bf16.mxu0 %v1833
  %1887 = vmatpush1.bf16.msra.mxu0 %v1832
  %1888 = vmatprep.subr.bf16.mxu0 %v1837
  %1889 = vmatpush1.bf16.msra.mxu0 %v1836
  %1890 = vmatprep.subr.bf16.mxu0 %v1841
  %1891 = vmatpush1.bf16.msra.mxu0 %v1840
  %1892 = vmatprep.subr.bf16.mxu0 0
  %1893 = vmatpush1.bf16.msra.mxu0 0
  %1894 = vmatprep.subr.bf16.mxu0 0
  %1895 = vmatpush1.bf16.msra.mxu0 0
  %1896 = vmatprep.subr.bf16.mxu0 0
  %1897 = vmatpush1.bf16.msra.mxu0 0
  %1898 = vmatprep.subr.bf16.mxu0 0
  %1899 = vmatpush1.bf16.msra.mxu0 0
  %1900 = vmatprep.subr.bf16.mxu0 0
  %1901 = vmatpush1.bf16.msra.mxu0 0
  %1902 = vmatprep.subr.bf16.mxu0 0
  %1903 = vmatpush1.bf16.msra.mxu0 0
  %1904 = vmatprep.subr.bf16.mxu0 0
  %1905 = vmatpush1.bf16.msra.mxu0 0
  %1906 = vmatprep.subr.bf16.mxu0 0
  %1907 = vmatpush1.bf16.msra.mxu0 0
  %1908 = vmatprep.mubr.bf16.mxu0 0
  %1909 = vmatmul.mubr.bf16.gmra.mrb[0].mxu0 %v1683
  %v1910 = vpop.f32.mrb[0].mxu0
  %v1911 = vadd.f32 0.0, %v1910
  %v1912 = vpop.f32.mrb[0].mxu0
  %v1913 = vadd.f32 0.0, %v1912
  %v1914 = vpop.f32.mrb[0].mxu0
  %v1915 = vpop.f32.mrb[0].mxu0
  %1916 = vdwg.mxu0
  %1917 = vmatprep.subr.bf16.mxu0 %v1815
  %1918 = vmatpush1.bf16.msra.mxu0 %v1814
  %1919 = vmatprep.subr.bf16.mxu0 %v1819
  %1920 = vmatpush1.bf16.msra.mxu0 %v1818
  %1921 = vmatprep.subr.bf16.mxu0 %v1823
  %1922 = vmatpush1.bf16.msra.mxu0 %v1822
  %1923 = vmatprep.subr.bf16.mxu0 %v1827
  %1924 = vmatpush1.bf16.msra.mxu0 %v1826
  %1925 = vmatprep.subr.bf16.mxu0 %v1831
  %1926 = vmatpush1.bf16.msra.mxu0 %v1830
  %1927 = vmatprep.subr.bf16.mxu0 %v1835
  %1928 = vmatpush1.bf16.msra.mxu0 %v1834
  %1929 = vmatprep.subr.bf16.mxu0 %v1839
  %1930 = vmatpush1.bf16.msra.mxu0 %v1838
  %1931 = vmatprep.subr.bf16.mxu0 %v1843
  %1932 = vmatpush1.bf16.msra.mxu0 %v1842
  %1933 = vmatprep.subr.bf16.mxu0 0
  %1934 = vmatpush1.bf16.msra.mxu0 0
  %1935 = vmatprep.subr.bf16.mxu0 0
  %1936 = vmatpush1.bf16.msra.mxu0 0
  %1937 = vmatprep.subr.bf16.mxu0 0
  %1938 = vmatpush1.bf16.msra.mxu0 0
  %1939 = vmatprep.subr.bf16.mxu0 0
  %1940 = vmatpush1.bf16.msra.mxu0 0
  %1941 = vmatprep.subr.bf16.mxu0 0
  %1942 = vmatpush1.bf16.msra.mxu0 0
  %1943 = vmatprep.subr.bf16.mxu0 0
  %1944 = vmatpush1.bf16.msra.mxu0 0
  %1945 = vmatprep.subr.bf16.mxu0 0
  %1946 = vmatpush1.bf16.msra.mxu0 0
  %1947 = vmatprep.subr.bf16.mxu0 0
  %1948 = vmatpush1.bf16.msra.mxu0 0
  %1949 = vmatprep.mubr.bf16.mxu0 0
  %1950 = vmatmul.mubr.bf16.gmra.mrb[0].mxu0 %v1683
  %v1951 = vpop.f32.mrb[0].mxu0
  %v1952 = vadd.f32 0.0, %v1951
  %v1953 = vpop.f32.mrb[0].mxu0
  %v1954 = vadd.f32 0.0, %v1953
  %v1955 = vpop.f32.mrb[0].mxu0
  %v1956 = vpop.f32.mrb[0].mxu0
  %1957 = vdwg.mxu0
  %v1958 = vadd.f32 %v1679, %v1911
  %v1959 = vadd.f32 %v1680, %v1913
  %v1960 = vadd.f32 %v1681, %v1952
  %v1961 = vadd.f32 %v1682, %v1954
  %v1962 = vmul.f32 %v1958, 0.5
  %v1963 = vtanh.pop %v1962
  %v1964 = vmul.f32 %v1963, 0.5
  %v1965 = vadd.f32 %v1964, 0.5
  %v1966 = vmul.f32 %v1959, 0.5
  %v1967 = vtanh.pop %v1966
  %v1968 = vmul.f32 %v1967, 0.5
  %v1969 = vadd.f32 %v1968, 0.5
  %v1970 = vtanh.pop %v1960
  %v1971 = vmul.f32 %v1961, 0.5
  %v1972 = vtanh.pop %v1971
  %v1973 = vmul.f32 %v1972, 0.5
  %v1974 = vadd.f32 %v1973, 0.5
  %v1975 = vmul.f32 %v1969, %v1671
  %v1976 = vmul.f32 %v1965, %v1970
  %v1977 = vadd.f32 %v1975, %v1976
  %v1978 = vtanh.pop %v1977
  %v1979 = vmul.f32 %v1974, %v1978
  %s1980 = scalar_lea.vmem [#allocation5], 32
  %1981 = vst [vmem:[%s1980] sm:$0xff] %v1979
  %s1982 = smul.u32 5, 4
  %s1983 = smul.addr %s1982, 8
  %s1984 = scalar_lea.vmem [#allocation4], %s1983
  %v1985 = vld [vmem:[%s1984] sm:$0xff]
  %v1986 = vld [vmem:[%s1984 + $0x8] sm:$0xff]
  %v1987 = vld [vmem:[%s1984 + $0x10] sm:$0xff]
  %v1988 = vld [vmem:[%s1984 + $0x18] sm:$0xff]
  %v1989 = vpack.c.bf16 %v1979, %v1979
  %v1990 = vld [vmem:[%s2] sm:$0xff]
  %v1991 = vld [vmem:[%s2 + $0x8] sm:$0xff]
  %v1992 = vld [vmem:[%s2 + $0x10] sm:$0xff]
  %v1993 = vld [vmem:[%s2 + $0x18] sm:$0xff]
  %v1994 = vld [vmem:[%s2 + $0x20] sm:$0xff]
  %v1995 = vld [vmem:[%s2 + $0x28] sm:$0xff]
  %v1996 = vld [vmem:[%s2 + $0x30] sm:$0xff]
  %v1997 = vld [vmem:[%s2 + $0x38] sm:$0xff]
  %v1998 = vld [vmem:[%s2 + $0x40] sm:$0xff]
  %v1999 = vld [vmem:[%s2 + $0x48] sm:$0xff]
  %v2000 = vld [vmem:[%s2 + $0x50] sm:$0xff]
  %v2001 = vld [vmem:[%s2 + $0x58] sm:$0xff]
  %v2002 = vld [vmem:[%s2 + $0x60] sm:$0xff]
  %v2003 = vld [vmem:[%s2 + $0x68] sm:$0xff]
  %v2004 = vld [vmem:[%s2 + $0x70] sm:$0xff]
  %v2005 = vld [vmem:[%s2 + $0x78] sm:$0xff]
  %v2006 = vld [vmem:[%s2 + $0x80] sm:$0xff]
  %v2007 = vld [vmem:[%s2 + $0x88] sm:$0xff]
  %v2008 = vld [vmem:[%s2 + $0x90] sm:$0xff]
  %v2009 = vld [vmem:[%s2 + $0x98] sm:$0xff]
  %v2010 = vld [vmem:[%s2 + $0xa0] sm:$0xff]
  %v2011 = vld [vmem:[%s2 + $0xa8] sm:$0xff]
  %v2012 = vld [vmem:[%s2 + $0xb0] sm:$0xff]
  %v2013 = vld [vmem:[%s2 + $0xb8] sm:$0xff]
  %v2014 = vld [vmem:[%s2 + $0xc0] sm:$0xff]
  %v2015 = vld [vmem:[%s2 + $0xc8] sm:$0xff]
  %v2016 = vld [vmem:[%s2 + $0xd0] sm:$0xff]
  %v2017 = vld [vmem:[%s2 + $0xd8] sm:$0xff]
  %v2018 = vld [vmem:[%s2 + $0xe0] sm:$0xff]
  %v2019 = vld [vmem:[%s2 + $0xe8] sm:$0xff]
  %v2020 = vld [vmem:[%s2 + $0xf0] sm:$0xff]
  %v2021 = vld [vmem:[%s2 + $0xf8] sm:$0xff]
  %v2054 = vunpack.c.l.b16 %v1990
  %v2055 = vunpack.c.h.b16 %v1990
  %v2056 = vunpack.c.l.b16 %v1991
  %v2057 = vunpack.c.h.b16 %v1991
  %v2058 = vunpack.c.l.b16 %v1992
  %v2059 = vunpack.c.h.b16 %v1992
  %v2060 = vunpack.c.l.b16 %v1993
  %v2061 = vunpack.c.h.b16 %v1993
  %v2062 = vunpack.c.l.b16 %v1994
  %v2063 = vunpack.c.h.b16 %v1994
  %v2064 = vunpack.c.l.b16 %v1995
  %v2065 = vunpack.c.h.b16 %v1995
  %v2066 = vunpack.c.l.b16 %v1996
  %v2067 = vunpack.c.h.b16 %v1996
  %v2068 = vunpack.c.l.b16 %v1997
  %v2069 = vunpack.c.h.b16 %v1997
  %v2070 = vunpack.c.l.b16 %v1998
  %v2071 = vunpack.c.h.b16 %v1998
  %v2072 = vunpack.c.l.b16 %v1999
  %v2073 = vunpack.c.h.b16 %v1999
  %v2074 = vunpack.c.l.b16 %v2000
  %v2075 = vunpack.c.h.b16 %v2000
  %v2076 = vunpack.c.l.b16 %v2001
  %v2077 = vunpack.c.h.b16 %v2001
  %v2078 = vunpack.c.l.b16 %v2002
  %v2079 = vunpack.c.h.b16 %v2002
  %v2080 = vunpack.c.l.b16 %v2003
  %v2081 = vunpack.c.h.b16 %v2003
  %v2082 = vunpack.c.l.b16 %v2004
  %v2083 = vunpack.c.h.b16 %v2004
  %v2084 = vunpack.c.l.b16 %v2005
  %v2085 = vunpack.c.h.b16 %v2005
  %v2086 = vunpack.c.l.b16 %v2006
  %v2087 = vunpack.c.h.b16 %v2006
  %v2088 = vunpack.c.l.b16 %v2007
  %v2089 = vunpack.c.h.b16 %v2007
  %v2090 = vunpack.c.l.b16 %v2008
  %v2091 = vunpack.c.h.b16 %v2008
  %v2092 = vunpack.c.l.b16 %v2009
  %v2093 = vunpack.c.h.b16 %v2009
  %v2094 = vunpack.c.l.b16 %v2010
  %v2095 = vunpack.c.h.b16 %v2010
  %v2096 = vunpack.c.l.b16 %v2011
  %v2097 = vunpack.c.h.b16 %v2011
  %v2098 = vunpack.c.l.b16 %v2012
  %v2099 = vunpack.c.h.b16 %v2012
  %v2100 = vunpack.c.l.b16 %v2013
  %v2101 = vunpack.c.h.b16 %v2013
  %v2102 = vunpack.c.l.b16 %v2014
  %v2103 = vunpack.c.h.b16 %v2014
  %v2104 = vunpack.c.l.b16 %v2015
  %v2105 = vunpack.c.h.b16 %v2015
  %v2106 = vunpack.c.l.b16 %v2016
  %v2107 = vunpack.c.h.b16 %v2016
  %v2108 = vunpack.c.l.b16 %v2017
  %v2109 = vunpack.c.h.b16 %v2017
  %v2110 = vunpack.c.l.b16 %v2018
  %v2111 = vunpack.c.h.b16 %v2018
  %v2112 = vunpack.c.l.b16 %v2019
  %v2113 = vunpack.c.h.b16 %v2019
  %v2114 = vunpack.c.l.b16 %v2020
  %v2115 = vunpack.c.h.b16 %v2020
  %v2116 = vunpack.c.l.b16 %v2021
  %v2117 = vunpack.c.h.b16 %v2021
  %v2118 = vpack.c.b16 %v2058, %v2054
  %v2119 = vpack.c.b16 %v2059, %v2055
  %v2120 = vpack.c.b16 %v2060, %v2056
  %v2121 = vpack.c.b16 %v2061, %v2057
  %v2122 = vpack.c.b16 %v2066, %v2062
  %v2123 = vpack.c.b16 %v2067, %v2063
  %v2124 = vpack.c.b16 %v2068, %v2064
  %v2125 = vpack.c.b16 %v2069, %v2065
  %v2126 = vpack.c.b16 %v2074, %v2070
  %v2127 = vpack.c.b16 %v2075, %v2071
  %v2128 = vpack.c.b16 %v2076, %v2072
  %v2129 = vpack.c.b16 %v2077, %v2073
  %v2130 = vpack.c.b16 %v2082, %v2078
  %v2131 = vpack.c.b16 %v2083, %v2079
  %v2132 = vpack.c.b16 %v2084, %v2080
  %v2133 = vpack.c.b16 %v2085, %v2081
  %v2134 = vpack.c.b16 %v2090, %v2086
  %v2135 = vpack.c.b16 %v2091, %v2087
  %v2136 = vpack.c.b16 %v2092, %v2088
  %v2137 = vpack.c.b16 %v2093, %v2089
  %v2138 = vpack.c.b16 %v2098, %v2094
  %v2139 = vpack.c.b16 %v2099, %v2095
  %v2140 = vpack.c.b16 %v2100, %v2096
  %v2141 = vpack.c.b16 %v2101, %v2097
  %v2142 = vpack.c.b16 %v2106, %v2102
  %v2143 = vpack.c.b16 %v2107, %v2103
  %v2144 = vpack.c.b16 %v2108, %v2104
  %v2145 = vpack.c.b16 %v2109, %v2105
  %v2146 = vpack.c.b16 %v2114, %v2110
  %v2147 = vpack.c.b16 %v2115, %v2111
  %v2148 = vpack.c.b16 %v2116, %v2112
  %v2149 = vpack.c.b16 %v2117, %v2113
  %2182 = vmatprep.subr.bf16.mxu0 %v2119
  %2183 = vmatpush1.bf16.msra.mxu0 %v2118
  %2184 = vmatprep.subr.bf16.mxu0 %v2123
  %2185 = vmatpush1.bf16.msra.mxu0 %v2122
  %2186 = vmatprep.subr.bf16.mxu0 %v2127
  %2187 = vmatpush1.bf16.msra.mxu0 %v2126
  %2188 = vmatprep.subr.bf16.mxu0 %v2131
  %2189 = vmatpush1.bf16.msra.mxu0 %v2130
  %2190 = vmatprep.subr.bf16.mxu0 %v2135
  %2191 = vmatpush1.bf16.msra.mxu0 %v2134
  %2192 = vmatprep.subr.bf16.mxu0 %v2139
  %2193 = vmatpush1.bf16.msra.mxu0 %v2138
  %2194 = vmatprep.subr.bf16.mxu0 %v2143
  %2195 = vmatpush1.bf16.msra.mxu0 %v2142
  %2196 = vmatprep.subr.bf16.mxu0 %v2147
  %2197 = vmatpush1.bf16.msra.mxu0 %v2146
  %2198 = vmatprep.subr.bf16.mxu0 0
  %2199 = vmatpush1.bf16.msra.mxu0 0
  %2200 = vmatprep.subr.bf16.mxu0 0
  %2201 = vmatpush1.bf16.msra.mxu0 0
  %2202 = vmatprep.subr.bf16.mxu0 0
  %2203 = vmatpush1.bf16.msra.mxu0 0
  %2204 = vmatprep.subr.bf16.mxu0 0
  %2205 = vmatpush1.bf16.msra.mxu0 0
  %2206 = vmatprep.subr.bf16.mxu0 0
  %2207 = vmatpush1.bf16.msra.mxu0 0
  %2208 = vmatprep.subr.bf16.mxu0 0
  %2209 = vmatpush1.bf16.msra.mxu0 0
  %2210 = vmatprep.subr.bf16.mxu0 0
  %2211 = vmatpush1.bf16.msra.mxu0 0
  %2212 = vmatprep.subr.bf16.mxu0 0
  %2213 = vmatpush1.bf16.msra.mxu0 0
  %2214 = vmatprep.mubr.bf16.mxu0 0
  %2215 = vmatmul.mubr.bf16.gmra.mrb[0].mxu0 %v1989
  %v2216 = vpop.f32.mrb[0].mxu0
  %v2217 = vadd.f32 0.0, %v2216
  %v2218 = vpop.f32.mrb[0].mxu0
  %v2219 = vadd.f32 0.0, %v2218
  %v2220 = vpop.f32.mrb[0].mxu0
  %v2221 = vpop.f32.mrb[0].mxu0
  %2222 = vdwg.mxu0
  %2223 = vmatprep.subr.bf16.mxu0 %v2121
  %2224 = vmatpush1.bf16.msra.mxu0 %v2120
  %2225 = vmatprep.subr.bf16.mxu0 %v2125
  %2226 = vmatpush1.bf16.msra.mxu0 %v2124
  %2227 = vmatprep.subr.bf16.mxu0 %v2129
  %2228 = vmatpush1.bf16.msra.mxu0 %v2128
  %2229 = vmatprep.subr.bf16.mxu0 %v2133
  %2230 = vmatpush1.bf16.msra.mxu0 %v2132
  %2231 = vmatprep.subr.bf16.mxu0 %v2137
  %2232 = vmatpush1.bf16.msra.mxu0 %v2136
  %2233 = vmatprep.subr.bf16.mxu0 %v2141
  %2234 = vmatpush1.bf16.msra.mxu0 %v2140
  %2235 = vmatprep.subr.bf16.mxu0 %v2145
  %2236 = vmatpush1.bf16.msra.mxu0 %v2144
  %2237 = vmatprep.subr.bf16.mxu0 %v2149
  %2238 = vmatpush1.bf16.msra.mxu0 %v2148
  %2239 = vmatprep.subr.bf16.mxu0 0
  %2240 = vmatpush1.bf16.msra.mxu0 0
  %2241 = vmatprep.subr.bf16.mxu0 0
  %2242 = vmatpush1.bf16.msra.mxu0 0
  %2243 = vmatprep.subr.bf16.mxu0 0
  %2244 = vmatpush1.bf16.msra.mxu0 0
  %2245 = vmatprep.subr.bf16.mxu0 0
  %2246 = vmatpush1.bf16.msra.mxu0 0
  %2247 = vmatprep.subr.bf16.mxu0 0
  %2248 = vmatpush1.bf16.msra.mxu0 0
  %2249 = vmatprep.subr.bf16.mxu0 0
  %2250 = vmatpush1.bf16.msra.mxu0 0
  %2251 = vmatprep.subr.bf16.mxu0 0
  %2252 = vmatpush1.bf16.msra.mxu0 0
  %2253 = vmatprep.subr.bf16.mxu0 0
  %2254 = vmatpush1.bf16.msra.mxu0 0
  %2255 = vmatprep.mubr.bf16.mxu0 0
  %2256 = vmatmul.mubr.bf16.gmra.mrb[0].mxu0 %v1989
  %v2257 = vpop.f32.mrb[0].mxu0
  %v2258 = vadd.f32 0.0, %v2257
  %v2259 = vpop.f32.mrb[0].mxu0
  %v2260 = vadd.f32 0.0, %v2259
  %v2261 = vpop.f32.mrb[0].mxu0
  %v2262 = vpop.f32.mrb[0].mxu0
  %2263 = vdwg.mxu0
  %v2264 = vadd.f32 %v1985, %v2217
  %v2265 = vadd.f32 %v1986, %v2219
  %v2266 = vadd.f32 %v1987, %v2258
  %v2267 = vadd.f32 %v1988, %v2260
  %v2268 = vmul.f32 %v2264, 0.5
  %v2269 = vtanh.pop %v2268
  %v2270 = vmul.f32 %v2269, 0.5
  %v2271 = vadd.f32 %v2270, 0.5
  %v2272 = vmul.f32 %v2265, 0.5
  %v2273 = vtanh.pop %v2272
  %v2274 = vmul.f32 %v2273, 0.5
  %v2275 = vadd.f32 %v2274, 0.5
  %v2276 = vtanh.pop %v2266
  %v2277 = vmul.f32 %v2267, 0.5
  %v2278 = vtanh.pop %v2277
  %v2279 = vmul.f32 %v2278, 0.5
  %v2280 = vadd.f32 %v2279, 0.5
  %v2281 = vmul.f32 %v2275, %v1977
  %v2282 = vmul.f32 %v2271, %v2276
  %v2283 = vadd.f32 %v2281, %v2282
  %v2284 = vtanh.pop %v2283
  %v2285 = vmul.f32 %v2280, %v2284
  %s2286 = scalar_lea.vmem [#allocation5], 40
  %2287 = vst [vmem:[%s2286] sm:$0xff] %v2285
  %s2288 = smul.u32 6, 4
  %s2289 = smul.addr %s2288, 8
  %s2290 = scalar_lea.vmem [#allocation4], %s2289
  %v2291 = vld [vmem:[%s2290] sm:$0xff]
  %v2292 = vld [vmem:[%s2290 + $0x8] sm:$0xff]
  %v2293 = vld [vmem:[%s2290 + $0x10] sm:$0xff]
  %v2294 = vld [vmem:[%s2290 + $0x18] sm:$0xff]
  %v2295 = vpack.c.bf16 %v2285, %v2285
  %v2296 = vld [vmem:[%s2] sm:$0xff]
  %v2297 = vld [vmem:[%s2 + $0x8] sm:$0xff]
  %v2298 = vld [vmem:[%s2 + $0x10] sm:$0xff]
  %v2299 = vld [vmem:[%s2 + $0x18] sm:$0xff]
  %v2300 = vld [vmem:[%s2 + $0x20] sm:$0xff]
  %v2301 = vld [vmem:[%s2 + $0x28] sm:$0xff]
  %v2302 = vld [vmem:[%s2 + $0x30] sm:$0xff]
  %v2303 = vld [vmem:[%s2 + $0x38] sm:$0xff]
  %v2304 = vld [vmem:[%s2 + $0x40] sm:$0xff]
  %v2305 = vld [vmem:[%s2 + $0x48] sm:$0xff]
  %v2306 = vld [vmem:[%s2 + $0x50] sm:$0xff]
  %v2307 = vld [vmem:[%s2 + $0x58] sm:$0xff]
  %v2308 = vld [vmem:[%s2 + $0x60] sm:$0xff]
  %v2309 = vld [vmem:[%s2 + $0x68] sm:$0xff]
  %v2310 = vld [vmem:[%s2 + $0x70] sm:$0xff]
  %v2311 = vld [vmem:[%s2 + $0x78] sm:$0xff]
  %v2312 = vld [vmem:[%s2 + $0x80] sm:$0xff]
  %v2313 = vld [vmem:[%s2 + $0x88] sm:$0xff]
  %v2314 = vld [vmem:[%s2 + $0x90] sm:$0xff]
  %v2315 = vld [vmem:[%s2 + $0x98] sm:$0xff]
  %v2316 = vld [vmem:[%s2 + $0xa0] sm:$0xff]
  %v2317 = vld [vmem:[%s2 + $0xa8] sm:$0xff]
  %v2318 = vld [vmem:[%s2 + $0xb0] sm:$0xff]
  %v2319 = vld [vmem:[%s2 + $0xb8] sm:$0xff]
  %v2320 = vld [vmem:[%s2 + $0xc0] sm:$0xff]
  %v2321 = vld [vmem:[%s2 + $0xc8] sm:$0xff]
  %v2322 = vld [vmem:[%s2 + $0xd0] sm:$0xff]
  %v2323 = vld [vmem:[%s2 + $0xd8] sm:$0xff]
  %v2324 = vld [vmem:[%s2 + $0xe0] sm:$0xff]
  %v2325 = vld [vmem:[%s2 + $0xe8] sm:$0xff]
  %v2326 = vld [vmem:[%s2 + $0xf0] sm:$0xff]
  %v2327 = vld [vmem:[%s2 + $0xf8] sm:$0xff]
  %v2360 = vunpack.c.l.b16 %v2296
  %v2361 = vunpack.c.h.b16 %v2296
  %v2362 = vunpack.c.l.b16 %v2297
  %v2363 = vunpack.c.h.b16 %v2297
  %v2364 = vunpack.c.l.b16 %v2298
  %v2365 = vunpack.c.h.b16 %v2298
  %v2366 = vunpack.c.l.b16 %v2299
  %v2367 = vunpack.c.h.b16 %v2299
  %v2368 = vunpack.c.l.b16 %v2300
  %v2369 = vunpack.c.h.b16 %v2300
  %v2370 = vunpack.c.l.b16 %v2301
  %v2371 = vunpack.c.h.b16 %v2301
  %v2372 = vunpack.c.l.b16 %v2302
  %v2373 = vunpack.c.h.b16 %v2302
  %v2374 = vunpack.c.l.b16 %v2303
  %v2375 = vunpack.c.h.b16 %v2303
  %v2376 = vunpack.c.l.b16 %v2304
  %v2377 = vunpack.c.h.b16 %v2304
  %v2378 = vunpack.c.l.b16 %v2305
  %v2379 = vunpack.c.h.b16 %v2305
  %v2380 = vunpack.c.l.b16 %v2306
  %v2381 = vunpack.c.h.b16 %v2306
  %v2382 = vunpack.c.l.b16 %v2307
  %v2383 = vunpack.c.h.b16 %v2307
  %v2384 = vunpack.c.l.b16 %v2308
  %v2385 = vunpack.c.h.b16 %v2308
  %v2386 = vunpack.c.l.b16 %v2309
  %v2387 = vunpack.c.h.b16 %v2309
  %v2388 = vunpack.c.l.b16 %v2310
  %v2389 = vunpack.c.h.b16 %v2310
  %v2390 = vunpack.c.l.b16 %v2311
  %v2391 = vunpack.c.h.b16 %v2311
  %v2392 = vunpack.c.l.b16 %v2312
  %v2393 = vunpack.c.h.b16 %v2312
  %v2394 = vunpack.c.l.b16 %v2313
  %v2395 = vunpack.c.h.b16 %v2313
  %v2396 = vunpack.c.l.b16 %v2314
  %v2397 = vunpack.c.h.b16 %v2314
  %v2398 = vunpack.c.l.b16 %v2315
  %v2399 = vunpack.c.h.b16 %v2315
  %v2400 = vunpack.c.l.b16 %v2316
  %v2401 = vunpack.c.h.b16 %v2316
  %v2402 = vunpack.c.l.b16 %v2317
  %v2403 = vunpack.c.h.b16 %v2317
  %v2404 = vunpack.c.l.b16 %v2318
  %v2405 = vunpack.c.h.b16 %v2318
  %v2406 = vunpack.c.l.b16 %v2319
  %v2407 = vunpack.c.h.b16 %v2319
  %v2408 = vunpack.c.l.b16 %v2320
  %v2409 = vunpack.c.h.b16 %v2320
  %v2410 = vunpack.c.l.b16 %v2321
  %v2411 = vunpack.c.h.b16 %v2321
  %v2412 = vunpack.c.l.b16 %v2322
  %v2413 = vunpack.c.h.b16 %v2322
  %v2414 = vunpack.c.l.b16 %v2323
  %v2415 = vunpack.c.h.b16 %v2323
  %v2416 = vunpack.c.l.b16 %v2324
  %v2417 = vunpack.c.h.b16 %v2324
  %v2418 = vunpack.c.l.b16 %v2325
  %v2419 = vunpack.c.h.b16 %v2325
  %v2420 = vunpack.c.l.b16 %v2326
  %v2421 = vunpack.c.h.b16 %v2326
  %v2422 = vunpack.c.l.b16 %v2327
  %v2423 = vunpack.c.h.b16 %v2327
  %v2424 = vpack.c.b16 %v2364, %v2360
  %v2425 = vpack.c.b16 %v2365, %v2361
  %v2426 = vpack.c.b16 %v2366, %v2362
  %v2427 = vpack.c.b16 %v2367, %v2363
  %v2428 = vpack.c.b16 %v2372, %v2368
  %v2429 = vpack.c.b16 %v2373, %v2369
  %v2430 = vpack.c.b16 %v2374, %v2370
  %v2431 = vpack.c.b16 %v2375, %v2371
  %v2432 = vpack.c.b16 %v2380, %v2376
  %v2433 = vpack.c.b16 %v2381, %v2377
  %v2434 = vpack.c.b16 %v2382, %v2378
  %v2435 = vpack.c.b16 %v2383, %v2379
  %v2436 = vpack.c.b16 %v2388, %v2384
  %v2437 = vpack.c.b16 %v2389, %v2385
  %v2438 = vpack.c.b16 %v2390, %v2386
  %v2439 = vpack.c.b16 %v2391, %v2387
  %v2440 = vpack.c.b16 %v2396, %v2392
  %v2441 = vpack.c.b16 %v2397, %v2393
  %v2442 = vpack.c.b16 %v2398, %v2394
  %v2443 = vpack.c.b16 %v2399, %v2395
  %v2444 = vpack.c.b16 %v2404, %v2400
  %v2445 = vpack.c.b16 %v2405, %v2401
  %v2446 = vpack.c.b16 %v2406, %v2402
  %v2447 = vpack.c.b16 %v2407, %v2403
  %v2448 = vpack.c.b16 %v2412, %v2408
  %v2449 = vpack.c.b16 %v2413, %v2409
  %v2450 = vpack.c.b16 %v2414, %v2410
  %v2451 = vpack.c.b16 %v2415, %v2411
  %v2452 = vpack.c.b16 %v2420, %v2416
  %v2453 = vpack.c.b16 %v2421, %v2417
  %v2454 = vpack.c.b16 %v2422, %v2418
  %v2455 = vpack.c.b16 %v2423, %v2419
  %2488 = vmatprep.subr.bf16.mxu0 %v2425
  %2489 = vmatpush1.bf16.msra.mxu0 %v2424
  %2490 = vmatprep.subr.bf16.mxu0 %v2429
  %2491 = vmatpush1.bf16.msra.mxu0 %v2428
  %2492 = vmatprep.subr.bf16.mxu0 %v2433
  %2493 = vmatpush1.bf16.msra.mxu0 %v2432
  %2494 = vmatprep.subr.bf16.mxu0 %v2437
  %2495 = vmatpush1.bf16.msra.mxu0 %v2436
  %2496 = vmatprep.subr.bf16.mxu0 %v2441
  %2497 = vmatpush1.bf16.msra.mxu0 %v2440
  %2498 = vmatprep.subr.bf16.mxu0 %v2445
  %2499 = vmatpush1.bf16.msra.mxu0 %v2444
  %2500 = vmatprep.subr.bf16.mxu0 %v2449
  %2501 = vmatpush1.bf16.msra.mxu0 %v2448
  %2502 = vmatprep.subr.bf16.mxu0 %v2453
  %2503 = vmatpush1.bf16.msra.mxu0 %v2452
  %2504 = vmatprep.subr.bf16.mxu0 0
  %2505 = vmatpush1.bf16.msra.mxu0 0
  %2506 = vmatprep.subr.bf16.mxu0 0
  %2507 = vmatpush1.bf16.msra.mxu0 0
  %2508 = vmatprep.subr.bf16.mxu0 0
  %2509 = vmatpush1.bf16.msra.mxu0 0
  %2510 = vmatprep.subr.bf16.mxu0 0
  %2511 = vmatpush1.bf16.msra.mxu0 0
  %2512 = vmatprep.subr.bf16.mxu0 0
  %2513 = vmatpush1.bf16.msra.mxu0 0
  %2514 = vmatprep.subr.bf16.mxu0 0
  %2515 = vmatpush1.bf16.msra.mxu0 0
  %2516 = vmatprep.subr.bf16.mxu0 0
  %2517 = vmatpush1.bf16.msra.mxu0 0
  %2518 = vmatprep.subr.bf16.mxu0 0
  %2519 = vmatpush1.bf16.msra.mxu0 0
  %2520 = vmatprep.mubr.bf16.mxu0 0
  %2521 = vmatmul.mubr.bf16.gmra.mrb[0].mxu0 %v2295
  %v2522 = vpop.f32.mrb[0].mxu0
  %v2523 = vadd.f32 0.0, %v2522
  %v2524 = vpop.f32.mrb[0].mxu0
  %v2525 = vadd.f32 0.0, %v2524
  %v2526 = vpop.f32.mrb[0].mxu0
  %v2527 = vpop.f32.mrb[0].mxu0
  %2528 = vdwg.mxu0
  %2529 = vmatprep.subr.bf16.mxu0 %v2427
  %2530 = vmatpush1.bf16.msra.mxu0 %v2426
  %2531 = vmatprep.subr.bf16.mxu0 %v2431
  %2532 = vmatpush1.bf16.msra.mxu0 %v2430
  %2533 = vmatprep.subr.bf16.mxu0 %v2435
  %2534 = vmatpush1.bf16.msra.mxu0 %v2434
  %2535 = vmatprep.subr.bf16.mxu0 %v2439
  %2536 = vmatpush1.bf16.msra.mxu0 %v2438
  %2537 = vmatprep.subr.bf16.mxu0 %v2443
  %2538 = vmatpush1.bf16.msra.mxu0 %v2442
  %2539 = vmatprep.subr.bf16.mxu0 %v2447
  %2540 = vmatpush1.bf16.msra.mxu0 %v2446
  %2541 = vmatprep.subr.bf16.mxu0 %v2451
  %2542 = vmatpush1.bf16.msra.mxu0 %v2450
  %2543 = vmatprep.subr.bf16.mxu0 %v2455
  %2544 = vmatpush1.bf16.msra.mxu0 %v2454
  %2545 = vmatprep.subr.bf16.mxu0 0
  %2546 = vmatpush1.bf16.msra.mxu0 0
  %2547 = vmatprep.subr.bf16.mxu0 0
  %2548 = vmatpush1.bf16.msra.mxu0 0
  %2549 = vmatprep.subr.bf16.mxu0 0
  %2550 = vmatpush1.bf16.msra.mxu0 0
  %2551 = vmatprep.subr.bf16.mxu0 0
  %2552 = vmatpush1.bf16.msra.mxu0 0
  %2553 = vmatprep.subr.bf16.mxu0 0
  %2554 = vmatpush1.bf16.msra.mxu0 0
  %2555 = vmatprep.subr.bf16.mxu0 0
  %2556 = vmatpush1.bf16.msra.mxu0 0
  %2557 = vmatprep.subr.bf16.mxu0 0
  %2558 = vmatpush1.bf16.msra.mxu0 0
  %2559 = vmatprep.subr.bf16.mxu0 0
  %2560 = vmatpush1.bf16.msra.mxu0 0
  %2561 = vmatprep.mubr.bf16.mxu0 0
  %2562 = vmatmul.mubr.bf16.gmra.mrb[0].mxu0 %v2295
  %v2563 = vpop.f32.mrb[0].mxu0
  %v2564 = vadd.f32 0.0, %v2563
  %v2565 = vpop.f32.mrb[0].mxu0
  %v2566 = vadd.f32 0.0, %v2565
  %v2567 = vpop.f32.mrb[0].mxu0
  %v2568 = vpop.f32.mrb[0].mxu0
  %2569 = vdwg.mxu0
  %v2570 = vadd.f32 %v2291, %v2523
  %v2571 = vadd.f32 %v2292, %v2525
  %v2572 = vadd.f32 %v2293, %v2564
  %v2573 = vadd.f32 %v2294, %v2566
  %v2574 = vmul.f32 %v2570, 0.5
  %v2575 = vtanh.pop %v2574
  %v2576 = vmul.f32 %v2575, 0.5
  %v2577 = vadd.f32 %v2576, 0.5
  %v2578 = vmul.f32 %v2571, 0.5
  %v2579 = vtanh.pop %v2578
  %v2580 = vmul.f32 %v2579, 0.5
  %v2581 = vadd.f32 %v2580, 0.5
  %v2582 = vtanh.pop %v2572
  %v2583 = vmul.f32 %v2573, 0.5
  %v2584 = vtanh.pop %v2583
  %v2585 = vmul.f32 %v2584, 0.5
  %v2586 = vadd.f32 %v2585, 0.5
  %v2587 = vmul.f32 %v2581, %v2283
  %v2588 = vmul.f32 %v2577, %v2582
  %v2589 = vadd.f32 %v2587, %v2588
  %v2590 = vtanh.pop %v2589
  %v2591 = vmul.f32 %v2586, %v2590
  %s2592 = scalar_lea.vmem [#allocation5], 48
  %2593 = vst [vmem:[%s2592] sm:$0xff] %v2591
  %s2594 = smul.u32 7, 4
  %s2595 = smul.addr %s2594, 8
  %s2596 = scalar_lea.vmem [#allocation4], %s2595
  %v2597 = vld [vmem:[%s2596] sm:$0xff]
  %v2598 = vld [vmem:[%s2596 + $0x8] sm:$0xff]
  %v2599 = vld [vmem:[%s2596 + $0x10] sm:$0xff]
  %v2600 = vld [vmem:[%s2596 + $0x18] sm:$0xff]
  %v2601 = vpack.c.bf16 %v2591, %v2591
  %v2602 = vld [vmem:[%s2] sm:$0xff]
  %v2603 = vld [vmem:[%s2 + $0x8] sm:$0xff]
  %v2604 = vld [vmem:[%s2 + $0x10] sm:$0xff]
  %v2605 = vld [vmem:[%s2 + $0x18] sm:$0xff]
  %v2606 = vld [vmem:[%s2 + $0x20] sm:$0xff]
  %v2607 = vld [vmem:[%s2 + $0x28] sm:$0xff]
  %v2608 = vld [vmem:[%s2 + $0x30] sm:$0xff]
  %v2609 = vld [vmem:[%s2 + $0x38] sm:$0xff]
  %v2610 = vld [vmem:[%s2 + $0x40] sm:$0xff]
  %v2611 = vld [vmem:[%s2 + $0x48] sm:$0xff]
  %v2612 = vld [vmem:[%s2 + $0x50] sm:$0xff]
  %v2613 = vld [vmem:[%s2 + $0x58] sm:$0xff]
  %v2614 = vld [vmem:[%s2 + $0x60] sm:$0xff]
  %v2615 = vld [vmem:[%s2 + $0x68] sm:$0xff]
  %v2616 = vld [vmem:[%s2 + $0x70] sm:$0xff]
  %v2617 = vld [vmem:[%s2 + $0x78] sm:$0xff]
  %v2618 = vld [vmem:[%s2 + $0x80] sm:$0xff]
  %v2619 = vld [vmem:[%s2 + $0x88] sm:$0xff]
  %v2620 = vld [vmem:[%s2 + $0x90] sm:$0xff]
  %v2621 = vld [vmem:[%s2 + $0x98] sm:$0xff]
  %v2622 = vld [vmem:[%s2 + $0xa0] sm:$0xff]
  %v2623 = vld [vmem:[%s2 + $0xa8] sm:$0xff]
  %v2624 = vld [vmem:[%s2 + $0xb0] sm:$0xff]
  %v2625 = vld [vmem:[%s2 + $0xb8] sm:$0xff]
  %v2626 = vld [vmem:[%s2 + $0xc0] sm:$0xff]
  %v2627 = vld [vmem:[%s2 + $0xc8] sm:$0xff]
  %v2628 = vld [vmem:[%s2 + $0xd0] sm:$0xff]
  %v2629 = vld [vmem:[%s2 + $0xd8] sm:$0xff]
  %v2630 = vld [vmem:[%s2 + $0xe0] sm:$0xff]
  %v2631 = vld [vmem:[%s2 + $0xe8] sm:$0xff]
  %v2632 = vld [vmem:[%s2 + $0xf0] sm:$0xff]
  %v2633 = vld [vmem:[%s2 + $0xf8] sm:$0xff]
  %v2666 = vunpack.c.l.b16 %v2602
  %v2667 = vunpack.c.h.b16 %v2602
  %v2668 = vunpack.c.l.b16 %v2603
  %v2669 = vunpack.c.h.b16 %v2603
  %v2670 = vunpack.c.l.b16 %v2604
  %v2671 = vunpack.c.h.b16 %v2604
  %v2672 = vunpack.c.l.b16 %v2605
  %v2673 = vunpack.c.h.b16 %v2605
  %v2674 = vunpack.c.l.b16 %v2606
  %v2675 = vunpack.c.h.b16 %v2606
  %v2676 = vunpack.c.l.b16 %v2607
  %v2677 = vunpack.c.h.b16 %v2607
  %v2678 = vunpack.c.l.b16 %v2608
  %v2679 = vunpack.c.h.b16 %v2608
  %v2680 = vunpack.c.l.b16 %v2609
  %v2681 = vunpack.c.h.b16 %v2609
  %v2682 = vunpack.c.l.b16 %v2610
  %v2683 = vunpack.c.h.b16 %v2610
  %v2684 = vunpack.c.l.b16 %v2611
  %v2685 = vunpack.c.h.b16 %v2611
  %v2686 = vunpack.c.l.b16 %v2612
  %v2687 = vunpack.c.h.b16 %v2612
  %v2688 = vunpack.c.l.b16 %v2613
  %v2689 = vunpack.c.h.b16 %v2613
  %v2690 = vunpack.c.l.b16 %v2614
  %v2691 = vunpack.c.h.b16 %v2614
  %v2692 = vunpack.c.l.b16 %v2615
  %v2693 = vunpack.c.h.b16 %v2615
  %v2694 = vunpack.c.l.b16 %v2616
  %v2695 = vunpack.c.h.b16 %v2616
  %v2696 = vunpack.c.l.b16 %v2617
  %v2697 = vunpack.c.h.b16 %v2617
  %v2698 = vunpack.c.l.b16 %v2618
  %v2699 = vunpack.c.h.b16 %v2618
  %v2700 = vunpack.c.l.b16 %v2619
  %v2701 = vunpack.c.h.b16 %v2619
  %v2702 = vunpack.c.l.b16 %v2620
  %v2703 = vunpack.c.h.b16 %v2620
  %v2704 = vunpack.c.l.b16 %v2621
  %v2705 = vunpack.c.h.b16 %v2621
  %v2706 = vunpack.c.l.b16 %v2622
  %v2707 = vunpack.c.h.b16 %v2622
  %v2708 = vunpack.c.l.b16 %v2623
  %v2709 = vunpack.c.h.b16 %v2623
  %v2710 = vunpack.c.l.b16 %v2624
  %v2711 = vunpack.c.h.b16 %v2624
  %v2712 = vunpack.c.l.b16 %v2625
  %v2713 = vunpack.c.h.b16 %v2625
  %v2714 = vunpack.c.l.b16 %v2626
  %v2715 = vunpack.c.h.b16 %v2626
  %v2716 = vunpack.c.l.b16 %v2627
  %v2717 = vunpack.c.h.b16 %v2627
  %v2718 = vunpack.c.l.b16 %v2628
  %v2719 = vunpack.c.h.b16 %v2628
  %v2720 = vunpack.c.l.b16 %v2629
  %v2721 = vunpack.c.h.b16 %v2629
  %v2722 = vunpack.c.l.b16 %v2630
  %v2723 = vunpack.c.h.b16 %v2630
  %v2724 = vunpack.c.l.b16 %v2631
  %v2725 = vunpack.c.h.b16 %v2631
  %v2726 = vunpack.c.l.b16 %v2632
  %v2727 = vunpack.c.h.b16 %v2632
  %v2728 = vunpack.c.l.b16 %v2633
  %v2729 = vunpack.c.h.b16 %v2633
  %v2730 = vpack.c.b16 %v2670, %v2666
  %v2731 = vpack.c.b16 %v2671, %v2667
  %v2732 = vpack.c.b16 %v2672, %v2668
  %v2733 = vpack.c.b16 %v2673, %v2669
  %v2734 = vpack.c.b16 %v2678, %v2674
  %v2735 = vpack.c.b16 %v2679, %v2675
  %v2736 = vpack.c.b16 %v2680, %v2676
  %v2737 = vpack.c.b16 %v2681, %v2677
  %v2738 = vpack.c.b16 %v2686, %v2682
  %v2739 = vpack.c.b16 %v2687, %v2683
  %v2740 = vpack.c.b16 %v2688, %v2684
  %v2741 = vpack.c.b16 %v2689, %v2685
  %v2742 = vpack.c.b16 %v2694, %v2690
  %v2743 = vpack.c.b16 %v2695, %v2691
  %v2744 = vpack.c.b16 %v2696, %v2692
  %v2745 = vpack.c.b16 %v2697, %v2693
  %v2746 = vpack.c.b16 %v2702, %v2698
  %v2747 = vpack.c.b16 %v2703, %v2699
  %v2748 = vpack.c.b16 %v2704, %v2700
  %v2749 = vpack.c.b16 %v2705, %v2701
  %v2750 = vpack.c.b16 %v2710, %v2706
  %v2751 = vpack.c.b16 %v2711, %v2707
  %v2752 = vpack.c.b16 %v2712, %v2708
  %v2753 = vpack.c.b16 %v2713, %v2709
  %v2754 = vpack.c.b16 %v2718, %v2714
  %v2755 = vpack.c.b16 %v2719, %v2715
  %v2756 = vpack.c.b16 %v2720, %v2716
  %v2757 = vpack.c.b16 %v2721, %v2717
  %v2758 = vpack.c.b16 %v2726, %v2722
  %v2759 = vpack.c.b16 %v2727, %v2723
  %v2760 = vpack.c.b16 %v2728, %v2724
  %v2761 = vpack.c.b16 %v2729, %v2725
  %2794 = vmatprep.subr.bf16.mxu0 %v2731
  %2795 = vmatpush1.bf16.msra.mxu0 %v2730
  %2796 = vmatprep.subr.bf16.mxu0 %v2735
  %2797 = vmatpush1.bf16.msra.mxu0 %v2734
  %2798 = vmatprep.subr.bf16.mxu0 %v2739
  %2799 = vmatpush1.bf16.msra.mxu0 %v2738
  %2800 = vmatprep.subr.bf16.mxu0 %v2743
  %2801 = vmatpush1.bf16.msra.mxu0 %v2742
  %2802 = vmatprep.subr.bf16.mxu0 %v2747
  %2803 = vmatpush1.bf16.msra.mxu0 %v2746
  %2804 = vmatprep.subr.bf16.mxu0 %v2751
  %2805 = vmatpush1.bf16.msra.mxu0 %v2750
  %2806 = vmatprep.subr.bf16.mxu0 %v2755
  %2807 = vmatpush1.bf16.msra.mxu0 %v2754
  %2808 = vmatprep.subr.bf16.mxu0 %v2759
  %2809 = vmatpush1.bf16.msra.mxu0 %v2758
  %2810 = vmatprep.subr.bf16.mxu0 0
  %2811 = vmatpush1.bf16.msra.mxu0 0
  %2812 = vmatprep.subr.bf16.mxu0 0
  %2813 = vmatpush1.bf16.msra.mxu0 0
  %2814 = vmatprep.subr.bf16.mxu0 0
  %2815 = vmatpush1.bf16.msra.mxu0 0
  %2816 = vmatprep.subr.bf16.mxu0 0
  %2817 = vmatpush1.bf16.msra.mxu0 0
  %2818 = vmatprep.subr.bf16.mxu0 0
  %2819 = vmatpush1.bf16.msra.mxu0 0
  %2820 = vmatprep.subr.bf16.mxu0 0
  %2821 = vmatpush1.bf16.msra.mxu0 0
  %2822 = vmatprep.subr.bf16.mxu0 0
  %2823 = vmatpush1.bf16.msra.mxu0 0
  %2824 = vmatprep.subr.bf16.mxu0 0
  %2825 = vmatpush1.bf16.msra.mxu0 0
  %2826 = vmatprep.mubr.bf16.mxu0 0
  %2827 = vmatmul.mubr.bf16.gmra.mrb[0].mxu0 %v2601
  %v2828 = vpop.f32.mrb[0].mxu0
  %v2829 = vadd.f32 0.0, %v2828
  %v2830 = vpop.f32.mrb[0].mxu0
  %v2831 = vadd.f32 0.0, %v2830
  %v2832 = vpop.f32.mrb[0].mxu0
  %v2833 = vpop.f32.mrb[0].mxu0
  %2834 = vdwg.mxu0
  %2835 = vmatprep.subr.bf16.mxu0 %v2733
  %2836 = vmatpush1.bf16.msra.mxu0 %v2732
  %2837 = vmatprep.subr.bf16.mxu0 %v2737
  %2838 = vmatpush1.bf16.msra.mxu0 %v2736
  %2839 = vmatprep.subr.bf16.mxu0 %v2741
  %2840 = vmatpush1.bf16.msra.mxu0 %v2740
  %2841 = vmatprep.subr.bf16.mxu0 %v2745
  %2842 = vmatpush1.bf16.msra.mxu0 %v2744
  %2843 = vmatprep.subr.bf16.mxu0 %v2749
  %2844 = vmatpush1.bf16.msra.mxu0 %v2748
  %2845 = vmatprep.subr.bf16.mxu0 %v2753
  %2846 = vmatpush1.bf16.msra.mxu0 %v2752
  %2847 = vmatprep.subr.bf16.mxu0 %v2757
  %2848 = vmatpush1.bf16.msra.mxu0 %v2756
  %2849 = vmatprep.subr.bf16.mxu0 %v2761
  %2850 = vmatpush1.bf16.msra.mxu0 %v2760
  %2851 = vmatprep.subr.bf16.mxu0 0
  %2852 = vmatpush1.bf16.msra.mxu0 0
  %2853 = vmatprep.subr.bf16.mxu0 0
  %2854 = vmatpush1.bf16.msra.mxu0 0
  %2855 = vmatprep.subr.bf16.mxu0 0
  %2856 = vmatpush1.bf16.msra.mxu0 0
  %2857 = vmatprep.subr.bf16.mxu0 0
  %2858 = vmatpush1.bf16.msra.mxu0 0
  %2859 = vmatprep.subr.bf16.mxu0 0
  %2860 = vmatpush1.bf16.msra.mxu0 0
  %2861 = vmatprep.subr.bf16.mxu0 0
  %2862 = vmatpush1.bf16.msra.mxu0 0
  %2863 = vmatprep.subr.bf16.mxu0 0
  %2864 = vmatpush1.bf16.msra.mxu0 0
  %2865 = vmatprep.subr.bf16.mxu0 0
  %2866 = vmatpush1.bf16.msra.mxu0 0
  %2867 = vmatprep.mubr.bf16.mxu0 0
  %2868 = vmatmul.mubr.bf16.gmra.mrb[0].mxu0 %v2601
  %v2869 = vpop.f32.mrb[0].mxu0
  %v2870 = vadd.f32 0.0, %v2869
  %v2871 = vpop.f32.mrb[0].mxu0
  %v2872 = vadd.f32 0.0, %v2871
  %v2873 = vpop.f32.mrb[0].mxu0
  %v2874 = vpop.f32.mrb[0].mxu0
  %2875 = vdwg.mxu0
  %v2876 = vadd.f32 %v2597, %v2829
  %v2877 = vadd.f32 %v2598, %v2831
  %v2878 = vadd.f32 %v2599, %v2870
  %v2879 = vadd.f32 %v2600, %v2872
  %v2880 = vmul.f32 %v2876, 0.5
  %v2881 = vtanh.pop %v2880
  %v2882 = vmul.f32 %v2881, 0.5
  %v2883 = vadd.f32 %v2882, 0.5
  %v2884 = vmul.f32 %v2877, 0.5
  %v2885 = vtanh.pop %v2884
  %v2886 = vmul.f32 %v2885, 0.5
  %v2887 = vadd.f32 %v2886, 0.5
  %v2888 = vtanh.pop %v2878
  %v2889 = vmul.f32 %v2879, 0.5
  %v2890 = vtanh.pop %v2889
  %v2891 = vmul.f32 %v2890, 0.5
  %v2892 = vadd.f32 %v2891, 0.5
  %v2893 = vmul.f32 %v2887, %v2589
  %v2894 = vmul.f32 %v2883, %v2888
  %v2895 = vadd.f32 %v2893, %v2894
  %v2896 = vtanh.pop %v2895
  %v2897 = vmul.f32 %v2892, %v2896
  %s2898 = scalar_lea.vmem [#allocation5], 56
  %2899 = vst [vmem:[%s2898] sm:$0xff] %v2897
  %v2900 = vld [vmem:[#allocation5] sm:$0xff]
  %v2901 = vld [vmem:[#allocation5 + $0x8] sm:$0xff]
  %v2902 = vld [vmem:[#allocation5 + $0x10] sm:$0xff]
  %v2903 = vld [vmem:[#allocation5 + $0x18] sm:$0xff]
  %v2904 = vld [vmem:[#allocation5 + $0x20] sm:$0xff]
  %v2905 = vld [vmem:[#allocation5 + $0x28] sm:$0xff]
  %v2906 = vld [vmem:[#allocation5 + $0x30] sm:$0xff]
  %v2907 = vld [vmem:[#allocation5 + $0x38] sm:$0xff]
  %2908 = vst [vmem:[%s4] sm:$0xff] %v2900
  %2909 = vst [vmem:[%s4 + $0x8] sm:$0xff] %v2901
  %2910 = vst [vmem:[%s4 + $0x10] sm:$0xff] %v2902
  %2911 = vst [vmem:[%s4 + $0x18] sm:$0xff] %v2903
  %2912 = vst [vmem:[%s4 + $0x20] sm:$0xff] %v2904
  %2913 = vst [vmem:[%s4 + $0x28] sm:$0xff] %v2905
  %2914 = vst [vmem:[%s4 + $0x30] sm:$0xff] %v2906
  %2915 = vst [vmem:[%s4 + $0x38] sm:$0xff] %v2907
  %2916 = vst [vmem:[#allocation2] sm:$0xff] %v2897
  %2917 = vst [vmem:[#allocation3] sm:$0xff] %v2895
  // Predicated region
  $region22: #{encoder_forward.3} parent=0 // pred_check
    %p2918 = pneg %p21
  $region23: #{encoder_forward.3} parent=0 // pred_check_branch
    %2920 = sbr.rel (%p2918) target = $region25
  $region24: #{encoder_forward.3} parent=0 // pred_region
    %2921 = vst [vmem:[%s5] sm:$0xff] %v2897
    %2922 = vst [vmem:[%s6] sm:$0xff] %v2895
  $region25: #{encoder_forward.3} parent=0 // pred_fallthru
    _
  // Predicated region
  $region26: #{encoder_forward.3} parent=0 // pred_check
    _
  $region27: #{encoder_forward.3} parent=0 // pred_check_branch
    %2924 = sbr.rel (0) target = $region29
  $region28: #{encoder_forward.3} parent=0 // pred_region
    _
  $region29: #{encoder_forward.3} parent=0 // pred_fallthru
    _
  // Predicated region
  $region30: #{encoder_forward.3} parent=0 // pred_check
    _
  $region31: #{encoder_forward.3} parent=0 // pred_check_branch
    %2926 = sbr.rel (0) target = $region33
  $region32: #{encoder_forward.3} parent=0 // pred_region
    _
  $region33: #{encoder_forward.3} parent=0 // pred_fallthru
    _
  // Predicated region
  $region34: #{encoder_forward.3} parent=0 // pred_check
    _
  $region35: #{encoder_forward.3} parent=0 // pred_check_branch
    %2928 = sbr.rel (0) target = $region37
  $region36: #{encoder_forward.3} parent=0 // pred_region
    _
  $region37: #{encoder_forward.3} parent=0 // pred_fallthru
    _
  // Predicated region
  $region38: #{encoder_forward.3} parent=0 // pred_check
    _
  $region39: #{encoder_forward.3} parent=0 // pred_check_branch
    %2930 = sbr.rel (0) target = $region41
  $region40: #{encoder_forward.3} parent=0 // pred_region
    _
  $region41: #{encoder_forward.3} parent=0 // pred_fallthru
    _
  // Predicated region
  $region42: #{encoder_forward.3} parent=0 // pred_check
    _
  $region43: #{encoder_forward.3} parent=0 // pred_check_branch
    %2932 = sbr.rel (0) target = $region45
  $region44: #{encoder_forward.3} parent=0 // pred_region
    _
  $region45: #{encoder_forward.3} parent=0 // pred_fallthru
    _
  // Predicated region
  $region46: #{encoder_forward.3} parent=0 // pred_check
    _
  $region47: #{encoder_forward.3} parent=0 // pred_check_branch
    %2934 = sbr.rel (0) target = $region49
  $region48: #{encoder_forward.3} parent=0 // pred_region
    _
  $region49: #{encoder_forward.3} parent=0 // pred_fallthru
    _

</llo_original>
